<compile_context>
chip_gen: v6e
topology: v6e:2x2x1
jax: 0.10.0
libtpu: 0.0.40
codegen_flags: <defaults>
</compile_context>

<pallas_src>
import numpy as np
import jax
import jax.numpy as jnp
from jax.experimental import pallas as pl
from jax.experimental.pallas import tpu as pltpu

P_MIN = 0.0  # Model.p_min


# ----------------------------------------------------------------------------
# Pallas kernel: forward projection (line integrals of mu through the mesh)
# ----------------------------------------------------------------------------
def _make_fp_kernel(nfaces, a_blk, unroll):
    """One grid step = `a_blk` angles over one (ray_tile, 128) detector tile.

    Per (angle, face) the kernel reads 11 precomputed SMEM scalars and does
    only the truly per-ray work:
        u = Au*uu + Bu*vv + Cu;  v = ...;  t = ...;  w = 1 - u - v
        hit = (u>=-eps)&(v>=-eps)&(w>=-eps)&(t>eps)
        acc += hitf * t * w_acc;  cnt += hitf * w_cnt
    """
    unroll = max(1, min(unroll, nfaces))

    def fp_kernel(coef_ref, uu_ref, vv_ref, phat_ref, mask_ref):
        ab = pl.program_id(0)
        uu = uu_ref[...]              # detector u coordinate per ray  [rt,128]
        vv = vv_ref[...]              # detector v coordinate per ray  [rt,128]
        zero = jnp.zeros_like(uu)

        # Static loop over the angles of this block: a_blk is small and each
        # angle's temporaries die at its phat/mask store.
        for al in range(a_blk):
            base = (ab * a_blk + al) * (nfaces * 11)

            def body(f, carry):
                acc, cnt = carry
                cb = base + 11 * f
                au = coef_ref[cb + 0]; bu = coef_ref[cb + 1]; cu = coef_ref[cb + 2]
                av = coef_ref[cb + 3]; bv = coef_ref[cb + 4]; cv = coef_ref[cb + 5]
                at = coef_ref[cb + 6]; bt = coef_ref[cb + 7]; ct = coef_ref[cb + 8]
                w_acc = coef_ref[cb + 9]   # valid ? -sign(a) * dmu : 0
                w_cnt = coef_ref[cb + 10]  # valid ? -sign(a)       : 0

                u = au * uu + bu * vv + cu
                v = av * uu + bv * vv + cv
                t = at * uu + bt * vv + ct
                w = 1.0 - u - v
                hit = (u >= -1e-6) & (v >= -1e-6) & (w >= -1e-6) & (t > 1e-6)
                hitf = hit.astype(jnp.float32)
                acc = acc + (hitf * t) * w_acc
                cnt = cnt + hitf * w_cnt
                return acc, cnt

            acc, cnt = jax.lax.fori_loop(0, nfaces, body, (zero, zero),
                                         unroll=unroll)
            phat_ref[al] = acc
            # ray is "valid" when crossings are parity-consistent
            mask_ref[al] = (jnp.abs(cnt) < 0.5).astype(jnp.float32)

    return fp_kernel


def _pick_angle_block(nangles, max_blk=8):
    """Largest divisor of nangles that is <= max_blk (amortize step overhead)."""
    for b in range(min(nangles, max_blk), 0, -1):
        if nangles % b == 0:
            return b
    return 1


def _pick_ray_tile(rs, max_rows=32):
    """Ray-tile rows: keep live set in vregs; block dim must be 8-multiple or
    equal to the full extent."""
    if rs <= max_rows:
        return rs
    for t in (32, 24, 16, 8):
        if rs % t == 0:
            return t
    return rs  # fall back to the whole slab (block == full dim is always legal)


def fp_project(coef, uu, vv, *, unroll=None):
    """coef:[A,F,11] f32; uu/vv:[RS,128] f32 -> (phat, mask) each [A,RS,128]."""
    A, F, NC = coef.shape
    assert NC == 11
    RS, LANE = uu.shape
    a_blk = _pick_angle_block(A)
    rt = _pick_ray_tile(RS)
    if unroll is None:
        vregs_per_array = max(1, rt // 8)
        if F <= 32 and vregs_per_array <= 2:
            unroll = F                       # full unroll for small meshes
        else:
            unroll = max(1, min(8, 16 // vregs_per_array))

    smem = pl.BlockSpec(memory_space=pltpu.MemorySpace.SMEM)
    ray_in = pl.BlockSpec((rt, LANE), lambda ab, r: (r, 0))
    ray_out = pl.BlockSpec((a_blk, rt, LANE), lambda ab, r: (ab, r, 0))

    R = RS * LANE
    cost = pl.CostEstimate(flops=27 * A * R * F, transcendentals=0,
                           bytes_accessed=8 * A * R + 8 * R + 44 * A * F)

    return pl.pallas_call(
        _make_fp_kernel(F, a_blk, unroll),
        out_shape=(jax.ShapeDtypeStruct((A, RS, LANE), jnp.float32),
                   jax.ShapeDtypeStruct((A, RS, LANE), jnp.float32)),
        grid=(A // a_blk, RS // rt),
        in_specs=[smem, ray_in, ray_in],
        out_specs=(ray_out, ray_out),
        compiler_params=pltpu.CompilerParams(
            dimension_semantics=("parallel", "parallel")),
        cost_estimate=cost,
    )(coef.reshape(-1), uu, vv)


# ----------------------------------------------------------------------------
# Glue (mesh template, parameters, geometry tables, Model.forward semantics)
# ----------------------------------------------------------------------------
def make_cube_template(h=0.4):
    """Deterministic stand-in for util_mesh.load_template: a cube, 1 material."""
    verts = np.array([[x, y, z] for x in (-h, h) for y in (-h, h) for z in (-h, h)],
                     dtype=np.float32)
    faces = np.array([[0, 1, 3], [0, 3, 2],      # -x
                      [4, 6, 7], [4, 7, 5],      # +x
                      [0, 4, 5], [0, 5, 1],      # -y
                      [2, 3, 7], [2, 7, 6],      # +y
                      [0, 6, 4], [0, 2, 6],      # -z
                      [1, 5, 7], [1, 7, 3]],     # +z
                     dtype=np.int32)
    labels_f = np.tile(np.array([[1, 0]], dtype=np.int32), (faces.shape[0], 1))
    labels_v = np.ones((verts.shape[0],), dtype=np.int32)
    return verts, faces, labels_v, labels_f


def build_detector(geom):
    """Detector pixel coordinates flattened to [R//128, 128] (shared by all angles)."""
    H, W = geom["det_rows"], geom["det_cols"]
    du, dv = geom["du"], geom["dv"]
    R = H * W
    assert R % 128 == 0, "detector size must flatten to a multiple of 128"
    cu = (jnp.arange(W, dtype=jnp.float32) - (W - 1) / 2.0) * du
    cv = (jnp.arange(H, dtype=jnp.float32) - (H - 1) / 2.0) * dv
    vvg, uug = jnp.meshgrid(cv, cu, indexing="ij")             # [H, W]
    uu = uug.reshape(R // 128, 128).astype(jnp.float32)
    vv = vvg.reshape(R // 128, 128).astype(jnp.float32)
    return uu, vv


def precompute_fp_affine(tri, dmu, angles, L):
    """Per-(angle, face) AFFINE Moller-Trumbore coefficients (tiny, O(A*F)).

    For a parallel beam with direction D=(c,s,0), origin O(uu,vv) =
    (-L*c - s*uu, -L*s + c*uu, vv) is affine in (uu, vv), hence so are the
    barycentric coords u, v and ray parameter t.
    """
    c = jnp.cos(angles)
    s = jnp.sin(angles)                                        # [A]
    zero = jnp.zeros_like(c)
    one = jnp.ones_like(c)
    D = jnp.stack([c, s, zero], axis=-1)[:, None, :]           # ray direction  [A,1,3]
    d1 = jnp.stack([-s, c, zero], axis=-1)[:, None, :]         # dOrigin/d(uu)
    d2 = jnp.stack([zero, zero, one], axis=-1)[:, None, :]     # dOrigin/d(vv)
    O0 = jnp.stack([-L * c, -L * s, zero], axis=-1)[:, None, :]  # origin @ uu=vv=0

    v0 = tri[None, :, 0:3]
    e1 = tri[None, :, 3:6] - v0
    e2 = tri[None, :, 6:9] - v0                                # [1,F,3]

    h = jnp.cross(D, e2)                                       # [A,F,3]
    a = jnp.sum(e1 * h, axis=-1)                               # [A,F]
    valid = jnp.abs(a) > 1e-8
    inv_a = 1.0 / jnp.where(valid, a, 1.0)
    sgn = -jnp.sign(a)                                         # sign(dot(D, outward normal))
    w_acc = jnp.where(valid, sgn * dmu[None, :], 0.0)
    w_cnt = jnp.where(valid, sgn, 0.0)

    S0 = O0 - v0                                               # [A,F,3]
    # u = dot(S, h)/a with S = S0 + uu*d1 + vv*d2
    Cu = jnp.sum(S0 * h, axis=-1) * inv_a
    Au = jnp.sum(d1 * h, axis=-1) * inv_a
    Bu = jnp.sum(d2 * h, axis=-1) * inv_a
    # q = cross(S, e1) is linear in S; v = dot(D, q)/a ; t = dot(e2, q)/a
    q0 = jnp.cross(S0, e1)
    q1 = jnp.cross(d1, e1)
    q2 = jnp.cross(d2, e1)
    Cv = jnp.sum(D * q0, axis=-1) * inv_a
    Av = jnp.sum(D * q1, axis=-1) * inv_a
    Bv = jnp.sum(D * q2, axis=-1) * inv_a
    Ct = jnp.sum(e2 * q0, axis=-1) * inv_a
    At = jnp.sum(e2 * q1, axis=-1) * inv_a
    Bt = jnp.sum(e2 * q2, axis=-1) * inv_a

    coef = jnp.stack([Au, Bu, Cu, Av, Bv, Cv, At, Bt, Ct, w_acc, w_cnt],
                     axis=-1).astype(jnp.float32)              # [A, F, 11]
    return coef


def compute_edge_length(vertices, faces):
    v0 = vertices[faces[:, 0]]
    v1 = vertices[faces[:, 1]]
    v2 = vertices[faces[:, 2]]
    e = jnp.concatenate([v1 - v0, v2 - v1, v0 - v2], axis=0)
    return jnp.mean(jnp.sum(e * e, axis=-1))


def model_forward(params, geom, idx_angles, wedge=0.0):
    """Mirrors Model.forward(idx_angles, wedge, backprop)."""
    # pretransform(translation=True): vertices - center
    vertices = params["vertices"] - params["center"]
    # deform(verts, None): + displace
    vertices = vertices + params["displace"]
    # mus_fixed_no == 1: mus[0] = p_min
    mus = params["mus"].at[0].set(P_MIN)

    labels = params["labels"]                                           # [F,2]
    dmu = (mus[labels[:, 0]] - mus[labels[:, 1]]).astype(jnp.float32)   # [F]
    faces = params["faces"]
    tri = jnp.concatenate([vertices[faces[:, 0]],
                           vertices[faces[:, 1]],
                           vertices[faces[:, 2]]], axis=1).astype(jnp.float32)  # [F,9]

    angles = jnp.asarray(geom["ProjectionAngles"], jnp.float32)[idx_angles]
    L = float(geom["src_dist"])
    coef = precompute_fp_affine(tri, dmu, angles, L)
    uu, vv = build_detector(geom)

    A = idx_angles.shape[0]
    phat, mask_valid = fp_project(coef, uu, vv)

    H, W = geom["det_rows"], geom["det_cols"]
    phat = phat.reshape(A, H, W)
    mask_valid = mask_valid.reshape(A, H, W)

    edge_loss = compute_edge_length(vertices, faces) if wedge > 0.0 else 0.0
    lap_loss = 0.0   # use_lap_loss == False (wlap = 0.0)
    flat_loss = 0.0  # use_flat_loss == False (wflat = 0.0)
    return phat, mask_valid, edge_loss, lap_loss, flat_loss


# ----------------------------------------------------------------------------
# Pure-numpy reference of the same projector (for correctness check)
# ----------------------------------------------------------------------------
def ref_project(coef, uu, vv):
    A, F, _ = coef.shape
    uu_f = uu.reshape(-1).astype(np.float32)
    vv_f = vv.reshape(-1).astype(np.float32)
    R = uu_f.shape[0]
    acc = np.zeros((A, R), np.float32)
    cnt = np.zeros((A, R), np.float32)
    for ai in range(A):
        for f in range(F):
            (au, bu, cu, av, bv, cv, at, bt, ct, w_acc, w_cnt) = coef[ai, f]
            u = au * uu_f + bu * vv_f + cu
            v = av * uu_f + bv * vv_f + cv
            t = at * uu_f + bt * vv_f + ct
            w = np.float32(1.0) - u - v
            hit = (u >= -1e-6) & (v >= -1e-6) & (w >= -1e-6) & (t > 1e-6)
            hitf = hit.astype(np.float32)
            acc[ai] += (hitf * t) * w_acc
            cnt[ai] += hitf * w_cnt
    return acc, (np.abs(cnt) < 0.5).astype(np.float32)


if __name__ == "__main__":
    # --- deterministic template + parameters (Model.__init__ / init_register) ---
    verts_np, faces_np, labels_v, labels_f = make_cube_template(h=0.4)
    key = jax.random.PRNGKey(0)
    params = {
        "vertices": jnp.asarray(verts_np),                                  # buffer
        "faces": jnp.asarray(faces_np, jnp.int32),                          # buffer
        "labels": jnp.asarray(labels_f, jnp.int32),                         # buffer
        "center": jnp.zeros((1, 3), jnp.float32),                           # buffer
        # displace is an nn.Parameter (zeros at init); perturb deterministically
        "displace": 0.02 * jax.random.normal(key, verts_np.shape, jnp.float32),
        "mus": jnp.array([0.0, 1.5], jnp.float32),                          # [nmaterials]
    }

    # --- projection geometry (parallel beam; 32x32 detector -> full (8,128) slab) ---
    nangles = 8
    geom = {
        "type": "parallel3d",
        "ProjectionAngles": np.linspace(0.0, np.pi, nangles, endpoint=False),
        "det_rows": 32, "det_cols": 32,
        "du": 0.05, "dv": 0.05,
        "src_dist": 2.0,
    }
    idx_angles = jnp.array([0, 2, 5, 7], jnp.int32)
    A = int(idx_angles.shape[0])

    fwd = jax.jit(lambda p, ia: model_forward(p, geom, ia))
    phat, mask_valid, edge_loss, lap_loss, flat_loss = fwd(params, idx_angles)
    jax.block_until_ready(phat)
    jax.block_until_ready(mask_valid)

    # --- numpy reference check of the Pallas projector ---
    vertices_e = params["vertices"] - params["center"] + params["displace"]
    mus_e = params["mus"].at[0].set(P_MIN)
    dmu_e = (mus_e[params["labels"][:, 0]] - mus_e[params["labels"][:, 1]]).astype(jnp.float32)
    tri_e = jnp.concatenate([vertices_e[params["faces"][:, 0]],
                             vertices_e[params["faces"][:, 1]],
                             vertices_e[params["faces"][:, 2]]], axis=1).astype(jnp.float32)
    angles_e = jnp.asarray(geom["ProjectionAngles"], jnp.float32)[idx_angles]
    coef_e = precompute_fp_affine(tri_e, dmu_e, angles_e, float(geom["src_dist"]))
    uu_e, vv_e = build_detector(geom)
    phat_ref, mask_ref = ref_project(np.asarray(coef_e), np.asarray(uu_e),
                                     np.asarray(vv_e))

    np.testing.assert_allclose(np.asarray(phat).reshape(A, -1), phat_ref,
                               rtol=1e-4, atol=1e-5)
    np.testing.assert_allclose(np.asarray(mask_valid).reshape(A, -1), mask_ref,
                               rtol=0, atol=0)
    assert float(jnp.max(phat)) > 0.0  # some rays do pass through the object

    print("KERNEL_OK")
</pallas_src>

<mosaic_0001>
module attributes {stable_mosaic.version = 11 : i64} {
  func.func @fp_kernel(%arg0: i32, %arg1: i32, %arg2: memref<528xf32, #tpu.memory_space<smem>>, %arg3: memref<8x128xf32, #tpu.memory_space<vmem>>, %arg4: memref<8x128xf32, #tpu.memory_space<vmem>>, %arg5: memref<4x8x128xf32, #tpu.memory_space<vmem>>, %arg6: memref<4x8x128xf32, #tpu.memory_space<vmem>>) attributes {dimension_semantics = [#tpu.dimension_semantics<parallel>, #tpu.dimension_semantics<parallel>], iteration_bounds = array<i64: 1, 1>, scalar_prefetch = 0 : i64, scratch_operands = 0 : i64, tpu.core_type = #tpu.core_type<tc>, window_params = [{transform_indices = @transform_0, window_bounds = array<i64: 528>}, {transform_indices = @transform_1, window_bounds = array<i64: 8, 128>}, {transform_indices = @transform_2, window_bounds = array<i64: 8, 128>}, {transform_indices = @transform_3, window_bounds = array<i64: 4, 8, 128>}, {transform_indices = @transform_4, window_bounds = array<i64: 4, 8, 128>}]} {
    %c0 = arith.constant 0 : index
    %c0_0 = arith.constant 0 : index
    %0 = vector.load %arg3[%c0, %c0_0] : memref<8x128xf32, #tpu.memory_space<vmem>>, vector<8x128xf32>
    %c0_1 = arith.constant 0 : index
    %c0_2 = arith.constant 0 : index
    %1 = vector.load %arg4[%c0_1, %c0_2] : memref<8x128xf32, #tpu.memory_space<vmem>>, vector<8x128xf32>
    %cst = arith.constant 0.000000e+00 : f32
    %2 = vector.broadcast %cst : f32 to vector<8x128xf32>
    %c4_i32 = arith.constant 4 : i32
    %3 = arith.muli %arg0, %c4_i32 : i32
    %c0_i32 = arith.constant 0 : i32
    %4 = arith.addi %3, %c0_i32 : i32
    %c132_i32 = arith.constant 132 : i32
    %5 = arith.muli %4, %c132_i32 : i32
    %c0_i32_3 = arith.constant 0 : i32
    %c11_i32 = arith.constant 11 : i32
    %6 = arith.muli %c11_i32, %c0_i32_3 : i32
    %7 = arith.addi %5, %6 : i32
    %c0_i32_4 = arith.constant 0 : i32
    %8 = arith.addi %7, %c0_i32_4 : i32
    %9 = arith.index_cast %8 : i32 to index
    %10 = memref.load %arg2[%9] : memref<528xf32, #tpu.memory_space<smem>>
    %c1_i32 = arith.constant 1 : i32
    %11 = arith.addi %7, %c1_i32 : i32
    %12 = arith.index_cast %11 : i32 to index
    %13 = memref.load %arg2[%12] : memref<528xf32, #tpu.memory_space<smem>>
    %c2_i32 = arith.constant 2 : i32
    %14 = arith.addi %7, %c2_i32 : i32
    %15 = arith.index_cast %14 : i32 to index
    %16 = memref.load %arg2[%15] : memref<528xf32, #tpu.memory_space<smem>>
    %c3_i32 = arith.constant 3 : i32
    %17 = arith.addi %7, %c3_i32 : i32
    %18 = arith.index_cast %17 : i32 to index
    %19 = memref.load %arg2[%18] : memref<528xf32, #tpu.memory_space<smem>>
    %c4_i32_5 = arith.constant 4 : i32
    %20 = arith.addi %7, %c4_i32_5 : i32
    %21 = arith.index_cast %20 : i32 to index
    %22 = memref.load %arg2[%21] : memref<528xf32, #tpu.memory_space<smem>>
    %c5_i32 = arith.constant 5 : i32
    %23 = arith.addi %7, %c5_i32 : i32
    %24 = arith.index_cast %23 : i32 to index
    %25 = memref.load %arg2[%24] : memref<528xf32, #tpu.memory_space<smem>>
    %c6_i32 = arith.constant 6 : i32
    %26 = arith.addi %7, %c6_i32 : i32
    %27 = arith.index_cast %26 : i32 to index
    %28 = memref.load %arg2[%27] : memref<528xf32, #tpu.memory_space<smem>>
    %c7_i32 = arith.constant 7 : i32
    %29 = arith.addi %7, %c7_i32 : i32
    %30 = arith.index_cast %29 : i32 to index
    %31 = memref.load %arg2[%30] : memref<528xf32, #tpu.memory_space<smem>>
    %c8_i32 = arith.constant 8 : i32
    %32 = arith.addi %7, %c8_i32 : i32
    %33 = arith.index_cast %32 : i32 to index
    %34 = memref.load %arg2[%33] : memref<528xf32, #tpu.memory_space<smem>>
    %c9_i32 = arith.constant 9 : i32
    %35 = arith.addi %7, %c9_i32 : i32
    %36 = arith.index_cast %35 : i32 to index
    %37 = memref.load %arg2[%36] : memref<528xf32, #tpu.memory_space<smem>>
    %c10_i32 = arith.constant 10 : i32
    %38 = arith.addi %7, %c10_i32 : i32
    %39 = arith.index_cast %38 : i32 to index
    %40 = memref.load %arg2[%39] : memref<528xf32, #tpu.memory_space<smem>>
    %41 = vector.broadcast %10 : f32 to vector<8x128xf32>
    %42 = arith.mulf %41, %0 : vector<8x128xf32>
    %43 = vector.broadcast %13 : f32 to vector<8x128xf32>
    %44 = arith.mulf %43, %1 : vector<8x128xf32>
    %45 = arith.addf %42, %44 : vector<8x128xf32>
    %46 = vector.broadcast %16 : f32 to vector<8x128xf32>
    %47 = arith.addf %45, %46 : vector<8x128xf32>
    %48 = vector.broadcast %19 : f32 to vector<8x128xf32>
    %49 = arith.mulf %48, %0 : vector<8x128xf32>
    %50 = vector.broadcast %22 : f32 to vector<8x128xf32>
    %51 = arith.mulf %50, %1 : vector<8x128xf32>
    %52 = arith.addf %49, %51 : vector<8x128xf32>
    %53 = vector.broadcast %25 : f32 to vector<8x128xf32>
    %54 = arith.addf %52, %53 : vector<8x128xf32>
    %55 = vector.broadcast %28 : f32 to vector<8x128xf32>
    %56 = arith.mulf %55, %0 : vector<8x128xf32>
    %57 = vector.broadcast %31 : f32 to vector<8x128xf32>
    %58 = arith.mulf %57, %1 : vector<8x128xf32>
    %59 = arith.addf %56, %58 : vector<8x128xf32>
    %60 = vector.broadcast %34 : f32 to vector<8x128xf32>
    %61 = arith.addf %59, %60 : vector<8x128xf32>
    %cst_6 = arith.constant 1.000000e+00 : f32
    %62 = vector.broadcast %cst_6 : f32 to vector<8x128xf32>
    %63 = arith.subf %62, %47 : vector<8x128xf32>
    %64 = arith.subf %63, %54 : vector<8x128xf32>
    %cst_7 = arith.constant -9.99999997E-7 : f32
    %65 = vector.broadcast %cst_7 : f32 to vector<8x128xf32>
    %66 = arith.cmpf oge, %47, %65 : vector<8x128xf32>
    %cst_8 = arith.constant -9.99999997E-7 : f32
    %67 = vector.broadcast %cst_8 : f32 to vector<8x128xf32>
    %68 = arith.cmpf oge, %54, %67 : vector<8x128xf32>
    %69 = arith.andi %66, %68 : vector<8x128xi1>
    %cst_9 = arith.constant -9.99999997E-7 : f32
    %70 = vector.broadcast %cst_9 : f32 to vector<8x128xf32>
    %71 = arith.cmpf oge, %64, %70 : vector<8x128xf32>
    %72 = arith.andi %69, %71 : vector<8x128xi1>
    %cst_10 = arith.constant 9.99999997E-7 : f32
    %73 = vector.broadcast %cst_10 : f32 to vector<8x128xf32>
    %74 = arith.cmpf ogt, %61, %73 : vector<8x128xf32>
    %75 = arith.andi %72, %74 : vector<8x128xi1>
    %76 = arith.extui %75 : vector<8x128xi1> to vector<8x128xi32>
    %77 = arith.sitofp %76 : vector<8x128xi32> to vector<8x128xf32>
    %78 = arith.mulf %77, %61 : vector<8x128xf32>
    %79 = vector.broadcast %37 : f32 to vector<8x128xf32>
    %80 = arith.mulf %78, %79 : vector<8x128xf32>
    %81 = arith.addf %2, %80 : vector<8x128xf32>
    %82 = vector.broadcast %40 : f32 to vector<8x128xf32>
    %83 = arith.mulf %77, %82 : vector<8x128xf32>
    %84 = arith.addf %2, %83 : vector<8x128xf32>
    %c1_i32_11 = arith.constant 1 : i32
    %c11_i32_12 = arith.constant 11 : i32
    %85 = arith.muli %c11_i32_12, %c1_i32_11 : i32
    %86 = arith.addi %5, %85 : i32
    %c0_i32_13 = arith.constant 0 : i32
    %87 = arith.addi %86, %c0_i32_13 : i32
    %88 = arith.index_cast %87 : i32 to index
    %89 = memref.load %arg2[%88] : memref<528xf32, #tpu.memory_space<smem>>
    %c1_i32_14 = arith.constant 1 : i32
    %90 = arith.addi %86, %c1_i32_14 : i32
    %91 = arith.index_cast %90 : i32 to index
    %92 = memref.load %arg2[%91] : memref<528xf32, #tpu.memory_space<smem>>
    %c2_i32_15 = arith.constant 2 : i32
    %93 = arith.addi %86, %c2_i32_15 : i32
    %94 = arith.index_cast %93 : i32 to index
    %95 = memref.load %arg2[%94] : memref<528xf32, #tpu.memory_space<smem>>
    %c3_i32_16 = arith.constant 3 : i32
    %96 = arith.addi %86, %c3_i32_16 : i32
    %97 = arith.index_cast %96 : i32 to index
    %98 = memref.load %arg2[%97] : memref<528xf32, #tpu.memory_space<smem>>
    %c4_i32_17 = arith.constant 4 : i32
    %99 = arith.addi %86, %c4_i32_17 : i32
    %100 = arith.index_cast %99 : i32 to index
    %101 = memref.load %arg2[%100] : memref<528xf32, #tpu.memory_space<smem>>
    %c5_i32_18 = arith.constant 5 : i32
    %102 = arith.addi %86, %c5_i32_18 : i32
    %103 = arith.index_cast %102 : i32 to index
    %104 = memref.load %arg2[%103] : memref<528xf32, #tpu.memory_space<smem>>
    %c6_i32_19 = arith.constant 6 : i32
    %105 = arith.addi %86, %c6_i32_19 : i32
    %106 = arith.index_cast %105 : i32 to index
    %107 = memref.load %arg2[%106] : memref<528xf32, #tpu.memory_space<smem>>
    %c7_i32_20 = arith.constant 7 : i32
    %108 = arith.addi %86, %c7_i32_20 : i32
    %109 = arith.index_cast %108 : i32 to index
    %110 = memref.load %arg2[%109] : memref<528xf32, #tpu.memory_space<smem>>
    %c8_i32_21 = arith.constant 8 : i32
    %111 = arith.addi %86, %c8_i32_21 : i32
    %112 = arith.index_cast %111 : i32 to index
    %113 = memref.load %arg2[%112] : memref<528xf32, #tpu.memory_space<smem>>
    %c9_i32_22 = arith.constant 9 : i32
    %114 = arith.addi %86, %c9_i32_22 : i32
    %115 = arith.index_cast %114 : i32 to index
    %116 = memref.load %arg2[%115] : memref<528xf32, #tpu.memory_space<smem>>
    %c10_i32_23 = arith.constant 10 : i32
    %117 = arith.addi %86, %c10_i32_23 : i32
    %118 = arith.index_cast %117 : i32 to index
    %119 = memref.load %arg2[%118] : memref<528xf32, #tpu.memory_space<smem>>
    %120 = vector.broadcast %89 : f32 to vector<8x128xf32>
    %121 = arith.mulf %120, %0 : vector<8x128xf32>
    %122 = vector.broadcast %92 : f32 to vector<8x128xf32>
    %123 = arith.mulf %122, %1 : vector<8x128xf32>
    %124 = arith.addf %121, %123 : vector<8x128xf32>
    %125 = vector.broadcast %95 : f32 to vector<8x128xf32>
    %126 = arith.addf %124, %125 : vector<8x128xf32>
    %127 = vector.broadcast %98 : f32 to vector<8x128xf32>
    %128 = arith.mulf %127, %0 : vector<8x128xf32>
    %129 = vector.broadcast %101 : f32 to vector<8x128xf32>
    %130 = arith.mulf %129, %1 : vector<8x128xf32>
    %131 = arith.addf %128, %130 : vector<8x128xf32>
    %132 = vector.broadcast %104 : f32 to vector<8x128xf32>
    %133 = arith.addf %131, %132 : vector<8x128xf32>
    %134 = vector.broadcast %107 : f32 to vector<8x128xf32>
    %135 = arith.mulf %134, %0 : vector<8x128xf32>
    %136 = vector.broadcast %110 : f32 to vector<8x128xf32>
    %137 = arith.mulf %136, %1 : vector<8x128xf32>
    %138 = arith.addf %135, %137 : vector<8x128xf32>
    %139 = vector.broadcast %113 : f32 to vector<8x128xf32>
    %140 = arith.addf %138, %139 : vector<8x128xf32>
    %cst_24 = arith.constant 1.000000e+00 : f32
    %141 = vector.broadcast %cst_24 : f32 to vector<8x128xf32>
    %142 = arith.subf %141, %126 : vector<8x128xf32>
    %143 = arith.subf %142, %133 : vector<8x128xf32>
    %cst_25 = arith.constant -9.99999997E-7 : f32
    %144 = vector.broadcast %cst_25 : f32 to vector<8x128xf32>
    %145 = arith.cmpf oge, %126, %144 : vector<8x128xf32>
    %cst_26 = arith.constant -9.99999997E-7 : f32
    %146 = vector.broadcast %cst_26 : f32 to vector<8x128xf32>
    %147 = arith.cmpf oge, %133, %146 : vector<8x128xf32>
    %148 = arith.andi %145, %147 : vector<8x128xi1>
    %cst_27 = arith.constant -9.99999997E-7 : f32
    %149 = vector.broadcast %cst_27 : f32 to vector<8x128xf32>
    %150 = arith.cmpf oge, %143, %149 : vector<8x128xf32>
    %151 = arith.andi %148, %150 : vector<8x128xi1>
    %cst_28 = arith.constant 9.99999997E-7 : f32
    %152 = vector.broadcast %cst_28 : f32 to vector<8x128xf32>
    %153 = arith.cmpf ogt, %140, %152 : vector<8x128xf32>
    %154 = arith.andi %151, %153 : vector<8x128xi1>
    %155 = arith.extui %154 : vector<8x128xi1> to vector<8x128xi32>
    %156 = arith.sitofp %155 : vector<8x128xi32> to vector<8x128xf32>
    %157 = arith.mulf %156, %140 : vector<8x128xf32>
    %158 = vector.broadcast %116 : f32 to vector<8x128xf32>
    %159 = arith.mulf %157, %158 : vector<8x128xf32>
    %160 = arith.addf %81, %159 : vector<8x128xf32>
    %161 = vector.broadcast %119 : f32 to vector<8x128xf32>
    %162 = arith.mulf %156, %161 : vector<8x128xf32>
    %163 = arith.addf %84, %162 : vector<8x128xf32>
    %c2_i32_29 = arith.constant 2 : i32
    %c11_i32_30 = arith.constant 11 : i32
    %164 = arith.muli %c11_i32_30, %c2_i32_29 : i32
    %165 = arith.addi %5, %164 : i32
    %c0_i32_31 = arith.constant 0 : i32
    %166 = arith.addi %165, %c0_i32_31 : i32
    %167 = arith.index_cast %166 : i32 to index
    %168 = memref.load %arg2[%167] : memref<528xf32, #tpu.memory_space<smem>>
    %c1_i32_32 = arith.constant 1 : i32
    %169 = arith.addi %165, %c1_i32_32 : i32
    %170 = arith.index_cast %169 : i32 to index
    %171 = memref.load %arg2[%170] : memref<528xf32, #tpu.memory_space<smem>>
    %c2_i32_33 = arith.constant 2 : i32
    %172 = arith.addi %165, %c2_i32_33 : i32
    %173 = arith.index_cast %172 : i32 to index
    %174 = memref.load %arg2[%173] : memref<528xf32, #tpu.memory_space<smem>>
    %c3_i32_34 = arith.constant 3 : i32
    %175 = arith.addi %165, %c3_i32_34 : i32
    %176 = arith.index_cast %175 : i32 to index
    %177 = memref.load %arg2[%176] : memref<528xf32, #tpu.memory_space<smem>>
    %c4_i32_35 = arith.constant 4 : i32
    %178 = arith.addi %165, %c4_i32_35 : i32
    %179 = arith.index_cast %178 : i32 to index
    %180 = memref.load %arg2[%179] : memref<528xf32, #tpu.memory_space<smem>>
    %c5_i32_36 = arith.constant 5 : i32
    %181 = arith.addi %165, %c5_i32_36 : i32
    %182 = arith.index_cast %181 : i32 to index
    %183 = memref.load %arg2[%182] : memref<528xf32, #tpu.memory_space<smem>>
    %c6_i32_37 = arith.constant 6 : i32
    %184 = arith.addi %165, %c6_i32_37 : i32
    %185 = arith.index_cast %184 : i32 to index
    %186 = memref.load %arg2[%185] : memref<528xf32, #tpu.memory_space<smem>>
    %c7_i32_38 = arith.constant 7 : i32
    %187 = arith.addi %165, %c7_i32_38 : i32
    %188 = arith.index_cast %187 : i32 to index
    %189 = memref.load %arg2[%188] : memref<528xf32, #tpu.memory_space<smem>>
    %c8_i32_39 = arith.constant 8 : i32
    %190 = arith.addi %165, %c8_i32_39 : i32
    %191 = arith.index_cast %190 : i32 to index
    %192 = memref.load %arg2[%191] : memref<528xf32, #tpu.memory_space<smem>>
    %c9_i32_40 = arith.constant 9 : i32
    %193 = arith.addi %165, %c9_i32_40 : i32
    %194 = arith.index_cast %193 : i32 to index
    %195 = memref.load %arg2[%194] : memref<528xf32, #tpu.memory_space<smem>>
    %c10_i32_41 = arith.constant 10 : i32
    %196 = arith.addi %165, %c10_i32_41 : i32
    %197 = arith.index_cast %196 : i32 to index
    %198 = memref.load %arg2[%197] : memref<528xf32, #tpu.memory_space<smem>>
    %199 = vector.broadcast %168 : f32 to vector<8x128xf32>
    %200 = arith.mulf %199, %0 : vector<8x128xf32>
    %201 = vector.broadcast %171 : f32 to vector<8x128xf32>
    %202 = arith.mulf %201, %1 : vector<8x128xf32>
    %203 = arith.addf %200, %202 : vector<8x128xf32>
    %204 = vector.broadcast %174 : f32 to vector<8x128xf32>
    %205 = arith.addf %203, %204 : vector<8x128xf32>
    %206 = vector.broadcast %177 : f32 to vector<8x128xf32>
    %207 = arith.mulf %206, %0 : vector<8x128xf32>
    %208 = vector.broadcast %180 : f32 to vector<8x128xf32>
    %209 = arith.mulf %208, %1 : vector<8x128xf32>
    %210 = arith.addf %207, %209 : vector<8x128xf32>
    %211 = vector.broadcast %183 : f32 to vector<8x128xf32>
    %212 = arith.addf %210, %211 : vector<8x128xf32>
    %213 = vector.broadcast %186 : f32 to vector<8x128xf32>
    %214 = arith.mulf %213, %0 : vector<8x128xf32>
    %215 = vector.broadcast %189 : f32 to vector<8x128xf32>
    %216 = arith.mulf %215, %1 : vector<8x128xf32>
    %217 = arith.addf %214, %216 : vector<8x128xf32>
    %218 = vector.broadcast %192 : f32 to vector<8x128xf32>
    %219 = arith.addf %217, %218 : vector<8x128xf32>
    %cst_42 = arith.constant 1.000000e+00 : f32
    %220 = vector.broadcast %cst_42 : f32 to vector<8x128xf32>
    %221 = arith.subf %220, %205 : vector<8x128xf32>
    %222 = arith.subf %221, %212 : vector<8x128xf32>
    %cst_43 = arith.constant -9.99999997E-7 : f32
    %223 = vector.broadcast %cst_43 : f32 to vector<8x128xf32>
    %224 = arith.cmpf oge, %205, %223 : vector<8x128xf32>
    %cst_44 = arith.constant -9.99999997E-7 : f32
    %225 = vector.broadcast %cst_44 : f32 to vector<8x128xf32>
    %226 = arith.cmpf oge, %212, %225 : vector<8x128xf32>
    %227 = arith.andi %224, %226 : vector<8x128xi1>
    %cst_45 = arith.constant -9.99999997E-7 : f32
    %228 = vector.broadcast %cst_45 : f32 to vector<8x128xf32>
    %229 = arith.cmpf oge, %222, %228 : vector<8x128xf32>
    %230 = arith.andi %227, %229 : vector<8x128xi1>
    %cst_46 = arith.constant 9.99999997E-7 : f32
    %231 = vector.broadcast %cst_46 : f32 to vector<8x128xf32>
    %232 = arith.cmpf ogt, %219, %231 : vector<8x128xf32>
    %233 = arith.andi %230, %232 : vector<8x128xi1>
    %234 = arith.extui %233 : vector<8x128xi1> to vector<8x128xi32>
    %235 = arith.sitofp %234 : vector<8x128xi32> to vector<8x128xf32>
    %236 = arith.mulf %235, %219 : vector<8x128xf32>
    %237 = vector.broadcast %195 : f32 to vector<8x128xf32>
    %238 = arith.mulf %236, %237 : vector<8x128xf32>
    %239 = arith.addf %160, %238 : vector<8x128xf32>
    %240 = vector.broadcast %198 : f32 to vector<8x128xf32>
    %241 = arith.mulf %235, %240 : vector<8x128xf32>
    %242 = arith.addf %163, %241 : vector<8x128xf32>
    %c3_i32_47 = arith.constant 3 : i32
    %c11_i32_48 = arith.constant 11 : i32
    %243 = arith.muli %c11_i32_48, %c3_i32_47 : i32
    %244 = arith.addi %5, %243 : i32
    %c0_i32_49 = arith.constant 0 : i32
    %245 = arith.addi %244, %c0_i32_49 : i32
    %246 = arith.index_cast %245 : i32 to index
    %247 = memref.load %arg2[%246] : memref<528xf32, #tpu.memory_space<smem>>
    %c1_i32_50 = arith.constant 1 : i32
    %248 = arith.addi %244, %c1_i32_50 : i32
    %249 = arith.index_cast %248 : i32 to index
    %250 = memref.load %arg2[%249] : memref<528xf32, #tpu.memory_space<smem>>
    %c2_i32_51 = arith.constant 2 : i32
    %251 = arith.addi %244, %c2_i32_51 : i32
    %252 = arith.index_cast %251 : i32 to index
    %253 = memref.load %arg2[%252] : memref<528xf32, #tpu.memory_space<smem>>
    %c3_i32_52 = arith.constant 3 : i32
    %254 = arith.addi %244, %c3_i32_52 : i32
    %255 = arith.index_cast %254 : i32 to index
    %256 = memref.load %arg2[%255] : memref<528xf32, #tpu.memory_space<smem>>
    %c4_i32_53 = arith.constant 4 : i32
    %257 = arith.addi %244, %c4_i32_53 : i32
    %258 = arith.index_cast %257 : i32 to index
    %259 = memref.load %arg2[%258] : memref<528xf32, #tpu.memory_space<smem>>
    %c5_i32_54 = arith.constant 5 : i32
    %260 = arith.addi %244, %c5_i32_54 : i32
    %261 = arith.index_cast %260 : i32 to index
    %262 = memref.load %arg2[%261] : memref<528xf32, #tpu.memory_space<smem>>
    %c6_i32_55 = arith.constant 6 : i32
    %263 = arith.addi %244, %c6_i32_55 : i32
    %264 = arith.index_cast %263 : i32 to index
    %265 = memref.load %arg2[%264] : memref<528xf32, #tpu.memory_space<smem>>
    %c7_i32_56 = arith.constant 7 : i32
    %266 = arith.addi %244, %c7_i32_56 : i32
    %267 = arith.index_cast %266 : i32 to index
    %268 = memref.load %arg2[%267] : memref<528xf32, #tpu.memory_space<smem>>
    %c8_i32_57 = arith.constant 8 : i32
    %269 = arith.addi %244, %c8_i32_57 : i32
    %270 = arith.index_cast %269 : i32 to index
    %271 = memref.load %arg2[%270] : memref<528xf32, #tpu.memory_space<smem>>
    %c9_i32_58 = arith.constant 9 : i32
    %272 = arith.addi %244, %c9_i32_58 : i32
    %273 = arith.index_cast %272 : i32 to index
    %274 = memref.load %arg2[%273] : memref<528xf32, #tpu.memory_space<smem>>
    %c10_i32_59 = arith.constant 10 : i32
    %275 = arith.addi %244, %c10_i32_59 : i32
    %276 = arith.index_cast %275 : i32 to index
    %277 = memref.load %arg2[%276] : memref<528xf32, #tpu.memory_space<smem>>
    %278 = vector.broadcast %247 : f32 to vector<8x128xf32>
    %279 = arith.mulf %278, %0 : vector<8x128xf32>
    %280 = vector.broadcast %250 : f32 to vector<8x128xf32>
    %281 = arith.mulf %280, %1 : vector<8x128xf32>
    %282 = arith.addf %279, %281 : vector<8x128xf32>
    %283 = vector.broadcast %253 : f32 to vector<8x128xf32>
    %284 = arith.addf %282, %283 : vector<8x128xf32>
    %285 = vector.broadcast %256 : f32 to vector<8x128xf32>
    %286 = arith.mulf %285, %0 : vector<8x128xf32>
    %287 = vector.broadcast %259 : f32 to vector<8x128xf32>
    %288 = arith.mulf %287, %1 : vector<8x128xf32>
    %289 = arith.addf %286, %288 : vector<8x128xf32>
    %290 = vector.broadcast %262 : f32 to vector<8x128xf32>
    %291 = arith.addf %289, %290 : vector<8x128xf32>
    %292 = vector.broadcast %265 : f32 to vector<8x128xf32>
    %293 = arith.mulf %292, %0 : vector<8x128xf32>
    %294 = vector.broadcast %268 : f32 to vector<8x128xf32>
    %295 = arith.mulf %294, %1 : vector<8x128xf32>
    %296 = arith.addf %293, %295 : vector<8x128xf32>
    %297 = vector.broadcast %271 : f32 to vector<8x128xf32>
    %298 = arith.addf %296, %297 : vector<8x128xf32>
    %cst_60 = arith.constant 1.000000e+00 : f32
    %299 = vector.broadcast %cst_60 : f32 to vector<8x128xf32>
    %300 = arith.subf %299, %284 : vector<8x128xf32>
    %301 = arith.subf %300, %291 : vector<8x128xf32>
    %cst_61 = arith.constant -9.99999997E-7 : f32
    %302 = vector.broadcast %cst_61 : f32 to vector<8x128xf32>
    %303 = arith.cmpf oge, %284, %302 : vector<8x128xf32>
    %cst_62 = arith.constant -9.99999997E-7 : f32
    %304 = vector.broadcast %cst_62 : f32 to vector<8x128xf32>
    %305 = arith.cmpf oge, %291, %304 : vector<8x128xf32>
    %306 = arith.andi %303, %305 : vector<8x128xi1>
    %cst_63 = arith.constant -9.99999997E-7 : f32
    %307 = vector.broadcast %cst_63 : f32 to vector<8x128xf32>
    %308 = arith.cmpf oge, %301, %307 : vector<8x128xf32>
    %309 = arith.andi %306, %308 : vector<8x128xi1>
    %cst_64 = arith.constant 9.99999997E-7 : f32
    %310 = vector.broadcast %cst_64 : f32 to vector<8x128xf32>
    %311 = arith.cmpf ogt, %298, %310 : vector<8x128xf32>
    %312 = arith.andi %309, %311 : vector<8x128xi1>
    %313 = arith.extui %312 : vector<8x128xi1> to vector<8x128xi32>
    %314 = arith.sitofp %313 : vector<8x128xi32> to vector<8x128xf32>
    %315 = arith.mulf %314, %298 : vector<8x128xf32>
    %316 = vector.broadcast %274 : f32 to vector<8x128xf32>
    %317 = arith.mulf %315, %316 : vector<8x128xf32>
    %318 = arith.addf %239, %317 : vector<8x128xf32>
    %319 = vector.broadcast %277 : f32 to vector<8x128xf32>
    %320 = arith.mulf %314, %319 : vector<8x128xf32>
    %321 = arith.addf %242, %320 : vector<8x128xf32>
    %c4_i32_65 = arith.constant 4 : i32
    %c11_i32_66 = arith.constant 11 : i32
    %322 = arith.muli %c11_i32_66, %c4_i32_65 : i32
    %323 = arith.addi %5, %322 : i32
    %c0_i32_67 = arith.constant 0 : i32
    %324 = arith.addi %323, %c0_i32_67 : i32
    %325 = arith.index_cast %324 : i32 to index
    %326 = memref.load %arg2[%325] : memref<528xf32, #tpu.memory_space<smem>>
    %c1_i32_68 = arith.constant 1 : i32
    %327 = arith.addi %323, %c1_i32_68 : i32
    %328 = arith.index_cast %327 : i32 to index
    %329 = memref.load %arg2[%328] : memref<528xf32, #tpu.memory_space<smem>>
    %c2_i32_69 = arith.constant 2 : i32
    %330 = arith.addi %323, %c2_i32_69 : i32
    %331 = arith.index_cast %330 : i32 to index
    %332 = memref.load %arg2[%331] : memref<528xf32, #tpu.memory_space<smem>>
    %c3_i32_70 = arith.constant 3 : i32
    %333 = arith.addi %323, %c3_i32_70 : i32
    %334 = arith.index_cast %333 : i32 to index
    %335 = memref.load %arg2[%334] : memref<528xf32, #tpu.memory_space<smem>>
    %c4_i32_71 = arith.constant 4 : i32
    %336 = arith.addi %323, %c4_i32_71 : i32
    %337 = arith.index_cast %336 : i32 to index
    %338 = memref.load %arg2[%337] : memref<528xf32, #tpu.memory_space<smem>>
    %c5_i32_72 = arith.constant 5 : i32
    %339 = arith.addi %323, %c5_i32_72 : i32
    %340 = arith.index_cast %339 : i32 to index
    %341 = memref.load %arg2[%340] : memref<528xf32, #tpu.memory_space<smem>>
    %c6_i32_73 = arith.constant 6 : i32
    %342 = arith.addi %323, %c6_i32_73 : i32
    %343 = arith.index_cast %342 : i32 to index
    %344 = memref.load %arg2[%343] : memref<528xf32, #tpu.memory_space<smem>>
    %c7_i32_74 = arith.constant 7 : i32
    %345 = arith.addi %323, %c7_i32_74 : i32
    %346 = arith.index_cast %345 : i32 to index
    %347 = memref.load %arg2[%346] : memref<528xf32, #tpu.memory_space<smem>>
    %c8_i32_75 = arith.constant 8 : i32
    %348 = arith.addi %323, %c8_i32_75 : i32
    %349 = arith.index_cast %348 : i32 to index
    %350 = memref.load %arg2[%349] : memref<528xf32, #tpu.memory_space<smem>>
    %c9_i32_76 = arith.constant 9 : i32
    %351 = arith.addi %323, %c9_i32_76 : i32
    %352 = arith.index_cast %351 : i32 to index
    %353 = memref.load %arg2[%352] : memref<528xf32, #tpu.memory_space<smem>>
    %c10_i32_77 = arith.constant 10 : i32
    %354 = arith.addi %323, %c10_i32_77 : i32
    %355 = arith.index_cast %354 : i32 to index
    %356 = memref.load %arg2[%355] : memref<528xf32, #tpu.memory_space<smem>>
    %357 = vector.broadcast %326 : f32 to vector<8x128xf32>
    %358 = arith.mulf %357, %0 : vector<8x128xf32>
    %359 = vector.broadcast %329 : f32 to vector<8x128xf32>
    %360 = arith.mulf %359, %1 : vector<8x128xf32>
    %361 = arith.addf %358, %360 : vector<8x128xf32>
    %362 = vector.broadcast %332 : f32 to vector<8x128xf32>
    %363 = arith.addf %361, %362 : vector<8x128xf32>
    %364 = vector.broadcast %335 : f32 to vector<8x128xf32>
    %365 = arith.mulf %364, %0 : vector<8x128xf32>
    %366 = vector.broadcast %338 : f32 to vector<8x128xf32>
    %367 = arith.mulf %366, %1 : vector<8x128xf32>
    %368 = arith.addf %365, %367 : vector<8x128xf32>
    %369 = vector.broadcast %341 : f32 to vector<8x128xf32>
    %370 = arith.addf %368, %369 : vector<8x128xf32>
    %371 = vector.broadcast %344 : f32 to vector<8x128xf32>
    %372 = arith.mulf %371, %0 : vector<8x128xf32>
    %373 = vector.broadcast %347 : f32 to vector<8x128xf32>
    %374 = arith.mulf %373, %1 : vector<8x128xf32>
    %375 = arith.addf %372, %374 : vector<8x128xf32>
    %376 = vector.broadcast %350 : f32 to vector<8x128xf32>
    %377 = arith.addf %375, %376 : vector<8x128xf32>
    %cst_78 = arith.constant 1.000000e+00 : f32
    %378 = vector.broadcast %cst_78 : f32 to vector<8x128xf32>
    %379 = arith.subf %378, %363 : vector<8x128xf32>
    %380 = arith.subf %379, %370 : vector<8x128xf32>
    %cst_79 = arith.constant -9.99999997E-7 : f32
    %381 = vector.broadcast %cst_79 : f32 to vector<8x128xf32>
    %382 = arith.cmpf oge, %363, %381 : vector<8x128xf32>
    %cst_80 = arith.constant -9.99999997E-7 : f32
    %383 = vector.broadcast %cst_80 : f32 to vector<8x128xf32>
    %384 = arith.cmpf oge, %370, %383 : vector<8x128xf32>
    %385 = arith.andi %382, %384 : vector<8x128xi1>
    %cst_81 = arith.constant -9.99999997E-7 : f32
    %386 = vector.broadcast %cst_81 : f32 to vector<8x128xf32>
    %387 = arith.cmpf oge, %380, %386 : vector<8x128xf32>
    %388 = arith.andi %385, %387 : vector<8x128xi1>
    %cst_82 = arith.constant 9.99999997E-7 : f32
    %389 = vector.broadcast %cst_82 : f32 to vector<8x128xf32>
    %390 = arith.cmpf ogt, %377, %389 : vector<8x128xf32>
    %391 = arith.andi %388, %390 : vector<8x128xi1>
    %392 = arith.extui %391 : vector<8x128xi1> to vector<8x128xi32>
    %393 = arith.sitofp %392 : vector<8x128xi32> to vector<8x128xf32>
    %394 = arith.mulf %393, %377 : vector<8x128xf32>
    %395 = vector.broadcast %353 : f32 to vector<8x128xf32>
    %396 = arith.mulf %394, %395 : vector<8x128xf32>
    %397 = arith.addf %318, %396 : vector<8x128xf32>
    %398 = vector.broadcast %356 : f32 to vector<8x128xf32>
    %399 = arith.mulf %393, %398 : vector<8x128xf32>
    %400 = arith.addf %321, %399 : vector<8x128xf32>
    %c5_i32_83 = arith.constant 5 : i32
    %c11_i32_84 = arith.constant 11 : i32
    %401 = arith.muli %c11_i32_84, %c5_i32_83 : i32
    %402 = arith.addi %5, %401 : i32
    %c0_i32_85 = arith.constant 0 : i32
    %403 = arith.addi %402, %c0_i32_85 : i32
    %404 = arith.index_cast %403 : i32 to index
    %405 = memref.load %arg2[%404] : memref<528xf32, #tpu.memory_space<smem>>
    %c1_i32_86 = arith.constant 1 : i32
    %406 = arith.addi %402, %c1_i32_86 : i32
    %407 = arith.index_cast %406 : i32 to index
    %408 = memref.load %arg2[%407] : memref<528xf32, #tpu.memory_space<smem>>
    %c2_i32_87 = arith.constant 2 : i32
    %409 = arith.addi %402, %c2_i32_87 : i32
    %410 = arith.index_cast %409 : i32 to index
    %411 = memref.load %arg2[%410] : memref<528xf32, #tpu.memory_space<smem>>
    %c3_i32_88 = arith.constant 3 : i32
    %412 = arith.addi %402, %c3_i32_88 : i32
    %413 = arith.index_cast %412 : i32 to index
    %414 = memref.load %arg2[%413] : memref<528xf32, #tpu.memory_space<smem>>
    %c4_i32_89 = arith.constant 4 : i32
    %415 = arith.addi %402, %c4_i32_89 : i32
    %416 = arith.index_cast %415 : i32 to index
    %417 = memref.load %arg2[%416] : memref<528xf32, #tpu.memory_space<smem>>
    %c5_i32_90 = arith.constant 5 : i32
    %418 = arith.addi %402, %c5_i32_90 : i32
    %419 = arith.index_cast %418 : i32 to index
    %420 = memref.load %arg2[%419] : memref<528xf32, #tpu.memory_space<smem>>
    %c6_i32_91 = arith.constant 6 : i32
    %421 = arith.addi %402, %c6_i32_91 : i32
    %422 = arith.index_cast %421 : i32 to index
    %423 = memref.load %arg2[%422] : memref<528xf32, #tpu.memory_space<smem>>
    %c7_i32_92 = arith.constant 7 : i32
    %424 = arith.addi %402, %c7_i32_92 : i32
    %425 = arith.index_cast %424 : i32 to index
    %426 = memref.load %arg2[%425] : memref<528xf32, #tpu.memory_space<smem>>
    %c8_i32_93 = arith.constant 8 : i32
    %427 = arith.addi %402, %c8_i32_93 : i32
    %428 = arith.index_cast %427 : i32 to index
    %429 = memref.load %arg2[%428] : memref<528xf32, #tpu.memory_space<smem>>
    %c9_i32_94 = arith.constant 9 : i32
    %430 = arith.addi %402, %c9_i32_94 : i32
    %431 = arith.index_cast %430 : i32 to index
    %432 = memref.load %arg2[%431] : memref<528xf32, #tpu.memory_space<smem>>
    %c10_i32_95 = arith.constant 10 : i32
    %433 = arith.addi %402, %c10_i32_95 : i32
    %434 = arith.index_cast %433 : i32 to index
    %435 = memref.load %arg2[%434] : memref<528xf32, #tpu.memory_space<smem>>
    %436 = vector.broadcast %405 : f32 to vector<8x128xf32>
    %437 = arith.mulf %436, %0 : vector<8x128xf32>
    %438 = vector.broadcast %408 : f32 to vector<8x128xf32>
    %439 = arith.mulf %438, %1 : vector<8x128xf32>
    %440 = arith.addf %437, %439 : vector<8x128xf32>
    %441 = vector.broadcast %411 : f32 to vector<8x128xf32>
    %442 = arith.addf %440, %441 : vector<8x128xf32>
    %443 = vector.broadcast %414 : f32 to vector<8x128xf32>
    %444 = arith.mulf %443, %0 : vector<8x128xf32>
    %445 = vector.broadcast %417 : f32 to vector<8x128xf32>
    %446 = arith.mulf %445, %1 : vector<8x128xf32>
    %447 = arith.addf %444, %446 : vector<8x128xf32>
    %448 = vector.broadcast %420 : f32 to vector<8x128xf32>
    %449 = arith.addf %447, %448 : vector<8x128xf32>
    %450 = vector.broadcast %423 : f32 to vector<8x128xf32>
    %451 = arith.mulf %450, %0 : vector<8x128xf32>
    %452 = vector.broadcast %426 : f32 to vector<8x128xf32>
    %453 = arith.mulf %452, %1 : vector<8x128xf32>
    %454 = arith.addf %451, %453 : vector<8x128xf32>
    %455 = vector.broadcast %429 : f32 to vector<8x128xf32>
    %456 = arith.addf %454, %455 : vector<8x128xf32>
    %cst_96 = arith.constant 1.000000e+00 : f32
    %457 = vector.broadcast %cst_96 : f32 to vector<8x128xf32>
    %458 = arith.subf %457, %442 : vector<8x128xf32>
    %459 = arith.subf %458, %449 : vector<8x128xf32>
    %cst_97 = arith.constant -9.99999997E-7 : f32
    %460 = vector.broadcast %cst_97 : f32 to vector<8x128xf32>
    %461 = arith.cmpf oge, %442, %460 : vector<8x128xf32>
    %cst_98 = arith.constant -9.99999997E-7 : f32
    %462 = vector.broadcast %cst_98 : f32 to vector<8x128xf32>
    %463 = arith.cmpf oge, %449, %462 : vector<8x128xf32>
    %464 = arith.andi %461, %463 : vector<8x128xi1>
    %cst_99 = arith.constant -9.99999997E-7 : f32
    %465 = vector.broadcast %cst_99 : f32 to vector<8x128xf32>
    %466 = arith.cmpf oge, %459, %465 : vector<8x128xf32>
    %467 = arith.andi %464, %466 : vector<8x128xi1>
    %cst_100 = arith.constant 9.99999997E-7 : f32
    %468 = vector.broadcast %cst_100 : f32 to vector<8x128xf32>
    %469 = arith.cmpf ogt, %456, %468 : vector<8x128xf32>
    %470 = arith.andi %467, %469 : vector<8x128xi1>
    %471 = arith.extui %470 : vector<8x128xi1> to vector<8x128xi32>
    %472 = arith.sitofp %471 : vector<8x128xi32> to vector<8x128xf32>
    %473 = arith.mulf %472, %456 : vector<8x128xf32>
    %474 = vector.broadcast %432 : f32 to vector<8x128xf32>
    %475 = arith.mulf %473, %474 : vector<8x128xf32>
    %476 = arith.addf %397, %475 : vector<8x128xf32>
    %477 = vector.broadcast %435 : f32 to vector<8x128xf32>
    %478 = arith.mulf %472, %477 : vector<8x128xf32>
    %479 = arith.addf %400, %478 : vector<8x128xf32>
    %c6_i32_101 = arith.constant 6 : i32
    %c11_i32_102 = arith.constant 11 : i32
    %480 = arith.muli %c11_i32_102, %c6_i32_101 : i32
    %481 = arith.addi %5, %480 : i32
    %c0_i32_103 = arith.constant 0 : i32
    %482 = arith.addi %481, %c0_i32_103 : i32
    %483 = arith.index_cast %482 : i32 to index
    %484 = memref.load %arg2[%483] : memref<528xf32, #tpu.memory_space<smem>>
    %c1_i32_104 = arith.constant 1 : i32
    %485 = arith.addi %481, %c1_i32_104 : i32
    %486 = arith.index_cast %485 : i32 to index
    %487 = memref.load %arg2[%486] : memref<528xf32, #tpu.memory_space<smem>>
    %c2_i32_105 = arith.constant 2 : i32
    %488 = arith.addi %481, %c2_i32_105 : i32
    %489 = arith.index_cast %488 : i32 to index
    %490 = memref.load %arg2[%489] : memref<528xf32, #tpu.memory_space<smem>>
    %c3_i32_106 = arith.constant 3 : i32
    %491 = arith.addi %481, %c3_i32_106 : i32
    %492 = arith.index_cast %491 : i32 to index
    %493 = memref.load %arg2[%492] : memref<528xf32, #tpu.memory_space<smem>>
    %c4_i32_107 = arith.constant 4 : i32
    %494 = arith.addi %481, %c4_i32_107 : i32
    %495 = arith.index_cast %494 : i32 to index
    %496 = memref.load %arg2[%495] : memref<528xf32, #tpu.memory_space<smem>>
    %c5_i32_108 = arith.constant 5 : i32
    %497 = arith.addi %481, %c5_i32_108 : i32
    %498 = arith.index_cast %497 : i32 to index
    %499 = memref.load %arg2[%498] : memref<528xf32, #tpu.memory_space<smem>>
    %c6_i32_109 = arith.constant 6 : i32
    %500 = arith.addi %481, %c6_i32_109 : i32
    %501 = arith.index_cast %500 : i32 to index
    %502 = memref.load %arg2[%501] : memref<528xf32, #tpu.memory_space<smem>>
    %c7_i32_110 = arith.constant 7 : i32
    %503 = arith.addi %481, %c7_i32_110 : i32
    %504 = arith.index_cast %503 : i32 to index
    %505 = memref.load %arg2[%504] : memref<528xf32, #tpu.memory_space<smem>>
    %c8_i32_111 = arith.constant 8 : i32
    %506 = arith.addi %481, %c8_i32_111 : i32
    %507 = arith.index_cast %506 : i32 to index
    %508 = memref.load %arg2[%507] : memref<528xf32, #tpu.memory_space<smem>>
    %c9_i32_112 = arith.constant 9 : i32
    %509 = arith.addi %481, %c9_i32_112 : i32
    %510 = arith.index_cast %509 : i32 to index
    %511 = memref.load %arg2[%510] : memref<528xf32, #tpu.memory_space<smem>>
    %c10_i32_113 = arith.constant 10 : i32
    %512 = arith.addi %481, %c10_i32_113 : i32
    %513 = arith.index_cast %512 : i32 to index
    %514 = memref.load %arg2[%513] : memref<528xf32, #tpu.memory_space<smem>>
    %515 = vector.broadcast %484 : f32 to vector<8x128xf32>
    %516 = arith.mulf %515, %0 : vector<8x128xf32>
    %517 = vector.broadcast %487 : f32 to vector<8x128xf32>
    %518 = arith.mulf %517, %1 : vector<8x128xf32>
    %519 = arith.addf %516, %518 : vector<8x128xf32>
    %520 = vector.broadcast %490 : f32 to vector<8x128xf32>
    %521 = arith.addf %519, %520 : vector<8x128xf32>
    %522 = vector.broadcast %493 : f32 to vector<8x128xf32>
    %523 = arith.mulf %522, %0 : vector<8x128xf32>
    %524 = vector.broadcast %496 : f32 to vector<8x128xf32>
    %525 = arith.mulf %524, %1 : vector<8x128xf32>
    %526 = arith.addf %523, %525 : vector<8x128xf32>
    %527 = vector.broadcast %499 : f32 to vector<8x128xf32>
    %528 = arith.addf %526, %527 : vector<8x128xf32>
    %529 = vector.broadcast %502 : f32 to vector<8x128xf32>
    %530 = arith.mulf %529, %0 : vector<8x128xf32>
    %531 = vector.broadcast %505 : f32 to vector<8x128xf32>
    %532 = arith.mulf %531, %1 : vector<8x128xf32>
    %533 = arith.addf %530, %532 : vector<8x128xf32>
    %534 = vector.broadcast %508 : f32 to vector<8x128xf32>
    %535 = arith.addf %533, %534 : vector<8x128xf32>
    %cst_114 = arith.constant 1.000000e+00 : f32
    %536 = vector.broadcast %cst_114 : f32 to vector<8x128xf32>
    %537 = arith.subf %536, %521 : vector<8x128xf32>
    %538 = arith.subf %537, %528 : vector<8x128xf32>
    %cst_115 = arith.constant -9.99999997E-7 : f32
    %539 = vector.broadcast %cst_115 : f32 to vector<8x128xf32>
    %540 = arith.cmpf oge, %521, %539 : vector<8x128xf32>
    %cst_116 = arith.constant -9.99999997E-7 : f32
    %541 = vector.broadcast %cst_116 : f32 to vector<8x128xf32>
    %542 = arith.cmpf oge, %528, %541 : vector<8x128xf32>
    %543 = arith.andi %540, %542 : vector<8x128xi1>
    %cst_117 = arith.constant -9.99999997E-7 : f32
    %544 = vector.broadcast %cst_117 : f32 to vector<8x128xf32>
    %545 = arith.cmpf oge, %538, %544 : vector<8x128xf32>
    %546 = arith.andi %543, %545 : vector<8x128xi1>
    %cst_118 = arith.constant 9.99999997E-7 : f32
    %547 = vector.broadcast %cst_118 : f32 to vector<8x128xf32>
    %548 = arith.cmpf ogt, %535, %547 : vector<8x128xf32>
    %549 = arith.andi %546, %548 : vector<8x128xi1>
    %550 = arith.extui %549 : vector<8x128xi1> to vector<8x128xi32>
    %551 = arith.sitofp %550 : vector<8x128xi32> to vector<8x128xf32>
    %552 = arith.mulf %551, %535 : vector<8x128xf32>
    %553 = vector.broadcast %511 : f32 to vector<8x128xf32>
    %554 = arith.mulf %552, %553 : vector<8x128xf32>
    %555 = arith.addf %476, %554 : vector<8x128xf32>
    %556 = vector.broadcast %514 : f32 to vector<8x128xf32>
    %557 = arith.mulf %551, %556 : vector<8x128xf32>
    %558 = arith.addf %479, %557 : vector<8x128xf32>
    %c7_i32_119 = arith.constant 7 : i32
    %c11_i32_120 = arith.constant 11 : i32
    %559 = arith.muli %c11_i32_120, %c7_i32_119 : i32
    %560 = arith.addi %5, %559 : i32
    %c0_i32_121 = arith.constant 0 : i32
    %561 = arith.addi %560, %c0_i32_121 : i32
    %562 = arith.index_cast %561 : i32 to index
    %563 = memref.load %arg2[%562] : memref<528xf32, #tpu.memory_space<smem>>
    %c1_i32_122 = arith.constant 1 : i32
    %564 = arith.addi %560, %c1_i32_122 : i32
    %565 = arith.index_cast %564 : i32 to index
    %566 = memref.load %arg2[%565] : memref<528xf32, #tpu.memory_space<smem>>
    %c2_i32_123 = arith.constant 2 : i32
    %567 = arith.addi %560, %c2_i32_123 : i32
    %568 = arith.index_cast %567 : i32 to index
    %569 = memref.load %arg2[%568] : memref<528xf32, #tpu.memory_space<smem>>
    %c3_i32_124 = arith.constant 3 : i32
    %570 = arith.addi %560, %c3_i32_124 : i32
    %571 = arith.index_cast %570 : i32 to index
    %572 = memref.load %arg2[%571] : memref<528xf32, #tpu.memory_space<smem>>
    %c4_i32_125 = arith.constant 4 : i32
    %573 = arith.addi %560, %c4_i32_125 : i32
    %574 = arith.index_cast %573 : i32 to index
    %575 = memref.load %arg2[%574] : memref<528xf32, #tpu.memory_space<smem>>
    %c5_i32_126 = arith.constant 5 : i32
    %576 = arith.addi %560, %c5_i32_126 : i32
    %577 = arith.index_cast %576 : i32 to index
    %578 = memref.load %arg2[%577] : memref<528xf32, #tpu.memory_space<smem>>
    %c6_i32_127 = arith.constant 6 : i32
    %579 = arith.addi %560, %c6_i32_127 : i32
    %580 = arith.index_cast %579 : i32 to index
    %581 = memref.load %arg2[%580] : memref<528xf32, #tpu.memory_space<smem>>
    %c7_i32_128 = arith.constant 7 : i32
    %582 = arith.addi %560, %c7_i32_128 : i32
    %583 = arith.index_cast %582 : i32 to index
    %584 = memref.load %arg2[%583] : memref<528xf32, #tpu.memory_space<smem>>
    %c8_i32_129 = arith.constant 8 : i32
    %585 = arith.addi %560, %c8_i32_129 : i32
    %586 = arith.index_cast %585 : i32 to index
    %587 = memref.load %arg2[%586] : memref<528xf32, #tpu.memory_space<smem>>
    %c9_i32_130 = arith.constant 9 : i32
    %588 = arith.addi %560, %c9_i32_130 : i32
    %589 = arith.index_cast %588 : i32 to index
    %590 = memref.load %arg2[%589] : memref<528xf32, #tpu.memory_space<smem>>
    %c10_i32_131 = arith.constant 10 : i32
    %591 = arith.addi %560, %c10_i32_131 : i32
    %592 = arith.index_cast %591 : i32 to index
    %593 = memref.load %arg2[%592] : memref<528xf32, #tpu.memory_space<smem>>
    %594 = vector.broadcast %563 : f32 to vector<8x128xf32>
    %595 = arith.mulf %594, %0 : vector<8x128xf32>
    %596 = vector.broadcast %566 : f32 to vector<8x128xf32>
    %597 = arith.mulf %596, %1 : vector<8x128xf32>
    %598 = arith.addf %595, %597 : vector<8x128xf32>
    %599 = vector.broadcast %569 : f32 to vector<8x128xf32>
    %600 = arith.addf %598, %599 : vector<8x128xf32>
    %601 = vector.broadcast %572 : f32 to vector<8x128xf32>
    %602 = arith.mulf %601, %0 : vector<8x128xf32>
    %603 = vector.broadcast %575 : f32 to vector<8x128xf32>
    %604 = arith.mulf %603, %1 : vector<8x128xf32>
    %605 = arith.addf %602, %604 : vector<8x128xf32>
    %606 = vector.broadcast %578 : f32 to vector<8x128xf32>
    %607 = arith.addf %605, %606 : vector<8x128xf32>
    %608 = vector.broadcast %581 : f32 to vector<8x128xf32>
    %609 = arith.mulf %608, %0 : vector<8x128xf32>
    %610 = vector.broadcast %584 : f32 to vector<8x128xf32>
    %611 = arith.mulf %610, %1 : vector<8x128xf32>
    %612 = arith.addf %609, %611 : vector<8x128xf32>
    %613 = vector.broadcast %587 : f32 to vector<8x128xf32>
    %614 = arith.addf %612, %613 : vector<8x128xf32>
    %cst_132 = arith.constant 1.000000e+00 : f32
    %615 = vector.broadcast %cst_132 : f32 to vector<8x128xf32>
    %616 = arith.subf %615, %600 : vector<8x128xf32>
    %617 = arith.subf %616, %607 : vector<8x128xf32>
    %cst_133 = arith.constant -9.99999997E-7 : f32
    %618 = vector.broadcast %cst_133 : f32 to vector<8x128xf32>
    %619 = arith.cmpf oge, %600, %618 : vector<8x128xf32>
    %cst_134 = arith.constant -9.99999997E-7 : f32
    %620 = vector.broadcast %cst_134 : f32 to vector<8x128xf32>
    %621 = arith.cmpf oge, %607, %620 : vector<8x128xf32>
    %622 = arith.andi %619, %621 : vector<8x128xi1>
    %cst_135 = arith.constant -9.99999997E-7 : f32
    %623 = vector.broadcast %cst_135 : f32 to vector<8x128xf32>
    %624 = arith.cmpf oge, %617, %623 : vector<8x128xf32>
    %625 = arith.andi %622, %624 : vector<8x128xi1>
    %cst_136 = arith.constant 9.99999997E-7 : f32
    %626 = vector.broadcast %cst_136 : f32 to vector<8x128xf32>
    %627 = arith.cmpf ogt, %614, %626 : vector<8x128xf32>
    %628 = arith.andi %625, %627 : vector<8x128xi1>
    %629 = arith.extui %628 : vector<8x128xi1> to vector<8x128xi32>
    %630 = arith.sitofp %629 : vector<8x128xi32> to vector<8x128xf32>
    %631 = arith.mulf %630, %614 : vector<8x128xf32>
    %632 = vector.broadcast %590 : f32 to vector<8x128xf32>
    %633 = arith.mulf %631, %632 : vector<8x128xf32>
    %634 = arith.addf %555, %633 : vector<8x128xf32>
    %635 = vector.broadcast %593 : f32 to vector<8x128xf32>
    %636 = arith.mulf %630, %635 : vector<8x128xf32>
    %637 = arith.addf %558, %636 : vector<8x128xf32>
    %c8_i32_137 = arith.constant 8 : i32
    %c11_i32_138 = arith.constant 11 : i32
    %638 = arith.muli %c11_i32_138, %c8_i32_137 : i32
    %639 = arith.addi %5, %638 : i32
    %c0_i32_139 = arith.constant 0 : i32
    %640 = arith.addi %639, %c0_i32_139 : i32
    %641 = arith.index_cast %640 : i32 to index
    %642 = memref.load %arg2[%641] : memref<528xf32, #tpu.memory_space<smem>>
    %c1_i32_140 = arith.constant 1 : i32
    %643 = arith.addi %639, %c1_i32_140 : i32
    %644 = arith.index_cast %643 : i32 to index
    %645 = memref.load %arg2[%644] : memref<528xf32, #tpu.memory_space<smem>>
    %c2_i32_141 = arith.constant 2 : i32
    %646 = arith.addi %639, %c2_i32_141 : i32
    %647 = arith.index_cast %646 : i32 to index
    %648 = memref.load %arg2[%647] : memref<528xf32, #tpu.memory_space<smem>>
    %c3_i32_142 = arith.constant 3 : i32
    %649 = arith.addi %639, %c3_i32_142 : i32
    %650 = arith.index_cast %649 : i32 to index
    %651 = memref.load %arg2[%650] : memref<528xf32, #tpu.memory_space<smem>>
    %c4_i32_143 = arith.constant 4 : i32
    %652 = arith.addi %639, %c4_i32_143 : i32
    %653 = arith.index_cast %652 : i32 to index
    %654 = memref.load %arg2[%653] : memref<528xf32, #tpu.memory_space<smem>>
    %c5_i32_144 = arith.constant 5 : i32
    %655 = arith.addi %639, %c5_i32_144 : i32
    %656 = arith.index_cast %655 : i32 to index
    %657 = memref.load %arg2[%656] : memref<528xf32, #tpu.memory_space<smem>>
    %c6_i32_145 = arith.constant 6 : i32
    %658 = arith.addi %639, %c6_i32_145 : i32
    %659 = arith.index_cast %658 : i32 to index
    %660 = memref.load %arg2[%659] : memref<528xf32, #tpu.memory_space<smem>>
    %c7_i32_146 = arith.constant 7 : i32
    %661 = arith.addi %639, %c7_i32_146 : i32
    %662 = arith.index_cast %661 : i32 to index
    %663 = memref.load %arg2[%662] : memref<528xf32, #tpu.memory_space<smem>>
    %c8_i32_147 = arith.constant 8 : i32
    %664 = arith.addi %639, %c8_i32_147 : i32
    %665 = arith.index_cast %664 : i32 to index
    %666 = memref.load %arg2[%665] : memref<528xf32, #tpu.memory_space<smem>>
    %c9_i32_148 = arith.constant 9 : i32
    %667 = arith.addi %639, %c9_i32_148 : i32
    %668 = arith.index_cast %667 : i32 to index
    %669 = memref.load %arg2[%668] : memref<528xf32, #tpu.memory_space<smem>>
    %c10_i32_149 = arith.constant 10 : i32
    %670 = arith.addi %639, %c10_i32_149 : i32
    %671 = arith.index_cast %670 : i32 to index
    %672 = memref.load %arg2[%671] : memref<528xf32, #tpu.memory_space<smem>>
    %673 = vector.broadcast %642 : f32 to vector<8x128xf32>
    %674 = arith.mulf %673, %0 : vector<8x128xf32>
    %675 = vector.broadcast %645 : f32 to vector<8x128xf32>
    %676 = arith.mulf %675, %1 : vector<8x128xf32>
    %677 = arith.addf %674, %676 : vector<8x128xf32>
    %678 = vector.broadcast %648 : f32 to vector<8x128xf32>
    %679 = arith.addf %677, %678 : vector<8x128xf32>
    %680 = vector.broadcast %651 : f32 to vector<8x128xf32>
    %681 = arith.mulf %680, %0 : vector<8x128xf32>
    %682 = vector.broadcast %654 : f32 to vector<8x128xf32>
    %683 = arith.mulf %682, %1 : vector<8x128xf32>
    %684 = arith.addf %681, %683 : vector<8x128xf32>
    %685 = vector.broadcast %657 : f32 to vector<8x128xf32>
    %686 = arith.addf %684, %685 : vector<8x128xf32>
    %687 = vector.broadcast %660 : f32 to vector<8x128xf32>
    %688 = arith.mulf %687, %0 : vector<8x128xf32>
    %689 = vector.broadcast %663 : f32 to vector<8x128xf32>
    %690 = arith.mulf %689, %1 : vector<8x128xf32>
    %691 = arith.addf %688, %690 : vector<8x128xf32>
    %692 = vector.broadcast %666 : f32 to vector<8x128xf32>
    %693 = arith.addf %691, %692 : vector<8x128xf32>
    %cst_150 = arith.constant 1.000000e+00 : f32
    %694 = vector.broadcast %cst_150 : f32 to vector<8x128xf32>
    %695 = arith.subf %694, %679 : vector<8x128xf32>
    %696 = arith.subf %695, %686 : vector<8x128xf32>
    %cst_151 = arith.constant -9.99999997E-7 : f32
    %697 = vector.broadcast %cst_151 : f32 to vector<8x128xf32>
    %698 = arith.cmpf oge, %679, %697 : vector<8x128xf32>
    %cst_152 = arith.constant -9.99999997E-7 : f32
    %699 = vector.broadcast %cst_152 : f32 to vector<8x128xf32>
    %700 = arith.cmpf oge, %686, %699 : vector<8x128xf32>
    %701 = arith.andi %698, %700 : vector<8x128xi1>
    %cst_153 = arith.constant -9.99999997E-7 : f32
    %702 = vector.broadcast %cst_153 : f32 to vector<8x128xf32>
    %703 = arith.cmpf oge, %696, %702 : vector<8x128xf32>
    %704 = arith.andi %701, %703 : vector<8x128xi1>
    %cst_154 = arith.constant 9.99999997E-7 : f32
    %705 = vector.broadcast %cst_154 : f32 to vector<8x128xf32>
    %706 = arith.cmpf ogt, %693, %705 : vector<8x128xf32>
    %707 = arith.andi %704, %706 : vector<8x128xi1>
    %708 = arith.extui %707 : vector<8x128xi1> to vector<8x128xi32>
    %709 = arith.sitofp %708 : vector<8x128xi32> to vector<8x128xf32>
    %710 = arith.mulf %709, %693 : vector<8x128xf32>
    %711 = vector.broadcast %669 : f32 to vector<8x128xf32>
    %712 = arith.mulf %710, %711 : vector<8x128xf32>
    %713 = arith.addf %634, %712 : vector<8x128xf32>
    %714 = vector.broadcast %672 : f32 to vector<8x128xf32>
    %715 = arith.mulf %709, %714 : vector<8x128xf32>
    %716 = arith.addf %637, %715 : vector<8x128xf32>
    %c9_i32_155 = arith.constant 9 : i32
    %c11_i32_156 = arith.constant 11 : i32
    %717 = arith.muli %c11_i32_156, %c9_i32_155 : i32
    %718 = arith.addi %5, %717 : i32
    %c0_i32_157 = arith.constant 0 : i32
    %719 = arith.addi %718, %c0_i32_157 : i32
    %720 = arith.index_cast %719 : i32 to index
    %721 = memref.load %arg2[%720] : memref<528xf32, #tpu.memory_space<smem>>
    %c1_i32_158 = arith.constant 1 : i32
    %722 = arith.addi %718, %c1_i32_158 : i32
    %723 = arith.index_cast %722 : i32 to index
    %724 = memref.load %arg2[%723] : memref<528xf32, #tpu.memory_space<smem>>
    %c2_i32_159 = arith.constant 2 : i32
    %725 = arith.addi %718, %c2_i32_159 : i32
    %726 = arith.index_cast %725 : i32 to index
    %727 = memref.load %arg2[%726] : memref<528xf32, #tpu.memory_space<smem>>
    %c3_i32_160 = arith.constant 3 : i32
    %728 = arith.addi %718, %c3_i32_160 : i32
    %729 = arith.index_cast %728 : i32 to index
    %730 = memref.load %arg2[%729] : memref<528xf32, #tpu.memory_space<smem>>
    %c4_i32_161 = arith.constant 4 : i32
    %731 = arith.addi %718, %c4_i32_161 : i32
    %732 = arith.index_cast %731 : i32 to index
    %733 = memref.load %arg2[%732] : memref<528xf32, #tpu.memory_space<smem>>
    %c5_i32_162 = arith.constant 5 : i32
    %734 = arith.addi %718, %c5_i32_162 : i32
    %735 = arith.index_cast %734 : i32 to index
    %736 = memref.load %arg2[%735] : memref<528xf32, #tpu.memory_space<smem>>
    %c6_i32_163 = arith.constant 6 : i32
    %737 = arith.addi %718, %c6_i32_163 : i32
    %738 = arith.index_cast %737 : i32 to index
    %739 = memref.load %arg2[%738] : memref<528xf32, #tpu.memory_space<smem>>
    %c7_i32_164 = arith.constant 7 : i32
    %740 = arith.addi %718, %c7_i32_164 : i32
    %741 = arith.index_cast %740 : i32 to index
    %742 = memref.load %arg2[%741] : memref<528xf32, #tpu.memory_space<smem>>
    %c8_i32_165 = arith.constant 8 : i32
    %743 = arith.addi %718, %c8_i32_165 : i32
    %744 = arith.index_cast %743 : i32 to index
    %745 = memref.load %arg2[%744] : memref<528xf32, #tpu.memory_space<smem>>
    %c9_i32_166 = arith.constant 9 : i32
    %746 = arith.addi %718, %c9_i32_166 : i32
    %747 = arith.index_cast %746 : i32 to index
    %748 = memref.load %arg2[%747] : memref<528xf32, #tpu.memory_space<smem>>
    %c10_i32_167 = arith.constant 10 : i32
    %749 = arith.addi %718, %c10_i32_167 : i32
    %750 = arith.index_cast %749 : i32 to index
    %751 = memref.load %arg2[%750] : memref<528xf32, #tpu.memory_space<smem>>
    %752 = vector.broadcast %721 : f32 to vector<8x128xf32>
    %753 = arith.mulf %752, %0 : vector<8x128xf32>
    %754 = vector.broadcast %724 : f32 to vector<8x128xf32>
    %755 = arith.mulf %754, %1 : vector<8x128xf32>
    %756 = arith.addf %753, %755 : vector<8x128xf32>
    %757 = vector.broadcast %727 : f32 to vector<8x128xf32>
    %758 = arith.addf %756, %757 : vector<8x128xf32>
    %759 = vector.broadcast %730 : f32 to vector<8x128xf32>
    %760 = arith.mulf %759, %0 : vector<8x128xf32>
    %761 = vector.broadcast %733 : f32 to vector<8x128xf32>
    %762 = arith.mulf %761, %1 : vector<8x128xf32>
    %763 = arith.addf %760, %762 : vector<8x128xf32>
    %764 = vector.broadcast %736 : f32 to vector<8x128xf32>
    %765 = arith.addf %763, %764 : vector<8x128xf32>
    %766 = vector.broadcast %739 : f32 to vector<8x128xf32>
    %767 = arith.mulf %766, %0 : vector<8x128xf32>
    %768 = vector.broadcast %742 : f32 to vector<8x128xf32>
    %769 = arith.mulf %768, %1 : vector<8x128xf32>
    %770 = arith.addf %767, %769 : vector<8x128xf32>
    %771 = vector.broadcast %745 : f32 to vector<8x128xf32>
    %772 = arith.addf %770, %771 : vector<8x128xf32>
    %cst_168 = arith.constant 1.000000e+00 : f32
    %773 = vector.broadcast %cst_168 : f32 to vector<8x128xf32>
    %774 = arith.subf %773, %758 : vector<8x128xf32>
    %775 = arith.subf %774, %765 : vector<8x128xf32>
    %cst_169 = arith.constant -9.99999997E-7 : f32
    %776 = vector.broadcast %cst_169 : f32 to vector<8x128xf32>
    %777 = arith.cmpf oge, %758, %776 : vector<8x128xf32>
    %cst_170 = arith.constant -9.99999997E-7 : f32
    %778 = vector.broadcast %cst_170 : f32 to vector<8x128xf32>
    %779 = arith.cmpf oge, %765, %778 : vector<8x128xf32>
    %780 = arith.andi %777, %779 : vector<8x128xi1>
    %cst_171 = arith.constant -9.99999997E-7 : f32
    %781 = vector.broadcast %cst_171 : f32 to vector<8x128xf32>
    %782 = arith.cmpf oge, %775, %781 : vector<8x128xf32>
    %783 = arith.andi %780, %782 : vector<8x128xi1>
    %cst_172 = arith.constant 9.99999997E-7 : f32
    %784 = vector.broadcast %cst_172 : f32 to vector<8x128xf32>
    %785 = arith.cmpf ogt, %772, %784 : vector<8x128xf32>
    %786 = arith.andi %783, %785 : vector<8x128xi1>
    %787 = arith.extui %786 : vector<8x128xi1> to vector<8x128xi32>
    %788 = arith.sitofp %787 : vector<8x128xi32> to vector<8x128xf32>
    %789 = arith.mulf %788, %772 : vector<8x128xf32>
    %790 = vector.broadcast %748 : f32 to vector<8x128xf32>
    %791 = arith.mulf %789, %790 : vector<8x128xf32>
    %792 = arith.addf %713, %791 : vector<8x128xf32>
    %793 = vector.broadcast %751 : f32 to vector<8x128xf32>
    %794 = arith.mulf %788, %793 : vector<8x128xf32>
    %795 = arith.addf %716, %794 : vector<8x128xf32>
    %c10_i32_173 = arith.constant 10 : i32
    %c11_i32_174 = arith.constant 11 : i32
    %796 = arith.muli %c11_i32_174, %c10_i32_173 : i32
    %797 = arith.addi %5, %796 : i32
    %c0_i32_175 = arith.constant 0 : i32
    %798 = arith.addi %797, %c0_i32_175 : i32
    %799 = arith.index_cast %798 : i32 to index
    %800 = memref.load %arg2[%799] : memref<528xf32, #tpu.memory_space<smem>>
    %c1_i32_176 = arith.constant 1 : i32
    %801 = arith.addi %797, %c1_i32_176 : i32
    %802 = arith.index_cast %801 : i32 to index
    %803 = memref.load %arg2[%802] : memref<528xf32, #tpu.memory_space<smem>>
    %c2_i32_177 = arith.constant 2 : i32
    %804 = arith.addi %797, %c2_i32_177 : i32
    %805 = arith.index_cast %804 : i32 to index
    %806 = memref.load %arg2[%805] : memref<528xf32, #tpu.memory_space<smem>>
    %c3_i32_178 = arith.constant 3 : i32
    %807 = arith.addi %797, %c3_i32_178 : i32
    %808 = arith.index_cast %807 : i32 to index
    %809 = memref.load %arg2[%808] : memref<528xf32, #tpu.memory_space<smem>>
    %c4_i32_179 = arith.constant 4 : i32
    %810 = arith.addi %797, %c4_i32_179 : i32
    %811 = arith.index_cast %810 : i32 to index
    %812 = memref.load %arg2[%811] : memref<528xf32, #tpu.memory_space<smem>>
    %c5_i32_180 = arith.constant 5 : i32
    %813 = arith.addi %797, %c5_i32_180 : i32
    %814 = arith.index_cast %813 : i32 to index
    %815 = memref.load %arg2[%814] : memref<528xf32, #tpu.memory_space<smem>>
    %c6_i32_181 = arith.constant 6 : i32
    %816 = arith.addi %797, %c6_i32_181 : i32
    %817 = arith.index_cast %816 : i32 to index
    %818 = memref.load %arg2[%817] : memref<528xf32, #tpu.memory_space<smem>>
    %c7_i32_182 = arith.constant 7 : i32
    %819 = arith.addi %797, %c7_i32_182 : i32
    %820 = arith.index_cast %819 : i32 to index
    %821 = memref.load %arg2[%820] : memref<528xf32, #tpu.memory_space<smem>>
    %c8_i32_183 = arith.constant 8 : i32
    %822 = arith.addi %797, %c8_i32_183 : i32
    %823 = arith.index_cast %822 : i32 to index
    %824 = memref.load %arg2[%823] : memref<528xf32, #tpu.memory_space<smem>>
    %c9_i32_184 = arith.constant 9 : i32
    %825 = arith.addi %797, %c9_i32_184 : i32
    %826 = arith.index_cast %825 : i32 to index
    %827 = memref.load %arg2[%826] : memref<528xf32, #tpu.memory_space<smem>>
    %c10_i32_185 = arith.constant 10 : i32
    %828 = arith.addi %797, %c10_i32_185 : i32
    %829 = arith.index_cast %828 : i32 to index
    %830 = memref.load %arg2[%829] : memref<528xf32, #tpu.memory_space<smem>>
    %831 = vector.broadcast %800 : f32 to vector<8x128xf32>
    %832 = arith.mulf %831, %0 : vector<8x128xf32>
    %833 = vector.broadcast %803 : f32 to vector<8x128xf32>
    %834 = arith.mulf %833, %1 : vector<8x128xf32>
    %835 = arith.addf %832, %834 : vector<8x128xf32>
    %836 = vector.broadcast %806 : f32 to vector<8x128xf32>
    %837 = arith.addf %835, %836 : vector<8x128xf32>
    %838 = vector.broadcast %809 : f32 to vector<8x128xf32>
    %839 = arith.mulf %838, %0 : vector<8x128xf32>
    %840 = vector.broadcast %812 : f32 to vector<8x128xf32>
    %841 = arith.mulf %840, %1 : vector<8x128xf32>
    %842 = arith.addf %839, %841 : vector<8x128xf32>
    %843 = vector.broadcast %815 : f32 to vector<8x128xf32>
    %844 = arith.addf %842, %843 : vector<8x128xf32>
    %845 = vector.broadcast %818 : f32 to vector<8x128xf32>
    %846 = arith.mulf %845, %0 : vector<8x128xf32>
    %847 = vector.broadcast %821 : f32 to vector<8x128xf32>
    %848 = arith.mulf %847, %1 : vector<8x128xf32>
    %849 = arith.addf %846, %848 : vector<8x128xf32>
    %850 = vector.broadcast %824 : f32 to vector<8x128xf32>
    %851 = arith.addf %849, %850 : vector<8x128xf32>
    %cst_186 = arith.constant 1.000000e+00 : f32
    %852 = vector.broadcast %cst_186 : f32 to vector<8x128xf32>
    %853 = arith.subf %852, %837 : vector<8x128xf32>
    %854 = arith.subf %853, %844 : vector<8x128xf32>
    %cst_187 = arith.constant -9.99999997E-7 : f32
    %855 = vector.broadcast %cst_187 : f32 to vector<8x128xf32>
    %856 = arith.cmpf oge, %837, %855 : vector<8x128xf32>
    %cst_188 = arith.constant -9.99999997E-7 : f32
    %857 = vector.broadcast %cst_188 : f32 to vector<8x128xf32>
    %858 = arith.cmpf oge, %844, %857 : vector<8x128xf32>
    %859 = arith.andi %856, %858 : vector<8x128xi1>
    %cst_189 = arith.constant -9.99999997E-7 : f32
    %860 = vector.broadcast %cst_189 : f32 to vector<8x128xf32>
    %861 = arith.cmpf oge, %854, %860 : vector<8x128xf32>
    %862 = arith.andi %859, %861 : vector<8x128xi1>
    %cst_190 = arith.constant 9.99999997E-7 : f32
    %863 = vector.broadcast %cst_190 : f32 to vector<8x128xf32>
    %864 = arith.cmpf ogt, %851, %863 : vector<8x128xf32>
    %865 = arith.andi %862, %864 : vector<8x128xi1>
    %866 = arith.extui %865 : vector<8x128xi1> to vector<8x128xi32>
    %867 = arith.sitofp %866 : vector<8x128xi32> to vector<8x128xf32>
    %868 = arith.mulf %867, %851 : vector<8x128xf32>
    %869 = vector.broadcast %827 : f32 to vector<8x128xf32>
    %870 = arith.mulf %868, %869 : vector<8x128xf32>
    %871 = arith.addf %792, %870 : vector<8x128xf32>
    %872 = vector.broadcast %830 : f32 to vector<8x128xf32>
    %873 = arith.mulf %867, %872 : vector<8x128xf32>
    %874 = arith.addf %795, %873 : vector<8x128xf32>
    %c11_i32_191 = arith.constant 11 : i32
    %c11_i32_192 = arith.constant 11 : i32
    %875 = arith.muli %c11_i32_192, %c11_i32_191 : i32
    %876 = arith.addi %5, %875 : i32
    %c0_i32_193 = arith.constant 0 : i32
    %877 = arith.addi %876, %c0_i32_193 : i32
    %878 = arith.index_cast %877 : i32 to index
    %879 = memref.load %arg2[%878] : memref<528xf32, #tpu.memory_space<smem>>
    %c1_i32_194 = arith.constant 1 : i32
    %880 = arith.addi %876, %c1_i32_194 : i32
    %881 = arith.index_cast %880 : i32 to index
    %882 = memref.load %arg2[%881] : memref<528xf32, #tpu.memory_space<smem>>
    %c2_i32_195 = arith.constant 2 : i32
    %883 = arith.addi %876, %c2_i32_195 : i32
    %884 = arith.index_cast %883 : i32 to index
    %885 = memref.load %arg2[%884] : memref<528xf32, #tpu.memory_space<smem>>
    %c3_i32_196 = arith.constant 3 : i32
    %886 = arith.addi %876, %c3_i32_196 : i32
    %887 = arith.index_cast %886 : i32 to index
    %888 = memref.load %arg2[%887] : memref<528xf32, #tpu.memory_space<smem>>
    %c4_i32_197 = arith.constant 4 : i32
    %889 = arith.addi %876, %c4_i32_197 : i32
    %890 = arith.index_cast %889 : i32 to index
    %891 = memref.load %arg2[%890] : memref<528xf32, #tpu.memory_space<smem>>
    %c5_i32_198 = arith.constant 5 : i32
    %892 = arith.addi %876, %c5_i32_198 : i32
    %893 = arith.index_cast %892 : i32 to index
    %894 = memref.load %arg2[%893] : memref<528xf32, #tpu.memory_space<smem>>
    %c6_i32_199 = arith.constant 6 : i32
    %895 = arith.addi %876, %c6_i32_199 : i32
    %896 = arith.index_cast %895 : i32 to index
    %897 = memref.load %arg2[%896] : memref<528xf32, #tpu.memory_space<smem>>
    %c7_i32_200 = arith.constant 7 : i32
    %898 = arith.addi %876, %c7_i32_200 : i32
    %899 = arith.index_cast %898 : i32 to index
    %900 = memref.load %arg2[%899] : memref<528xf32, #tpu.memory_space<smem>>
    %c8_i32_201 = arith.constant 8 : i32
    %901 = arith.addi %876, %c8_i32_201 : i32
    %902 = arith.index_cast %901 : i32 to index
    %903 = memref.load %arg2[%902] : memref<528xf32, #tpu.memory_space<smem>>
    %c9_i32_202 = arith.constant 9 : i32
    %904 = arith.addi %876, %c9_i32_202 : i32
    %905 = arith.index_cast %904 : i32 to index
    %906 = memref.load %arg2[%905] : memref<528xf32, #tpu.memory_space<smem>>
    %c10_i32_203 = arith.constant 10 : i32
    %907 = arith.addi %876, %c10_i32_203 : i32
    %908 = arith.index_cast %907 : i32 to index
    %909 = memref.load %arg2[%908] : memref<528xf32, #tpu.memory_space<smem>>
    %910 = vector.broadcast %879 : f32 to vector<8x128xf32>
    %911 = arith.mulf %910, %0 : vector<8x128xf32>
    %912 = vector.broadcast %882 : f32 to vector<8x128xf32>
    %913 = arith.mulf %912, %1 : vector<8x128xf32>
    %914 = arith.addf %911, %913 : vector<8x128xf32>
    %915 = vector.broadcast %885 : f32 to vector<8x128xf32>
    %916 = arith.addf %914, %915 : vector<8x128xf32>
    %917 = vector.broadcast %888 : f32 to vector<8x128xf32>
    %918 = arith.mulf %917, %0 : vector<8x128xf32>
    %919 = vector.broadcast %891 : f32 to vector<8x128xf32>
    %920 = arith.mulf %919, %1 : vector<8x128xf32>
    %921 = arith.addf %918, %920 : vector<8x128xf32>
    %922 = vector.broadcast %894 : f32 to vector<8x128xf32>
    %923 = arith.addf %921, %922 : vector<8x128xf32>
    %924 = vector.broadcast %897 : f32 to vector<8x128xf32>
    %925 = arith.mulf %924, %0 : vector<8x128xf32>
    %926 = vector.broadcast %900 : f32 to vector<8x128xf32>
    %927 = arith.mulf %926, %1 : vector<8x128xf32>
    %928 = arith.addf %925, %927 : vector<8x128xf32>
    %929 = vector.broadcast %903 : f32 to vector<8x128xf32>
    %930 = arith.addf %928, %929 : vector<8x128xf32>
    %cst_204 = arith.constant 1.000000e+00 : f32
    %931 = vector.broadcast %cst_204 : f32 to vector<8x128xf32>
    %932 = arith.subf %931, %916 : vector<8x128xf32>
    %933 = arith.subf %932, %923 : vector<8x128xf32>
    %cst_205 = arith.constant -9.99999997E-7 : f32
    %934 = vector.broadcast %cst_205 : f32 to vector<8x128xf32>
    %935 = arith.cmpf oge, %916, %934 : vector<8x128xf32>
    %cst_206 = arith.constant -9.99999997E-7 : f32
    %936 = vector.broadcast %cst_206 : f32 to vector<8x128xf32>
    %937 = arith.cmpf oge, %923, %936 : vector<8x128xf32>
    %938 = arith.andi %935, %937 : vector<8x128xi1>
    %cst_207 = arith.constant -9.99999997E-7 : f32
    %939 = vector.broadcast %cst_207 : f32 to vector<8x128xf32>
    %940 = arith.cmpf oge, %933, %939 : vector<8x128xf32>
    %941 = arith.andi %938, %940 : vector<8x128xi1>
    %cst_208 = arith.constant 9.99999997E-7 : f32
    %942 = vector.broadcast %cst_208 : f32 to vector<8x128xf32>
    %943 = arith.cmpf ogt, %930, %942 : vector<8x128xf32>
    %944 = arith.andi %941, %943 : vector<8x128xi1>
    %945 = arith.extui %944 : vector<8x128xi1> to vector<8x128xi32>
    %946 = arith.sitofp %945 : vector<8x128xi32> to vector<8x128xf32>
    %947 = arith.mulf %946, %930 : vector<8x128xf32>
    %948 = vector.broadcast %906 : f32 to vector<8x128xf32>
    %949 = arith.mulf %947, %948 : vector<8x128xf32>
    %950 = arith.addf %871, %949 : vector<8x128xf32>
    %951 = vector.broadcast %909 : f32 to vector<8x128xf32>
    %952 = arith.mulf %946, %951 : vector<8x128xf32>
    %953 = arith.addf %874, %952 : vector<8x128xf32>
    %c12_i32 = arith.constant 12 : i32
    %c0_209 = arith.constant 0 : index
    %c0_210 = arith.constant 0 : index
    %c0_211 = arith.constant 0 : index
    %954 = vector.load %arg5[%c0_209, %c0_210, %c0_211] : memref<4x8x128xf32, #tpu.memory_space<vmem>>, vector<1x8x128xf32>
    %955 = vector.shape_cast %954 : vector<1x8x128xf32> to vector<8x128xf32>
    %956 = vector.shape_cast %950 : vector<8x128xf32> to vector<1x8x128xf32>
    tpu.vector_store %arg5[%c0_209, %c0_210, %c0_211], %956 {strides = array<i32>} : memref<4x8x128xf32, #tpu.memory_space<vmem>>, vector<1x8x128xf32>,
    %957 = math.absf %953 : vector<8x128xf32>
    %cst_212 = arith.constant 5.000000e-01 : f32
    %958 = vector.broadcast %cst_212 : f32 to vector<8x128xf32>
    %959 = arith.cmpf olt, %957, %958 : vector<8x128xf32>
    %960 = arith.extui %959 : vector<8x128xi1> to vector<8x128xi32>
    %961 = arith.sitofp %960 : vector<8x128xi32> to vector<8x128xf32>
    %c0_213 = arith.constant 0 : index
    %c0_214 = arith.constant 0 : index
    %c0_215 = arith.constant 0 : index
    %962 = vector.load %arg6[%c0_213, %c0_214, %c0_215] : memref<4x8x128xf32, #tpu.memory_space<vmem>>, vector<1x8x128xf32>
    %963 = vector.shape_cast %962 : vector<1x8x128xf32> to vector<8x128xf32>
    %964 = vector.shape_cast %961 : vector<8x128xf32> to vector<1x8x128xf32>
    tpu.vector_store %arg6[%c0_213, %c0_214, %c0_215], %964 {strides = array<i32>} : memref<4x8x128xf32, #tpu.memory_space<vmem>>, vector<1x8x128xf32>,
    %c4_i32_216 = arith.constant 4 : i32
    %965 = arith.muli %arg0, %c4_i32_216 : i32
    %c1_i32_217 = arith.constant 1 : i32
    %966 = arith.addi %965, %c1_i32_217 : i32
    %c132_i32_218 = arith.constant 132 : i32
    %967 = arith.muli %966, %c132_i32_218 : i32
    %c0_i32_219 = arith.constant 0 : i32
    %c11_i32_220 = arith.constant 11 : i32
    %968 = arith.muli %c11_i32_220, %c0_i32_219 : i32
    %969 = arith.addi %967, %968 : i32
    %c0_i32_221 = arith.constant 0 : i32
    %970 = arith.addi %969, %c0_i32_221 : i32
    %971 = arith.index_cast %970 : i32 to index
    %972 = memref.load %arg2[%971] : memref<528xf32, #tpu.memory_space<smem>>
    %c1_i32_222 = arith.constant 1 : i32
    %973 = arith.addi %969, %c1_i32_222 : i32
    %974 = arith.index_cast %973 : i32 to index
    %975 = memref.load %arg2[%974] : memref<528xf32, #tpu.memory_space<smem>>
    %c2_i32_223 = arith.constant 2 : i32
    %976 = arith.addi %969, %c2_i32_223 : i32
    %977 = arith.index_cast %976 : i32 to index
    %978 = memref.load %arg2[%977] : memref<528xf32, #tpu.memory_space<smem>>
    %c3_i32_224 = arith.constant 3 : i32
    %979 = arith.addi %969, %c3_i32_224 : i32
    %980 = arith.index_cast %979 : i32 to index
    %981 = memref.load %arg2[%980] : memref<528xf32, #tpu.memory_space<smem>>
    %c4_i32_225 = arith.constant 4 : i32
    %982 = arith.addi %969, %c4_i32_225 : i32
    %983 = arith.index_cast %982 : i32 to index
    %984 = memref.load %arg2[%983] : memref<528xf32, #tpu.memory_space<smem>>
    %c5_i32_226 = arith.constant 5 : i32
    %985 = arith.addi %969, %c5_i32_226 : i32
    %986 = arith.index_cast %985 : i32 to index
    %987 = memref.load %arg2[%986] : memref<528xf32, #tpu.memory_space<smem>>
    %c6_i32_227 = arith.constant 6 : i32
    %988 = arith.addi %969, %c6_i32_227 : i32
    %989 = arith.index_cast %988 : i32 to index
    %990 = memref.load %arg2[%989] : memref<528xf32, #tpu.memory_space<smem>>
    %c7_i32_228 = arith.constant 7 : i32
    %991 = arith.addi %969, %c7_i32_228 : i32
    %992 = arith.index_cast %991 : i32 to index
    %993 = memref.load %arg2[%992] : memref<528xf32, #tpu.memory_space<smem>>
    %c8_i32_229 = arith.constant 8 : i32
    %994 = arith.addi %969, %c8_i32_229 : i32
    %995 = arith.index_cast %994 : i32 to index
    %996 = memref.load %arg2[%995] : memref<528xf32, #tpu.memory_space<smem>>
    %c9_i32_230 = arith.constant 9 : i32
    %997 = arith.addi %969, %c9_i32_230 : i32
    %998 = arith.index_cast %997 : i32 to index
    %999 = memref.load %arg2[%998] : memref<528xf32, #tpu.memory_space<smem>>
    %c10_i32_231 = arith.constant 10 : i32
    %1000 = arith.addi %969, %c10_i32_231 : i32
    %1001 = arith.index_cast %1000 : i32 to index
    %1002 = memref.load %arg2[%1001] : memref<528xf32, #tpu.memory_space<smem>>
    %1003 = vector.broadcast %972 : f32 to vector<8x128xf32>
    %1004 = arith.mulf %1003, %0 : vector<8x128xf32>
    %1005 = vector.broadcast %975 : f32 to vector<8x128xf32>
    %1006 = arith.mulf %1005, %1 : vector<8x128xf32>
    %1007 = arith.addf %1004, %1006 : vector<8x128xf32>
    %1008 = vector.broadcast %978 : f32 to vector<8x128xf32>
    %1009 = arith.addf %1007, %1008 : vector<8x128xf32>
    %1010 = vector.broadcast %981 : f32 to vector<8x128xf32>
    %1011 = arith.mulf %1010, %0 : vector<8x128xf32>
    %1012 = vector.broadcast %984 : f32 to vector<8x128xf32>
    %1013 = arith.mulf %1012, %1 : vector<8x128xf32>
    %1014 = arith.addf %1011, %1013 : vector<8x128xf32>
    %1015 = vector.broadcast %987 : f32 to vector<8x128xf32>
    %1016 = arith.addf %1014, %1015 : vector<8x128xf32>
    %1017 = vector.broadcast %990 : f32 to vector<8x128xf32>
    %1018 = arith.mulf %1017, %0 : vector<8x128xf32>
    %1019 = vector.broadcast %993 : f32 to vector<8x128xf32>
    %1020 = arith.mulf %1019, %1 : vector<8x128xf32>
    %1021 = arith.addf %1018, %1020 : vector<8x128xf32>
    %1022 = vector.broadcast %996 : f32 to vector<8x128xf32>
    %1023 = arith.addf %1021, %1022 : vector<8x128xf32>
    %cst_232 = arith.constant 1.000000e+00 : f32
    %1024 = vector.broadcast %cst_232 : f32 to vector<8x128xf32>
    %1025 = arith.subf %1024, %1009 : vector<8x128xf32>
    %1026 = arith.subf %1025, %1016 : vector<8x128xf32>
    %cst_233 = arith.constant -9.99999997E-7 : f32
    %1027 = vector.broadcast %cst_233 : f32 to vector<8x128xf32>
    %1028 = arith.cmpf oge, %1009, %1027 : vector<8x128xf32>
    %cst_234 = arith.constant -9.99999997E-7 : f32
    %1029 = vector.broadcast %cst_234 : f32 to vector<8x128xf32>
    %1030 = arith.cmpf oge, %1016, %1029 : vector<8x128xf32>
    %1031 = arith.andi %1028, %1030 : vector<8x128xi1>
    %cst_235 = arith.constant -9.99999997E-7 : f32
    %1032 = vector.broadcast %cst_235 : f32 to vector<8x128xf32>
    %1033 = arith.cmpf oge, %1026, %1032 : vector<8x128xf32>
    %1034 = arith.andi %1031, %1033 : vector<8x128xi1>
    %cst_236 = arith.constant 9.99999997E-7 : f32
    %1035 = vector.broadcast %cst_236 : f32 to vector<8x128xf32>
    %1036 = arith.cmpf ogt, %1023, %1035 : vector<8x128xf32>
    %1037 = arith.andi %1034, %1036 : vector<8x128xi1>
    %1038 = arith.extui %1037 : vector<8x128xi1> to vector<8x128xi32>
    %1039 = arith.sitofp %1038 : vector<8x128xi32> to vector<8x128xf32>
    %1040 = arith.mulf %1039, %1023 : vector<8x128xf32>
    %1041 = vector.broadcast %999 : f32 to vector<8x128xf32>
    %1042 = arith.mulf %1040, %1041 : vector<8x128xf32>
    %1043 = arith.addf %2, %1042 : vector<8x128xf32>
    %1044 = vector.broadcast %1002 : f32 to vector<8x128xf32>
    %1045 = arith.mulf %1039, %1044 : vector<8x128xf32>
    %1046 = arith.addf %2, %1045 : vector<8x128xf32>
    %c1_i32_237 = arith.constant 1 : i32
    %c11_i32_238 = arith.constant 11 : i32
    %1047 = arith.muli %c11_i32_238, %c1_i32_237 : i32
    %1048 = arith.addi %967, %1047 : i32
    %c0_i32_239 = arith.constant 0 : i32
    %1049 = arith.addi %1048, %c0_i32_239 : i32
    %1050 = arith.index_cast %1049 : i32 to index
    %1051 = memref.load %arg2[%1050] : memref<528xf32, #tpu.memory_space<smem>>
    %c1_i32_240 = arith.constant 1 : i32
    %1052 = arith.addi %1048, %c1_i32_240 : i32
    %1053 = arith.index_cast %1052 : i32 to index
    %1054 = memref.load %arg2[%1053] : memref<528xf32, #tpu.memory_space<smem>>
    %c2_i32_241 = arith.constant 2 : i32
    %1055 = arith.addi %1048, %c2_i32_241 : i32
    %1056 = arith.index_cast %1055 : i32 to index
    %1057 = memref.load %arg2[%1056] : memref<528xf32, #tpu.memory_space<smem>>
    %c3_i32_242 = arith.constant 3 : i32
    %1058 = arith.addi %1048, %c3_i32_242 : i32
    %1059 = arith.index_cast %1058 : i32 to index
    %1060 = memref.load %arg2[%1059] : memref<528xf32, #tpu.memory_space<smem>>
    %c4_i32_243 = arith.constant 4 : i32
    %1061 = arith.addi %1048, %c4_i32_243 : i32
    %1062 = arith.index_cast %1061 : i32 to index
    %1063 = memref.load %arg2[%1062] : memref<528xf32, #tpu.memory_space<smem>>
    %c5_i32_244 = arith.constant 5 : i32
    %1064 = arith.addi %1048, %c5_i32_244 : i32
    %1065 = arith.index_cast %1064 : i32 to index
    %1066 = memref.load %arg2[%1065] : memref<528xf32, #tpu.memory_space<smem>>
    %c6_i32_245 = arith.constant 6 : i32
    %1067 = arith.addi %1048, %c6_i32_245 : i32
    %1068 = arith.index_cast %1067 : i32 to index
    %1069 = memref.load %arg2[%1068] : memref<528xf32, #tpu.memory_space<smem>>
    %c7_i32_246 = arith.constant 7 : i32
    %1070 = arith.addi %1048, %c7_i32_246 : i32
    %1071 = arith.index_cast %1070 : i32 to index
    %1072 = memref.load %arg2[%1071] : memref<528xf32, #tpu.memory_space<smem>>
    %c8_i32_247 = arith.constant 8 : i32
    %1073 = arith.addi %1048, %c8_i32_247 : i32
    %1074 = arith.index_cast %1073 : i32 to index
    %1075 = memref.load %arg2[%1074] : memref<528xf32, #tpu.memory_space<smem>>
    %c9_i32_248 = arith.constant 9 : i32
    %1076 = arith.addi %1048, %c9_i32_248 : i32
    %1077 = arith.index_cast %1076 : i32 to index
    %1078 = memref.load %arg2[%1077] : memref<528xf32, #tpu.memory_space<smem>>
    %c10_i32_249 = arith.constant 10 : i32
    %1079 = arith.addi %1048, %c10_i32_249 : i32
    %1080 = arith.index_cast %1079 : i32 to index
    %1081 = memref.load %arg2[%1080] : memref<528xf32, #tpu.memory_space<smem>>
    %1082 = vector.broadcast %1051 : f32 to vector<8x128xf32>
    %1083 = arith.mulf %1082, %0 : vector<8x128xf32>
    %1084 = vector.broadcast %1054 : f32 to vector<8x128xf32>
    %1085 = arith.mulf %1084, %1 : vector<8x128xf32>
    %1086 = arith.addf %1083, %1085 : vector<8x128xf32>
    %1087 = vector.broadcast %1057 : f32 to vector<8x128xf32>
    %1088 = arith.addf %1086, %1087 : vector<8x128xf32>
    %1089 = vector.broadcast %1060 : f32 to vector<8x128xf32>
    %1090 = arith.mulf %1089, %0 : vector<8x128xf32>
    %1091 = vector.broadcast %1063 : f32 to vector<8x128xf32>
    %1092 = arith.mulf %1091, %1 : vector<8x128xf32>
    %1093 = arith.addf %1090, %1092 : vector<8x128xf32>
    %1094 = vector.broadcast %1066 : f32 to vector<8x128xf32>
    %1095 = arith.addf %1093, %1094 : vector<8x128xf32>
    %1096 = vector.broadcast %1069 : f32 to vector<8x128xf32>
    %1097 = arith.mulf %1096, %0 : vector<8x128xf32>
    %1098 = vector.broadcast %1072 : f32 to vector<8x128xf32>
    %1099 = arith.mulf %1098, %1 : vector<8x128xf32>
    %1100 = arith.addf %1097, %1099 : vector<8x128xf32>
    %1101 = vector.broadcast %1075 : f32 to vector<8x128xf32>
    %1102 = arith.addf %1100, %1101 : vector<8x128xf32>
    %cst_250 = arith.constant 1.000000e+00 : f32
    %1103 = vector.broadcast %cst_250 : f32 to vector<8x128xf32>
    %1104 = arith.subf %1103, %1088 : vector<8x128xf32>
    %1105 = arith.subf %1104, %1095 : vector<8x128xf32>
    %cst_251 = arith.constant -9.99999997E-7 : f32
    %1106 = vector.broadcast %cst_251 : f32 to vector<8x128xf32>
    %1107 = arith.cmpf oge, %1088, %1106 : vector<8x128xf32>
    %cst_252 = arith.constant -9.99999997E-7 : f32
    %1108 = vector.broadcast %cst_252 : f32 to vector<8x128xf32>
    %1109 = arith.cmpf oge, %1095, %1108 : vector<8x128xf32>
    %1110 = arith.andi %1107, %1109 : vector<8x128xi1>
    %cst_253 = arith.constant -9.99999997E-7 : f32
    %1111 = vector.broadcast %cst_253 : f32 to vector<8x128xf32>
    %1112 = arith.cmpf oge, %1105, %1111 : vector<8x128xf32>
    %1113 = arith.andi %1110, %1112 : vector<8x128xi1>
    %cst_254 = arith.constant 9.99999997E-7 : f32
    %1114 = vector.broadcast %cst_254 : f32 to vector<8x128xf32>
    %1115 = arith.cmpf ogt, %1102, %1114 : vector<8x128xf32>
    %1116 = arith.andi %1113, %1115 : vector<8x128xi1>
    %1117 = arith.extui %1116 : vector<8x128xi1> to vector<8x128xi32>
    %1118 = arith.sitofp %1117 : vector<8x128xi32> to vector<8x128xf32>
    %1119 = arith.mulf %1118, %1102 : vector<8x128xf32>
    %1120 = vector.broadcast %1078 : f32 to vector<8x128xf32>
    %1121 = arith.mulf %1119, %1120 : vector<8x128xf32>
    %1122 = arith.addf %1043, %1121 : vector<8x128xf32>
    %1123 = vector.broadcast %1081 : f32 to vector<8x128xf32>
    %1124 = arith.mulf %1118, %1123 : vector<8x128xf32>
    %1125 = arith.addf %1046, %1124 : vector<8x128xf32>
    %c2_i32_255 = arith.constant 2 : i32
    %c11_i32_256 = arith.constant 11 : i32
    %1126 = arith.muli %c11_i32_256, %c2_i32_255 : i32
    %1127 = arith.addi %967, %1126 : i32
    %c0_i32_257 = arith.constant 0 : i32
    %1128 = arith.addi %1127, %c0_i32_257 : i32
    %1129 = arith.index_cast %1128 : i32 to index
    %1130 = memref.load %arg2[%1129] : memref<528xf32, #tpu.memory_space<smem>>
    %c1_i32_258 = arith.constant 1 : i32
    %1131 = arith.addi %1127, %c1_i32_258 : i32
    %1132 = arith.index_cast %1131 : i32 to index
    %1133 = memref.load %arg2[%1132] : memref<528xf32, #tpu.memory_space<smem>>
    %c2_i32_259 = arith.constant 2 : i32
    %1134 = arith.addi %1127, %c2_i32_259 : i32
    %1135 = arith.index_cast %1134 : i32 to index
    %1136 = memref.load %arg2[%1135] : memref<528xf32, #tpu.memory_space<smem>>
    %c3_i32_260 = arith.constant 3 : i32
    %1137 = arith.addi %1127, %c3_i32_260 : i32
    %1138 = arith.index_cast %1137 : i32 to index
    %1139 = memref.load %arg2[%1138] : memref<528xf32, #tpu.memory_space<smem>>
    %c4_i32_261 = arith.constant 4 : i32
    %1140 = arith.addi %1127, %c4_i32_261 : i32
    %1141 = arith.index_cast %1140 : i32 to index
    %1142 = memref.load %arg2[%1141] : memref<528xf32, #tpu.memory_space<smem>>
    %c5_i32_262 = arith.constant 5 : i32
    %1143 = arith.addi %1127, %c5_i32_262 : i32
    %1144 = arith.index_cast %1143 : i32 to index
    %1145 = memref.load %arg2[%1144] : memref<528xf32, #tpu.memory_space<smem>>
    %c6_i32_263 = arith.constant 6 : i32
    %1146 = arith.addi %1127, %c6_i32_263 : i32
    %1147 = arith.index_cast %1146 : i32 to index
    %1148 = memref.load %arg2[%1147] : memref<528xf32, #tpu.memory_space<smem>>
    %c7_i32_264 = arith.constant 7 : i32
    %1149 = arith.addi %1127, %c7_i32_264 : i32
    %1150 = arith.index_cast %1149 : i32 to index
    %1151 = memref.load %arg2[%1150] : memref<528xf32, #tpu.memory_space<smem>>
    %c8_i32_265 = arith.constant 8 : i32
    %1152 = arith.addi %1127, %c8_i32_265 : i32
    %1153 = arith.index_cast %1152 : i32 to index
    %1154 = memref.load %arg2[%1153] : memref<528xf32, #tpu.memory_space<smem>>
    %c9_i32_266 = arith.constant 9 : i32
    %1155 = arith.addi %1127, %c9_i32_266 : i32
    %1156 = arith.index_cast %1155 : i32 to index
    %1157 = memref.load %arg2[%1156] : memref<528xf32, #tpu.memory_space<smem>>
    %c10_i32_267 = arith.constant 10 : i32
    %1158 = arith.addi %1127, %c10_i32_267 : i32
    %1159 = arith.index_cast %1158 : i32 to index
    %1160 = memref.load %arg2[%1159] : memref<528xf32, #tpu.memory_space<smem>>
    %1161 = vector.broadcast %1130 : f32 to vector<8x128xf32>
    %1162 = arith.mulf %1161, %0 : vector<8x128xf32>
    %1163 = vector.broadcast %1133 : f32 to vector<8x128xf32>
    %1164 = arith.mulf %1163, %1 : vector<8x128xf32>
    %1165 = arith.addf %1162, %1164 : vector<8x128xf32>
    %1166 = vector.broadcast %1136 : f32 to vector<8x128xf32>
    %1167 = arith.addf %1165, %1166 : vector<8x128xf32>
    %1168 = vector.broadcast %1139 : f32 to vector<8x128xf32>
    %1169 = arith.mulf %1168, %0 : vector<8x128xf32>
    %1170 = vector.broadcast %1142 : f32 to vector<8x128xf32>
    %1171 = arith.mulf %1170, %1 : vector<8x128xf32>
    %1172 = arith.addf %1169, %1171 : vector<8x128xf32>
    %1173 = vector.broadcast %1145 : f32 to vector<8x128xf32>
    %1174 = arith.addf %1172, %1173 : vector<8x128xf32>
    %1175 = vector.broadcast %1148 : f32 to vector<8x128xf32>
    %1176 = arith.mulf %1175, %0 : vector<8x128xf32>
    %1177 = vector.broadcast %1151 : f32 to vector<8x128xf32>
    %1178 = arith.mulf %1177, %1 : vector<8x128xf32>
    %1179 = arith.addf %1176, %1178 : vector<8x128xf32>
    %1180 = vector.broadcast %1154 : f32 to vector<8x128xf32>
    %1181 = arith.addf %1179, %1180 : vector<8x128xf32>
    %cst_268 = arith.constant 1.000000e+00 : f32
    %1182 = vector.broadcast %cst_268 : f32 to vector<8x128xf32>
    %1183 = arith.subf %1182, %1167 : vector<8x128xf32>
    %1184 = arith.subf %1183, %1174 : vector<8x128xf32>
    %cst_269 = arith.constant -9.99999997E-7 : f32
    %1185 = vector.broadcast %cst_269 : f32 to vector<8x128xf32>
    %1186 = arith.cmpf oge, %1167, %1185 : vector<8x128xf32>
    %cst_270 = arith.constant -9.99999997E-7 : f32
    %1187 = vector.broadcast %cst_270 : f32 to vector<8x128xf32>
    %1188 = arith.cmpf oge, %1174, %1187 : vector<8x128xf32>
    %1189 = arith.andi %1186, %1188 : vector<8x128xi1>
    %cst_271 = arith.constant -9.99999997E-7 : f32
    %1190 = vector.broadcast %cst_271 : f32 to vector<8x128xf32>
    %1191 = arith.cmpf oge, %1184, %1190 : vector<8x128xf32>
    %1192 = arith.andi %1189, %1191 : vector<8x128xi1>
    %cst_272 = arith.constant 9.99999997E-7 : f32
    %1193 = vector.broadcast %cst_272 : f32 to vector<8x128xf32>
    %1194 = arith.cmpf ogt, %1181, %1193 : vector<8x128xf32>
    %1195 = arith.andi %1192, %1194 : vector<8x128xi1>
    %1196 = arith.extui %1195 : vector<8x128xi1> to vector<8x128xi32>
    %1197 = arith.sitofp %1196 : vector<8x128xi32> to vector<8x128xf32>
    %1198 = arith.mulf %1197, %1181 : vector<8x128xf32>
    %1199 = vector.broadcast %1157 : f32 to vector<8x128xf32>
    %1200 = arith.mulf %1198, %1199 : vector<8x128xf32>
    %1201 = arith.addf %1122, %1200 : vector<8x128xf32>
    %1202 = vector.broadcast %1160 : f32 to vector<8x128xf32>
    %1203 = arith.mulf %1197, %1202 : vector<8x128xf32>
    %1204 = arith.addf %1125, %1203 : vector<8x128xf32>
    %c3_i32_273 = arith.constant 3 : i32
    %c11_i32_274 = arith.constant 11 : i32
    %1205 = arith.muli %c11_i32_274, %c3_i32_273 : i32
    %1206 = arith.addi %967, %1205 : i32
    %c0_i32_275 = arith.constant 0 : i32
    %1207 = arith.addi %1206, %c0_i32_275 : i32
    %1208 = arith.index_cast %1207 : i32 to index
    %1209 = memref.load %arg2[%1208] : memref<528xf32, #tpu.memory_space<smem>>
    %c1_i32_276 = arith.constant 1 : i32
    %1210 = arith.addi %1206, %c1_i32_276 : i32
    %1211 = arith.index_cast %1210 : i32 to index
    %1212 = memref.load %arg2[%1211] : memref<528xf32, #tpu.memory_space<smem>>
    %c2_i32_277 = arith.constant 2 : i32
    %1213 = arith.addi %1206, %c2_i32_277 : i32
    %1214 = arith.index_cast %1213 : i32 to index
    %1215 = memref.load %arg2[%1214] : memref<528xf32, #tpu.memory_space<smem>>
    %c3_i32_278 = arith.constant 3 : i32
    %1216 = arith.addi %1206, %c3_i32_278 : i32
    %1217 = arith.index_cast %1216 : i32 to index
    %1218 = memref.load %arg2[%1217] : memref<528xf32, #tpu.memory_space<smem>>
    %c4_i32_279 = arith.constant 4 : i32
    %1219 = arith.addi %1206, %c4_i32_279 : i32
    %1220 = arith.index_cast %1219 : i32 to index
    %1221 = memref.load %arg2[%1220] : memref<528xf32, #tpu.memory_space<smem>>
    %c5_i32_280 = arith.constant 5 : i32
    %1222 = arith.addi %1206, %c5_i32_280 : i32
    %1223 = arith.index_cast %1222 : i32 to index
    %1224 = memref.load %arg2[%1223] : memref<528xf32, #tpu.memory_space<smem>>
    %c6_i32_281 = arith.constant 6 : i32
    %1225 = arith.addi %1206, %c6_i32_281 : i32
    %1226 = arith.index_cast %1225 : i32 to index
    %1227 = memref.load %arg2[%1226] : memref<528xf32, #tpu.memory_space<smem>>
    %c7_i32_282 = arith.constant 7 : i32
    %1228 = arith.addi %1206, %c7_i32_282 : i32
    %1229 = arith.index_cast %1228 : i32 to index
    %1230 = memref.load %arg2[%1229] : memref<528xf32, #tpu.memory_space<smem>>
    %c8_i32_283 = arith.constant 8 : i32
    %1231 = arith.addi %1206, %c8_i32_283 : i32
    %1232 = arith.index_cast %1231 : i32 to index
    %1233 = memref.load %arg2[%1232] : memref<528xf32, #tpu.memory_space<smem>>
    %c9_i32_284 = arith.constant 9 : i32
    %1234 = arith.addi %1206, %c9_i32_284 : i32
    %1235 = arith.index_cast %1234 : i32 to index
    %1236 = memref.load %arg2[%1235] : memref<528xf32, #tpu.memory_space<smem>>
    %c10_i32_285 = arith.constant 10 : i32
    %1237 = arith.addi %1206, %c10_i32_285 : i32
    %1238 = arith.index_cast %1237 : i32 to index
    %1239 = memref.load %arg2[%1238] : memref<528xf32, #tpu.memory_space<smem>>
    %1240 = vector.broadcast %1209 : f32 to vector<8x128xf32>
    %1241 = arith.mulf %1240, %0 : vector<8x128xf32>
    %1242 = vector.broadcast %1212 : f32 to vector<8x128xf32>
    %1243 = arith.mulf %1242, %1 : vector<8x128xf32>
    %1244 = arith.addf %1241, %1243 : vector<8x128xf32>
    %1245 = vector.broadcast %1215 : f32 to vector<8x128xf32>
    %1246 = arith.addf %1244, %1245 : vector<8x128xf32>
    %1247 = vector.broadcast %1218 : f32 to vector<8x128xf32>
    %1248 = arith.mulf %1247, %0 : vector<8x128xf32>
    %1249 = vector.broadcast %1221 : f32 to vector<8x128xf32>
    %1250 = arith.mulf %1249, %1 : vector<8x128xf32>
    %1251 = arith.addf %1248, %1250 : vector<8x128xf32>
    %1252 = vector.broadcast %1224 : f32 to vector<8x128xf32>
    %1253 = arith.addf %1251, %1252 : vector<8x128xf32>
    %1254 = vector.broadcast %1227 : f32 to vector<8x128xf32>
    %1255 = arith.mulf %1254, %0 : vector<8x128xf32>
    %1256 = vector.broadcast %1230 : f32 to vector<8x128xf32>
    %1257 = arith.mulf %1256, %1 : vector<8x128xf32>
    %1258 = arith.addf %1255, %1257 : vector<8x128xf32>
    %1259 = vector.broadcast %1233 : f32 to vector<8x128xf32>
    %1260 = arith.addf %1258, %1259 : vector<8x128xf32>
    %cst_286 = arith.constant 1.000000e+00 : f32
    %1261 = vector.broadcast %cst_286 : f32 to vector<8x128xf32>
    %1262 = arith.subf %1261, %1246 : vector<8x128xf32>
    %1263 = arith.subf %1262, %1253 : vector<8x128xf32>
    %cst_287 = arith.constant -9.99999997E-7 : f32
    %1264 = vector.broadcast %cst_287 : f32 to vector<8x128xf32>
    %1265 = arith.cmpf oge, %1246, %1264 : vector<8x128xf32>
    %cst_288 = arith.constant -9.99999997E-7 : f32
    %1266 = vector.broadcast %cst_288 : f32 to vector<8x128xf32>
    %1267 = arith.cmpf oge, %1253, %1266 : vector<8x128xf32>
    %1268 = arith.andi %1265, %1267 : vector<8x128xi1>
    %cst_289 = arith.constant -9.99999997E-7 : f32
    %1269 = vector.broadcast %cst_289 : f32 to vector<8x128xf32>
    %1270 = arith.cmpf oge, %1263, %1269 : vector<8x128xf32>
    %1271 = arith.andi %1268, %1270 : vector<8x128xi1>
    %cst_290 = arith.constant 9.99999997E-7 : f32
    %1272 = vector.broadcast %cst_290 : f32 to vector<8x128xf32>
    %1273 = arith.cmpf ogt, %1260, %1272 : vector<8x128xf32>
    %1274 = arith.andi %1271, %1273 : vector<8x128xi1>
    %1275 = arith.extui %1274 : vector<8x128xi1> to vector<8x128xi32>
    %1276 = arith.sitofp %1275 : vector<8x128xi32> to vector<8x128xf32>
    %1277 = arith.mulf %1276, %1260 : vector<8x128xf32>
    %1278 = vector.broadcast %1236 : f32 to vector<8x128xf32>
    %1279 = arith.mulf %1277, %1278 : vector<8x128xf32>
    %1280 = arith.addf %1201, %1279 : vector<8x128xf32>
    %1281 = vector.broadcast %1239 : f32 to vector<8x128xf32>
    %1282 = arith.mulf %1276, %1281 : vector<8x128xf32>
    %1283 = arith.addf %1204, %1282 : vector<8x128xf32>
    %c4_i32_291 = arith.constant 4 : i32
    %c11_i32_292 = arith.constant 11 : i32
    %1284 = arith.muli %c11_i32_292, %c4_i32_291 : i32
    %1285 = arith.addi %967, %1284 : i32
    %c0_i32_293 = arith.constant 0 : i32
    %1286 = arith.addi %1285, %c0_i32_293 : i32
    %1287 = arith.index_cast %1286 : i32 to index
    %1288 = memref.load %arg2[%1287] : memref<528xf32, #tpu.memory_space<smem>>
    %c1_i32_294 = arith.constant 1 : i32
    %1289 = arith.addi %1285, %c1_i32_294 : i32
    %1290 = arith.index_cast %1289 : i32 to index
    %1291 = memref.load %arg2[%1290] : memref<528xf32, #tpu.memory_space<smem>>
    %c2_i32_295 = arith.constant 2 : i32
    %1292 = arith.addi %1285, %c2_i32_295 : i32
    %1293 = arith.index_cast %1292 : i32 to index
    %1294 = memref.load %arg2[%1293] : memref<528xf32, #tpu.memory_space<smem>>
    %c3_i32_296 = arith.constant 3 : i32
    %1295 = arith.addi %1285, %c3_i32_296 : i32
    %1296 = arith.index_cast %1295 : i32 to index
    %1297 = memref.load %arg2[%1296] : memref<528xf32, #tpu.memory_space<smem>>
    %c4_i32_297 = arith.constant 4 : i32
    %1298 = arith.addi %1285, %c4_i32_297 : i32
    %1299 = arith.index_cast %1298 : i32 to index
    %1300 = memref.load %arg2[%1299] : memref<528xf32, #tpu.memory_space<smem>>
    %c5_i32_298 = arith.constant 5 : i32
    %1301 = arith.addi %1285, %c5_i32_298 : i32
    %1302 = arith.index_cast %1301 : i32 to index
    %1303 = memref.load %arg2[%1302] : memref<528xf32, #tpu.memory_space<smem>>
    %c6_i32_299 = arith.constant 6 : i32
    %1304 = arith.addi %1285, %c6_i32_299 : i32
    %1305 = arith.index_cast %1304 : i32 to index
    %1306 = memref.load %arg2[%1305] : memref<528xf32, #tpu.memory_space<smem>>
    %c7_i32_300 = arith.constant 7 : i32
    %1307 = arith.addi %1285, %c7_i32_300 : i32
    %1308 = arith.index_cast %1307 : i32 to index
    %1309 = memref.load %arg2[%1308] : memref<528xf32, #tpu.memory_space<smem>>
    %c8_i32_301 = arith.constant 8 : i32
    %1310 = arith.addi %1285, %c8_i32_301 : i32
    %1311 = arith.index_cast %1310 : i32 to index
    %1312 = memref.load %arg2[%1311] : memref<528xf32, #tpu.memory_space<smem>>
    %c9_i32_302 = arith.constant 9 : i32
    %1313 = arith.addi %1285, %c9_i32_302 : i32
    %1314 = arith.index_cast %1313 : i32 to index
    %1315 = memref.load %arg2[%1314] : memref<528xf32, #tpu.memory_space<smem>>
    %c10_i32_303 = arith.constant 10 : i32
    %1316 = arith.addi %1285, %c10_i32_303 : i32
    %1317 = arith.index_cast %1316 : i32 to index
    %1318 = memref.load %arg2[%1317] : memref<528xf32, #tpu.memory_space<smem>>
    %1319 = vector.broadcast %1288 : f32 to vector<8x128xf32>
    %1320 = arith.mulf %1319, %0 : vector<8x128xf32>
    %1321 = vector.broadcast %1291 : f32 to vector<8x128xf32>
    %1322 = arith.mulf %1321, %1 : vector<8x128xf32>
    %1323 = arith.addf %1320, %1322 : vector<8x128xf32>
    %1324 = vector.broadcast %1294 : f32 to vector<8x128xf32>
    %1325 = arith.addf %1323, %1324 : vector<8x128xf32>
    %1326 = vector.broadcast %1297 : f32 to vector<8x128xf32>
    %1327 = arith.mulf %1326, %0 : vector<8x128xf32>
    %1328 = vector.broadcast %1300 : f32 to vector<8x128xf32>
    %1329 = arith.mulf %1328, %1 : vector<8x128xf32>
    %1330 = arith.addf %1327, %1329 : vector<8x128xf32>
    %1331 = vector.broadcast %1303 : f32 to vector<8x128xf32>
    %1332 = arith.addf %1330, %1331 : vector<8x128xf32>
    %1333 = vector.broadcast %1306 : f32 to vector<8x128xf32>
    %1334 = arith.mulf %1333, %0 : vector<8x128xf32>
    %1335 = vector.broadcast %1309 : f32 to vector<8x128xf32>
    %1336 = arith.mulf %1335, %1 : vector<8x128xf32>
    %1337 = arith.addf %1334, %1336 : vector<8x128xf32>
    %1338 = vector.broadcast %1312 : f32 to vector<8x128xf32>
    %1339 = arith.addf %1337, %1338 : vector<8x128xf32>
    %cst_304 = arith.constant 1.000000e+00 : f32
    %1340 = vector.broadcast %cst_304 : f32 to vector<8x128xf32>
    %1341 = arith.subf %1340, %1325 : vector<8x128xf32>
    %1342 = arith.subf %1341, %1332 : vector<8x128xf32>
    %cst_305 = arith.constant -9.99999997E-7 : f32
    %1343 = vector.broadcast %cst_305 : f32 to vector<8x128xf32>
    %1344 = arith.cmpf oge, %1325, %1343 : vector<8x128xf32>
    %cst_306 = arith.constant -9.99999997E-7 : f32
    %1345 = vector.broadcast %cst_306 : f32 to vector<8x128xf32>
    %1346 = arith.cmpf oge, %1332, %1345 : vector<8x128xf32>
    %1347 = arith.andi %1344, %1346 : vector<8x128xi1>
    %cst_307 = arith.constant -9.99999997E-7 : f32
    %1348 = vector.broadcast %cst_307 : f32 to vector<8x128xf32>
    %1349 = arith.cmpf oge, %1342, %1348 : vector<8x128xf32>
    %1350 = arith.andi %1347, %1349 : vector<8x128xi1>
    %cst_308 = arith.constant 9.99999997E-7 : f32
    %1351 = vector.broadcast %cst_308 : f32 to vector<8x128xf32>
    %1352 = arith.cmpf ogt, %1339, %1351 : vector<8x128xf32>
    %1353 = arith.andi %1350, %1352 : vector<8x128xi1>
    %1354 = arith.extui %1353 : vector<8x128xi1> to vector<8x128xi32>
    %1355 = arith.sitofp %1354 : vector<8x128xi32> to vector<8x128xf32>
    %1356 = arith.mulf %1355, %1339 : vector<8x128xf32>
    %1357 = vector.broadcast %1315 : f32 to vector<8x128xf32>
    %1358 = arith.mulf %1356, %1357 : vector<8x128xf32>
    %1359 = arith.addf %1280, %1358 : vector<8x128xf32>
    %1360 = vector.broadcast %1318 : f32 to vector<8x128xf32>
    %1361 = arith.mulf %1355, %1360 : vector<8x128xf32>
    %1362 = arith.addf %1283, %1361 : vector<8x128xf32>
    %c5_i32_309 = arith.constant 5 : i32
    %c11_i32_310 = arith.constant 11 : i32
    %1363 = arith.muli %c11_i32_310, %c5_i32_309 : i32
    %1364 = arith.addi %967, %1363 : i32
    %c0_i32_311 = arith.constant 0 : i32
    %1365 = arith.addi %1364, %c0_i32_311 : i32
    %1366 = arith.index_cast %1365 : i32 to index
    %1367 = memref.load %arg2[%1366] : memref<528xf32, #tpu.memory_space<smem>>
    %c1_i32_312 = arith.constant 1 : i32
    %1368 = arith.addi %1364, %c1_i32_312 : i32
    %1369 = arith.index_cast %1368 : i32 to index
    %1370 = memref.load %arg2[%1369] : memref<528xf32, #tpu.memory_space<smem>>
    %c2_i32_313 = arith.constant 2 : i32
    %1371 = arith.addi %1364, %c2_i32_313 : i32
    %1372 = arith.index_cast %1371 : i32 to index
    %1373 = memref.load %arg2[%1372] : memref<528xf32, #tpu.memory_space<smem>>
    %c3_i32_314 = arith.constant 3 : i32
    %1374 = arith.addi %1364, %c3_i32_314 : i32
    %1375 = arith.index_cast %1374 : i32 to index
    %1376 = memref.load %arg2[%1375] : memref<528xf32, #tpu.memory_space<smem>>
    %c4_i32_315 = arith.constant 4 : i32
    %1377 = arith.addi %1364, %c4_i32_315 : i32
    %1378 = arith.index_cast %1377 : i32 to index
    %1379 = memref.load %arg2[%1378] : memref<528xf32, #tpu.memory_space<smem>>
    %c5_i32_316 = arith.constant 5 : i32
    %1380 = arith.addi %1364, %c5_i32_316 : i32
    %1381 = arith.index_cast %1380 : i32 to index
    %1382 = memref.load %arg2[%1381] : memref<528xf32, #tpu.memory_space<smem>>
    %c6_i32_317 = arith.constant 6 : i32
    %1383 = arith.addi %1364, %c6_i32_317 : i32
    %1384 = arith.index_cast %1383 : i32 to index
    %1385 = memref.load %arg2[%1384] : memref<528xf32, #tpu.memory_space<smem>>
    %c7_i32_318 = arith.constant 7 : i32
    %1386 = arith.addi %1364, %c7_i32_318 : i32
    %1387 = arith.index_cast %1386 : i32 to index
    %1388 = memref.load %arg2[%1387] : memref<528xf32, #tpu.memory_space<smem>>
    %c8_i32_319 = arith.constant 8 : i32
    %1389 = arith.addi %1364, %c8_i32_319 : i32
    %1390 = arith.index_cast %1389 : i32 to index
    %1391 = memref.load %arg2[%1390] : memref<528xf32, #tpu.memory_space<smem>>
    %c9_i32_320 = arith.constant 9 : i32
    %1392 = arith.addi %1364, %c9_i32_320 : i32
    %1393 = arith.index_cast %1392 : i32 to index
    %1394 = memref.load %arg2[%1393] : memref<528xf32, #tpu.memory_space<smem>>
    %c10_i32_321 = arith.constant 10 : i32
    %1395 = arith.addi %1364, %c10_i32_321 : i32
    %1396 = arith.index_cast %1395 : i32 to index
    %1397 = memref.load %arg2[%1396] : memref<528xf32, #tpu.memory_space<smem>>
    %1398 = vector.broadcast %1367 : f32 to vector<8x128xf32>
    %1399 = arith.mulf %1398, %0 : vector<8x128xf32>
    %1400 = vector.broadcast %1370 : f32 to vector<8x128xf32>
    %1401 = arith.mulf %1400, %1 : vector<8x128xf32>
    %1402 = arith.addf %1399, %1401 : vector<8x128xf32>
    %1403 = vector.broadcast %1373 : f32 to vector<8x128xf32>
    %1404 = arith.addf %1402, %1403 : vector<8x128xf32>
    %1405 = vector.broadcast %1376 : f32 to vector<8x128xf32>
    %1406 = arith.mulf %1405, %0 : vector<8x128xf32>
    %1407 = vector.broadcast %1379 : f32 to vector<8x128xf32>
    %1408 = arith.mulf %1407, %1 : vector<8x128xf32>
    %1409 = arith.addf %1406, %1408 : vector<8x128xf32>
    %1410 = vector.broadcast %1382 : f32 to vector<8x128xf32>
    %1411 = arith.addf %1409, %1410 : vector<8x128xf32>
    %1412 = vector.broadcast %1385 : f32 to vector<8x128xf32>
    %1413 = arith.mulf %1412, %0 : vector<8x128xf32>
    %1414 = vector.broadcast %1388 : f32 to vector<8x128xf32>
    %1415 = arith.mulf %1414, %1 : vector<8x128xf32>
    %1416 = arith.addf %1413, %1415 : vector<8x128xf32>
    %1417 = vector.broadcast %1391 : f32 to vector<8x128xf32>
    %1418 = arith.addf %1416, %1417 : vector<8x128xf32>
    %cst_322 = arith.constant 1.000000e+00 : f32
    %1419 = vector.broadcast %cst_322 : f32 to vector<8x128xf32>
    %1420 = arith.subf %1419, %1404 : vector<8x128xf32>
    %1421 = arith.subf %1420, %1411 : vector<8x128xf32>
    %cst_323 = arith.constant -9.99999997E-7 : f32
    %1422 = vector.broadcast %cst_323 : f32 to vector<8x128xf32>
    %1423 = arith.cmpf oge, %1404, %1422 : vector<8x128xf32>
    %cst_324 = arith.constant -9.99999997E-7 : f32
    %1424 = vector.broadcast %cst_324 : f32 to vector<8x128xf32>
    %1425 = arith.cmpf oge, %1411, %1424 : vector<8x128xf32>
    %1426 = arith.andi %1423, %1425 : vector<8x128xi1>
    %cst_325 = arith.constant -9.99999997E-7 : f32
    %1427 = vector.broadcast %cst_325 : f32 to vector<8x128xf32>
    %1428 = arith.cmpf oge, %1421, %1427 : vector<8x128xf32>
    %1429 = arith.andi %1426, %1428 : vector<8x128xi1>
    %cst_326 = arith.constant 9.99999997E-7 : f32
    %1430 = vector.broadcast %cst_326 : f32 to vector<8x128xf32>
    %1431 = arith.cmpf ogt, %1418, %1430 : vector<8x128xf32>
    %1432 = arith.andi %1429, %1431 : vector<8x128xi1>
    %1433 = arith.extui %1432 : vector<8x128xi1> to vector<8x128xi32>
    %1434 = arith.sitofp %1433 : vector<8x128xi32> to vector<8x128xf32>
    %1435 = arith.mulf %1434, %1418 : vector<8x128xf32>
    %1436 = vector.broadcast %1394 : f32 to vector<8x128xf32>
    %1437 = arith.mulf %1435, %1436 : vector<8x128xf32>
    %1438 = arith.addf %1359, %1437 : vector<8x128xf32>
    %1439 = vector.broadcast %1397 : f32 to vector<8x128xf32>
    %1440 = arith.mulf %1434, %1439 : vector<8x128xf32>
    %1441 = arith.addf %1362, %1440 : vector<8x128xf32>
    %c6_i32_327 = arith.constant 6 : i32
    %c11_i32_328 = arith.constant 11 : i32
    %1442 = arith.muli %c11_i32_328, %c6_i32_327 : i32
    %1443 = arith.addi %967, %1442 : i32
    %c0_i32_329 = arith.constant 0 : i32
    %1444 = arith.addi %1443, %c0_i32_329 : i32
    %1445 = arith.index_cast %1444 : i32 to index
    %1446 = memref.load %arg2[%1445] : memref<528xf32, #tpu.memory_space<smem>>
    %c1_i32_330 = arith.constant 1 : i32
    %1447 = arith.addi %1443, %c1_i32_330 : i32
    %1448 = arith.index_cast %1447 : i32 to index
    %1449 = memref.load %arg2[%1448] : memref<528xf32, #tpu.memory_space<smem>>
    %c2_i32_331 = arith.constant 2 : i32
    %1450 = arith.addi %1443, %c2_i32_331 : i32
    %1451 = arith.index_cast %1450 : i32 to index
    %1452 = memref.load %arg2[%1451] : memref<528xf32, #tpu.memory_space<smem>>
    %c3_i32_332 = arith.constant 3 : i32
    %1453 = arith.addi %1443, %c3_i32_332 : i32
    %1454 = arith.index_cast %1453 : i32 to index
    %1455 = memref.load %arg2[%1454] : memref<528xf32, #tpu.memory_space<smem>>
    %c4_i32_333 = arith.constant 4 : i32
    %1456 = arith.addi %1443, %c4_i32_333 : i32
    %1457 = arith.index_cast %1456 : i32 to index
    %1458 = memref.load %arg2[%1457] : memref<528xf32, #tpu.memory_space<smem>>
    %c5_i32_334 = arith.constant 5 : i32
    %1459 = arith.addi %1443, %c5_i32_334 : i32
    %1460 = arith.index_cast %1459 : i32 to index
    %1461 = memref.load %arg2[%1460] : memref<528xf32, #tpu.memory_space<smem>>
    %c6_i32_335 = arith.constant 6 : i32
    %1462 = arith.addi %1443, %c6_i32_335 : i32
    %1463 = arith.index_cast %1462 : i32 to index
    %1464 = memref.load %arg2[%1463] : memref<528xf32, #tpu.memory_space<smem>>
    %c7_i32_336 = arith.constant 7 : i32
    %1465 = arith.addi %1443, %c7_i32_336 : i32
    %1466 = arith.index_cast %1465 : i32 to index
    %1467 = memref.load %arg2[%1466] : memref<528xf32, #tpu.memory_space<smem>>
    %c8_i32_337 = arith.constant 8 : i32
    %1468 = arith.addi %1443, %c8_i32_337 : i32
    %1469 = arith.index_cast %1468 : i32 to index
    %1470 = memref.load %arg2[%1469] : memref<528xf32, #tpu.memory_space<smem>>
    %c9_i32_338 = arith.constant 9 : i32
    %1471 = arith.addi %1443, %c9_i32_338 : i32
    %1472 = arith.index_cast %1471 : i32 to index
    %1473 = memref.load %arg2[%1472] : memref<528xf32, #tpu.memory_space<smem>>
    %c10_i32_339 = arith.constant 10 : i32
    %1474 = arith.addi %1443, %c10_i32_339 : i32
    %1475 = arith.index_cast %1474 : i32 to index
    %1476 = memref.load %arg2[%1475] : memref<528xf32, #tpu.memory_space<smem>>
    %1477 = vector.broadcast %1446 : f32 to vector<8x128xf32>
    %1478 = arith.mulf %1477, %0 : vector<8x128xf32>
    %1479 = vector.broadcast %1449 : f32 to vector<8x128xf32>
    %1480 = arith.mulf %1479, %1 : vector<8x128xf32>
    %1481 = arith.addf %1478, %1480 : vector<8x128xf32>
    %1482 = vector.broadcast %1452 : f32 to vector<8x128xf32>
    %1483 = arith.addf %1481, %1482 : vector<8x128xf32>
    %1484 = vector.broadcast %1455 : f32 to vector<8x128xf32>
    %1485 = arith.mulf %1484, %0 : vector<8x128xf32>
    %1486 = vector.broadcast %1458 : f32 to vector<8x128xf32>
    %1487 = arith.mulf %1486, %1 : vector<8x128xf32>
    %1488 = arith.addf %1485, %1487 : vector<8x128xf32>
    %1489 = vector.broadcast %1461 : f32 to vector<8x128xf32>
    %1490 = arith.addf %1488, %1489 : vector<8x128xf32>
    %1491 = vector.broadcast %1464 : f32 to vector<8x128xf32>
    %1492 = arith.mulf %1491, %0 : vector<8x128xf32>
    %1493 = vector.broadcast %1467 : f32 to vector<8x128xf32>
    %1494 = arith.mulf %1493, %1 : vector<8x128xf32>
    %1495 = arith.addf %1492, %1494 : vector<8x128xf32>
    %1496 = vector.broadcast %1470 : f32 to vector<8x128xf32>
    %1497 = arith.addf %1495, %1496 : vector<8x128xf32>
    %cst_340 = arith.constant 1.000000e+00 : f32
    %1498 = vector.broadcast %cst_340 : f32 to vector<8x128xf32>
    %1499 = arith.subf %1498, %1483 : vector<8x128xf32>
    %1500 = arith.subf %1499, %1490 : vector<8x128xf32>
    %cst_341 = arith.constant -9.99999997E-7 : f32
    %1501 = vector.broadcast %cst_341 : f32 to vector<8x128xf32>
    %1502 = arith.cmpf oge, %1483, %1501 : vector<8x128xf32>
    %cst_342 = arith.constant -9.99999997E-7 : f32
    %1503 = vector.broadcast %cst_342 : f32 to vector<8x128xf32>
    %1504 = arith.cmpf oge, %1490, %1503 : vector<8x128xf32>
    %1505 = arith.andi %1502, %1504 : vector<8x128xi1>
    %cst_343 = arith.constant -9.99999997E-7 : f32
    %1506 = vector.broadcast %cst_343 : f32 to vector<8x128xf32>
    %1507 = arith.cmpf oge, %1500, %1506 : vector<8x128xf32>
    %1508 = arith.andi %1505, %1507 : vector<8x128xi1>
    %cst_344 = arith.constant 9.99999997E-7 : f32
    %1509 = vector.broadcast %cst_344 : f32 to vector<8x128xf32>
    %1510 = arith.cmpf ogt, %1497, %1509 : vector<8x128xf32>
    %1511 = arith.andi %1508, %1510 : vector<8x128xi1>
    %1512 = arith.extui %1511 : vector<8x128xi1> to vector<8x128xi32>
    %1513 = arith.sitofp %1512 : vector<8x128xi32> to vector<8x128xf32>
    %1514 = arith.mulf %1513, %1497 : vector<8x128xf32>
    %1515 = vector.broadcast %1473 : f32 to vector<8x128xf32>
    %1516 = arith.mulf %1514, %1515 : vector<8x128xf32>
    %1517 = arith.addf %1438, %1516 : vector<8x128xf32>
    %1518 = vector.broadcast %1476 : f32 to vector<8x128xf32>
    %1519 = arith.mulf %1513, %1518 : vector<8x128xf32>
    %1520 = arith.addf %1441, %1519 : vector<8x128xf32>
    %c7_i32_345 = arith.constant 7 : i32
    %c11_i32_346 = arith.constant 11 : i32
    %1521 = arith.muli %c11_i32_346, %c7_i32_345 : i32
    %1522 = arith.addi %967, %1521 : i32
    %c0_i32_347 = arith.constant 0 : i32
    %1523 = arith.addi %1522, %c0_i32_347 : i32
    %1524 = arith.index_cast %1523 : i32 to index
    %1525 = memref.load %arg2[%1524] : memref<528xf32, #tpu.memory_space<smem>>
    %c1_i32_348 = arith.constant 1 : i32
    %1526 = arith.addi %1522, %c1_i32_348 : i32
    %1527 = arith.index_cast %1526 : i32 to index
    %1528 = memref.load %arg2[%1527] : memref<528xf32, #tpu.memory_space<smem>>
    %c2_i32_349 = arith.constant 2 : i32
    %1529 = arith.addi %1522, %c2_i32_349 : i32
    %1530 = arith.index_cast %1529 : i32 to index
    %1531 = memref.load %arg2[%1530] : memref<528xf32, #tpu.memory_space<smem>>
    %c3_i32_350 = arith.constant 3 : i32
    %1532 = arith.addi %1522, %c3_i32_350 : i32
    %1533 = arith.index_cast %1532 : i32 to index
    %1534 = memref.load %arg2[%1533] : memref<528xf32, #tpu.memory_space<smem>>
    %c4_i32_351 = arith.constant 4 : i32
    %1535 = arith.addi %1522, %c4_i32_351 : i32
    %1536 = arith.index_cast %1535 : i32 to index
    %1537 = memref.load %arg2[%1536] : memref<528xf32, #tpu.memory_space<smem>>
    %c5_i32_352 = arith.constant 5 : i32
    %1538 = arith.addi %1522, %c5_i32_352 : i32
    %1539 = arith.index_cast %1538 : i32 to index
    %1540 = memref.load %arg2[%1539] : memref<528xf32, #tpu.memory_space<smem>>
    %c6_i32_353 = arith.constant 6 : i32
    %1541 = arith.addi %1522, %c6_i32_353 : i32
    %1542 = arith.index_cast %1541 : i32 to index
    %1543 = memref.load %arg2[%1542] : memref<528xf32, #tpu.memory_space<smem>>
    %c7_i32_354 = arith.constant 7 : i32
    %1544 = arith.addi %1522, %c7_i32_354 : i32
    %1545 = arith.index_cast %1544 : i32 to index
    %1546 = memref.load %arg2[%1545] : memref<528xf32, #tpu.memory_space<smem>>
    %c8_i32_355 = arith.constant 8 : i32
    %1547 = arith.addi %1522, %c8_i32_355 : i32
    %1548 = arith.index_cast %1547 : i32 to index
    %1549 = memref.load %arg2[%1548] : memref<528xf32, #tpu.memory_space<smem>>
    %c9_i32_356 = arith.constant 9 : i32
    %1550 = arith.addi %1522, %c9_i32_356 : i32
    %1551 = arith.index_cast %1550 : i32 to index
    %1552 = memref.load %arg2[%1551] : memref<528xf32, #tpu.memory_space<smem>>
    %c10_i32_357 = arith.constant 10 : i32
    %1553 = arith.addi %1522, %c10_i32_357 : i32
    %1554 = arith.index_cast %1553 : i32 to index
    %1555 = memref.load %arg2[%1554] : memref<528xf32, #tpu.memory_space<smem>>
    %1556 = vector.broadcast %1525 : f32 to vector<8x128xf32>
    %1557 = arith.mulf %1556, %0 : vector<8x128xf32>
    %1558 = vector.broadcast %1528 : f32 to vector<8x128xf32>
    %1559 = arith.mulf %1558, %1 : vector<8x128xf32>
    %1560 = arith.addf %1557, %1559 : vector<8x128xf32>
    %1561 = vector.broadcast %1531 : f32 to vector<8x128xf32>
    %1562 = arith.addf %1560, %1561 : vector<8x128xf32>
    %1563 = vector.broadcast %1534 : f32 to vector<8x128xf32>
    %1564 = arith.mulf %1563, %0 : vector<8x128xf32>
    %1565 = vector.broadcast %1537 : f32 to vector<8x128xf32>
    %1566 = arith.mulf %1565, %1 : vector<8x128xf32>
    %1567 = arith.addf %1564, %1566 : vector<8x128xf32>
    %1568 = vector.broadcast %1540 : f32 to vector<8x128xf32>
    %1569 = arith.addf %1567, %1568 : vector<8x128xf32>
    %1570 = vector.broadcast %1543 : f32 to vector<8x128xf32>
    %1571 = arith.mulf %1570, %0 : vector<8x128xf32>
    %1572 = vector.broadcast %1546 : f32 to vector<8x128xf32>
    %1573 = arith.mulf %1572, %1 : vector<8x128xf32>
    %1574 = arith.addf %1571, %1573 : vector<8x128xf32>
    %1575 = vector.broadcast %1549 : f32 to vector<8x128xf32>
    %1576 = arith.addf %1574, %1575 : vector<8x128xf32>
    %cst_358 = arith.constant 1.000000e+00 : f32
    %1577 = vector.broadcast %cst_358 : f32 to vector<8x128xf32>
    %1578 = arith.subf %1577, %1562 : vector<8x128xf32>
    %1579 = arith.subf %1578, %1569 : vector<8x128xf32>
    %cst_359 = arith.constant -9.99999997E-7 : f32
    %1580 = vector.broadcast %cst_359 : f32 to vector<8x128xf32>
    %1581 = arith.cmpf oge, %1562, %1580 : vector<8x128xf32>
    %cst_360 = arith.constant -9.99999997E-7 : f32
    %1582 = vector.broadcast %cst_360 : f32 to vector<8x128xf32>
    %1583 = arith.cmpf oge, %1569, %1582 : vector<8x128xf32>
    %1584 = arith.andi %1581, %1583 : vector<8x128xi1>
    %cst_361 = arith.constant -9.99999997E-7 : f32
    %1585 = vector.broadcast %cst_361 : f32 to vector<8x128xf32>
    %1586 = arith.cmpf oge, %1579, %1585 : vector<8x128xf32>
    %1587 = arith.andi %1584, %1586 : vector<8x128xi1>
    %cst_362 = arith.constant 9.99999997E-7 : f32
    %1588 = vector.broadcast %cst_362 : f32 to vector<8x128xf32>
    %1589 = arith.cmpf ogt, %1576, %1588 : vector<8x128xf32>
    %1590 = arith.andi %1587, %1589 : vector<8x128xi1>
    %1591 = arith.extui %1590 : vector<8x128xi1> to vector<8x128xi32>
    %1592 = arith.sitofp %1591 : vector<8x128xi32> to vector<8x128xf32>
    %1593 = arith.mulf %1592, %1576 : vector<8x128xf32>
    %1594 = vector.broadcast %1552 : f32 to vector<8x128xf32>
    %1595 = arith.mulf %1593, %1594 : vector<8x128xf32>
    %1596 = arith.addf %1517, %1595 : vector<8x128xf32>
    %1597 = vector.broadcast %1555 : f32 to vector<8x128xf32>
    %1598 = arith.mulf %1592, %1597 : vector<8x128xf32>
    %1599 = arith.addf %1520, %1598 : vector<8x128xf32>
    %c8_i32_363 = arith.constant 8 : i32
    %c11_i32_364 = arith.constant 11 : i32
    %1600 = arith.muli %c11_i32_364, %c8_i32_363 : i32
    %1601 = arith.addi %967, %1600 : i32
    %c0_i32_365 = arith.constant 0 : i32
    %1602 = arith.addi %1601, %c0_i32_365 : i32
    %1603 = arith.index_cast %1602 : i32 to index
    %1604 = memref.load %arg2[%1603] : memref<528xf32, #tpu.memory_space<smem>>
    %c1_i32_366 = arith.constant 1 : i32
    %1605 = arith.addi %1601, %c1_i32_366 : i32
    %1606 = arith.index_cast %1605 : i32 to index
    %1607 = memref.load %arg2[%1606] : memref<528xf32, #tpu.memory_space<smem>>
    %c2_i32_367 = arith.constant 2 : i32
    %1608 = arith.addi %1601, %c2_i32_367 : i32
    %1609 = arith.index_cast %1608 : i32 to index
    %1610 = memref.load %arg2[%1609] : memref<528xf32, #tpu.memory_space<smem>>
    %c3_i32_368 = arith.constant 3 : i32
    %1611 = arith.addi %1601, %c3_i32_368 : i32
    %1612 = arith.index_cast %1611 : i32 to index
    %1613 = memref.load %arg2[%1612] : memref<528xf32, #tpu.memory_space<smem>>
    %c4_i32_369 = arith.constant 4 : i32
    %1614 = arith.addi %1601, %c4_i32_369 : i32
    %1615 = arith.index_cast %1614 : i32 to index
    %1616 = memref.load %arg2[%1615] : memref<528xf32, #tpu.memory_space<smem>>
    %c5_i32_370 = arith.constant 5 : i32
    %1617 = arith.addi %1601, %c5_i32_370 : i32
    %1618 = arith.index_cast %1617 : i32 to index
    %1619 = memref.load %arg2[%1618] : memref<528xf32, #tpu.memory_space<smem>>
    %c6_i32_371 = arith.constant 6 : i32
    %1620 = arith.addi %1601, %c6_i32_371 : i32
    %1621 = arith.index_cast %1620 : i32 to index
    %1622 = memref.load %arg2[%1621] : memref<528xf32, #tpu.memory_space<smem>>
    %c7_i32_372 = arith.constant 7 : i32
    %1623 = arith.addi %1601, %c7_i32_372 : i32
    %1624 = arith.index_cast %1623 : i32 to index
    %1625 = memref.load %arg2[%1624] : memref<528xf32, #tpu.memory_space<smem>>
    %c8_i32_373 = arith.constant 8 : i32
    %1626 = arith.addi %1601, %c8_i32_373 : i32
    %1627 = arith.index_cast %1626 : i32 to index
    %1628 = memref.load %arg2[%1627] : memref<528xf32, #tpu.memory_space<smem>>
    %c9_i32_374 = arith.constant 9 : i32
    %1629 = arith.addi %1601, %c9_i32_374 : i32
    %1630 = arith.index_cast %1629 : i32 to index
    %1631 = memref.load %arg2[%1630] : memref<528xf32, #tpu.memory_space<smem>>
    %c10_i32_375 = arith.constant 10 : i32
    %1632 = arith.addi %1601, %c10_i32_375 : i32
    %1633 = arith.index_cast %1632 : i32 to index
    %1634 = memref.load %arg2[%1633] : memref<528xf32, #tpu.memory_space<smem>>
    %1635 = vector.broadcast %1604 : f32 to vector<8x128xf32>
    %1636 = arith.mulf %1635, %0 : vector<8x128xf32>
    %1637 = vector.broadcast %1607 : f32 to vector<8x128xf32>
    %1638 = arith.mulf %1637, %1 : vector<8x128xf32>
    %1639 = arith.addf %1636, %1638 : vector<8x128xf32>
    %1640 = vector.broadcast %1610 : f32 to vector<8x128xf32>
    %1641 = arith.addf %1639, %1640 : vector<8x128xf32>
    %1642 = vector.broadcast %1613 : f32 to vector<8x128xf32>
    %1643 = arith.mulf %1642, %0 : vector<8x128xf32>
    %1644 = vector.broadcast %1616 : f32 to vector<8x128xf32>
    %1645 = arith.mulf %1644, %1 : vector<8x128xf32>
    %1646 = arith.addf %1643, %1645 : vector<8x128xf32>
    %1647 = vector.broadcast %1619 : f32 to vector<8x128xf32>
    %1648 = arith.addf %1646, %1647 : vector<8x128xf32>
    %1649 = vector.broadcast %1622 : f32 to vector<8x128xf32>
    %1650 = arith.mulf %1649, %0 : vector<8x128xf32>
    %1651 = vector.broadcast %1625 : f32 to vector<8x128xf32>
    %1652 = arith.mulf %1651, %1 : vector<8x128xf32>
    %1653 = arith.addf %1650, %1652 : vector<8x128xf32>
    %1654 = vector.broadcast %1628 : f32 to vector<8x128xf32>
    %1655 = arith.addf %1653, %1654 : vector<8x128xf32>
    %cst_376 = arith.constant 1.000000e+00 : f32
    %1656 = vector.broadcast %cst_376 : f32 to vector<8x128xf32>
    %1657 = arith.subf %1656, %1641 : vector<8x128xf32>
    %1658 = arith.subf %1657, %1648 : vector<8x128xf32>
    %cst_377 = arith.constant -9.99999997E-7 : f32
    %1659 = vector.broadcast %cst_377 : f32 to vector<8x128xf32>
    %1660 = arith.cmpf oge, %1641, %1659 : vector<8x128xf32>
    %cst_378 = arith.constant -9.99999997E-7 : f32
    %1661 = vector.broadcast %cst_378 : f32 to vector<8x128xf32>
    %1662 = arith.cmpf oge, %1648, %1661 : vector<8x128xf32>
    %1663 = arith.andi %1660, %1662 : vector<8x128xi1>
    %cst_379 = arith.constant -9.99999997E-7 : f32
    %1664 = vector.broadcast %cst_379 : f32 to vector<8x128xf32>
    %1665 = arith.cmpf oge, %1658, %1664 : vector<8x128xf32>
    %1666 = arith.andi %1663, %1665 : vector<8x128xi1>
    %cst_380 = arith.constant 9.99999997E-7 : f32
    %1667 = vector.broadcast %cst_380 : f32 to vector<8x128xf32>
    %1668 = arith.cmpf ogt, %1655, %1667 : vector<8x128xf32>
    %1669 = arith.andi %1666, %1668 : vector<8x128xi1>
    %1670 = arith.extui %1669 : vector<8x128xi1> to vector<8x128xi32>
    %1671 = arith.sitofp %1670 : vector<8x128xi32> to vector<8x128xf32>
    %1672 = arith.mulf %1671, %1655 : vector<8x128xf32>
    %1673 = vector.broadcast %1631 : f32 to vector<8x128xf32>
    %1674 = arith.mulf %1672, %1673 : vector<8x128xf32>
    %1675 = arith.addf %1596, %1674 : vector<8x128xf32>
    %1676 = vector.broadcast %1634 : f32 to vector<8x128xf32>
    %1677 = arith.mulf %1671, %1676 : vector<8x128xf32>
    %1678 = arith.addf %1599, %1677 : vector<8x128xf32>
    %c9_i32_381 = arith.constant 9 : i32
    %c11_i32_382 = arith.constant 11 : i32
    %1679 = arith.muli %c11_i32_382, %c9_i32_381 : i32
    %1680 = arith.addi %967, %1679 : i32
    %c0_i32_383 = arith.constant 0 : i32
    %1681 = arith.addi %1680, %c0_i32_383 : i32
    %1682 = arith.index_cast %1681 : i32 to index
    %1683 = memref.load %arg2[%1682] : memref<528xf32, #tpu.memory_space<smem>>
    %c1_i32_384 = arith.constant 1 : i32
    %1684 = arith.addi %1680, %c1_i32_384 : i32
    %1685 = arith.index_cast %1684 : i32 to index
    %1686 = memref.load %arg2[%1685] : memref<528xf32, #tpu.memory_space<smem>>
    %c2_i32_385 = arith.constant 2 : i32
    %1687 = arith.addi %1680, %c2_i32_385 : i32
    %1688 = arith.index_cast %1687 : i32 to index
    %1689 = memref.load %arg2[%1688] : memref<528xf32, #tpu.memory_space<smem>>
    %c3_i32_386 = arith.constant 3 : i32
    %1690 = arith.addi %1680, %c3_i32_386 : i32
    %1691 = arith.index_cast %1690 : i32 to index
    %1692 = memref.load %arg2[%1691] : memref<528xf32, #tpu.memory_space<smem>>
    %c4_i32_387 = arith.constant 4 : i32
    %1693 = arith.addi %1680, %c4_i32_387 : i32
    %1694 = arith.index_cast %1693 : i32 to index
    %1695 = memref.load %arg2[%1694] : memref<528xf32, #tpu.memory_space<smem>>
    %c5_i32_388 = arith.constant 5 : i32
    %1696 = arith.addi %1680, %c5_i32_388 : i32
    %1697 = arith.index_cast %1696 : i32 to index
    %1698 = memref.load %arg2[%1697] : memref<528xf32, #tpu.memory_space<smem>>
    %c6_i32_389 = arith.constant 6 : i32
    %1699 = arith.addi %1680, %c6_i32_389 : i32
    %1700 = arith.index_cast %1699 : i32 to index
    %1701 = memref.load %arg2[%1700] : memref<528xf32, #tpu.memory_space<smem>>
    %c7_i32_390 = arith.constant 7 : i32
    %1702 = arith.addi %1680, %c7_i32_390 : i32
    %1703 = arith.index_cast %1702 : i32 to index
    %1704 = memref.load %arg2[%1703] : memref<528xf32, #tpu.memory_space<smem>>
    %c8_i32_391 = arith.constant 8 : i32
    %1705 = arith.addi %1680, %c8_i32_391 : i32
    %1706 = arith.index_cast %1705 : i32 to index
    %1707 = memref.load %arg2[%1706] : memref<528xf32, #tpu.memory_space<smem>>
    %c9_i32_392 = arith.constant 9 : i32
    %1708 = arith.addi %1680, %c9_i32_392 : i32
    %1709 = arith.index_cast %1708 : i32 to index
    %1710 = memref.load %arg2[%1709] : memref<528xf32, #tpu.memory_space<smem>>
    %c10_i32_393 = arith.constant 10 : i32
    %1711 = arith.addi %1680, %c10_i32_393 : i32
    %1712 = arith.index_cast %1711 : i32 to index
    %1713 = memref.load %arg2[%1712] : memref<528xf32, #tpu.memory_space<smem>>
    %1714 = vector.broadcast %1683 : f32 to vector<8x128xf32>
    %1715 = arith.mulf %1714, %0 : vector<8x128xf32>
    %1716 = vector.broadcast %1686 : f32 to vector<8x128xf32>
    %1717 = arith.mulf %1716, %1 : vector<8x128xf32>
    %1718 = arith.addf %1715, %1717 : vector<8x128xf32>
    %1719 = vector.broadcast %1689 : f32 to vector<8x128xf32>
    %1720 = arith.addf %1718, %1719 : vector<8x128xf32>
    %1721 = vector.broadcast %1692 : f32 to vector<8x128xf32>
    %1722 = arith.mulf %1721, %0 : vector<8x128xf32>
    %1723 = vector.broadcast %1695 : f32 to vector<8x128xf32>
    %1724 = arith.mulf %1723, %1 : vector<8x128xf32>
    %1725 = arith.addf %1722, %1724 : vector<8x128xf32>
    %1726 = vector.broadcast %1698 : f32 to vector<8x128xf32>
    %1727 = arith.addf %1725, %1726 : vector<8x128xf32>
    %1728 = vector.broadcast %1701 : f32 to vector<8x128xf32>
    %1729 = arith.mulf %1728, %0 : vector<8x128xf32>
    %1730 = vector.broadcast %1704 : f32 to vector<8x128xf32>
    %1731 = arith.mulf %1730, %1 : vector<8x128xf32>
    %1732 = arith.addf %1729, %1731 : vector<8x128xf32>
    %1733 = vector.broadcast %1707 : f32 to vector<8x128xf32>
    %1734 = arith.addf %1732, %1733 : vector<8x128xf32>
    %cst_394 = arith.constant 1.000000e+00 : f32
    %1735 = vector.broadcast %cst_394 : f32 to vector<8x128xf32>
    %1736 = arith.subf %1735, %1720 : vector<8x128xf32>
    %1737 = arith.subf %1736, %1727 : vector<8x128xf32>
    %cst_395 = arith.constant -9.99999997E-7 : f32
    %1738 = vector.broadcast %cst_395 : f32 to vector<8x128xf32>
    %1739 = arith.cmpf oge, %1720, %1738 : vector<8x128xf32>
    %cst_396 = arith.constant -9.99999997E-7 : f32
    %1740 = vector.broadcast %cst_396 : f32 to vector<8x128xf32>
    %1741 = arith.cmpf oge, %1727, %1740 : vector<8x128xf32>
    %1742 = arith.andi %1739, %1741 : vector<8x128xi1>
    %cst_397 = arith.constant -9.99999997E-7 : f32
    %1743 = vector.broadcast %cst_397 : f32 to vector<8x128xf32>
    %1744 = arith.cmpf oge, %1737, %1743 : vector<8x128xf32>
    %1745 = arith.andi %1742, %1744 : vector<8x128xi1>
    %cst_398 = arith.constant 9.99999997E-7 : f32
    %1746 = vector.broadcast %cst_398 : f32 to vector<8x128xf32>
    %1747 = arith.cmpf ogt, %1734, %1746 : vector<8x128xf32>
    %1748 = arith.andi %1745, %1747 : vector<8x128xi1>
    %1749 = arith.extui %1748 : vector<8x128xi1> to vector<8x128xi32>
    %1750 = arith.sitofp %1749 : vector<8x128xi32> to vector<8x128xf32>
    %1751 = arith.mulf %1750, %1734 : vector<8x128xf32>
    %1752 = vector.broadcast %1710 : f32 to vector<8x128xf32>
    %1753 = arith.mulf %1751, %1752 : vector<8x128xf32>
    %1754 = arith.addf %1675, %1753 : vector<8x128xf32>
    %1755 = vector.broadcast %1713 : f32 to vector<8x128xf32>
    %1756 = arith.mulf %1750, %1755 : vector<8x128xf32>
    %1757 = arith.addf %1678, %1756 : vector<8x128xf32>
    %c10_i32_399 = arith.constant 10 : i32
    %c11_i32_400 = arith.constant 11 : i32
    %1758 = arith.muli %c11_i32_400, %c10_i32_399 : i32
    %1759 = arith.addi %967, %1758 : i32
    %c0_i32_401 = arith.constant 0 : i32
    %1760 = arith.addi %1759, %c0_i32_401 : i32
    %1761 = arith.index_cast %1760 : i32 to index
    %1762 = memref.load %arg2[%1761] : memref<528xf32, #tpu.memory_space<smem>>
    %c1_i32_402 = arith.constant 1 : i32
    %1763 = arith.addi %1759, %c1_i32_402 : i32
    %1764 = arith.index_cast %1763 : i32 to index
    %1765 = memref.load %arg2[%1764] : memref<528xf32, #tpu.memory_space<smem>>
    %c2_i32_403 = arith.constant 2 : i32
    %1766 = arith.addi %1759, %c2_i32_403 : i32
    %1767 = arith.index_cast %1766 : i32 to index
    %1768 = memref.load %arg2[%1767] : memref<528xf32, #tpu.memory_space<smem>>
    %c3_i32_404 = arith.constant 3 : i32
    %1769 = arith.addi %1759, %c3_i32_404 : i32
    %1770 = arith.index_cast %1769 : i32 to index
    %1771 = memref.load %arg2[%1770] : memref<528xf32, #tpu.memory_space<smem>>
    %c4_i32_405 = arith.constant 4 : i32
    %1772 = arith.addi %1759, %c4_i32_405 : i32
    %1773 = arith.index_cast %1772 : i32 to index
    %1774 = memref.load %arg2[%1773] : memref<528xf32, #tpu.memory_space<smem>>
    %c5_i32_406 = arith.constant 5 : i32
    %1775 = arith.addi %1759, %c5_i32_406 : i32
    %1776 = arith.index_cast %1775 : i32 to index
    %1777 = memref.load %arg2[%1776] : memref<528xf32, #tpu.memory_space<smem>>
    %c6_i32_407 = arith.constant 6 : i32
    %1778 = arith.addi %1759, %c6_i32_407 : i32
    %1779 = arith.index_cast %1778 : i32 to index
    %1780 = memref.load %arg2[%1779] : memref<528xf32, #tpu.memory_space<smem>>
    %c7_i32_408 = arith.constant 7 : i32
    %1781 = arith.addi %1759, %c7_i32_408 : i32
    %1782 = arith.index_cast %1781 : i32 to index
    %1783 = memref.load %arg2[%1782] : memref<528xf32, #tpu.memory_space<smem>>
    %c8_i32_409 = arith.constant 8 : i32
    %1784 = arith.addi %1759, %c8_i32_409 : i32
    %1785 = arith.index_cast %1784 : i32 to index
    %1786 = memref.load %arg2[%1785] : memref<528xf32, #tpu.memory_space<smem>>
    %c9_i32_410 = arith.constant 9 : i32
    %1787 = arith.addi %1759, %c9_i32_410 : i32
    %1788 = arith.index_cast %1787 : i32 to index
    %1789 = memref.load %arg2[%1788] : memref<528xf32, #tpu.memory_space<smem>>
    %c10_i32_411 = arith.constant 10 : i32
    %1790 = arith.addi %1759, %c10_i32_411 : i32
    %1791 = arith.index_cast %1790 : i32 to index
    %1792 = memref.load %arg2[%1791] : memref<528xf32, #tpu.memory_space<smem>>
    %1793 = vector.broadcast %1762 : f32 to vector<8x128xf32>
    %1794 = arith.mulf %1793, %0 : vector<8x128xf32>
    %1795 = vector.broadcast %1765 : f32 to vector<8x128xf32>
    %1796 = arith.mulf %1795, %1 : vector<8x128xf32>
    %1797 = arith.addf %1794, %1796 : vector<8x128xf32>
    %1798 = vector.broadcast %1768 : f32 to vector<8x128xf32>
    %1799 = arith.addf %1797, %1798 : vector<8x128xf32>
    %1800 = vector.broadcast %1771 : f32 to vector<8x128xf32>
    %1801 = arith.mulf %1800, %0 : vector<8x128xf32>
    %1802 = vector.broadcast %1774 : f32 to vector<8x128xf32>
    %1803 = arith.mulf %1802, %1 : vector<8x128xf32>
    %1804 = arith.addf %1801, %1803 : vector<8x128xf32>
    %1805 = vector.broadcast %1777 : f32 to vector<8x128xf32>
    %1806 = arith.addf %1804, %1805 : vector<8x128xf32>
    %1807 = vector.broadcast %1780 : f32 to vector<8x128xf32>
    %1808 = arith.mulf %1807, %0 : vector<8x128xf32>
    %1809 = vector.broadcast %1783 : f32 to vector<8x128xf32>
    %1810 = arith.mulf %1809, %1 : vector<8x128xf32>
    %1811 = arith.addf %1808, %1810 : vector<8x128xf32>
    %1812 = vector.broadcast %1786 : f32 to vector<8x128xf32>
    %1813 = arith.addf %1811, %1812 : vector<8x128xf32>
    %cst_412 = arith.constant 1.000000e+00 : f32
    %1814 = vector.broadcast %cst_412 : f32 to vector<8x128xf32>
    %1815 = arith.subf %1814, %1799 : vector<8x128xf32>
    %1816 = arith.subf %1815, %1806 : vector<8x128xf32>
    %cst_413 = arith.constant -9.99999997E-7 : f32
    %1817 = vector.broadcast %cst_413 : f32 to vector<8x128xf32>
    %1818 = arith.cmpf oge, %1799, %1817 : vector<8x128xf32>
    %cst_414 = arith.constant -9.99999997E-7 : f32
    %1819 = vector.broadcast %cst_414 : f32 to vector<8x128xf32>
    %1820 = arith.cmpf oge, %1806, %1819 : vector<8x128xf32>
    %1821 = arith.andi %1818, %1820 : vector<8x128xi1>
    %cst_415 = arith.constant -9.99999997E-7 : f32
    %1822 = vector.broadcast %cst_415 : f32 to vector<8x128xf32>
    %1823 = arith.cmpf oge, %1816, %1822 : vector<8x128xf32>
    %1824 = arith.andi %1821, %1823 : vector<8x128xi1>
    %cst_416 = arith.constant 9.99999997E-7 : f32
    %1825 = vector.broadcast %cst_416 : f32 to vector<8x128xf32>
    %1826 = arith.cmpf ogt, %1813, %1825 : vector<8x128xf32>
    %1827 = arith.andi %1824, %1826 : vector<8x128xi1>
    %1828 = arith.extui %1827 : vector<8x128xi1> to vector<8x128xi32>
    %1829 = arith.sitofp %1828 : vector<8x128xi32> to vector<8x128xf32>
    %1830 = arith.mulf %1829, %1813 : vector<8x128xf32>
    %1831 = vector.broadcast %1789 : f32 to vector<8x128xf32>
    %1832 = arith.mulf %1830, %1831 : vector<8x128xf32>
    %1833 = arith.addf %1754, %1832 : vector<8x128xf32>
    %1834 = vector.broadcast %1792 : f32 to vector<8x128xf32>
    %1835 = arith.mulf %1829, %1834 : vector<8x128xf32>
    %1836 = arith.addf %1757, %1835 : vector<8x128xf32>
    %c11_i32_417 = arith.constant 11 : i32
    %c11_i32_418 = arith.constant 11 : i32
    %1837 = arith.muli %c11_i32_418, %c11_i32_417 : i32
    %1838 = arith.addi %967, %1837 : i32
    %c0_i32_419 = arith.constant 0 : i32
    %1839 = arith.addi %1838, %c0_i32_419 : i32
    %1840 = arith.index_cast %1839 : i32 to index
    %1841 = memref.load %arg2[%1840] : memref<528xf32, #tpu.memory_space<smem>>
    %c1_i32_420 = arith.constant 1 : i32
    %1842 = arith.addi %1838, %c1_i32_420 : i32
    %1843 = arith.index_cast %1842 : i32 to index
    %1844 = memref.load %arg2[%1843] : memref<528xf32, #tpu.memory_space<smem>>
    %c2_i32_421 = arith.constant 2 : i32
    %1845 = arith.addi %1838, %c2_i32_421 : i32
    %1846 = arith.index_cast %1845 : i32 to index
    %1847 = memref.load %arg2[%1846] : memref<528xf32, #tpu.memory_space<smem>>
    %c3_i32_422 = arith.constant 3 : i32
    %1848 = arith.addi %1838, %c3_i32_422 : i32
    %1849 = arith.index_cast %1848 : i32 to index
    %1850 = memref.load %arg2[%1849] : memref<528xf32, #tpu.memory_space<smem>>
    %c4_i32_423 = arith.constant 4 : i32
    %1851 = arith.addi %1838, %c4_i32_423 : i32
    %1852 = arith.index_cast %1851 : i32 to index
    %1853 = memref.load %arg2[%1852] : memref<528xf32, #tpu.memory_space<smem>>
    %c5_i32_424 = arith.constant 5 : i32
    %1854 = arith.addi %1838, %c5_i32_424 : i32
    %1855 = arith.index_cast %1854 : i32 to index
    %1856 = memref.load %arg2[%1855] : memref<528xf32, #tpu.memory_space<smem>>
    %c6_i32_425 = arith.constant 6 : i32
    %1857 = arith.addi %1838, %c6_i32_425 : i32
    %1858 = arith.index_cast %1857 : i32 to index
    %1859 = memref.load %arg2[%1858] : memref<528xf32, #tpu.memory_space<smem>>
    %c7_i32_426 = arith.constant 7 : i32
    %1860 = arith.addi %1838, %c7_i32_426 : i32
    %1861 = arith.index_cast %1860 : i32 to index
    %1862 = memref.load %arg2[%1861] : memref<528xf32, #tpu.memory_space<smem>>
    %c8_i32_427 = arith.constant 8 : i32
    %1863 = arith.addi %1838, %c8_i32_427 : i32
    %1864 = arith.index_cast %1863 : i32 to index
    %1865 = memref.load %arg2[%1864] : memref<528xf32, #tpu.memory_space<smem>>
    %c9_i32_428 = arith.constant 9 : i32
    %1866 = arith.addi %1838, %c9_i32_428 : i32
    %1867 = arith.index_cast %1866 : i32 to index
    %1868 = memref.load %arg2[%1867] : memref<528xf32, #tpu.memory_space<smem>>
    %c10_i32_429 = arith.constant 10 : i32
    %1869 = arith.addi %1838, %c10_i32_429 : i32
    %1870 = arith.index_cast %1869 : i32 to index
    %1871 = memref.load %arg2[%1870] : memref<528xf32, #tpu.memory_space<smem>>
    %1872 = vector.broadcast %1841 : f32 to vector<8x128xf32>
    %1873 = arith.mulf %1872, %0 : vector<8x128xf32>
    %1874 = vector.broadcast %1844 : f32 to vector<8x128xf32>
    %1875 = arith.mulf %1874, %1 : vector<8x128xf32>
    %1876 = arith.addf %1873, %1875 : vector<8x128xf32>
    %1877 = vector.broadcast %1847 : f32 to vector<8x128xf32>
    %1878 = arith.addf %1876, %1877 : vector<8x128xf32>
    %1879 = vector.broadcast %1850 : f32 to vector<8x128xf32>
    %1880 = arith.mulf %1879, %0 : vector<8x128xf32>
    %1881 = vector.broadcast %1853 : f32 to vector<8x128xf32>
    %1882 = arith.mulf %1881, %1 : vector<8x128xf32>
    %1883 = arith.addf %1880, %1882 : vector<8x128xf32>
    %1884 = vector.broadcast %1856 : f32 to vector<8x128xf32>
    %1885 = arith.addf %1883, %1884 : vector<8x128xf32>
    %1886 = vector.broadcast %1859 : f32 to vector<8x128xf32>
    %1887 = arith.mulf %1886, %0 : vector<8x128xf32>
    %1888 = vector.broadcast %1862 : f32 to vector<8x128xf32>
    %1889 = arith.mulf %1888, %1 : vector<8x128xf32>
    %1890 = arith.addf %1887, %1889 : vector<8x128xf32>
    %1891 = vector.broadcast %1865 : f32 to vector<8x128xf32>
    %1892 = arith.addf %1890, %1891 : vector<8x128xf32>
    %cst_430 = arith.constant 1.000000e+00 : f32
    %1893 = vector.broadcast %cst_430 : f32 to vector<8x128xf32>
    %1894 = arith.subf %1893, %1878 : vector<8x128xf32>
    %1895 = arith.subf %1894, %1885 : vector<8x128xf32>
    %cst_431 = arith.constant -9.99999997E-7 : f32
    %1896 = vector.broadcast %cst_431 : f32 to vector<8x128xf32>
    %1897 = arith.cmpf oge, %1878, %1896 : vector<8x128xf32>
    %cst_432 = arith.constant -9.99999997E-7 : f32
    %1898 = vector.broadcast %cst_432 : f32 to vector<8x128xf32>
    %1899 = arith.cmpf oge, %1885, %1898 : vector<8x128xf32>
    %1900 = arith.andi %1897, %1899 : vector<8x128xi1>
    %cst_433 = arith.constant -9.99999997E-7 : f32
    %1901 = vector.broadcast %cst_433 : f32 to vector<8x128xf32>
    %1902 = arith.cmpf oge, %1895, %1901 : vector<8x128xf32>
    %1903 = arith.andi %1900, %1902 : vector<8x128xi1>
    %cst_434 = arith.constant 9.99999997E-7 : f32
    %1904 = vector.broadcast %cst_434 : f32 to vector<8x128xf32>
    %1905 = arith.cmpf ogt, %1892, %1904 : vector<8x128xf32>
    %1906 = arith.andi %1903, %1905 : vector<8x128xi1>
    %1907 = arith.extui %1906 : vector<8x128xi1> to vector<8x128xi32>
    %1908 = arith.sitofp %1907 : vector<8x128xi32> to vector<8x128xf32>
    %1909 = arith.mulf %1908, %1892 : vector<8x128xf32>
    %1910 = vector.broadcast %1868 : f32 to vector<8x128xf32>
    %1911 = arith.mulf %1909, %1910 : vector<8x128xf32>
    %1912 = arith.addf %1833, %1911 : vector<8x128xf32>
    %1913 = vector.broadcast %1871 : f32 to vector<8x128xf32>
    %1914 = arith.mulf %1908, %1913 : vector<8x128xf32>
    %1915 = arith.addf %1836, %1914 : vector<8x128xf32>
    %c12_i32_435 = arith.constant 12 : i32
    %c1 = arith.constant 1 : index
    %c0_436 = arith.constant 0 : index
    %c0_437 = arith.constant 0 : index
    %1916 = vector.load %arg5[%c1, %c0_436, %c0_437] : memref<4x8x128xf32, #tpu.memory_space<vmem>>, vector<1x8x128xf32>
    %1917 = vector.shape_cast %1916 : vector<1x8x128xf32> to vector<8x128xf32>
    %1918 = vector.shape_cast %1912 : vector<8x128xf32> to vector<1x8x128xf32>
    tpu.vector_store %arg5[%c1, %c0_436, %c0_437], %1918 {strides = array<i32>} : memref<4x8x128xf32, #tpu.memory_space<vmem>>, vector<1x8x128xf32>,
    %1919 = math.absf %1915 : vector<8x128xf32>
    %cst_438 = arith.constant 5.000000e-01 : f32
    %1920 = vector.broadcast %cst_438 : f32 to vector<8x128xf32>
    %1921 = arith.cmpf olt, %1919, %1920 : vector<8x128xf32>
    %1922 = arith.extui %1921 : vector<8x128xi1> to vector<8x128xi32>
    %1923 = arith.sitofp %1922 : vector<8x128xi32> to vector<8x128xf32>
    %c1_439 = arith.constant 1 : index
    %c0_440 = arith.constant 0 : index
    %c0_441 = arith.constant 0 : index
    %1924 = vector.load %arg6[%c1_439, %c0_440, %c0_441] : memref<4x8x128xf32, #tpu.memory_space<vmem>>, vector<1x8x128xf32>
    %1925 = vector.shape_cast %1924 : vector<1x8x128xf32> to vector<8x128xf32>
    %1926 = vector.shape_cast %1923 : vector<8x128xf32> to vector<1x8x128xf32>
    tpu.vector_store %arg6[%c1_439, %c0_440, %c0_441], %1926 {strides = array<i32>} : memref<4x8x128xf32, #tpu.memory_space<vmem>>, vector<1x8x128xf32>,
    %c4_i32_442 = arith.constant 4 : i32
    %1927 = arith.muli %arg0, %c4_i32_442 : i32
    %c2_i32_443 = arith.constant 2 : i32
    %1928 = arith.addi %1927, %c2_i32_443 : i32
    %c132_i32_444 = arith.constant 132 : i32
    %1929 = arith.muli %1928, %c132_i32_444 : i32
    %c0_i32_445 = arith.constant 0 : i32
    %c11_i32_446 = arith.constant 11 : i32
    %1930 = arith.muli %c11_i32_446, %c0_i32_445 : i32
    %1931 = arith.addi %1929, %1930 : i32
    %c0_i32_447 = arith.constant 0 : i32
    %1932 = arith.addi %1931, %c0_i32_447 : i32
    %1933 = arith.index_cast %1932 : i32 to index
    %1934 = memref.load %arg2[%1933] : memref<528xf32, #tpu.memory_space<smem>>
    %c1_i32_448 = arith.constant 1 : i32
    %1935 = arith.addi %1931, %c1_i32_448 : i32
    %1936 = arith.index_cast %1935 : i32 to index
    %1937 = memref.load %arg2[%1936] : memref<528xf32, #tpu.memory_space<smem>>
    %c2_i32_449 = arith.constant 2 : i32
    %1938 = arith.addi %1931, %c2_i32_449 : i32
    %1939 = arith.index_cast %1938 : i32 to index
    %1940 = memref.load %arg2[%1939] : memref<528xf32, #tpu.memory_space<smem>>
    %c3_i32_450 = arith.constant 3 : i32
    %1941 = arith.addi %1931, %c3_i32_450 : i32
    %1942 = arith.index_cast %1941 : i32 to index
    %1943 = memref.load %arg2[%1942] : memref<528xf32, #tpu.memory_space<smem>>
    %c4_i32_451 = arith.constant 4 : i32
    %1944 = arith.addi %1931, %c4_i32_451 : i32
    %1945 = arith.index_cast %1944 : i32 to index
    %1946 = memref.load %arg2[%1945] : memref<528xf32, #tpu.memory_space<smem>>
    %c5_i32_452 = arith.constant 5 : i32
    %1947 = arith.addi %1931, %c5_i32_452 : i32
    %1948 = arith.index_cast %1947 : i32 to index
    %1949 = memref.load %arg2[%1948] : memref<528xf32, #tpu.memory_space<smem>>
    %c6_i32_453 = arith.constant 6 : i32
    %1950 = arith.addi %1931, %c6_i32_453 : i32
    %1951 = arith.index_cast %1950 : i32 to index
    %1952 = memref.load %arg2[%1951] : memref<528xf32, #tpu.memory_space<smem>>
    %c7_i32_454 = arith.constant 7 : i32
    %1953 = arith.addi %1931, %c7_i32_454 : i32
    %1954 = arith.index_cast %1953 : i32 to index
    %1955 = memref.load %arg2[%1954] : memref<528xf32, #tpu.memory_space<smem>>
    %c8_i32_455 = arith.constant 8 : i32
    %1956 = arith.addi %1931, %c8_i32_455 : i32
    %1957 = arith.index_cast %1956 : i32 to index
    %1958 = memref.load %arg2[%1957] : memref<528xf32, #tpu.memory_space<smem>>
    %c9_i32_456 = arith.constant 9 : i32
    %1959 = arith.addi %1931, %c9_i32_456 : i32
    %1960 = arith.index_cast %1959 : i32 to index
    %1961 = memref.load %arg2[%1960] : memref<528xf32, #tpu.memory_space<smem>>
    %c10_i32_457 = arith.constant 10 : i32
    %1962 = arith.addi %1931, %c10_i32_457 : i32
    %1963 = arith.index_cast %1962 : i32 to index
    %1964 = memref.load %arg2[%1963] : memref<528xf32, #tpu.memory_space<smem>>
    %1965 = vector.broadcast %1934 : f32 to vector<8x128xf32>
    %1966 = arith.mulf %1965, %0 : vector<8x128xf32>
    %1967 = vector.broadcast %1937 : f32 to vector<8x128xf32>
    %1968 = arith.mulf %1967, %1 : vector<8x128xf32>
    %1969 = arith.addf %1966, %1968 : vector<8x128xf32>
    %1970 = vector.broadcast %1940 : f32 to vector<8x128xf32>
    %1971 = arith.addf %1969, %1970 : vector<8x128xf32>
    %1972 = vector.broadcast %1943 : f32 to vector<8x128xf32>
    %1973 = arith.mulf %1972, %0 : vector<8x128xf32>
    %1974 = vector.broadcast %1946 : f32 to vector<8x128xf32>
    %1975 = arith.mulf %1974, %1 : vector<8x128xf32>
    %1976 = arith.addf %1973, %1975 : vector<8x128xf32>
    %1977 = vector.broadcast %1949 : f32 to vector<8x128xf32>
    %1978 = arith.addf %1976, %1977 : vector<8x128xf32>
    %1979 = vector.broadcast %1952 : f32 to vector<8x128xf32>
    %1980 = arith.mulf %1979, %0 : vector<8x128xf32>
    %1981 = vector.broadcast %1955 : f32 to vector<8x128xf32>
    %1982 = arith.mulf %1981, %1 : vector<8x128xf32>
    %1983 = arith.addf %1980, %1982 : vector<8x128xf32>
    %1984 = vector.broadcast %1958 : f32 to vector<8x128xf32>
    %1985 = arith.addf %1983, %1984 : vector<8x128xf32>
    %cst_458 = arith.constant 1.000000e+00 : f32
    %1986 = vector.broadcast %cst_458 : f32 to vector<8x128xf32>
    %1987 = arith.subf %1986, %1971 : vector<8x128xf32>
    %1988 = arith.subf %1987, %1978 : vector<8x128xf32>
    %cst_459 = arith.constant -9.99999997E-7 : f32
    %1989 = vector.broadcast %cst_459 : f32 to vector<8x128xf32>
    %1990 = arith.cmpf oge, %1971, %1989 : vector<8x128xf32>
    %cst_460 = arith.constant -9.99999997E-7 : f32
    %1991 = vector.broadcast %cst_460 : f32 to vector<8x128xf32>
    %1992 = arith.cmpf oge, %1978, %1991 : vector<8x128xf32>
    %1993 = arith.andi %1990, %1992 : vector<8x128xi1>
    %cst_461 = arith.constant -9.99999997E-7 : f32
    %1994 = vector.broadcast %cst_461 : f32 to vector<8x128xf32>
    %1995 = arith.cmpf oge, %1988, %1994 : vector<8x128xf32>
    %1996 = arith.andi %1993, %1995 : vector<8x128xi1>
    %cst_462 = arith.constant 9.99999997E-7 : f32
    %1997 = vector.broadcast %cst_462 : f32 to vector<8x128xf32>
    %1998 = arith.cmpf ogt, %1985, %1997 : vector<8x128xf32>
    %1999 = arith.andi %1996, %1998 : vector<8x128xi1>
    %2000 = arith.extui %1999 : vector<8x128xi1> to vector<8x128xi32>
    %2001 = arith.sitofp %2000 : vector<8x128xi32> to vector<8x128xf32>
    %2002 = arith.mulf %2001, %1985 : vector<8x128xf32>
    %2003 = vector.broadcast %1961 : f32 to vector<8x128xf32>
    %2004 = arith.mulf %2002, %2003 : vector<8x128xf32>
    %2005 = arith.addf %2, %2004 : vector<8x128xf32>
    %2006 = vector.broadcast %1964 : f32 to vector<8x128xf32>
    %2007 = arith.mulf %2001, %2006 : vector<8x128xf32>
    %2008 = arith.addf %2, %2007 : vector<8x128xf32>
    %c1_i32_463 = arith.constant 1 : i32
    %c11_i32_464 = arith.constant 11 : i32
    %2009 = arith.muli %c11_i32_464, %c1_i32_463 : i32
    %2010 = arith.addi %1929, %2009 : i32
    %c0_i32_465 = arith.constant 0 : i32
    %2011 = arith.addi %2010, %c0_i32_465 : i32
    %2012 = arith.index_cast %2011 : i32 to index
    %2013 = memref.load %arg2[%2012] : memref<528xf32, #tpu.memory_space<smem>>
    %c1_i32_466 = arith.constant 1 : i32
    %2014 = arith.addi %2010, %c1_i32_466 : i32
    %2015 = arith.index_cast %2014 : i32 to index
    %2016 = memref.load %arg2[%2015] : memref<528xf32, #tpu.memory_space<smem>>
    %c2_i32_467 = arith.constant 2 : i32
    %2017 = arith.addi %2010, %c2_i32_467 : i32
    %2018 = arith.index_cast %2017 : i32 to index
    %2019 = memref.load %arg2[%2018] : memref<528xf32, #tpu.memory_space<smem>>
    %c3_i32_468 = arith.constant 3 : i32
    %2020 = arith.addi %2010, %c3_i32_468 : i32
    %2021 = arith.index_cast %2020 : i32 to index
    %2022 = memref.load %arg2[%2021] : memref<528xf32, #tpu.memory_space<smem>>
    %c4_i32_469 = arith.constant 4 : i32
    %2023 = arith.addi %2010, %c4_i32_469 : i32
    %2024 = arith.index_cast %2023 : i32 to index
    %2025 = memref.load %arg2[%2024] : memref<528xf32, #tpu.memory_space<smem>>
    %c5_i32_470 = arith.constant 5 : i32
    %2026 = arith.addi %2010, %c5_i32_470 : i32
    %2027 = arith.index_cast %2026 : i32 to index
    %2028 = memref.load %arg2[%2027] : memref<528xf32, #tpu.memory_space<smem>>
    %c6_i32_471 = arith.constant 6 : i32
    %2029 = arith.addi %2010, %c6_i32_471 : i32
    %2030 = arith.index_cast %2029 : i32 to index
    %2031 = memref.load %arg2[%2030] : memref<528xf32, #tpu.memory_space<smem>>
    %c7_i32_472 = arith.constant 7 : i32
    %2032 = arith.addi %2010, %c7_i32_472 : i32
    %2033 = arith.index_cast %2032 : i32 to index
    %2034 = memref.load %arg2[%2033] : memref<528xf32, #tpu.memory_space<smem>>
    %c8_i32_473 = arith.constant 8 : i32
    %2035 = arith.addi %2010, %c8_i32_473 : i32
    %2036 = arith.index_cast %2035 : i32 to index
    %2037 = memref.load %arg2[%2036] : memref<528xf32, #tpu.memory_space<smem>>
    %c9_i32_474 = arith.constant 9 : i32
    %2038 = arith.addi %2010, %c9_i32_474 : i32
    %2039 = arith.index_cast %2038 : i32 to index
    %2040 = memref.load %arg2[%2039] : memref<528xf32, #tpu.memory_space<smem>>
    %c10_i32_475 = arith.constant 10 : i32
    %2041 = arith.addi %2010, %c10_i32_475 : i32
    %2042 = arith.index_cast %2041 : i32 to index
    %2043 = memref.load %arg2[%2042] : memref<528xf32, #tpu.memory_space<smem>>
    %2044 = vector.broadcast %2013 : f32 to vector<8x128xf32>
    %2045 = arith.mulf %2044, %0 : vector<8x128xf32>
    %2046 = vector.broadcast %2016 : f32 to vector<8x128xf32>
    %2047 = arith.mulf %2046, %1 : vector<8x128xf32>
    %2048 = arith.addf %2045, %2047 : vector<8x128xf32>
    %2049 = vector.broadcast %2019 : f32 to vector<8x128xf32>
    %2050 = arith.addf %2048, %2049 : vector<8x128xf32>
    %2051 = vector.broadcast %2022 : f32 to vector<8x128xf32>
    %2052 = arith.mulf %2051, %0 : vector<8x128xf32>
    %2053 = vector.broadcast %2025 : f32 to vector<8x128xf32>
    %2054 = arith.mulf %2053, %1 : vector<8x128xf32>
    %2055 = arith.addf %2052, %2054 : vector<8x128xf32>
    %2056 = vector.broadcast %2028 : f32 to vector<8x128xf32>
    %2057 = arith.addf %2055, %2056 : vector<8x128xf32>
    %2058 = vector.broadcast %2031 : f32 to vector<8x128xf32>
    %2059 = arith.mulf %2058, %0 : vector<8x128xf32>
    %2060 = vector.broadcast %2034 : f32 to vector<8x128xf32>
    %2061 = arith.mulf %2060, %1 : vector<8x128xf32>
    %2062 = arith.addf %2059, %2061 : vector<8x128xf32>
    %2063 = vector.broadcast %2037 : f32 to vector<8x128xf32>
    %2064 = arith.addf %2062, %2063 : vector<8x128xf32>
    %cst_476 = arith.constant 1.000000e+00 : f32
    %2065 = vector.broadcast %cst_476 : f32 to vector<8x128xf32>
    %2066 = arith.subf %2065, %2050 : vector<8x128xf32>
    %2067 = arith.subf %2066, %2057 : vector<8x128xf32>
    %cst_477 = arith.constant -9.99999997E-7 : f32
    %2068 = vector.broadcast %cst_477 : f32 to vector<8x128xf32>
    %2069 = arith.cmpf oge, %2050, %2068 : vector<8x128xf32>
    %cst_478 = arith.constant -9.99999997E-7 : f32
    %2070 = vector.broadcast %cst_478 : f32 to vector<8x128xf32>
    %2071 = arith.cmpf oge, %2057, %2070 : vector<8x128xf32>
    %2072 = arith.andi %2069, %2071 : vector<8x128xi1>
    %cst_479 = arith.constant -9.99999997E-7 : f32
    %2073 = vector.broadcast %cst_479 : f32 to vector<8x128xf32>
    %2074 = arith.cmpf oge, %2067, %2073 : vector<8x128xf32>
    %2075 = arith.andi %2072, %2074 : vector<8x128xi1>
    %cst_480 = arith.constant 9.99999997E-7 : f32
    %2076 = vector.broadcast %cst_480 : f32 to vector<8x128xf32>
    %2077 = arith.cmpf ogt, %2064, %2076 : vector<8x128xf32>
    %2078 = arith.andi %2075, %2077 : vector<8x128xi1>
    %2079 = arith.extui %2078 : vector<8x128xi1> to vector<8x128xi32>
    %2080 = arith.sitofp %2079 : vector<8x128xi32> to vector<8x128xf32>
    %2081 = arith.mulf %2080, %2064 : vector<8x128xf32>
    %2082 = vector.broadcast %2040 : f32 to vector<8x128xf32>
    %2083 = arith.mulf %2081, %2082 : vector<8x128xf32>
    %2084 = arith.addf %2005, %2083 : vector<8x128xf32>
    %2085 = vector.broadcast %2043 : f32 to vector<8x128xf32>
    %2086 = arith.mulf %2080, %2085 : vector<8x128xf32>
    %2087 = arith.addf %2008, %2086 : vector<8x128xf32>
    %c2_i32_481 = arith.constant 2 : i32
    %c11_i32_482 = arith.constant 11 : i32
    %2088 = arith.muli %c11_i32_482, %c2_i32_481 : i32
    %2089 = arith.addi %1929, %2088 : i32
    %c0_i32_483 = arith.constant 0 : i32
    %2090 = arith.addi %2089, %c0_i32_483 : i32
    %2091 = arith.index_cast %2090 : i32 to index
    %2092 = memref.load %arg2[%2091] : memref<528xf32, #tpu.memory_space<smem>>
    %c1_i32_484 = arith.constant 1 : i32
    %2093 = arith.addi %2089, %c1_i32_484 : i32
    %2094 = arith.index_cast %2093 : i32 to index
    %2095 = memref.load %arg2[%2094] : memref<528xf32, #tpu.memory_space<smem>>
    %c2_i32_485 = arith.constant 2 : i32
    %2096 = arith.addi %2089, %c2_i32_485 : i32
    %2097 = arith.index_cast %2096 : i32 to index
    %2098 = memref.load %arg2[%2097] : memref<528xf32, #tpu.memory_space<smem>>
    %c3_i32_486 = arith.constant 3 : i32
    %2099 = arith.addi %2089, %c3_i32_486 : i32
    %2100 = arith.index_cast %2099 : i32 to index
    %2101 = memref.load %arg2[%2100] : memref<528xf32, #tpu.memory_space<smem>>
    %c4_i32_487 = arith.constant 4 : i32
    %2102 = arith.addi %2089, %c4_i32_487 : i32
    %2103 = arith.index_cast %2102 : i32 to index
    %2104 = memref.load %arg2[%2103] : memref<528xf32, #tpu.memory_space<smem>>
    %c5_i32_488 = arith.constant 5 : i32
    %2105 = arith.addi %2089, %c5_i32_488 : i32
    %2106 = arith.index_cast %2105 : i32 to index
    %2107 = memref.load %arg2[%2106] : memref<528xf32, #tpu.memory_space<smem>>
    %c6_i32_489 = arith.constant 6 : i32
    %2108 = arith.addi %2089, %c6_i32_489 : i32
    %2109 = arith.index_cast %2108 : i32 to index
    %2110 = memref.load %arg2[%2109] : memref<528xf32, #tpu.memory_space<smem>>
    %c7_i32_490 = arith.constant 7 : i32
    %2111 = arith.addi %2089, %c7_i32_490 : i32
    %2112 = arith.index_cast %2111 : i32 to index
    %2113 = memref.load %arg2[%2112] : memref<528xf32, #tpu.memory_space<smem>>
    %c8_i32_491 = arith.constant 8 : i32
    %2114 = arith.addi %2089, %c8_i32_491 : i32
    %2115 = arith.index_cast %2114 : i32 to index
    %2116 = memref.load %arg2[%2115] : memref<528xf32, #tpu.memory_space<smem>>
    %c9_i32_492 = arith.constant 9 : i32
    %2117 = arith.addi %2089, %c9_i32_492 : i32
    %2118 = arith.index_cast %2117 : i32 to index
    %2119 = memref.load %arg2[%2118] : memref<528xf32, #tpu.memory_space<smem>>
    %c10_i32_493 = arith.constant 10 : i32
    %2120 = arith.addi %2089, %c10_i32_493 : i32
    %2121 = arith.index_cast %2120 : i32 to index
    %2122 = memref.load %arg2[%2121] : memref<528xf32, #tpu.memory_space<smem>>
    %2123 = vector.broadcast %2092 : f32 to vector<8x128xf32>
    %2124 = arith.mulf %2123, %0 : vector<8x128xf32>
    %2125 = vector.broadcast %2095 : f32 to vector<8x128xf32>
    %2126 = arith.mulf %2125, %1 : vector<8x128xf32>
    %2127 = arith.addf %2124, %2126 : vector<8x128xf32>
    %2128 = vector.broadcast %2098 : f32 to vector<8x128xf32>
    %2129 = arith.addf %2127, %2128 : vector<8x128xf32>
    %2130 = vector.broadcast %2101 : f32 to vector<8x128xf32>
    %2131 = arith.mulf %2130, %0 : vector<8x128xf32>
    %2132 = vector.broadcast %2104 : f32 to vector<8x128xf32>
    %2133 = arith.mulf %2132, %1 : vector<8x128xf32>
    %2134 = arith.addf %2131, %2133 : vector<8x128xf32>
    %2135 = vector.broadcast %2107 : f32 to vector<8x128xf32>
    %2136 = arith.addf %2134, %2135 : vector<8x128xf32>
    %2137 = vector.broadcast %2110 : f32 to vector<8x128xf32>
    %2138 = arith.mulf %2137, %0 : vector<8x128xf32>
    %2139 = vector.broadcast %2113 : f32 to vector<8x128xf32>
    %2140 = arith.mulf %2139, %1 : vector<8x128xf32>
    %2141 = arith.addf %2138, %2140 : vector<8x128xf32>
    %2142 = vector.broadcast %2116 : f32 to vector<8x128xf32>
    %2143 = arith.addf %2141, %2142 : vector<8x128xf32>
    %cst_494 = arith.constant 1.000000e+00 : f32
    %2144 = vector.broadcast %cst_494 : f32 to vector<8x128xf32>
    %2145 = arith.subf %2144, %2129 : vector<8x128xf32>
    %2146 = arith.subf %2145, %2136 : vector<8x128xf32>
    %cst_495 = arith.constant -9.99999997E-7 : f32
    %2147 = vector.broadcast %cst_495 : f32 to vector<8x128xf32>
    %2148 = arith.cmpf oge, %2129, %2147 : vector<8x128xf32>
    %cst_496 = arith.constant -9.99999997E-7 : f32
    %2149 = vector.broadcast %cst_496 : f32 to vector<8x128xf32>
    %2150 = arith.cmpf oge, %2136, %2149 : vector<8x128xf32>
    %2151 = arith.andi %2148, %2150 : vector<8x128xi1>
    %cst_497 = arith.constant -9.99999997E-7 : f32
    %2152 = vector.broadcast %cst_497 : f32 to vector<8x128xf32>
    %2153 = arith.cmpf oge, %2146, %2152 : vector<8x128xf32>
    %2154 = arith.andi %2151, %2153 : vector<8x128xi1>
    %cst_498 = arith.constant 9.99999997E-7 : f32
    %2155 = vector.broadcast %cst_498 : f32 to vector<8x128xf32>
    %2156 = arith.cmpf ogt, %2143, %2155 : vector<8x128xf32>
    %2157 = arith.andi %2154, %2156 : vector<8x128xi1>
    %2158 = arith.extui %2157 : vector<8x128xi1> to vector<8x128xi32>
    %2159 = arith.sitofp %2158 : vector<8x128xi32> to vector<8x128xf32>
    %2160 = arith.mulf %2159, %2143 : vector<8x128xf32>
    %2161 = vector.broadcast %2119 : f32 to vector<8x128xf32>
    %2162 = arith.mulf %2160, %2161 : vector<8x128xf32>
    %2163 = arith.addf %2084, %2162 : vector<8x128xf32>
    %2164 = vector.broadcast %2122 : f32 to vector<8x128xf32>
    %2165 = arith.mulf %2159, %2164 : vector<8x128xf32>
    %2166 = arith.addf %2087, %2165 : vector<8x128xf32>
    %c3_i32_499 = arith.constant 3 : i32
    %c11_i32_500 = arith.constant 11 : i32
    %2167 = arith.muli %c11_i32_500, %c3_i32_499 : i32
    %2168 = arith.addi %1929, %2167 : i32
    %c0_i32_501 = arith.constant 0 : i32
    %2169 = arith.addi %2168, %c0_i32_501 : i32
    %2170 = arith.index_cast %2169 : i32 to index
    %2171 = memref.load %arg2[%2170] : memref<528xf32, #tpu.memory_space<smem>>
    %c1_i32_502 = arith.constant 1 : i32
    %2172 = arith.addi %2168, %c1_i32_502 : i32
    %2173 = arith.index_cast %2172 : i32 to index
    %2174 = memref.load %arg2[%2173] : memref<528xf32, #tpu.memory_space<smem>>
    %c2_i32_503 = arith.constant 2 : i32
    %2175 = arith.addi %2168, %c2_i32_503 : i32
    %2176 = arith.index_cast %2175 : i32 to index
    %2177 = memref.load %arg2[%2176] : memref<528xf32, #tpu.memory_space<smem>>
    %c3_i32_504 = arith.constant 3 : i32
    %2178 = arith.addi %2168, %c3_i32_504 : i32
    %2179 = arith.index_cast %2178 : i32 to index
    %2180 = memref.load %arg2[%2179] : memref<528xf32, #tpu.memory_space<smem>>
    %c4_i32_505 = arith.constant 4 : i32
    %2181 = arith.addi %2168, %c4_i32_505 : i32
    %2182 = arith.index_cast %2181 : i32 to index
    %2183 = memref.load %arg2[%2182] : memref<528xf32, #tpu.memory_space<smem>>
    %c5_i32_506 = arith.constant 5 : i32
    %2184 = arith.addi %2168, %c5_i32_506 : i32
    %2185 = arith.index_cast %2184 : i32 to index
    %2186 = memref.load %arg2[%2185] : memref<528xf32, #tpu.memory_space<smem>>
    %c6_i32_507 = arith.constant 6 : i32
    %2187 = arith.addi %2168, %c6_i32_507 : i32
    %2188 = arith.index_cast %2187 : i32 to index
    %2189 = memref.load %arg2[%2188] : memref<528xf32, #tpu.memory_space<smem>>
    %c7_i32_508 = arith.constant 7 : i32
    %2190 = arith.addi %2168, %c7_i32_508 : i32
    %2191 = arith.index_cast %2190 : i32 to index
    %2192 = memref.load %arg2[%2191] : memref<528xf32, #tpu.memory_space<smem>>
    %c8_i32_509 = arith.constant 8 : i32
    %2193 = arith.addi %2168, %c8_i32_509 : i32
    %2194 = arith.index_cast %2193 : i32 to index
    %2195 = memref.load %arg2[%2194] : memref<528xf32, #tpu.memory_space<smem>>
    %c9_i32_510 = arith.constant 9 : i32
    %2196 = arith.addi %2168, %c9_i32_510 : i32
    %2197 = arith.index_cast %2196 : i32 to index
    %2198 = memref.load %arg2[%2197] : memref<528xf32, #tpu.memory_space<smem>>
    %c10_i32_511 = arith.constant 10 : i32
    %2199 = arith.addi %2168, %c10_i32_511 : i32
    %2200 = arith.index_cast %2199 : i32 to index
    %2201 = memref.load %arg2[%2200] : memref<528xf32, #tpu.memory_space<smem>>
    %2202 = vector.broadcast %2171 : f32 to vector<8x128xf32>
    %2203 = arith.mulf %2202, %0 : vector<8x128xf32>
    %2204 = vector.broadcast %2174 : f32 to vector<8x128xf32>
    %2205 = arith.mulf %2204, %1 : vector<8x128xf32>
    %2206 = arith.addf %2203, %2205 : vector<8x128xf32>
    %2207 = vector.broadcast %2177 : f32 to vector<8x128xf32>
    %2208 = arith.addf %2206, %2207 : vector<8x128xf32>
    %2209 = vector.broadcast %2180 : f32 to vector<8x128xf32>
    %2210 = arith.mulf %2209, %0 : vector<8x128xf32>
    %2211 = vector.broadcast %2183 : f32 to vector<8x128xf32>
    %2212 = arith.mulf %2211, %1 : vector<8x128xf32>
    %2213 = arith.addf %2210, %2212 : vector<8x128xf32>
    %2214 = vector.broadcast %2186 : f32 to vector<8x128xf32>
    %2215 = arith.addf %2213, %2214 : vector<8x128xf32>
    %2216 = vector.broadcast %2189 : f32 to vector<8x128xf32>
    %2217 = arith.mulf %2216, %0 : vector<8x128xf32>
    %2218 = vector.broadcast %2192 : f32 to vector<8x128xf32>
    %2219 = arith.mulf %2218, %1 : vector<8x128xf32>
    %2220 = arith.addf %2217, %2219 : vector<8x128xf32>
    %2221 = vector.broadcast %2195 : f32 to vector<8x128xf32>
    %2222 = arith.addf %2220, %2221 : vector<8x128xf32>
    %cst_512 = arith.constant 1.000000e+00 : f32
    %2223 = vector.broadcast %cst_512 : f32 to vector<8x128xf32>
    %2224 = arith.subf %2223, %2208 : vector<8x128xf32>
    %2225 = arith.subf %2224, %2215 : vector<8x128xf32>
    %cst_513 = arith.constant -9.99999997E-7 : f32
    %2226 = vector.broadcast %cst_513 : f32 to vector<8x128xf32>
    %2227 = arith.cmpf oge, %2208, %2226 : vector<8x128xf32>
    %cst_514 = arith.constant -9.99999997E-7 : f32
    %2228 = vector.broadcast %cst_514 : f32 to vector<8x128xf32>
    %2229 = arith.cmpf oge, %2215, %2228 : vector<8x128xf32>
    %2230 = arith.andi %2227, %2229 : vector<8x128xi1>
    %cst_515 = arith.constant -9.99999997E-7 : f32
    %2231 = vector.broadcast %cst_515 : f32 to vector<8x128xf32>
    %2232 = arith.cmpf oge, %2225, %2231 : vector<8x128xf32>
    %2233 = arith.andi %2230, %2232 : vector<8x128xi1>
    %cst_516 = arith.constant 9.99999997E-7 : f32
    %2234 = vector.broadcast %cst_516 : f32 to vector<8x128xf32>
    %2235 = arith.cmpf ogt, %2222, %2234 : vector<8x128xf32>
    %2236 = arith.andi %2233, %2235 : vector<8x128xi1>
    %2237 = arith.extui %2236 : vector<8x128xi1> to vector<8x128xi32>
    %2238 = arith.sitofp %2237 : vector<8x128xi32> to vector<8x128xf32>
    %2239 = arith.mulf %2238, %2222 : vector<8x128xf32>
    %2240 = vector.broadcast %2198 : f32 to vector<8x128xf32>
    %2241 = arith.mulf %2239, %2240 : vector<8x128xf32>
    %2242 = arith.addf %2163, %2241 : vector<8x128xf32>
    %2243 = vector.broadcast %2201 : f32 to vector<8x128xf32>
    %2244 = arith.mulf %2238, %2243 : vector<8x128xf32>
    %2245 = arith.addf %2166, %2244 : vector<8x128xf32>
    %c4_i32_517 = arith.constant 4 : i32
    %c11_i32_518 = arith.constant 11 : i32
    %2246 = arith.muli %c11_i32_518, %c4_i32_517 : i32
    %2247 = arith.addi %1929, %2246 : i32
    %c0_i32_519 = arith.constant 0 : i32
    %2248 = arith.addi %2247, %c0_i32_519 : i32
    %2249 = arith.index_cast %2248 : i32 to index
    %2250 = memref.load %arg2[%2249] : memref<528xf32, #tpu.memory_space<smem>>
    %c1_i32_520 = arith.constant 1 : i32
    %2251 = arith.addi %2247, %c1_i32_520 : i32
    %2252 = arith.index_cast %2251 : i32 to index
    %2253 = memref.load %arg2[%2252] : memref<528xf32, #tpu.memory_space<smem>>
    %c2_i32_521 = arith.constant 2 : i32
    %2254 = arith.addi %2247, %c2_i32_521 : i32
    %2255 = arith.index_cast %2254 : i32 to index
    %2256 = memref.load %arg2[%2255] : memref<528xf32, #tpu.memory_space<smem>>
    %c3_i32_522 = arith.constant 3 : i32
    %2257 = arith.addi %2247, %c3_i32_522 : i32
    %2258 = arith.index_cast %2257 : i32 to index
    %2259 = memref.load %arg2[%2258] : memref<528xf32, #tpu.memory_space<smem>>
    %c4_i32_523 = arith.constant 4 : i32
    %2260 = arith.addi %2247, %c4_i32_523 : i32
    %2261 = arith.index_cast %2260 : i32 to index
    %2262 = memref.load %arg2[%2261] : memref<528xf32, #tpu.memory_space<smem>>
    %c5_i32_524 = arith.constant 5 : i32
    %2263 = arith.addi %2247, %c5_i32_524 : i32
    %2264 = arith.index_cast %2263 : i32 to index
    %2265 = memref.load %arg2[%2264] : memref<528xf32, #tpu.memory_space<smem>>
    %c6_i32_525 = arith.constant 6 : i32
    %2266 = arith.addi %2247, %c6_i32_525 : i32
    %2267 = arith.index_cast %2266 : i32 to index
    %2268 = memref.load %arg2[%2267] : memref<528xf32, #tpu.memory_space<smem>>
    %c7_i32_526 = arith.constant 7 : i32
    %2269 = arith.addi %2247, %c7_i32_526 : i32
    %2270 = arith.index_cast %2269 : i32 to index
    %2271 = memref.load %arg2[%2270] : memref<528xf32, #tpu.memory_space<smem>>
    %c8_i32_527 = arith.constant 8 : i32
    %2272 = arith.addi %2247, %c8_i32_527 : i32
    %2273 = arith.index_cast %2272 : i32 to index
    %2274 = memref.load %arg2[%2273] : memref<528xf32, #tpu.memory_space<smem>>
    %c9_i32_528 = arith.constant 9 : i32
    %2275 = arith.addi %2247, %c9_i32_528 : i32
    %2276 = arith.index_cast %2275 : i32 to index
    %2277 = memref.load %arg2[%2276] : memref<528xf32, #tpu.memory_space<smem>>
    %c10_i32_529 = arith.constant 10 : i32
    %2278 = arith.addi %2247, %c10_i32_529 : i32
    %2279 = arith.index_cast %2278 : i32 to index
    %2280 = memref.load %arg2[%2279] : memref<528xf32, #tpu.memory_space<smem>>
    %2281 = vector.broadcast %2250 : f32 to vector<8x128xf32>
    %2282 = arith.mulf %2281, %0 : vector<8x128xf32>
    %2283 = vector.broadcast %2253 : f32 to vector<8x128xf32>
    %2284 = arith.mulf %2283, %1 : vector<8x128xf32>
    %2285 = arith.addf %2282, %2284 : vector<8x128xf32>
    %2286 = vector.broadcast %2256 : f32 to vector<8x128xf32>
    %2287 = arith.addf %2285, %2286 : vector<8x128xf32>
    %2288 = vector.broadcast %2259 : f32 to vector<8x128xf32>
    %2289 = arith.mulf %2288, %0 : vector<8x128xf32>
    %2290 = vector.broadcast %2262 : f32 to vector<8x128xf32>
    %2291 = arith.mulf %2290, %1 : vector<8x128xf32>
    %2292 = arith.addf %2289, %2291 : vector<8x128xf32>
    %2293 = vector.broadcast %2265 : f32 to vector<8x128xf32>
    %2294 = arith.addf %2292, %2293 : vector<8x128xf32>
    %2295 = vector.broadcast %2268 : f32 to vector<8x128xf32>
    %2296 = arith.mulf %2295, %0 : vector<8x128xf32>
    %2297 = vector.broadcast %2271 : f32 to vector<8x128xf32>
    %2298 = arith.mulf %2297, %1 : vector<8x128xf32>
    %2299 = arith.addf %2296, %2298 : vector<8x128xf32>
    %2300 = vector.broadcast %2274 : f32 to vector<8x128xf32>
    %2301 = arith.addf %2299, %2300 : vector<8x128xf32>
    %cst_530 = arith.constant 1.000000e+00 : f32
    %2302 = vector.broadcast %cst_530 : f32 to vector<8x128xf32>
    %2303 = arith.subf %2302, %2287 : vector<8x128xf32>
    %2304 = arith.subf %2303, %2294 : vector<8x128xf32>
    %cst_531 = arith.constant -9.99999997E-7 : f32
    %2305 = vector.broadcast %cst_531 : f32 to vector<8x128xf32>
    %2306 = arith.cmpf oge, %2287, %2305 : vector<8x128xf32>
    %cst_532 = arith.constant -9.99999997E-7 : f32
    %2307 = vector.broadcast %cst_532 : f32 to vector<8x128xf32>
    %2308 = arith.cmpf oge, %2294, %2307 : vector<8x128xf32>
    %2309 = arith.andi %2306, %2308 : vector<8x128xi1>
    %cst_533 = arith.constant -9.99999997E-7 : f32
    %2310 = vector.broadcast %cst_533 : f32 to vector<8x128xf32>
    %2311 = arith.cmpf oge, %2304, %2310 : vector<8x128xf32>
    %2312 = arith.andi %2309, %2311 : vector<8x128xi1>
    %cst_534 = arith.constant 9.99999997E-7 : f32
    %2313 = vector.broadcast %cst_534 : f32 to vector<8x128xf32>
    %2314 = arith.cmpf ogt, %2301, %2313 : vector<8x128xf32>
    %2315 = arith.andi %2312, %2314 : vector<8x128xi1>
    %2316 = arith.extui %2315 : vector<8x128xi1> to vector<8x128xi32>
    %2317 = arith.sitofp %2316 : vector<8x128xi32> to vector<8x128xf32>
    %2318 = arith.mulf %2317, %2301 : vector<8x128xf32>
    %2319 = vector.broadcast %2277 : f32 to vector<8x128xf32>
    %2320 = arith.mulf %2318, %2319 : vector<8x128xf32>
    %2321 = arith.addf %2242, %2320 : vector<8x128xf32>
    %2322 = vector.broadcast %2280 : f32 to vector<8x128xf32>
    %2323 = arith.mulf %2317, %2322 : vector<8x128xf32>
    %2324 = arith.addf %2245, %2323 : vector<8x128xf32>
    %c5_i32_535 = arith.constant 5 : i32
    %c11_i32_536 = arith.constant 11 : i32
    %2325 = arith.muli %c11_i32_536, %c5_i32_535 : i32
    %2326 = arith.addi %1929, %2325 : i32
    %c0_i32_537 = arith.constant 0 : i32
    %2327 = arith.addi %2326, %c0_i32_537 : i32
    %2328 = arith.index_cast %2327 : i32 to index
    %2329 = memref.load %arg2[%2328] : memref<528xf32, #tpu.memory_space<smem>>
    %c1_i32_538 = arith.constant 1 : i32
    %2330 = arith.addi %2326, %c1_i32_538 : i32
    %2331 = arith.index_cast %2330 : i32 to index
    %2332 = memref.load %arg2[%2331] : memref<528xf32, #tpu.memory_space<smem>>
    %c2_i32_539 = arith.constant 2 : i32
    %2333 = arith.addi %2326, %c2_i32_539 : i32
    %2334 = arith.index_cast %2333 : i32 to index
    %2335 = memref.load %arg2[%2334] : memref<528xf32, #tpu.memory_space<smem>>
    %c3_i32_540 = arith.constant 3 : i32
    %2336 = arith.addi %2326, %c3_i32_540 : i32
    %2337 = arith.index_cast %2336 : i32 to index
    %2338 = memref.load %arg2[%2337] : memref<528xf32, #tpu.memory_space<smem>>
    %c4_i32_541 = arith.constant 4 : i32
    %2339 = arith.addi %2326, %c4_i32_541 : i32
    %2340 = arith.index_cast %2339 : i32 to index
    %2341 = memref.load %arg2[%2340] : memref<528xf32, #tpu.memory_space<smem>>
    %c5_i32_542 = arith.constant 5 : i32
    %2342 = arith.addi %2326, %c5_i32_542 : i32
    %2343 = arith.index_cast %2342 : i32 to index
    %2344 = memref.load %arg2[%2343] : memref<528xf32, #tpu.memory_space<smem>>
    %c6_i32_543 = arith.constant 6 : i32
    %2345 = arith.addi %2326, %c6_i32_543 : i32
    %2346 = arith.index_cast %2345 : i32 to index
    %2347 = memref.load %arg2[%2346] : memref<528xf32, #tpu.memory_space<smem>>
    %c7_i32_544 = arith.constant 7 : i32
    %2348 = arith.addi %2326, %c7_i32_544 : i32
    %2349 = arith.index_cast %2348 : i32 to index
    %2350 = memref.load %arg2[%2349] : memref<528xf32, #tpu.memory_space<smem>>
    %c8_i32_545 = arith.constant 8 : i32
    %2351 = arith.addi %2326, %c8_i32_545 : i32
    %2352 = arith.index_cast %2351 : i32 to index
    %2353 = memref.load %arg2[%2352] : memref<528xf32, #tpu.memory_space<smem>>
    %c9_i32_546 = arith.constant 9 : i32
    %2354 = arith.addi %2326, %c9_i32_546 : i32
    %2355 = arith.index_cast %2354 : i32 to index
    %2356 = memref.load %arg2[%2355] : memref<528xf32, #tpu.memory_space<smem>>
    %c10_i32_547 = arith.constant 10 : i32
    %2357 = arith.addi %2326, %c10_i32_547 : i32
    %2358 = arith.index_cast %2357 : i32 to index
    %2359 = memref.load %arg2[%2358] : memref<528xf32, #tpu.memory_space<smem>>
    %2360 = vector.broadcast %2329 : f32 to vector<8x128xf32>
    %2361 = arith.mulf %2360, %0 : vector<8x128xf32>
    %2362 = vector.broadcast %2332 : f32 to vector<8x128xf32>
    %2363 = arith.mulf %2362, %1 : vector<8x128xf32>
    %2364 = arith.addf %2361, %2363 : vector<8x128xf32>
    %2365 = vector.broadcast %2335 : f32 to vector<8x128xf32>
    %2366 = arith.addf %2364, %2365 : vector<8x128xf32>
    %2367 = vector.broadcast %2338 : f32 to vector<8x128xf32>
    %2368 = arith.mulf %2367, %0 : vector<8x128xf32>
    %2369 = vector.broadcast %2341 : f32 to vector<8x128xf32>
    %2370 = arith.mulf %2369, %1 : vector<8x128xf32>
    %2371 = arith.addf %2368, %2370 : vector<8x128xf32>
    %2372 = vector.broadcast %2344 : f32 to vector<8x128xf32>
    %2373 = arith.addf %2371, %2372 : vector<8x128xf32>
    %2374 = vector.broadcast %2347 : f32 to vector<8x128xf32>
    %2375 = arith.mulf %2374, %0 : vector<8x128xf32>
    %2376 = vector.broadcast %2350 : f32 to vector<8x128xf32>
    %2377 = arith.mulf %2376, %1 : vector<8x128xf32>
    %2378 = arith.addf %2375, %2377 : vector<8x128xf32>
    %2379 = vector.broadcast %2353 : f32 to vector<8x128xf32>
    %2380 = arith.addf %2378, %2379 : vector<8x128xf32>
    %cst_548 = arith.constant 1.000000e+00 : f32
    %2381 = vector.broadcast %cst_548 : f32 to vector<8x128xf32>
    %2382 = arith.subf %2381, %2366 : vector<8x128xf32>
    %2383 = arith.subf %2382, %2373 : vector<8x128xf32>
    %cst_549 = arith.constant -9.99999997E-7 : f32
    %2384 = vector.broadcast %cst_549 : f32 to vector<8x128xf32>
    %2385 = arith.cmpf oge, %2366, %2384 : vector<8x128xf32>
    %cst_550 = arith.constant -9.99999997E-7 : f32
    %2386 = vector.broadcast %cst_550 : f32 to vector<8x128xf32>
    %2387 = arith.cmpf oge, %2373, %2386 : vector<8x128xf32>
    %2388 = arith.andi %2385, %2387 : vector<8x128xi1>
    %cst_551 = arith.constant -9.99999997E-7 : f32
    %2389 = vector.broadcast %cst_551 : f32 to vector<8x128xf32>
    %2390 = arith.cmpf oge, %2383, %2389 : vector<8x128xf32>
    %2391 = arith.andi %2388, %2390 : vector<8x128xi1>
    %cst_552 = arith.constant 9.99999997E-7 : f32
    %2392 = vector.broadcast %cst_552 : f32 to vector<8x128xf32>
    %2393 = arith.cmpf ogt, %2380, %2392 : vector<8x128xf32>
    %2394 = arith.andi %2391, %2393 : vector<8x128xi1>
    %2395 = arith.extui %2394 : vector<8x128xi1> to vector<8x128xi32>
    %2396 = arith.sitofp %2395 : vector<8x128xi32> to vector<8x128xf32>
    %2397 = arith.mulf %2396, %2380 : vector<8x128xf32>
    %2398 = vector.broadcast %2356 : f32 to vector<8x128xf32>
    %2399 = arith.mulf %2397, %2398 : vector<8x128xf32>
    %2400 = arith.addf %2321, %2399 : vector<8x128xf32>
    %2401 = vector.broadcast %2359 : f32 to vector<8x128xf32>
    %2402 = arith.mulf %2396, %2401 : vector<8x128xf32>
    %2403 = arith.addf %2324, %2402 : vector<8x128xf32>
    %c6_i32_553 = arith.constant 6 : i32
    %c11_i32_554 = arith.constant 11 : i32
    %2404 = arith.muli %c11_i32_554, %c6_i32_553 : i32
    %2405 = arith.addi %1929, %2404 : i32
    %c0_i32_555 = arith.constant 0 : i32
    %2406 = arith.addi %2405, %c0_i32_555 : i32
    %2407 = arith.index_cast %2406 : i32 to index
    %2408 = memref.load %arg2[%2407] : memref<528xf32, #tpu.memory_space<smem>>
    %c1_i32_556 = arith.constant 1 : i32
    %2409 = arith.addi %2405, %c1_i32_556 : i32
    %2410 = arith.index_cast %2409 : i32 to index
    %2411 = memref.load %arg2[%2410] : memref<528xf32, #tpu.memory_space<smem>>
    %c2_i32_557 = arith.constant 2 : i32
    %2412 = arith.addi %2405, %c2_i32_557 : i32
    %2413 = arith.index_cast %2412 : i32 to index
    %2414 = memref.load %arg2[%2413] : memref<528xf32, #tpu.memory_space<smem>>
    %c3_i32_558 = arith.constant 3 : i32
    %2415 = arith.addi %2405, %c3_i32_558 : i32
    %2416 = arith.index_cast %2415 : i32 to index
    %2417 = memref.load %arg2[%2416] : memref<528xf32, #tpu.memory_space<smem>>
    %c4_i32_559 = arith.constant 4 : i32
    %2418 = arith.addi %2405, %c4_i32_559 : i32
    %2419 = arith.index_cast %2418 : i32 to index
    %2420 = memref.load %arg2[%2419] : memref<528xf32, #tpu.memory_space<smem>>
    %c5_i32_560 = arith.constant 5 : i32
    %2421 = arith.addi %2405, %c5_i32_560 : i32
    %2422 = arith.index_cast %2421 : i32 to index
    %2423 = memref.load %arg2[%2422] : memref<528xf32, #tpu.memory_space<smem>>
    %c6_i32_561 = arith.constant 6 : i32
    %2424 = arith.addi %2405, %c6_i32_561 : i32
    %2425 = arith.index_cast %2424 : i32 to index
    %2426 = memref.load %arg2[%2425] : memref<528xf32, #tpu.memory_space<smem>>
    %c7_i32_562 = arith.constant 7 : i32
    %2427 = arith.addi %2405, %c7_i32_562 : i32
    %2428 = arith.index_cast %2427 : i32 to index
    %2429 = memref.load %arg2[%2428] : memref<528xf32, #tpu.memory_space<smem>>
    %c8_i32_563 = arith.constant 8 : i32
    %2430 = arith.addi %2405, %c8_i32_563 : i32
    %2431 = arith.index_cast %2430 : i32 to index
    %2432 = memref.load %arg2[%2431] : memref<528xf32, #tpu.memory_space<smem>>
    %c9_i32_564 = arith.constant 9 : i32
    %2433 = arith.addi %2405, %c9_i32_564 : i32
    %2434 = arith.index_cast %2433 : i32 to index
    %2435 = memref.load %arg2[%2434] : memref<528xf32, #tpu.memory_space<smem>>
    %c10_i32_565 = arith.constant 10 : i32
    %2436 = arith.addi %2405, %c10_i32_565 : i32
    %2437 = arith.index_cast %2436 : i32 to index
    %2438 = memref.load %arg2[%2437] : memref<528xf32, #tpu.memory_space<smem>>
    %2439 = vector.broadcast %2408 : f32 to vector<8x128xf32>
    %2440 = arith.mulf %2439, %0 : vector<8x128xf32>
    %2441 = vector.broadcast %2411 : f32 to vector<8x128xf32>
    %2442 = arith.mulf %2441, %1 : vector<8x128xf32>
    %2443 = arith.addf %2440, %2442 : vector<8x128xf32>
    %2444 = vector.broadcast %2414 : f32 to vector<8x128xf32>
    %2445 = arith.addf %2443, %2444 : vector<8x128xf32>
    %2446 = vector.broadcast %2417 : f32 to vector<8x128xf32>
    %2447 = arith.mulf %2446, %0 : vector<8x128xf32>
    %2448 = vector.broadcast %2420 : f32 to vector<8x128xf32>
    %2449 = arith.mulf %2448, %1 : vector<8x128xf32>
    %2450 = arith.addf %2447, %2449 : vector<8x128xf32>
    %2451 = vector.broadcast %2423 : f32 to vector<8x128xf32>
    %2452 = arith.addf %2450, %2451 : vector<8x128xf32>
    %2453 = vector.broadcast %2426 : f32 to vector<8x128xf32>
    %2454 = arith.mulf %2453, %0 : vector<8x128xf32>
    %2455 = vector.broadcast %2429 : f32 to vector<8x128xf32>
    %2456 = arith.mulf %2455, %1 : vector<8x128xf32>
    %2457 = arith.addf %2454, %2456 : vector<8x128xf32>
    %2458 = vector.broadcast %2432 : f32 to vector<8x128xf32>
    %2459 = arith.addf %2457, %2458 : vector<8x128xf32>
    %cst_566 = arith.constant 1.000000e+00 : f32
    %2460 = vector.broadcast %cst_566 : f32 to vector<8x128xf32>
    %2461 = arith.subf %2460, %2445 : vector<8x128xf32>
    %2462 = arith.subf %2461, %2452 : vector<8x128xf32>
    %cst_567 = arith.constant -9.99999997E-7 : f32
    %2463 = vector.broadcast %cst_567 : f32 to vector<8x128xf32>
    %2464 = arith.cmpf oge, %2445, %2463 : vector<8x128xf32>
    %cst_568 = arith.constant -9.99999997E-7 : f32
    %2465 = vector.broadcast %cst_568 : f32 to vector<8x128xf32>
    %2466 = arith.cmpf oge, %2452, %2465 : vector<8x128xf32>
    %2467 = arith.andi %2464, %2466 : vector<8x128xi1>
    %cst_569 = arith.constant -9.99999997E-7 : f32
    %2468 = vector.broadcast %cst_569 : f32 to vector<8x128xf32>
    %2469 = arith.cmpf oge, %2462, %2468 : vector<8x128xf32>
    %2470 = arith.andi %2467, %2469 : vector<8x128xi1>
    %cst_570 = arith.constant 9.99999997E-7 : f32
    %2471 = vector.broadcast %cst_570 : f32 to vector<8x128xf32>
    %2472 = arith.cmpf ogt, %2459, %2471 : vector<8x128xf32>
    %2473 = arith.andi %2470, %2472 : vector<8x128xi1>
    %2474 = arith.extui %2473 : vector<8x128xi1> to vector<8x128xi32>
    %2475 = arith.sitofp %2474 : vector<8x128xi32> to vector<8x128xf32>
    %2476 = arith.mulf %2475, %2459 : vector<8x128xf32>
    %2477 = vector.broadcast %2435 : f32 to vector<8x128xf32>
    %2478 = arith.mulf %2476, %2477 : vector<8x128xf32>
    %2479 = arith.addf %2400, %2478 : vector<8x128xf32>
    %2480 = vector.broadcast %2438 : f32 to vector<8x128xf32>
    %2481 = arith.mulf %2475, %2480 : vector<8x128xf32>
    %2482 = arith.addf %2403, %2481 : vector<8x128xf32>
    %c7_i32_571 = arith.constant 7 : i32
    %c11_i32_572 = arith.constant 11 : i32
    %2483 = arith.muli %c11_i32_572, %c7_i32_571 : i32
    %2484 = arith.addi %1929, %2483 : i32
    %c0_i32_573 = arith.constant 0 : i32
    %2485 = arith.addi %2484, %c0_i32_573 : i32
    %2486 = arith.index_cast %2485 : i32 to index
    %2487 = memref.load %arg2[%2486] : memref<528xf32, #tpu.memory_space<smem>>
    %c1_i32_574 = arith.constant 1 : i32
    %2488 = arith.addi %2484, %c1_i32_574 : i32
    %2489 = arith.index_cast %2488 : i32 to index
    %2490 = memref.load %arg2[%2489] : memref<528xf32, #tpu.memory_space<smem>>
    %c2_i32_575 = arith.constant 2 : i32
    %2491 = arith.addi %2484, %c2_i32_575 : i32
    %2492 = arith.index_cast %2491 : i32 to index
    %2493 = memref.load %arg2[%2492] : memref<528xf32, #tpu.memory_space<smem>>
    %c3_i32_576 = arith.constant 3 : i32
    %2494 = arith.addi %2484, %c3_i32_576 : i32
    %2495 = arith.index_cast %2494 : i32 to index
    %2496 = memref.load %arg2[%2495] : memref<528xf32, #tpu.memory_space<smem>>
    %c4_i32_577 = arith.constant 4 : i32
    %2497 = arith.addi %2484, %c4_i32_577 : i32
    %2498 = arith.index_cast %2497 : i32 to index
    %2499 = memref.load %arg2[%2498] : memref<528xf32, #tpu.memory_space<smem>>
    %c5_i32_578 = arith.constant 5 : i32
    %2500 = arith.addi %2484, %c5_i32_578 : i32
    %2501 = arith.index_cast %2500 : i32 to index
    %2502 = memref.load %arg2[%2501] : memref<528xf32, #tpu.memory_space<smem>>
    %c6_i32_579 = arith.constant 6 : i32
    %2503 = arith.addi %2484, %c6_i32_579 : i32
    %2504 = arith.index_cast %2503 : i32 to index
    %2505 = memref.load %arg2[%2504] : memref<528xf32, #tpu.memory_space<smem>>
    %c7_i32_580 = arith.constant 7 : i32
    %2506 = arith.addi %2484, %c7_i32_580 : i32
    %2507 = arith.index_cast %2506 : i32 to index
    %2508 = memref.load %arg2[%2507] : memref<528xf32, #tpu.memory_space<smem>>
    %c8_i32_581 = arith.constant 8 : i32
    %2509 = arith.addi %2484, %c8_i32_581 : i32
    %2510 = arith.index_cast %2509 : i32 to index
    %2511 = memref.load %arg2[%2510] : memref<528xf32, #tpu.memory_space<smem>>
    %c9_i32_582 = arith.constant 9 : i32
    %2512 = arith.addi %2484, %c9_i32_582 : i32
    %2513 = arith.index_cast %2512 : i32 to index
    %2514 = memref.load %arg2[%2513] : memref<528xf32, #tpu.memory_space<smem>>
    %c10_i32_583 = arith.constant 10 : i32
    %2515 = arith.addi %2484, %c10_i32_583 : i32
    %2516 = arith.index_cast %2515 : i32 to index
    %2517 = memref.load %arg2[%2516] : memref<528xf32, #tpu.memory_space<smem>>
    %2518 = vector.broadcast %2487 : f32 to vector<8x128xf32>
    %2519 = arith.mulf %2518, %0 : vector<8x128xf32>
    %2520 = vector.broadcast %2490 : f32 to vector<8x128xf32>
    %2521 = arith.mulf %2520, %1 : vector<8x128xf32>
    %2522 = arith.addf %2519, %2521 : vector<8x128xf32>
    %2523 = vector.broadcast %2493 : f32 to vector<8x128xf32>
    %2524 = arith.addf %2522, %2523 : vector<8x128xf32>
    %2525 = vector.broadcast %2496 : f32 to vector<8x128xf32>
    %2526 = arith.mulf %2525, %0 : vector<8x128xf32>
    %2527 = vector.broadcast %2499 : f32 to vector<8x128xf32>
    %2528 = arith.mulf %2527, %1 : vector<8x128xf32>
    %2529 = arith.addf %2526, %2528 : vector<8x128xf32>
    %2530 = vector.broadcast %2502 : f32 to vector<8x128xf32>
    %2531 = arith.addf %2529, %2530 : vector<8x128xf32>
    %2532 = vector.broadcast %2505 : f32 to vector<8x128xf32>
    %2533 = arith.mulf %2532, %0 : vector<8x128xf32>
    %2534 = vector.broadcast %2508 : f32 to vector<8x128xf32>
    %2535 = arith.mulf %2534, %1 : vector<8x128xf32>
    %2536 = arith.addf %2533, %2535 : vector<8x128xf32>
    %2537 = vector.broadcast %2511 : f32 to vector<8x128xf32>
    %2538 = arith.addf %2536, %2537 : vector<8x128xf32>
    %cst_584 = arith.constant 1.000000e+00 : f32
    %2539 = vector.broadcast %cst_584 : f32 to vector<8x128xf32>
    %2540 = arith.subf %2539, %2524 : vector<8x128xf32>
    %2541 = arith.subf %2540, %2531 : vector<8x128xf32>
    %cst_585 = arith.constant -9.99999997E-7 : f32
    %2542 = vector.broadcast %cst_585 : f32 to vector<8x128xf32>
    %2543 = arith.cmpf oge, %2524, %2542 : vector<8x128xf32>
    %cst_586 = arith.constant -9.99999997E-7 : f32
    %2544 = vector.broadcast %cst_586 : f32 to vector<8x128xf32>
    %2545 = arith.cmpf oge, %2531, %2544 : vector<8x128xf32>
    %2546 = arith.andi %2543, %2545 : vector<8x128xi1>
    %cst_587 = arith.constant -9.99999997E-7 : f32
    %2547 = vector.broadcast %cst_587 : f32 to vector<8x128xf32>
    %2548 = arith.cmpf oge, %2541, %2547 : vector<8x128xf32>
    %2549 = arith.andi %2546, %2548 : vector<8x128xi1>
    %cst_588 = arith.constant 9.99999997E-7 : f32
    %2550 = vector.broadcast %cst_588 : f32 to vector<8x128xf32>
    %2551 = arith.cmpf ogt, %2538, %2550 : vector<8x128xf32>
    %2552 = arith.andi %2549, %2551 : vector<8x128xi1>
    %2553 = arith.extui %2552 : vector<8x128xi1> to vector<8x128xi32>
    %2554 = arith.sitofp %2553 : vector<8x128xi32> to vector<8x128xf32>
    %2555 = arith.mulf %2554, %2538 : vector<8x128xf32>
    %2556 = vector.broadcast %2514 : f32 to vector<8x128xf32>
    %2557 = arith.mulf %2555, %2556 : vector<8x128xf32>
    %2558 = arith.addf %2479, %2557 : vector<8x128xf32>
    %2559 = vector.broadcast %2517 : f32 to vector<8x128xf32>
    %2560 = arith.mulf %2554, %2559 : vector<8x128xf32>
    %2561 = arith.addf %2482, %2560 : vector<8x128xf32>
    %c8_i32_589 = arith.constant 8 : i32
    %c11_i32_590 = arith.constant 11 : i32
    %2562 = arith.muli %c11_i32_590, %c8_i32_589 : i32
    %2563 = arith.addi %1929, %2562 : i32
    %c0_i32_591 = arith.constant 0 : i32
    %2564 = arith.addi %2563, %c0_i32_591 : i32
    %2565 = arith.index_cast %2564 : i32 to index
    %2566 = memref.load %arg2[%2565] : memref<528xf32, #tpu.memory_space<smem>>
    %c1_i32_592 = arith.constant 1 : i32
    %2567 = arith.addi %2563, %c1_i32_592 : i32
    %2568 = arith.index_cast %2567 : i32 to index
    %2569 = memref.load %arg2[%2568] : memref<528xf32, #tpu.memory_space<smem>>
    %c2_i32_593 = arith.constant 2 : i32
    %2570 = arith.addi %2563, %c2_i32_593 : i32
    %2571 = arith.index_cast %2570 : i32 to index
    %2572 = memref.load %arg2[%2571] : memref<528xf32, #tpu.memory_space<smem>>
    %c3_i32_594 = arith.constant 3 : i32
    %2573 = arith.addi %2563, %c3_i32_594 : i32
    %2574 = arith.index_cast %2573 : i32 to index
    %2575 = memref.load %arg2[%2574] : memref<528xf32, #tpu.memory_space<smem>>
    %c4_i32_595 = arith.constant 4 : i32
    %2576 = arith.addi %2563, %c4_i32_595 : i32
    %2577 = arith.index_cast %2576 : i32 to index
    %2578 = memref.load %arg2[%2577] : memref<528xf32, #tpu.memory_space<smem>>
    %c5_i32_596 = arith.constant 5 : i32
    %2579 = arith.addi %2563, %c5_i32_596 : i32
    %2580 = arith.index_cast %2579 : i32 to index
    %2581 = memref.load %arg2[%2580] : memref<528xf32, #tpu.memory_space<smem>>
    %c6_i32_597 = arith.constant 6 : i32
    %2582 = arith.addi %2563, %c6_i32_597 : i32
    %2583 = arith.index_cast %2582 : i32 to index
    %2584 = memref.load %arg2[%2583] : memref<528xf32, #tpu.memory_space<smem>>
    %c7_i32_598 = arith.constant 7 : i32
    %2585 = arith.addi %2563, %c7_i32_598 : i32
    %2586 = arith.index_cast %2585 : i32 to index
    %2587 = memref.load %arg2[%2586] : memref<528xf32, #tpu.memory_space<smem>>
    %c8_i32_599 = arith.constant 8 : i32
    %2588 = arith.addi %2563, %c8_i32_599 : i32
    %2589 = arith.index_cast %2588 : i32 to index
    %2590 = memref.load %arg2[%2589] : memref<528xf32, #tpu.memory_space<smem>>
    %c9_i32_600 = arith.constant 9 : i32
    %2591 = arith.addi %2563, %c9_i32_600 : i32
    %2592 = arith.index_cast %2591 : i32 to index
    %2593 = memref.load %arg2[%2592] : memref<528xf32, #tpu.memory_space<smem>>
    %c10_i32_601 = arith.constant 10 : i32
    %2594 = arith.addi %2563, %c10_i32_601 : i32
    %2595 = arith.index_cast %2594 : i32 to index
    %2596 = memref.load %arg2[%2595] : memref<528xf32, #tpu.memory_space<smem>>
    %2597 = vector.broadcast %2566 : f32 to vector<8x128xf32>
    %2598 = arith.mulf %2597, %0 : vector<8x128xf32>
    %2599 = vector.broadcast %2569 : f32 to vector<8x128xf32>
    %2600 = arith.mulf %2599, %1 : vector<8x128xf32>
    %2601 = arith.addf %2598, %2600 : vector<8x128xf32>
    %2602 = vector.broadcast %2572 : f32 to vector<8x128xf32>
    %2603 = arith.addf %2601, %2602 : vector<8x128xf32>
    %2604 = vector.broadcast %2575 : f32 to vector<8x128xf32>
    %2605 = arith.mulf %2604, %0 : vector<8x128xf32>
    %2606 = vector.broadcast %2578 : f32 to vector<8x128xf32>
    %2607 = arith.mulf %2606, %1 : vector<8x128xf32>
    %2608 = arith.addf %2605, %2607 : vector<8x128xf32>
    %2609 = vector.broadcast %2581 : f32 to vector<8x128xf32>
    %2610 = arith.addf %2608, %2609 : vector<8x128xf32>
    %2611 = vector.broadcast %2584 : f32 to vector<8x128xf32>
    %2612 = arith.mulf %2611, %0 : vector<8x128xf32>
    %2613 = vector.broadcast %2587 : f32 to vector<8x128xf32>
    %2614 = arith.mulf %2613, %1 : vector<8x128xf32>
    %2615 = arith.addf %2612, %2614 : vector<8x128xf32>
    %2616 = vector.broadcast %2590 : f32 to vector<8x128xf32>
    %2617 = arith.addf %2615, %2616 : vector<8x128xf32>
    %cst_602 = arith.constant 1.000000e+00 : f32
    %2618 = vector.broadcast %cst_602 : f32 to vector<8x128xf32>
    %2619 = arith.subf %2618, %2603 : vector<8x128xf32>
    %2620 = arith.subf %2619, %2610 : vector<8x128xf32>
    %cst_603 = arith.constant -9.99999997E-7 : f32
    %2621 = vector.broadcast %cst_603 : f32 to vector<8x128xf32>
    %2622 = arith.cmpf oge, %2603, %2621 : vector<8x128xf32>
    %cst_604 = arith.constant -9.99999997E-7 : f32
    %2623 = vector.broadcast %cst_604 : f32 to vector<8x128xf32>
    %2624 = arith.cmpf oge, %2610, %2623 : vector<8x128xf32>
    %2625 = arith.andi %2622, %2624 : vector<8x128xi1>
    %cst_605 = arith.constant -9.99999997E-7 : f32
    %2626 = vector.broadcast %cst_605 : f32 to vector<8x128xf32>
    %2627 = arith.cmpf oge, %2620, %2626 : vector<8x128xf32>
    %2628 = arith.andi %2625, %2627 : vector<8x128xi1>
    %cst_606 = arith.constant 9.99999997E-7 : f32
    %2629 = vector.broadcast %cst_606 : f32 to vector<8x128xf32>
    %2630 = arith.cmpf ogt, %2617, %2629 : vector<8x128xf32>
    %2631 = arith.andi %2628, %2630 : vector<8x128xi1>
    %2632 = arith.extui %2631 : vector<8x128xi1> to vector<8x128xi32>
    %2633 = arith.sitofp %2632 : vector<8x128xi32> to vector<8x128xf32>
    %2634 = arith.mulf %2633, %2617 : vector<8x128xf32>
    %2635 = vector.broadcast %2593 : f32 to vector<8x128xf32>
    %2636 = arith.mulf %2634, %2635 : vector<8x128xf32>
    %2637 = arith.addf %2558, %2636 : vector<8x128xf32>
    %2638 = vector.broadcast %2596 : f32 to vector<8x128xf32>
    %2639 = arith.mulf %2633, %2638 : vector<8x128xf32>
    %2640 = arith.addf %2561, %2639 : vector<8x128xf32>
    %c9_i32_607 = arith.constant 9 : i32
    %c11_i32_608 = arith.constant 11 : i32
    %2641 = arith.muli %c11_i32_608, %c9_i32_607 : i32
    %2642 = arith.addi %1929, %2641 : i32
    %c0_i32_609 = arith.constant 0 : i32
    %2643 = arith.addi %2642, %c0_i32_609 : i32
    %2644 = arith.index_cast %2643 : i32 to index
    %2645 = memref.load %arg2[%2644] : memref<528xf32, #tpu.memory_space<smem>>
    %c1_i32_610 = arith.constant 1 : i32
    %2646 = arith.addi %2642, %c1_i32_610 : i32
    %2647 = arith.index_cast %2646 : i32 to index
    %2648 = memref.load %arg2[%2647] : memref<528xf32, #tpu.memory_space<smem>>
    %c2_i32_611 = arith.constant 2 : i32
    %2649 = arith.addi %2642, %c2_i32_611 : i32
    %2650 = arith.index_cast %2649 : i32 to index
    %2651 = memref.load %arg2[%2650] : memref<528xf32, #tpu.memory_space<smem>>
    %c3_i32_612 = arith.constant 3 : i32
    %2652 = arith.addi %2642, %c3_i32_612 : i32
    %2653 = arith.index_cast %2652 : i32 to index
    %2654 = memref.load %arg2[%2653] : memref<528xf32, #tpu.memory_space<smem>>
    %c4_i32_613 = arith.constant 4 : i32
    %2655 = arith.addi %2642, %c4_i32_613 : i32
    %2656 = arith.index_cast %2655 : i32 to index
    %2657 = memref.load %arg2[%2656] : memref<528xf32, #tpu.memory_space<smem>>
    %c5_i32_614 = arith.constant 5 : i32
    %2658 = arith.addi %2642, %c5_i32_614 : i32
    %2659 = arith.index_cast %2658 : i32 to index
    %2660 = memref.load %arg2[%2659] : memref<528xf32, #tpu.memory_space<smem>>
    %c6_i32_615 = arith.constant 6 : i32
    %2661 = arith.addi %2642, %c6_i32_615 : i32
    %2662 = arith.index_cast %2661 : i32 to index
    %2663 = memref.load %arg2[%2662] : memref<528xf32, #tpu.memory_space<smem>>
    %c7_i32_616 = arith.constant 7 : i32
    %2664 = arith.addi %2642, %c7_i32_616 : i32
    %2665 = arith.index_cast %2664 : i32 to index
    %2666 = memref.load %arg2[%2665] : memref<528xf32, #tpu.memory_space<smem>>
    %c8_i32_617 = arith.constant 8 : i32
    %2667 = arith.addi %2642, %c8_i32_617 : i32
    %2668 = arith.index_cast %2667 : i32 to index
    %2669 = memref.load %arg2[%2668] : memref<528xf32, #tpu.memory_space<smem>>
    %c9_i32_618 = arith.constant 9 : i32
    %2670 = arith.addi %2642, %c9_i32_618 : i32
    %2671 = arith.index_cast %2670 : i32 to index
    %2672 = memref.load %arg2[%2671] : memref<528xf32, #tpu.memory_space<smem>>
    %c10_i32_619 = arith.constant 10 : i32
    %2673 = arith.addi %2642, %c10_i32_619 : i32
    %2674 = arith.index_cast %2673 : i32 to index
    %2675 = memref.load %arg2[%2674] : memref<528xf32, #tpu.memory_space<smem>>
    %2676 = vector.broadcast %2645 : f32 to vector<8x128xf32>
    %2677 = arith.mulf %2676, %0 : vector<8x128xf32>
    %2678 = vector.broadcast %2648 : f32 to vector<8x128xf32>
    %2679 = arith.mulf %2678, %1 : vector<8x128xf32>
    %2680 = arith.addf %2677, %2679 : vector<8x128xf32>
    %2681 = vector.broadcast %2651 : f32 to vector<8x128xf32>
    %2682 = arith.addf %2680, %2681 : vector<8x128xf32>
    %2683 = vector.broadcast %2654 : f32 to vector<8x128xf32>
    %2684 = arith.mulf %2683, %0 : vector<8x128xf32>
    %2685 = vector.broadcast %2657 : f32 to vector<8x128xf32>
    %2686 = arith.mulf %2685, %1 : vector<8x128xf32>
    %2687 = arith.addf %2684, %2686 : vector<8x128xf32>
    %2688 = vector.broadcast %2660 : f32 to vector<8x128xf32>
    %2689 = arith.addf %2687, %2688 : vector<8x128xf32>
    %2690 = vector.broadcast %2663 : f32 to vector<8x128xf32>
    %2691 = arith.mulf %2690, %0 : vector<8x128xf32>
    %2692 = vector.broadcast %2666 : f32 to vector<8x128xf32>
    %2693 = arith.mulf %2692, %1 : vector<8x128xf32>
    %2694 = arith.addf %2691, %2693 : vector<8x128xf32>
    %2695 = vector.broadcast %2669 : f32 to vector<8x128xf32>
    %2696 = arith.addf %2694, %2695 : vector<8x128xf32>
    %cst_620 = arith.constant 1.000000e+00 : f32
    %2697 = vector.broadcast %cst_620 : f32 to vector<8x128xf32>
    %2698 = arith.subf %2697, %2682 : vector<8x128xf32>
    %2699 = arith.subf %2698, %2689 : vector<8x128xf32>
    %cst_621 = arith.constant -9.99999997E-7 : f32
    %2700 = vector.broadcast %cst_621 : f32 to vector<8x128xf32>
    %2701 = arith.cmpf oge, %2682, %2700 : vector<8x128xf32>
    %cst_622 = arith.constant -9.99999997E-7 : f32
    %2702 = vector.broadcast %cst_622 : f32 to vector<8x128xf32>
    %2703 = arith.cmpf oge, %2689, %2702 : vector<8x128xf32>
    %2704 = arith.andi %2701, %2703 : vector<8x128xi1>
    %cst_623 = arith.constant -9.99999997E-7 : f32
    %2705 = vector.broadcast %cst_623 : f32 to vector<8x128xf32>
    %2706 = arith.cmpf oge, %2699, %2705 : vector<8x128xf32>
    %2707 = arith.andi %2704, %2706 : vector<8x128xi1>
    %cst_624 = arith.constant 9.99999997E-7 : f32
    %2708 = vector.broadcast %cst_624 : f32 to vector<8x128xf32>
    %2709 = arith.cmpf ogt, %2696, %2708 : vector<8x128xf32>
    %2710 = arith.andi %2707, %2709 : vector<8x128xi1>
    %2711 = arith.extui %2710 : vector<8x128xi1> to vector<8x128xi32>
    %2712 = arith.sitofp %2711 : vector<8x128xi32> to vector<8x128xf32>
    %2713 = arith.mulf %2712, %2696 : vector<8x128xf32>
    %2714 = vector.broadcast %2672 : f32 to vector<8x128xf32>
    %2715 = arith.mulf %2713, %2714 : vector<8x128xf32>
    %2716 = arith.addf %2637, %2715 : vector<8x128xf32>
    %2717 = vector.broadcast %2675 : f32 to vector<8x128xf32>
    %2718 = arith.mulf %2712, %2717 : vector<8x128xf32>
    %2719 = arith.addf %2640, %2718 : vector<8x128xf32>
    %c10_i32_625 = arith.constant 10 : i32
    %c11_i32_626 = arith.constant 11 : i32
    %2720 = arith.muli %c11_i32_626, %c10_i32_625 : i32
    %2721 = arith.addi %1929, %2720 : i32
    %c0_i32_627 = arith.constant 0 : i32
    %2722 = arith.addi %2721, %c0_i32_627 : i32
    %2723 = arith.index_cast %2722 : i32 to index
    %2724 = memref.load %arg2[%2723] : memref<528xf32, #tpu.memory_space<smem>>
    %c1_i32_628 = arith.constant 1 : i32
    %2725 = arith.addi %2721, %c1_i32_628 : i32
    %2726 = arith.index_cast %2725 : i32 to index
    %2727 = memref.load %arg2[%2726] : memref<528xf32, #tpu.memory_space<smem>>
    %c2_i32_629 = arith.constant 2 : i32
    %2728 = arith.addi %2721, %c2_i32_629 : i32
    %2729 = arith.index_cast %2728 : i32 to index
    %2730 = memref.load %arg2[%2729] : memref<528xf32, #tpu.memory_space<smem>>
    %c3_i32_630 = arith.constant 3 : i32
    %2731 = arith.addi %2721, %c3_i32_630 : i32
    %2732 = arith.index_cast %2731 : i32 to index
    %2733 = memref.load %arg2[%2732] : memref<528xf32, #tpu.memory_space<smem>>
    %c4_i32_631 = arith.constant 4 : i32
    %2734 = arith.addi %2721, %c4_i32_631 : i32
    %2735 = arith.index_cast %2734 : i32 to index
    %2736 = memref.load %arg2[%2735] : memref<528xf32, #tpu.memory_space<smem>>
    %c5_i32_632 = arith.constant 5 : i32
    %2737 = arith.addi %2721, %c5_i32_632 : i32
    %2738 = arith.index_cast %2737 : i32 to index
    %2739 = memref.load %arg2[%2738] : memref<528xf32, #tpu.memory_space<smem>>
    %c6_i32_633 = arith.constant 6 : i32
    %2740 = arith.addi %2721, %c6_i32_633 : i32
    %2741 = arith.index_cast %2740 : i32 to index
    %2742 = memref.load %arg2[%2741] : memref<528xf32, #tpu.memory_space<smem>>
    %c7_i32_634 = arith.constant 7 : i32
    %2743 = arith.addi %2721, %c7_i32_634 : i32
    %2744 = arith.index_cast %2743 : i32 to index
    %2745 = memref.load %arg2[%2744] : memref<528xf32, #tpu.memory_space<smem>>
    %c8_i32_635 = arith.constant 8 : i32
    %2746 = arith.addi %2721, %c8_i32_635 : i32
    %2747 = arith.index_cast %2746 : i32 to index
    %2748 = memref.load %arg2[%2747] : memref<528xf32, #tpu.memory_space<smem>>
    %c9_i32_636 = arith.constant 9 : i32
    %2749 = arith.addi %2721, %c9_i32_636 : i32
    %2750 = arith.index_cast %2749 : i32 to index
    %2751 = memref.load %arg2[%2750] : memref<528xf32, #tpu.memory_space<smem>>
    %c10_i32_637 = arith.constant 10 : i32
    %2752 = arith.addi %2721, %c10_i32_637 : i32
    %2753 = arith.index_cast %2752 : i32 to index
    %2754 = memref.load %arg2[%2753] : memref<528xf32, #tpu.memory_space<smem>>
    %2755 = vector.broadcast %2724 : f32 to vector<8x128xf32>
    %2756 = arith.mulf %2755, %0 : vector<8x128xf32>
    %2757 = vector.broadcast %2727 : f32 to vector<8x128xf32>
    %2758 = arith.mulf %2757, %1 : vector<8x128xf32>
    %2759 = arith.addf %2756, %2758 : vector<8x128xf32>
    %2760 = vector.broadcast %2730 : f32 to vector<8x128xf32>
    %2761 = arith.addf %2759, %2760 : vector<8x128xf32>
    %2762 = vector.broadcast %2733 : f32 to vector<8x128xf32>
    %2763 = arith.mulf %2762, %0 : vector<8x128xf32>
    %2764 = vector.broadcast %2736 : f32 to vector<8x128xf32>
    %2765 = arith.mulf %2764, %1 : vector<8x128xf32>
    %2766 = arith.addf %2763, %2765 : vector<8x128xf32>
    %2767 = vector.broadcast %2739 : f32 to vector<8x128xf32>
    %2768 = arith.addf %2766, %2767 : vector<8x128xf32>
    %2769 = vector.broadcast %2742 : f32 to vector<8x128xf32>
    %2770 = arith.mulf %2769, %0 : vector<8x128xf32>
    %2771 = vector.broadcast %2745 : f32 to vector<8x128xf32>
    %2772 = arith.mulf %2771, %1 : vector<8x128xf32>
    %2773 = arith.addf %2770, %2772 : vector<8x128xf32>
    %2774 = vector.broadcast %2748 : f32 to vector<8x128xf32>
    %2775 = arith.addf %2773, %2774 : vector<8x128xf32>
    %cst_638 = arith.constant 1.000000e+00 : f32
    %2776 = vector.broadcast %cst_638 : f32 to vector<8x128xf32>
    %2777 = arith.subf %2776, %2761 : vector<8x128xf32>
    %2778 = arith.subf %2777, %2768 : vector<8x128xf32>
    %cst_639 = arith.constant -9.99999997E-7 : f32
    %2779 = vector.broadcast %cst_639 : f32 to vector<8x128xf32>
    %2780 = arith.cmpf oge, %2761, %2779 : vector<8x128xf32>
    %cst_640 = arith.constant -9.99999997E-7 : f32
    %2781 = vector.broadcast %cst_640 : f32 to vector<8x128xf32>
    %2782 = arith.cmpf oge, %2768, %2781 : vector<8x128xf32>
    %2783 = arith.andi %2780, %2782 : vector<8x128xi1>
    %cst_641 = arith.constant -9.99999997E-7 : f32
    %2784 = vector.broadcast %cst_641 : f32 to vector<8x128xf32>
    %2785 = arith.cmpf oge, %2778, %2784 : vector<8x128xf32>
    %2786 = arith.andi %2783, %2785 : vector<8x128xi1>
    %cst_642 = arith.constant 9.99999997E-7 : f32
    %2787 = vector.broadcast %cst_642 : f32 to vector<8x128xf32>
    %2788 = arith.cmpf ogt, %2775, %2787 : vector<8x128xf32>
    %2789 = arith.andi %2786, %2788 : vector<8x128xi1>
    %2790 = arith.extui %2789 : vector<8x128xi1> to vector<8x128xi32>
    %2791 = arith.sitofp %2790 : vector<8x128xi32> to vector<8x128xf32>
    %2792 = arith.mulf %2791, %2775 : vector<8x128xf32>
    %2793 = vector.broadcast %2751 : f32 to vector<8x128xf32>
    %2794 = arith.mulf %2792, %2793 : vector<8x128xf32>
    %2795 = arith.addf %2716, %2794 : vector<8x128xf32>
    %2796 = vector.broadcast %2754 : f32 to vector<8x128xf32>
    %2797 = arith.mulf %2791, %2796 : vector<8x128xf32>
    %2798 = arith.addf %2719, %2797 : vector<8x128xf32>
    %c11_i32_643 = arith.constant 11 : i32
    %c11_i32_644 = arith.constant 11 : i32
    %2799 = arith.muli %c11_i32_644, %c11_i32_643 : i32
    %2800 = arith.addi %1929, %2799 : i32
    %c0_i32_645 = arith.constant 0 : i32
    %2801 = arith.addi %2800, %c0_i32_645 : i32
    %2802 = arith.index_cast %2801 : i32 to index
    %2803 = memref.load %arg2[%2802] : memref<528xf32, #tpu.memory_space<smem>>
    %c1_i32_646 = arith.constant 1 : i32
    %2804 = arith.addi %2800, %c1_i32_646 : i32
    %2805 = arith.index_cast %2804 : i32 to index
    %2806 = memref.load %arg2[%2805] : memref<528xf32, #tpu.memory_space<smem>>
    %c2_i32_647 = arith.constant 2 : i32
    %2807 = arith.addi %2800, %c2_i32_647 : i32
    %2808 = arith.index_cast %2807 : i32 to index
    %2809 = memref.load %arg2[%2808] : memref<528xf32, #tpu.memory_space<smem>>
    %c3_i32_648 = arith.constant 3 : i32
    %2810 = arith.addi %2800, %c3_i32_648 : i32
    %2811 = arith.index_cast %2810 : i32 to index
    %2812 = memref.load %arg2[%2811] : memref<528xf32, #tpu.memory_space<smem>>
    %c4_i32_649 = arith.constant 4 : i32
    %2813 = arith.addi %2800, %c4_i32_649 : i32
    %2814 = arith.index_cast %2813 : i32 to index
    %2815 = memref.load %arg2[%2814] : memref<528xf32, #tpu.memory_space<smem>>
    %c5_i32_650 = arith.constant 5 : i32
    %2816 = arith.addi %2800, %c5_i32_650 : i32
    %2817 = arith.index_cast %2816 : i32 to index
    %2818 = memref.load %arg2[%2817] : memref<528xf32, #tpu.memory_space<smem>>
    %c6_i32_651 = arith.constant 6 : i32
    %2819 = arith.addi %2800, %c6_i32_651 : i32
    %2820 = arith.index_cast %2819 : i32 to index
    %2821 = memref.load %arg2[%2820] : memref<528xf32, #tpu.memory_space<smem>>
    %c7_i32_652 = arith.constant 7 : i32
    %2822 = arith.addi %2800, %c7_i32_652 : i32
    %2823 = arith.index_cast %2822 : i32 to index
    %2824 = memref.load %arg2[%2823] : memref<528xf32, #tpu.memory_space<smem>>
    %c8_i32_653 = arith.constant 8 : i32
    %2825 = arith.addi %2800, %c8_i32_653 : i32
    %2826 = arith.index_cast %2825 : i32 to index
    %2827 = memref.load %arg2[%2826] : memref<528xf32, #tpu.memory_space<smem>>
    %c9_i32_654 = arith.constant 9 : i32
    %2828 = arith.addi %2800, %c9_i32_654 : i32
    %2829 = arith.index_cast %2828 : i32 to index
    %2830 = memref.load %arg2[%2829] : memref<528xf32, #tpu.memory_space<smem>>
    %c10_i32_655 = arith.constant 10 : i32
    %2831 = arith.addi %2800, %c10_i32_655 : i32
    %2832 = arith.index_cast %2831 : i32 to index
    %2833 = memref.load %arg2[%2832] : memref<528xf32, #tpu.memory_space<smem>>
    %2834 = vector.broadcast %2803 : f32 to vector<8x128xf32>
    %2835 = arith.mulf %2834, %0 : vector<8x128xf32>
    %2836 = vector.broadcast %2806 : f32 to vector<8x128xf32>
    %2837 = arith.mulf %2836, %1 : vector<8x128xf32>
    %2838 = arith.addf %2835, %2837 : vector<8x128xf32>
    %2839 = vector.broadcast %2809 : f32 to vector<8x128xf32>
    %2840 = arith.addf %2838, %2839 : vector<8x128xf32>
    %2841 = vector.broadcast %2812 : f32 to vector<8x128xf32>
    %2842 = arith.mulf %2841, %0 : vector<8x128xf32>
    %2843 = vector.broadcast %2815 : f32 to vector<8x128xf32>
    %2844 = arith.mulf %2843, %1 : vector<8x128xf32>
    %2845 = arith.addf %2842, %2844 : vector<8x128xf32>
    %2846 = vector.broadcast %2818 : f32 to vector<8x128xf32>
    %2847 = arith.addf %2845, %2846 : vector<8x128xf32>
    %2848 = vector.broadcast %2821 : f32 to vector<8x128xf32>
    %2849 = arith.mulf %2848, %0 : vector<8x128xf32>
    %2850 = vector.broadcast %2824 : f32 to vector<8x128xf32>
    %2851 = arith.mulf %2850, %1 : vector<8x128xf32>
    %2852 = arith.addf %2849, %2851 : vector<8x128xf32>
    %2853 = vector.broadcast %2827 : f32 to vector<8x128xf32>
    %2854 = arith.addf %2852, %2853 : vector<8x128xf32>
    %cst_656 = arith.constant 1.000000e+00 : f32
    %2855 = vector.broadcast %cst_656 : f32 to vector<8x128xf32>
    %2856 = arith.subf %2855, %2840 : vector<8x128xf32>
    %2857 = arith.subf %2856, %2847 : vector<8x128xf32>
    %cst_657 = arith.constant -9.99999997E-7 : f32
    %2858 = vector.broadcast %cst_657 : f32 to vector<8x128xf32>
    %2859 = arith.cmpf oge, %2840, %2858 : vector<8x128xf32>
    %cst_658 = arith.constant -9.99999997E-7 : f32
    %2860 = vector.broadcast %cst_658 : f32 to vector<8x128xf32>
    %2861 = arith.cmpf oge, %2847, %2860 : vector<8x128xf32>
    %2862 = arith.andi %2859, %2861 : vector<8x128xi1>
    %cst_659 = arith.constant -9.99999997E-7 : f32
    %2863 = vector.broadcast %cst_659 : f32 to vector<8x128xf32>
    %2864 = arith.cmpf oge, %2857, %2863 : vector<8x128xf32>
    %2865 = arith.andi %2862, %2864 : vector<8x128xi1>
    %cst_660 = arith.constant 9.99999997E-7 : f32
    %2866 = vector.broadcast %cst_660 : f32 to vector<8x128xf32>
    %2867 = arith.cmpf ogt, %2854, %2866 : vector<8x128xf32>
    %2868 = arith.andi %2865, %2867 : vector<8x128xi1>
    %2869 = arith.extui %2868 : vector<8x128xi1> to vector<8x128xi32>
    %2870 = arith.sitofp %2869 : vector<8x128xi32> to vector<8x128xf32>
    %2871 = arith.mulf %2870, %2854 : vector<8x128xf32>
    %2872 = vector.broadcast %2830 : f32 to vector<8x128xf32>
    %2873 = arith.mulf %2871, %2872 : vector<8x128xf32>
    %2874 = arith.addf %2795, %2873 : vector<8x128xf32>
    %2875 = vector.broadcast %2833 : f32 to vector<8x128xf32>
    %2876 = arith.mulf %2870, %2875 : vector<8x128xf32>
    %2877 = arith.addf %2798, %2876 : vector<8x128xf32>
    %c12_i32_661 = arith.constant 12 : i32
    %c2 = arith.constant 2 : index
    %c0_662 = arith.constant 0 : index
    %c0_663 = arith.constant 0 : index
    %2878 = vector.load %arg5[%c2, %c0_662, %c0_663] : memref<4x8x128xf32, #tpu.memory_space<vmem>>, vector<1x8x128xf32>
    %2879 = vector.shape_cast %2878 : vector<1x8x128xf32> to vector<8x128xf32>
    %2880 = vector.shape_cast %2874 : vector<8x128xf32> to vector<1x8x128xf32>
    tpu.vector_store %arg5[%c2, %c0_662, %c0_663], %2880 {strides = array<i32>} : memref<4x8x128xf32, #tpu.memory_space<vmem>>, vector<1x8x128xf32>,
    %2881 = math.absf %2877 : vector<8x128xf32>
    %cst_664 = arith.constant 5.000000e-01 : f32
    %2882 = vector.broadcast %cst_664 : f32 to vector<8x128xf32>
    %2883 = arith.cmpf olt, %2881, %2882 : vector<8x128xf32>
    %2884 = arith.extui %2883 : vector<8x128xi1> to vector<8x128xi32>
    %2885 = arith.sitofp %2884 : vector<8x128xi32> to vector<8x128xf32>
    %c2_665 = arith.constant 2 : index
    %c0_666 = arith.constant 0 : index
    %c0_667 = arith.constant 0 : index
    %2886 = vector.load %arg6[%c2_665, %c0_666, %c0_667] : memref<4x8x128xf32, #tpu.memory_space<vmem>>, vector<1x8x128xf32>
    %2887 = vector.shape_cast %2886 : vector<1x8x128xf32> to vector<8x128xf32>
    %2888 = vector.shape_cast %2885 : vector<8x128xf32> to vector<1x8x128xf32>
    tpu.vector_store %arg6[%c2_665, %c0_666, %c0_667], %2888 {strides = array<i32>} : memref<4x8x128xf32, #tpu.memory_space<vmem>>, vector<1x8x128xf32>,
    %c4_i32_668 = arith.constant 4 : i32
    %2889 = arith.muli %arg0, %c4_i32_668 : i32
    %c3_i32_669 = arith.constant 3 : i32
    %2890 = arith.addi %2889, %c3_i32_669 : i32
    %c132_i32_670 = arith.constant 132 : i32
    %2891 = arith.muli %2890, %c132_i32_670 : i32
    %c0_i32_671 = arith.constant 0 : i32
    %c11_i32_672 = arith.constant 11 : i32
    %2892 = arith.muli %c11_i32_672, %c0_i32_671 : i32
    %2893 = arith.addi %2891, %2892 : i32
    %c0_i32_673 = arith.constant 0 : i32
    %2894 = arith.addi %2893, %c0_i32_673 : i32
    %2895 = arith.index_cast %2894 : i32 to index
    %2896 = memref.load %arg2[%2895] : memref<528xf32, #tpu.memory_space<smem>>
    %c1_i32_674 = arith.constant 1 : i32
    %2897 = arith.addi %2893, %c1_i32_674 : i32
    %2898 = arith.index_cast %2897 : i32 to index
    %2899 = memref.load %arg2[%2898] : memref<528xf32, #tpu.memory_space<smem>>
    %c2_i32_675 = arith.constant 2 : i32
    %2900 = arith.addi %2893, %c2_i32_675 : i32
    %2901 = arith.index_cast %2900 : i32 to index
    %2902 = memref.load %arg2[%2901] : memref<528xf32, #tpu.memory_space<smem>>
    %c3_i32_676 = arith.constant 3 : i32
    %2903 = arith.addi %2893, %c3_i32_676 : i32
    %2904 = arith.index_cast %2903 : i32 to index
    %2905 = memref.load %arg2[%2904] : memref<528xf32, #tpu.memory_space<smem>>
    %c4_i32_677 = arith.constant 4 : i32
    %2906 = arith.addi %2893, %c4_i32_677 : i32
    %2907 = arith.index_cast %2906 : i32 to index
    %2908 = memref.load %arg2[%2907] : memref<528xf32, #tpu.memory_space<smem>>
    %c5_i32_678 = arith.constant 5 : i32
    %2909 = arith.addi %2893, %c5_i32_678 : i32
    %2910 = arith.index_cast %2909 : i32 to index
    %2911 = memref.load %arg2[%2910] : memref<528xf32, #tpu.memory_space<smem>>
    %c6_i32_679 = arith.constant 6 : i32
    %2912 = arith.addi %2893, %c6_i32_679 : i32
    %2913 = arith.index_cast %2912 : i32 to index
    %2914 = memref.load %arg2[%2913] : memref<528xf32, #tpu.memory_space<smem>>
    %c7_i32_680 = arith.constant 7 : i32
    %2915 = arith.addi %2893, %c7_i32_680 : i32
    %2916 = arith.index_cast %2915 : i32 to index
    %2917 = memref.load %arg2[%2916] : memref<528xf32, #tpu.memory_space<smem>>
    %c8_i32_681 = arith.constant 8 : i32
    %2918 = arith.addi %2893, %c8_i32_681 : i32
    %2919 = arith.index_cast %2918 : i32 to index
    %2920 = memref.load %arg2[%2919] : memref<528xf32, #tpu.memory_space<smem>>
    %c9_i32_682 = arith.constant 9 : i32
    %2921 = arith.addi %2893, %c9_i32_682 : i32
    %2922 = arith.index_cast %2921 : i32 to index
    %2923 = memref.load %arg2[%2922] : memref<528xf32, #tpu.memory_space<smem>>
    %c10_i32_683 = arith.constant 10 : i32
    %2924 = arith.addi %2893, %c10_i32_683 : i32
    %2925 = arith.index_cast %2924 : i32 to index
    %2926 = memref.load %arg2[%2925] : memref<528xf32, #tpu.memory_space<smem>>
    %2927 = vector.broadcast %2896 : f32 to vector<8x128xf32>
    %2928 = arith.mulf %2927, %0 : vector<8x128xf32>
    %2929 = vector.broadcast %2899 : f32 to vector<8x128xf32>
    %2930 = arith.mulf %2929, %1 : vector<8x128xf32>
    %2931 = arith.addf %2928, %2930 : vector<8x128xf32>
    %2932 = vector.broadcast %2902 : f32 to vector<8x128xf32>
    %2933 = arith.addf %2931, %2932 : vector<8x128xf32>
    %2934 = vector.broadcast %2905 : f32 to vector<8x128xf32>
    %2935 = arith.mulf %2934, %0 : vector<8x128xf32>
    %2936 = vector.broadcast %2908 : f32 to vector<8x128xf32>
    %2937 = arith.mulf %2936, %1 : vector<8x128xf32>
    %2938 = arith.addf %2935, %2937 : vector<8x128xf32>
    %2939 = vector.broadcast %2911 : f32 to vector<8x128xf32>
    %2940 = arith.addf %2938, %2939 : vector<8x128xf32>
    %2941 = vector.broadcast %2914 : f32 to vector<8x128xf32>
    %2942 = arith.mulf %2941, %0 : vector<8x128xf32>
    %2943 = vector.broadcast %2917 : f32 to vector<8x128xf32>
    %2944 = arith.mulf %2943, %1 : vector<8x128xf32>
    %2945 = arith.addf %2942, %2944 : vector<8x128xf32>
    %2946 = vector.broadcast %2920 : f32 to vector<8x128xf32>
    %2947 = arith.addf %2945, %2946 : vector<8x128xf32>
    %cst_684 = arith.constant 1.000000e+00 : f32
    %2948 = vector.broadcast %cst_684 : f32 to vector<8x128xf32>
    %2949 = arith.subf %2948, %2933 : vector<8x128xf32>
    %2950 = arith.subf %2949, %2940 : vector<8x128xf32>
    %cst_685 = arith.constant -9.99999997E-7 : f32
    %2951 = vector.broadcast %cst_685 : f32 to vector<8x128xf32>
    %2952 = arith.cmpf oge, %2933, %2951 : vector<8x128xf32>
    %cst_686 = arith.constant -9.99999997E-7 : f32
    %2953 = vector.broadcast %cst_686 : f32 to vector<8x128xf32>
    %2954 = arith.cmpf oge, %2940, %2953 : vector<8x128xf32>
    %2955 = arith.andi %2952, %2954 : vector<8x128xi1>
    %cst_687 = arith.constant -9.99999997E-7 : f32
    %2956 = vector.broadcast %cst_687 : f32 to vector<8x128xf32>
    %2957 = arith.cmpf oge, %2950, %2956 : vector<8x128xf32>
    %2958 = arith.andi %2955, %2957 : vector<8x128xi1>
    %cst_688 = arith.constant 9.99999997E-7 : f32
    %2959 = vector.broadcast %cst_688 : f32 to vector<8x128xf32>
    %2960 = arith.cmpf ogt, %2947, %2959 : vector<8x128xf32>
    %2961 = arith.andi %2958, %2960 : vector<8x128xi1>
    %2962 = arith.extui %2961 : vector<8x128xi1> to vector<8x128xi32>
    %2963 = arith.sitofp %2962 : vector<8x128xi32> to vector<8x128xf32>
    %2964 = arith.mulf %2963, %2947 : vector<8x128xf32>
    %2965 = vector.broadcast %2923 : f32 to vector<8x128xf32>
    %2966 = arith.mulf %2964, %2965 : vector<8x128xf32>
    %2967 = arith.addf %2, %2966 : vector<8x128xf32>
    %2968 = vector.broadcast %2926 : f32 to vector<8x128xf32>
    %2969 = arith.mulf %2963, %2968 : vector<8x128xf32>
    %2970 = arith.addf %2, %2969 : vector<8x128xf32>
    %c1_i32_689 = arith.constant 1 : i32
    %c11_i32_690 = arith.constant 11 : i32
    %2971 = arith.muli %c11_i32_690, %c1_i32_689 : i32
    %2972 = arith.addi %2891, %2971 : i32
    %c0_i32_691 = arith.constant 0 : i32
    %2973 = arith.addi %2972, %c0_i32_691 : i32
    %2974 = arith.index_cast %2973 : i32 to index
    %2975 = memref.load %arg2[%2974] : memref<528xf32, #tpu.memory_space<smem>>
    %c1_i32_692 = arith.constant 1 : i32
    %2976 = arith.addi %2972, %c1_i32_692 : i32
    %2977 = arith.index_cast %2976 : i32 to index
    %2978 = memref.load %arg2[%2977] : memref<528xf32, #tpu.memory_space<smem>>
    %c2_i32_693 = arith.constant 2 : i32
    %2979 = arith.addi %2972, %c2_i32_693 : i32
    %2980 = arith.index_cast %2979 : i32 to index
    %2981 = memref.load %arg2[%2980] : memref<528xf32, #tpu.memory_space<smem>>
    %c3_i32_694 = arith.constant 3 : i32
    %2982 = arith.addi %2972, %c3_i32_694 : i32
    %2983 = arith.index_cast %2982 : i32 to index
    %2984 = memref.load %arg2[%2983] : memref<528xf32, #tpu.memory_space<smem>>
    %c4_i32_695 = arith.constant 4 : i32
    %2985 = arith.addi %2972, %c4_i32_695 : i32
    %2986 = arith.index_cast %2985 : i32 to index
    %2987 = memref.load %arg2[%2986] : memref<528xf32, #tpu.memory_space<smem>>
    %c5_i32_696 = arith.constant 5 : i32
    %2988 = arith.addi %2972, %c5_i32_696 : i32
    %2989 = arith.index_cast %2988 : i32 to index
    %2990 = memref.load %arg2[%2989] : memref<528xf32, #tpu.memory_space<smem>>
    %c6_i32_697 = arith.constant 6 : i32
    %2991 = arith.addi %2972, %c6_i32_697 : i32
    %2992 = arith.index_cast %2991 : i32 to index
    %2993 = memref.load %arg2[%2992] : memref<528xf32, #tpu.memory_space<smem>>
    %c7_i32_698 = arith.constant 7 : i32
    %2994 = arith.addi %2972, %c7_i32_698 : i32
    %2995 = arith.index_cast %2994 : i32 to index
    %2996 = memref.load %arg2[%2995] : memref<528xf32, #tpu.memory_space<smem>>
    %c8_i32_699 = arith.constant 8 : i32
    %2997 = arith.addi %2972, %c8_i32_699 : i32
    %2998 = arith.index_cast %2997 : i32 to index
    %2999 = memref.load %arg2[%2998] : memref<528xf32, #tpu.memory_space<smem>>
    %c9_i32_700 = arith.constant 9 : i32
    %3000 = arith.addi %2972, %c9_i32_700 : i32
    %3001 = arith.index_cast %3000 : i32 to index
    %3002 = memref.load %arg2[%3001] : memref<528xf32, #tpu.memory_space<smem>>
    %c10_i32_701 = arith.constant 10 : i32
    %3003 = arith.addi %2972, %c10_i32_701 : i32
    %3004 = arith.index_cast %3003 : i32 to index
    %3005 = memref.load %arg2[%3004] : memref<528xf32, #tpu.memory_space<smem>>
    %3006 = vector.broadcast %2975 : f32 to vector<8x128xf32>
    %3007 = arith.mulf %3006, %0 : vector<8x128xf32>
    %3008 = vector.broadcast %2978 : f32 to vector<8x128xf32>
    %3009 = arith.mulf %3008, %1 : vector<8x128xf32>
    %3010 = arith.addf %3007, %3009 : vector<8x128xf32>
    %3011 = vector.broadcast %2981 : f32 to vector<8x128xf32>
    %3012 = arith.addf %3010, %3011 : vector<8x128xf32>
    %3013 = vector.broadcast %2984 : f32 to vector<8x128xf32>
    %3014 = arith.mulf %3013, %0 : vector<8x128xf32>
    %3015 = vector.broadcast %2987 : f32 to vector<8x128xf32>
    %3016 = arith.mulf %3015, %1 : vector<8x128xf32>
    %3017 = arith.addf %3014, %3016 : vector<8x128xf32>
    %3018 = vector.broadcast %2990 : f32 to vector<8x128xf32>
    %3019 = arith.addf %3017, %3018 : vector<8x128xf32>
    %3020 = vector.broadcast %2993 : f32 to vector<8x128xf32>
    %3021 = arith.mulf %3020, %0 : vector<8x128xf32>
    %3022 = vector.broadcast %2996 : f32 to vector<8x128xf32>
    %3023 = arith.mulf %3022, %1 : vector<8x128xf32>
    %3024 = arith.addf %3021, %3023 : vector<8x128xf32>
    %3025 = vector.broadcast %2999 : f32 to vector<8x128xf32>
    %3026 = arith.addf %3024, %3025 : vector<8x128xf32>
    %cst_702 = arith.constant 1.000000e+00 : f32
    %3027 = vector.broadcast %cst_702 : f32 to vector<8x128xf32>
    %3028 = arith.subf %3027, %3012 : vector<8x128xf32>
    %3029 = arith.subf %3028, %3019 : vector<8x128xf32>
    %cst_703 = arith.constant -9.99999997E-7 : f32
    %3030 = vector.broadcast %cst_703 : f32 to vector<8x128xf32>
    %3031 = arith.cmpf oge, %3012, %3030 : vector<8x128xf32>
    %cst_704 = arith.constant -9.99999997E-7 : f32
    %3032 = vector.broadcast %cst_704 : f32 to vector<8x128xf32>
    %3033 = arith.cmpf oge, %3019, %3032 : vector<8x128xf32>
    %3034 = arith.andi %3031, %3033 : vector<8x128xi1>
    %cst_705 = arith.constant -9.99999997E-7 : f32
    %3035 = vector.broadcast %cst_705 : f32 to vector<8x128xf32>
    %3036 = arith.cmpf oge, %3029, %3035 : vector<8x128xf32>
    %3037 = arith.andi %3034, %3036 : vector<8x128xi1>
    %cst_706 = arith.constant 9.99999997E-7 : f32
    %3038 = vector.broadcast %cst_706 : f32 to vector<8x128xf32>
    %3039 = arith.cmpf ogt, %3026, %3038 : vector<8x128xf32>
    %3040 = arith.andi %3037, %3039 : vector<8x128xi1>
    %3041 = arith.extui %3040 : vector<8x128xi1> to vector<8x128xi32>
    %3042 = arith.sitofp %3041 : vector<8x128xi32> to vector<8x128xf32>
    %3043 = arith.mulf %3042, %3026 : vector<8x128xf32>
    %3044 = vector.broadcast %3002 : f32 to vector<8x128xf32>
    %3045 = arith.mulf %3043, %3044 : vector<8x128xf32>
    %3046 = arith.addf %2967, %3045 : vector<8x128xf32>
    %3047 = vector.broadcast %3005 : f32 to vector<8x128xf32>
    %3048 = arith.mulf %3042, %3047 : vector<8x128xf32>
    %3049 = arith.addf %2970, %3048 : vector<8x128xf32>
    %c2_i32_707 = arith.constant 2 : i32
    %c11_i32_708 = arith.constant 11 : i32
    %3050 = arith.muli %c11_i32_708, %c2_i32_707 : i32
    %3051 = arith.addi %2891, %3050 : i32
    %c0_i32_709 = arith.constant 0 : i32
    %3052 = arith.addi %3051, %c0_i32_709 : i32
    %3053 = arith.index_cast %3052 : i32 to index
    %3054 = memref.load %arg2[%3053] : memref<528xf32, #tpu.memory_space<smem>>
    %c1_i32_710 = arith.constant 1 : i32
    %3055 = arith.addi %3051, %c1_i32_710 : i32
    %3056 = arith.index_cast %3055 : i32 to index
    %3057 = memref.load %arg2[%3056] : memref<528xf32, #tpu.memory_space<smem>>
    %c2_i32_711 = arith.constant 2 : i32
    %3058 = arith.addi %3051, %c2_i32_711 : i32
    %3059 = arith.index_cast %3058 : i32 to index
    %3060 = memref.load %arg2[%3059] : memref<528xf32, #tpu.memory_space<smem>>
    %c3_i32_712 = arith.constant 3 : i32
    %3061 = arith.addi %3051, %c3_i32_712 : i32
    %3062 = arith.index_cast %3061 : i32 to index
    %3063 = memref.load %arg2[%3062] : memref<528xf32, #tpu.memory_space<smem>>
    %c4_i32_713 = arith.constant 4 : i32
    %3064 = arith.addi %3051, %c4_i32_713 : i32
    %3065 = arith.index_cast %3064 : i32 to index
    %3066 = memref.load %arg2[%3065] : memref<528xf32, #tpu.memory_space<smem>>
    %c5_i32_714 = arith.constant 5 : i32
    %3067 = arith.addi %3051, %c5_i32_714 : i32
    %3068 = arith.index_cast %3067 : i32 to index
    %3069 = memref.load %arg2[%3068] : memref<528xf32, #tpu.memory_space<smem>>
    %c6_i32_715 = arith.constant 6 : i32
    %3070 = arith.addi %3051, %c6_i32_715 : i32
    %3071 = arith.index_cast %3070 : i32 to index
    %3072 = memref.load %arg2[%3071] : memref<528xf32, #tpu.memory_space<smem>>
    %c7_i32_716 = arith.constant 7 : i32
    %3073 = arith.addi %3051, %c7_i32_716 : i32
    %3074 = arith.index_cast %3073 : i32 to index
    %3075 = memref.load %arg2[%3074] : memref<528xf32, #tpu.memory_space<smem>>
    %c8_i32_717 = arith.constant 8 : i32
    %3076 = arith.addi %3051, %c8_i32_717 : i32
    %3077 = arith.index_cast %3076 : i32 to index
    %3078 = memref.load %arg2[%3077] : memref<528xf32, #tpu.memory_space<smem>>
    %c9_i32_718 = arith.constant 9 : i32
    %3079 = arith.addi %3051, %c9_i32_718 : i32
    %3080 = arith.index_cast %3079 : i32 to index
    %3081 = memref.load %arg2[%3080] : memref<528xf32, #tpu.memory_space<smem>>
    %c10_i32_719 = arith.constant 10 : i32
    %3082 = arith.addi %3051, %c10_i32_719 : i32
    %3083 = arith.index_cast %3082 : i32 to index
    %3084 = memref.load %arg2[%3083] : memref<528xf32, #tpu.memory_space<smem>>
    %3085 = vector.broadcast %3054 : f32 to vector<8x128xf32>
    %3086 = arith.mulf %3085, %0 : vector<8x128xf32>
    %3087 = vector.broadcast %3057 : f32 to vector<8x128xf32>
    %3088 = arith.mulf %3087, %1 : vector<8x128xf32>
    %3089 = arith.addf %3086, %3088 : vector<8x128xf32>
    %3090 = vector.broadcast %3060 : f32 to vector<8x128xf32>
    %3091 = arith.addf %3089, %3090 : vector<8x128xf32>
    %3092 = vector.broadcast %3063 : f32 to vector<8x128xf32>
    %3093 = arith.mulf %3092, %0 : vector<8x128xf32>
    %3094 = vector.broadcast %3066 : f32 to vector<8x128xf32>
    %3095 = arith.mulf %3094, %1 : vector<8x128xf32>
    %3096 = arith.addf %3093, %3095 : vector<8x128xf32>
    %3097 = vector.broadcast %3069 : f32 to vector<8x128xf32>
    %3098 = arith.addf %3096, %3097 : vector<8x128xf32>
    %3099 = vector.broadcast %3072 : f32 to vector<8x128xf32>
    %3100 = arith.mulf %3099, %0 : vector<8x128xf32>
    %3101 = vector.broadcast %3075 : f32 to vector<8x128xf32>
    %3102 = arith.mulf %3101, %1 : vector<8x128xf32>
    %3103 = arith.addf %3100, %3102 : vector<8x128xf32>
    %3104 = vector.broadcast %3078 : f32 to vector<8x128xf32>
    %3105 = arith.addf %3103, %3104 : vector<8x128xf32>
    %cst_720 = arith.constant 1.000000e+00 : f32
    %3106 = vector.broadcast %cst_720 : f32 to vector<8x128xf32>
    %3107 = arith.subf %3106, %3091 : vector<8x128xf32>
    %3108 = arith.subf %3107, %3098 : vector<8x128xf32>
    %cst_721 = arith.constant -9.99999997E-7 : f32
    %3109 = vector.broadcast %cst_721 : f32 to vector<8x128xf32>
    %3110 = arith.cmpf oge, %3091, %3109 : vector<8x128xf32>
    %cst_722 = arith.constant -9.99999997E-7 : f32
    %3111 = vector.broadcast %cst_722 : f32 to vector<8x128xf32>
    %3112 = arith.cmpf oge, %3098, %3111 : vector<8x128xf32>
    %3113 = arith.andi %3110, %3112 : vector<8x128xi1>
    %cst_723 = arith.constant -9.99999997E-7 : f32
    %3114 = vector.broadcast %cst_723 : f32 to vector<8x128xf32>
    %3115 = arith.cmpf oge, %3108, %3114 : vector<8x128xf32>
    %3116 = arith.andi %3113, %3115 : vector<8x128xi1>
    %cst_724 = arith.constant 9.99999997E-7 : f32
    %3117 = vector.broadcast %cst_724 : f32 to vector<8x128xf32>
    %3118 = arith.cmpf ogt, %3105, %3117 : vector<8x128xf32>
    %3119 = arith.andi %3116, %3118 : vector<8x128xi1>
    %3120 = arith.extui %3119 : vector<8x128xi1> to vector<8x128xi32>
    %3121 = arith.sitofp %3120 : vector<8x128xi32> to vector<8x128xf32>
    %3122 = arith.mulf %3121, %3105 : vector<8x128xf32>
    %3123 = vector.broadcast %3081 : f32 to vector<8x128xf32>
    %3124 = arith.mulf %3122, %3123 : vector<8x128xf32>
    %3125 = arith.addf %3046, %3124 : vector<8x128xf32>
    %3126 = vector.broadcast %3084 : f32 to vector<8x128xf32>
    %3127 = arith.mulf %3121, %3126 : vector<8x128xf32>
    %3128 = arith.addf %3049, %3127 : vector<8x128xf32>
    %c3_i32_725 = arith.constant 3 : i32
    %c11_i32_726 = arith.constant 11 : i32
    %3129 = arith.muli %c11_i32_726, %c3_i32_725 : i32
    %3130 = arith.addi %2891, %3129 : i32
    %c0_i32_727 = arith.constant 0 : i32
    %3131 = arith.addi %3130, %c0_i32_727 : i32
    %3132 = arith.index_cast %3131 : i32 to index
    %3133 = memref.load %arg2[%3132] : memref<528xf32, #tpu.memory_space<smem>>
    %c1_i32_728 = arith.constant 1 : i32
    %3134 = arith.addi %3130, %c1_i32_728 : i32
    %3135 = arith.index_cast %3134 : i32 to index
    %3136 = memref.load %arg2[%3135] : memref<528xf32, #tpu.memory_space<smem>>
    %c2_i32_729 = arith.constant 2 : i32
    %3137 = arith.addi %3130, %c2_i32_729 : i32
    %3138 = arith.index_cast %3137 : i32 to index
    %3139 = memref.load %arg2[%3138] : memref<528xf32, #tpu.memory_space<smem>>
    %c3_i32_730 = arith.constant 3 : i32
    %3140 = arith.addi %3130, %c3_i32_730 : i32
    %3141 = arith.index_cast %3140 : i32 to index
    %3142 = memref.load %arg2[%3141] : memref<528xf32, #tpu.memory_space<smem>>
    %c4_i32_731 = arith.constant 4 : i32
    %3143 = arith.addi %3130, %c4_i32_731 : i32
    %3144 = arith.index_cast %3143 : i32 to index
    %3145 = memref.load %arg2[%3144] : memref<528xf32, #tpu.memory_space<smem>>
    %c5_i32_732 = arith.constant 5 : i32
    %3146 = arith.addi %3130, %c5_i32_732 : i32
    %3147 = arith.index_cast %3146 : i32 to index
    %3148 = memref.load %arg2[%3147] : memref<528xf32, #tpu.memory_space<smem>>
    %c6_i32_733 = arith.constant 6 : i32
    %3149 = arith.addi %3130, %c6_i32_733 : i32
    %3150 = arith.index_cast %3149 : i32 to index
    %3151 = memref.load %arg2[%3150] : memref<528xf32, #tpu.memory_space<smem>>
    %c7_i32_734 = arith.constant 7 : i32
    %3152 = arith.addi %3130, %c7_i32_734 : i32
    %3153 = arith.index_cast %3152 : i32 to index
    %3154 = memref.load %arg2[%3153] : memref<528xf32, #tpu.memory_space<smem>>
    %c8_i32_735 = arith.constant 8 : i32
    %3155 = arith.addi %3130, %c8_i32_735 : i32
    %3156 = arith.index_cast %3155 : i32 to index
    %3157 = memref.load %arg2[%3156] : memref<528xf32, #tpu.memory_space<smem>>
    %c9_i32_736 = arith.constant 9 : i32
    %3158 = arith.addi %3130, %c9_i32_736 : i32
    %3159 = arith.index_cast %3158 : i32 to index
    %3160 = memref.load %arg2[%3159] : memref<528xf32, #tpu.memory_space<smem>>
    %c10_i32_737 = arith.constant 10 : i32
    %3161 = arith.addi %3130, %c10_i32_737 : i32
    %3162 = arith.index_cast %3161 : i32 to index
    %3163 = memref.load %arg2[%3162] : memref<528xf32, #tpu.memory_space<smem>>
    %3164 = vector.broadcast %3133 : f32 to vector<8x128xf32>
    %3165 = arith.mulf %3164, %0 : vector<8x128xf32>
    %3166 = vector.broadcast %3136 : f32 to vector<8x128xf32>
    %3167 = arith.mulf %3166, %1 : vector<8x128xf32>
    %3168 = arith.addf %3165, %3167 : vector<8x128xf32>
    %3169 = vector.broadcast %3139 : f32 to vector<8x128xf32>
    %3170 = arith.addf %3168, %3169 : vector<8x128xf32>
    %3171 = vector.broadcast %3142 : f32 to vector<8x128xf32>
    %3172 = arith.mulf %3171, %0 : vector<8x128xf32>
    %3173 = vector.broadcast %3145 : f32 to vector<8x128xf32>
    %3174 = arith.mulf %3173, %1 : vector<8x128xf32>
    %3175 = arith.addf %3172, %3174 : vector<8x128xf32>
    %3176 = vector.broadcast %3148 : f32 to vector<8x128xf32>
    %3177 = arith.addf %3175, %3176 : vector<8x128xf32>
    %3178 = vector.broadcast %3151 : f32 to vector<8x128xf32>
    %3179 = arith.mulf %3178, %0 : vector<8x128xf32>
    %3180 = vector.broadcast %3154 : f32 to vector<8x128xf32>
    %3181 = arith.mulf %3180, %1 : vector<8x128xf32>
    %3182 = arith.addf %3179, %3181 : vector<8x128xf32>
    %3183 = vector.broadcast %3157 : f32 to vector<8x128xf32>
    %3184 = arith.addf %3182, %3183 : vector<8x128xf32>
    %cst_738 = arith.constant 1.000000e+00 : f32
    %3185 = vector.broadcast %cst_738 : f32 to vector<8x128xf32>
    %3186 = arith.subf %3185, %3170 : vector<8x128xf32>
    %3187 = arith.subf %3186, %3177 : vector<8x128xf32>
    %cst_739 = arith.constant -9.99999997E-7 : f32
    %3188 = vector.broadcast %cst_739 : f32 to vector<8x128xf32>
    %3189 = arith.cmpf oge, %3170, %3188 : vector<8x128xf32>
    %cst_740 = arith.constant -9.99999997E-7 : f32
    %3190 = vector.broadcast %cst_740 : f32 to vector<8x128xf32>
    %3191 = arith.cmpf oge, %3177, %3190 : vector<8x128xf32>
    %3192 = arith.andi %3189, %3191 : vector<8x128xi1>
    %cst_741 = arith.constant -9.99999997E-7 : f32
    %3193 = vector.broadcast %cst_741 : f32 to vector<8x128xf32>
    %3194 = arith.cmpf oge, %3187, %3193 : vector<8x128xf32>
    %3195 = arith.andi %3192, %3194 : vector<8x128xi1>
    %cst_742 = arith.constant 9.99999997E-7 : f32
    %3196 = vector.broadcast %cst_742 : f32 to vector<8x128xf32>
    %3197 = arith.cmpf ogt, %3184, %3196 : vector<8x128xf32>
    %3198 = arith.andi %3195, %3197 : vector<8x128xi1>
    %3199 = arith.extui %3198 : vector<8x128xi1> to vector<8x128xi32>
    %3200 = arith.sitofp %3199 : vector<8x128xi32> to vector<8x128xf32>
    %3201 = arith.mulf %3200, %3184 : vector<8x128xf32>
    %3202 = vector.broadcast %3160 : f32 to vector<8x128xf32>
    %3203 = arith.mulf %3201, %3202 : vector<8x128xf32>
    %3204 = arith.addf %3125, %3203 : vector<8x128xf32>
    %3205 = vector.broadcast %3163 : f32 to vector<8x128xf32>
    %3206 = arith.mulf %3200, %3205 : vector<8x128xf32>
    %3207 = arith.addf %3128, %3206 : vector<8x128xf32>
    %c4_i32_743 = arith.constant 4 : i32
    %c11_i32_744 = arith.constant 11 : i32
    %3208 = arith.muli %c11_i32_744, %c4_i32_743 : i32
    %3209 = arith.addi %2891, %3208 : i32
    %c0_i32_745 = arith.constant 0 : i32
    %3210 = arith.addi %3209, %c0_i32_745 : i32
    %3211 = arith.index_cast %3210 : i32 to index
    %3212 = memref.load %arg2[%3211] : memref<528xf32, #tpu.memory_space<smem>>
    %c1_i32_746 = arith.constant 1 : i32
    %3213 = arith.addi %3209, %c1_i32_746 : i32
    %3214 = arith.index_cast %3213 : i32 to index
    %3215 = memref.load %arg2[%3214] : memref<528xf32, #tpu.memory_space<smem>>
    %c2_i32_747 = arith.constant 2 : i32
    %3216 = arith.addi %3209, %c2_i32_747 : i32
    %3217 = arith.index_cast %3216 : i32 to index
    %3218 = memref.load %arg2[%3217] : memref<528xf32, #tpu.memory_space<smem>>
    %c3_i32_748 = arith.constant 3 : i32
    %3219 = arith.addi %3209, %c3_i32_748 : i32
    %3220 = arith.index_cast %3219 : i32 to index
    %3221 = memref.load %arg2[%3220] : memref<528xf32, #tpu.memory_space<smem>>
    %c4_i32_749 = arith.constant 4 : i32
    %3222 = arith.addi %3209, %c4_i32_749 : i32
    %3223 = arith.index_cast %3222 : i32 to index
    %3224 = memref.load %arg2[%3223] : memref<528xf32, #tpu.memory_space<smem>>
    %c5_i32_750 = arith.constant 5 : i32
    %3225 = arith.addi %3209, %c5_i32_750 : i32
    %3226 = arith.index_cast %3225 : i32 to index
    %3227 = memref.load %arg2[%3226] : memref<528xf32, #tpu.memory_space<smem>>
    %c6_i32_751 = arith.constant 6 : i32
    %3228 = arith.addi %3209, %c6_i32_751 : i32
    %3229 = arith.index_cast %3228 : i32 to index
    %3230 = memref.load %arg2[%3229] : memref<528xf32, #tpu.memory_space<smem>>
    %c7_i32_752 = arith.constant 7 : i32
    %3231 = arith.addi %3209, %c7_i32_752 : i32
    %3232 = arith.index_cast %3231 : i32 to index
    %3233 = memref.load %arg2[%3232] : memref<528xf32, #tpu.memory_space<smem>>
    %c8_i32_753 = arith.constant 8 : i32
    %3234 = arith.addi %3209, %c8_i32_753 : i32
    %3235 = arith.index_cast %3234 : i32 to index
    %3236 = memref.load %arg2[%3235] : memref<528xf32, #tpu.memory_space<smem>>
    %c9_i32_754 = arith.constant 9 : i32
    %3237 = arith.addi %3209, %c9_i32_754 : i32
    %3238 = arith.index_cast %3237 : i32 to index
    %3239 = memref.load %arg2[%3238] : memref<528xf32, #tpu.memory_space<smem>>
    %c10_i32_755 = arith.constant 10 : i32
    %3240 = arith.addi %3209, %c10_i32_755 : i32
    %3241 = arith.index_cast %3240 : i32 to index
    %3242 = memref.load %arg2[%3241] : memref<528xf32, #tpu.memory_space<smem>>
    %3243 = vector.broadcast %3212 : f32 to vector<8x128xf32>
    %3244 = arith.mulf %3243, %0 : vector<8x128xf32>
    %3245 = vector.broadcast %3215 : f32 to vector<8x128xf32>
    %3246 = arith.mulf %3245, %1 : vector<8x128xf32>
    %3247 = arith.addf %3244, %3246 : vector<8x128xf32>
    %3248 = vector.broadcast %3218 : f32 to vector<8x128xf32>
    %3249 = arith.addf %3247, %3248 : vector<8x128xf32>
    %3250 = vector.broadcast %3221 : f32 to vector<8x128xf32>
    %3251 = arith.mulf %3250, %0 : vector<8x128xf32>
    %3252 = vector.broadcast %3224 : f32 to vector<8x128xf32>
    %3253 = arith.mulf %3252, %1 : vector<8x128xf32>
    %3254 = arith.addf %3251, %3253 : vector<8x128xf32>
    %3255 = vector.broadcast %3227 : f32 to vector<8x128xf32>
    %3256 = arith.addf %3254, %3255 : vector<8x128xf32>
    %3257 = vector.broadcast %3230 : f32 to vector<8x128xf32>
    %3258 = arith.mulf %3257, %0 : vector<8x128xf32>
    %3259 = vector.broadcast %3233 : f32 to vector<8x128xf32>
    %3260 = arith.mulf %3259, %1 : vector<8x128xf32>
    %3261 = arith.addf %3258, %3260 : vector<8x128xf32>
    %3262 = vector.broadcast %3236 : f32 to vector<8x128xf32>
    %3263 = arith.addf %3261, %3262 : vector<8x128xf32>
    %cst_756 = arith.constant 1.000000e+00 : f32
    %3264 = vector.broadcast %cst_756 : f32 to vector<8x128xf32>
    %3265 = arith.subf %3264, %3249 : vector<8x128xf32>
    %3266 = arith.subf %3265, %3256 : vector<8x128xf32>
    %cst_757 = arith.constant -9.99999997E-7 : f32
    %3267 = vector.broadcast %cst_757 : f32 to vector<8x128xf32>
    %3268 = arith.cmpf oge, %3249, %3267 : vector<8x128xf32>
    %cst_758 = arith.constant -9.99999997E-7 : f32
    %3269 = vector.broadcast %cst_758 : f32 to vector<8x128xf32>
    %3270 = arith.cmpf oge, %3256, %3269 : vector<8x128xf32>
    %3271 = arith.andi %3268, %3270 : vector<8x128xi1>
    %cst_759 = arith.constant -9.99999997E-7 : f32
    %3272 = vector.broadcast %cst_759 : f32 to vector<8x128xf32>
    %3273 = arith.cmpf oge, %3266, %3272 : vector<8x128xf32>
    %3274 = arith.andi %3271, %3273 : vector<8x128xi1>
    %cst_760 = arith.constant 9.99999997E-7 : f32
    %3275 = vector.broadcast %cst_760 : f32 to vector<8x128xf32>
    %3276 = arith.cmpf ogt, %3263, %3275 : vector<8x128xf32>
    %3277 = arith.andi %3274, %3276 : vector<8x128xi1>
    %3278 = arith.extui %3277 : vector<8x128xi1> to vector<8x128xi32>
    %3279 = arith.sitofp %3278 : vector<8x128xi32> to vector<8x128xf32>
    %3280 = arith.mulf %3279, %3263 : vector<8x128xf32>
    %3281 = vector.broadcast %3239 : f32 to vector<8x128xf32>
    %3282 = arith.mulf %3280, %3281 : vector<8x128xf32>
    %3283 = arith.addf %3204, %3282 : vector<8x128xf32>
    %3284 = vector.broadcast %3242 : f32 to vector<8x128xf32>
    %3285 = arith.mulf %3279, %3284 : vector<8x128xf32>
    %3286 = arith.addf %3207, %3285 : vector<8x128xf32>
    %c5_i32_761 = arith.constant 5 : i32
    %c11_i32_762 = arith.constant 11 : i32
    %3287 = arith.muli %c11_i32_762, %c5_i32_761 : i32
    %3288 = arith.addi %2891, %3287 : i32
    %c0_i32_763 = arith.constant 0 : i32
    %3289 = arith.addi %3288, %c0_i32_763 : i32
    %3290 = arith.index_cast %3289 : i32 to index
    %3291 = memref.load %arg2[%3290] : memref<528xf32, #tpu.memory_space<smem>>
    %c1_i32_764 = arith.constant 1 : i32
    %3292 = arith.addi %3288, %c1_i32_764 : i32
    %3293 = arith.index_cast %3292 : i32 to index
    %3294 = memref.load %arg2[%3293] : memref<528xf32, #tpu.memory_space<smem>>
    %c2_i32_765 = arith.constant 2 : i32
    %3295 = arith.addi %3288, %c2_i32_765 : i32
    %3296 = arith.index_cast %3295 : i32 to index
    %3297 = memref.load %arg2[%3296] : memref<528xf32, #tpu.memory_space<smem>>
    %c3_i32_766 = arith.constant 3 : i32
    %3298 = arith.addi %3288, %c3_i32_766 : i32
    %3299 = arith.index_cast %3298 : i32 to index
    %3300 = memref.load %arg2[%3299] : memref<528xf32, #tpu.memory_space<smem>>
    %c4_i32_767 = arith.constant 4 : i32
    %3301 = arith.addi %3288, %c4_i32_767 : i32
    %3302 = arith.index_cast %3301 : i32 to index
    %3303 = memref.load %arg2[%3302] : memref<528xf32, #tpu.memory_space<smem>>
    %c5_i32_768 = arith.constant 5 : i32
    %3304 = arith.addi %3288, %c5_i32_768 : i32
    %3305 = arith.index_cast %3304 : i32 to index
    %3306 = memref.load %arg2[%3305] : memref<528xf32, #tpu.memory_space<smem>>
    %c6_i32_769 = arith.constant 6 : i32
    %3307 = arith.addi %3288, %c6_i32_769 : i32
    %3308 = arith.index_cast %3307 : i32 to index
    %3309 = memref.load %arg2[%3308] : memref<528xf32, #tpu.memory_space<smem>>
    %c7_i32_770 = arith.constant 7 : i32
    %3310 = arith.addi %3288, %c7_i32_770 : i32
    %3311 = arith.index_cast %3310 : i32 to index
    %3312 = memref.load %arg2[%3311] : memref<528xf32, #tpu.memory_space<smem>>
    %c8_i32_771 = arith.constant 8 : i32
    %3313 = arith.addi %3288, %c8_i32_771 : i32
    %3314 = arith.index_cast %3313 : i32 to index
    %3315 = memref.load %arg2[%3314] : memref<528xf32, #tpu.memory_space<smem>>
    %c9_i32_772 = arith.constant 9 : i32
    %3316 = arith.addi %3288, %c9_i32_772 : i32
    %3317 = arith.index_cast %3316 : i32 to index
    %3318 = memref.load %arg2[%3317] : memref<528xf32, #tpu.memory_space<smem>>
    %c10_i32_773 = arith.constant 10 : i32
    %3319 = arith.addi %3288, %c10_i32_773 : i32
    %3320 = arith.index_cast %3319 : i32 to index
    %3321 = memref.load %arg2[%3320] : memref<528xf32, #tpu.memory_space<smem>>
    %3322 = vector.broadcast %3291 : f32 to vector<8x128xf32>
    %3323 = arith.mulf %3322, %0 : vector<8x128xf32>
    %3324 = vector.broadcast %3294 : f32 to vector<8x128xf32>
    %3325 = arith.mulf %3324, %1 : vector<8x128xf32>
    %3326 = arith.addf %3323, %3325 : vector<8x128xf32>
    %3327 = vector.broadcast %3297 : f32 to vector<8x128xf32>
    %3328 = arith.addf %3326, %3327 : vector<8x128xf32>
    %3329 = vector.broadcast %3300 : f32 to vector<8x128xf32>
    %3330 = arith.mulf %3329, %0 : vector<8x128xf32>
    %3331 = vector.broadcast %3303 : f32 to vector<8x128xf32>
    %3332 = arith.mulf %3331, %1 : vector<8x128xf32>
    %3333 = arith.addf %3330, %3332 : vector<8x128xf32>
    %3334 = vector.broadcast %3306 : f32 to vector<8x128xf32>
    %3335 = arith.addf %3333, %3334 : vector<8x128xf32>
    %3336 = vector.broadcast %3309 : f32 to vector<8x128xf32>
    %3337 = arith.mulf %3336, %0 : vector<8x128xf32>
    %3338 = vector.broadcast %3312 : f32 to vector<8x128xf32>
    %3339 = arith.mulf %3338, %1 : vector<8x128xf32>
    %3340 = arith.addf %3337, %3339 : vector<8x128xf32>
    %3341 = vector.broadcast %3315 : f32 to vector<8x128xf32>
    %3342 = arith.addf %3340, %3341 : vector<8x128xf32>
    %cst_774 = arith.constant 1.000000e+00 : f32
    %3343 = vector.broadcast %cst_774 : f32 to vector<8x128xf32>
    %3344 = arith.subf %3343, %3328 : vector<8x128xf32>
    %3345 = arith.subf %3344, %3335 : vector<8x128xf32>
    %cst_775 = arith.constant -9.99999997E-7 : f32
    %3346 = vector.broadcast %cst_775 : f32 to vector<8x128xf32>
    %3347 = arith.cmpf oge, %3328, %3346 : vector<8x128xf32>
    %cst_776 = arith.constant -9.99999997E-7 : f32
    %3348 = vector.broadcast %cst_776 : f32 to vector<8x128xf32>
    %3349 = arith.cmpf oge, %3335, %3348 : vector<8x128xf32>
    %3350 = arith.andi %3347, %3349 : vector<8x128xi1>
    %cst_777 = arith.constant -9.99999997E-7 : f32
    %3351 = vector.broadcast %cst_777 : f32 to vector<8x128xf32>
    %3352 = arith.cmpf oge, %3345, %3351 : vector<8x128xf32>
    %3353 = arith.andi %3350, %3352 : vector<8x128xi1>
    %cst_778 = arith.constant 9.99999997E-7 : f32
    %3354 = vector.broadcast %cst_778 : f32 to vector<8x128xf32>
    %3355 = arith.cmpf ogt, %3342, %3354 : vector<8x128xf32>
    %3356 = arith.andi %3353, %3355 : vector<8x128xi1>
    %3357 = arith.extui %3356 : vector<8x128xi1> to vector<8x128xi32>
    %3358 = arith.sitofp %3357 : vector<8x128xi32> to vector<8x128xf32>
    %3359 = arith.mulf %3358, %3342 : vector<8x128xf32>
    %3360 = vector.broadcast %3318 : f32 to vector<8x128xf32>
    %3361 = arith.mulf %3359, %3360 : vector<8x128xf32>
    %3362 = arith.addf %3283, %3361 : vector<8x128xf32>
    %3363 = vector.broadcast %3321 : f32 to vector<8x128xf32>
    %3364 = arith.mulf %3358, %3363 : vector<8x128xf32>
    %3365 = arith.addf %3286, %3364 : vector<8x128xf32>
    %c6_i32_779 = arith.constant 6 : i32
    %c11_i32_780 = arith.constant 11 : i32
    %3366 = arith.muli %c11_i32_780, %c6_i32_779 : i32
    %3367 = arith.addi %2891, %3366 : i32
    %c0_i32_781 = arith.constant 0 : i32
    %3368 = arith.addi %3367, %c0_i32_781 : i32
    %3369 = arith.index_cast %3368 : i32 to index
    %3370 = memref.load %arg2[%3369] : memref<528xf32, #tpu.memory_space<smem>>
    %c1_i32_782 = arith.constant 1 : i32
    %3371 = arith.addi %3367, %c1_i32_782 : i32
    %3372 = arith.index_cast %3371 : i32 to index
    %3373 = memref.load %arg2[%3372] : memref<528xf32, #tpu.memory_space<smem>>
    %c2_i32_783 = arith.constant 2 : i32
    %3374 = arith.addi %3367, %c2_i32_783 : i32
    %3375 = arith.index_cast %3374 : i32 to index
    %3376 = memref.load %arg2[%3375] : memref<528xf32, #tpu.memory_space<smem>>
    %c3_i32_784 = arith.constant 3 : i32
    %3377 = arith.addi %3367, %c3_i32_784 : i32
    %3378 = arith.index_cast %3377 : i32 to index
    %3379 = memref.load %arg2[%3378] : memref<528xf32, #tpu.memory_space<smem>>
    %c4_i32_785 = arith.constant 4 : i32
    %3380 = arith.addi %3367, %c4_i32_785 : i32
    %3381 = arith.index_cast %3380 : i32 to index
    %3382 = memref.load %arg2[%3381] : memref<528xf32, #tpu.memory_space<smem>>
    %c5_i32_786 = arith.constant 5 : i32
    %3383 = arith.addi %3367, %c5_i32_786 : i32
    %3384 = arith.index_cast %3383 : i32 to index
    %3385 = memref.load %arg2[%3384] : memref<528xf32, #tpu.memory_space<smem>>
    %c6_i32_787 = arith.constant 6 : i32
    %3386 = arith.addi %3367, %c6_i32_787 : i32
    %3387 = arith.index_cast %3386 : i32 to index
    %3388 = memref.load %arg2[%3387] : memref<528xf32, #tpu.memory_space<smem>>
    %c7_i32_788 = arith.constant 7 : i32
    %3389 = arith.addi %3367, %c7_i32_788 : i32
    %3390 = arith.index_cast %3389 : i32 to index
    %3391 = memref.load %arg2[%3390] : memref<528xf32, #tpu.memory_space<smem>>
    %c8_i32_789 = arith.constant 8 : i32
    %3392 = arith.addi %3367, %c8_i32_789 : i32
    %3393 = arith.index_cast %3392 : i32 to index
    %3394 = memref.load %arg2[%3393] : memref<528xf32, #tpu.memory_space<smem>>
    %c9_i32_790 = arith.constant 9 : i32
    %3395 = arith.addi %3367, %c9_i32_790 : i32
    %3396 = arith.index_cast %3395 : i32 to index
    %3397 = memref.load %arg2[%3396] : memref<528xf32, #tpu.memory_space<smem>>
    %c10_i32_791 = arith.constant 10 : i32
    %3398 = arith.addi %3367, %c10_i32_791 : i32
    %3399 = arith.index_cast %3398 : i32 to index
    %3400 = memref.load %arg2[%3399] : memref<528xf32, #tpu.memory_space<smem>>
    %3401 = vector.broadcast %3370 : f32 to vector<8x128xf32>
    %3402 = arith.mulf %3401, %0 : vector<8x128xf32>
    %3403 = vector.broadcast %3373 : f32 to vector<8x128xf32>
    %3404 = arith.mulf %3403, %1 : vector<8x128xf32>
    %3405 = arith.addf %3402, %3404 : vector<8x128xf32>
    %3406 = vector.broadcast %3376 : f32 to vector<8x128xf32>
    %3407 = arith.addf %3405, %3406 : vector<8x128xf32>
    %3408 = vector.broadcast %3379 : f32 to vector<8x128xf32>
    %3409 = arith.mulf %3408, %0 : vector<8x128xf32>
    %3410 = vector.broadcast %3382 : f32 to vector<8x128xf32>
    %3411 = arith.mulf %3410, %1 : vector<8x128xf32>
    %3412 = arith.addf %3409, %3411 : vector<8x128xf32>
    %3413 = vector.broadcast %3385 : f32 to vector<8x128xf32>
    %3414 = arith.addf %3412, %3413 : vector<8x128xf32>
    %3415 = vector.broadcast %3388 : f32 to vector<8x128xf32>
    %3416 = arith.mulf %3415, %0 : vector<8x128xf32>
    %3417 = vector.broadcast %3391 : f32 to vector<8x128xf32>
    %3418 = arith.mulf %3417, %1 : vector<8x128xf32>
    %3419 = arith.addf %3416, %3418 : vector<8x128xf32>
    %3420 = vector.broadcast %3394 : f32 to vector<8x128xf32>
    %3421 = arith.addf %3419, %3420 : vector<8x128xf32>
    %cst_792 = arith.constant 1.000000e+00 : f32
    %3422 = vector.broadcast %cst_792 : f32 to vector<8x128xf32>
    %3423 = arith.subf %3422, %3407 : vector<8x128xf32>
    %3424 = arith.subf %3423, %3414 : vector<8x128xf32>
    %cst_793 = arith.constant -9.99999997E-7 : f32
    %3425 = vector.broadcast %cst_793 : f32 to vector<8x128xf32>
    %3426 = arith.cmpf oge, %3407, %3425 : vector<8x128xf32>
    %cst_794 = arith.constant -9.99999997E-7 : f32
    %3427 = vector.broadcast %cst_794 : f32 to vector<8x128xf32>
    %3428 = arith.cmpf oge, %3414, %3427 : vector<8x128xf32>
    %3429 = arith.andi %3426, %3428 : vector<8x128xi1>
    %cst_795 = arith.constant -9.99999997E-7 : f32
    %3430 = vector.broadcast %cst_795 : f32 to vector<8x128xf32>
    %3431 = arith.cmpf oge, %3424, %3430 : vector<8x128xf32>
    %3432 = arith.andi %3429, %3431 : vector<8x128xi1>
    %cst_796 = arith.constant 9.99999997E-7 : f32
    %3433 = vector.broadcast %cst_796 : f32 to vector<8x128xf32>
    %3434 = arith.cmpf ogt, %3421, %3433 : vector<8x128xf32>
    %3435 = arith.andi %3432, %3434 : vector<8x128xi1>
    %3436 = arith.extui %3435 : vector<8x128xi1> to vector<8x128xi32>
    %3437 = arith.sitofp %3436 : vector<8x128xi32> to vector<8x128xf32>
    %3438 = arith.mulf %3437, %3421 : vector<8x128xf32>
    %3439 = vector.broadcast %3397 : f32 to vector<8x128xf32>
    %3440 = arith.mulf %3438, %3439 : vector<8x128xf32>
    %3441 = arith.addf %3362, %3440 : vector<8x128xf32>
    %3442 = vector.broadcast %3400 : f32 to vector<8x128xf32>
    %3443 = arith.mulf %3437, %3442 : vector<8x128xf32>
    %3444 = arith.addf %3365, %3443 : vector<8x128xf32>
    %c7_i32_797 = arith.constant 7 : i32
    %c11_i32_798 = arith.constant 11 : i32
    %3445 = arith.muli %c11_i32_798, %c7_i32_797 : i32
    %3446 = arith.addi %2891, %3445 : i32
    %c0_i32_799 = arith.constant 0 : i32
    %3447 = arith.addi %3446, %c0_i32_799 : i32
    %3448 = arith.index_cast %3447 : i32 to index
    %3449 = memref.load %arg2[%3448] : memref<528xf32, #tpu.memory_space<smem>>
    %c1_i32_800 = arith.constant 1 : i32
    %3450 = arith.addi %3446, %c1_i32_800 : i32
    %3451 = arith.index_cast %3450 : i32 to index
    %3452 = memref.load %arg2[%3451] : memref<528xf32, #tpu.memory_space<smem>>
    %c2_i32_801 = arith.constant 2 : i32
    %3453 = arith.addi %3446, %c2_i32_801 : i32
    %3454 = arith.index_cast %3453 : i32 to index
    %3455 = memref.load %arg2[%3454] : memref<528xf32, #tpu.memory_space<smem>>
    %c3_i32_802 = arith.constant 3 : i32
    %3456 = arith.addi %3446, %c3_i32_802 : i32
    %3457 = arith.index_cast %3456 : i32 to index
    %3458 = memref.load %arg2[%3457] : memref<528xf32, #tpu.memory_space<smem>>
    %c4_i32_803 = arith.constant 4 : i32
    %3459 = arith.addi %3446, %c4_i32_803 : i32
    %3460 = arith.index_cast %3459 : i32 to index
    %3461 = memref.load %arg2[%3460] : memref<528xf32, #tpu.memory_space<smem>>
    %c5_i32_804 = arith.constant 5 : i32
    %3462 = arith.addi %3446, %c5_i32_804 : i32
    %3463 = arith.index_cast %3462 : i32 to index
    %3464 = memref.load %arg2[%3463] : memref<528xf32, #tpu.memory_space<smem>>
    %c6_i32_805 = arith.constant 6 : i32
    %3465 = arith.addi %3446, %c6_i32_805 : i32
    %3466 = arith.index_cast %3465 : i32 to index
    %3467 = memref.load %arg2[%3466] : memref<528xf32, #tpu.memory_space<smem>>
    %c7_i32_806 = arith.constant 7 : i32
    %3468 = arith.addi %3446, %c7_i32_806 : i32
    %3469 = arith.index_cast %3468 : i32 to index
    %3470 = memref.load %arg2[%3469] : memref<528xf32, #tpu.memory_space<smem>>
    %c8_i32_807 = arith.constant 8 : i32
    %3471 = arith.addi %3446, %c8_i32_807 : i32
    %3472 = arith.index_cast %3471 : i32 to index
    %3473 = memref.load %arg2[%3472] : memref<528xf32, #tpu.memory_space<smem>>
    %c9_i32_808 = arith.constant 9 : i32
    %3474 = arith.addi %3446, %c9_i32_808 : i32
    %3475 = arith.index_cast %3474 : i32 to index
    %3476 = memref.load %arg2[%3475] : memref<528xf32, #tpu.memory_space<smem>>
    %c10_i32_809 = arith.constant 10 : i32
    %3477 = arith.addi %3446, %c10_i32_809 : i32
    %3478 = arith.index_cast %3477 : i32 to index
    %3479 = memref.load %arg2[%3478] : memref<528xf32, #tpu.memory_space<smem>>
    %3480 = vector.broadcast %3449 : f32 to vector<8x128xf32>
    %3481 = arith.mulf %3480, %0 : vector<8x128xf32>
    %3482 = vector.broadcast %3452 : f32 to vector<8x128xf32>
    %3483 = arith.mulf %3482, %1 : vector<8x128xf32>
    %3484 = arith.addf %3481, %3483 : vector<8x128xf32>
    %3485 = vector.broadcast %3455 : f32 to vector<8x128xf32>
    %3486 = arith.addf %3484, %3485 : vector<8x128xf32>
    %3487 = vector.broadcast %3458 : f32 to vector<8x128xf32>
    %3488 = arith.mulf %3487, %0 : vector<8x128xf32>
    %3489 = vector.broadcast %3461 : f32 to vector<8x128xf32>
    %3490 = arith.mulf %3489, %1 : vector<8x128xf32>
    %3491 = arith.addf %3488, %3490 : vector<8x128xf32>
    %3492 = vector.broadcast %3464 : f32 to vector<8x128xf32>
    %3493 = arith.addf %3491, %3492 : vector<8x128xf32>
    %3494 = vector.broadcast %3467 : f32 to vector<8x128xf32>
    %3495 = arith.mulf %3494, %0 : vector<8x128xf32>
    %3496 = vector.broadcast %3470 : f32 to vector<8x128xf32>
    %3497 = arith.mulf %3496, %1 : vector<8x128xf32>
    %3498 = arith.addf %3495, %3497 : vector<8x128xf32>
    %3499 = vector.broadcast %3473 : f32 to vector<8x128xf32>
    %3500 = arith.addf %3498, %3499 : vector<8x128xf32>
    %cst_810 = arith.constant 1.000000e+00 : f32
    %3501 = vector.broadcast %cst_810 : f32 to vector<8x128xf32>
    %3502 = arith.subf %3501, %3486 : vector<8x128xf32>
    %3503 = arith.subf %3502, %3493 : vector<8x128xf32>
    %cst_811 = arith.constant -9.99999997E-7 : f32
    %3504 = vector.broadcast %cst_811 : f32 to vector<8x128xf32>
    %3505 = arith.cmpf oge, %3486, %3504 : vector<8x128xf32>
    %cst_812 = arith.constant -9.99999997E-7 : f32
    %3506 = vector.broadcast %cst_812 : f32 to vector<8x128xf32>
    %3507 = arith.cmpf oge, %3493, %3506 : vector<8x128xf32>
    %3508 = arith.andi %3505, %3507 : vector<8x128xi1>
    %cst_813 = arith.constant -9.99999997E-7 : f32
    %3509 = vector.broadcast %cst_813 : f32 to vector<8x128xf32>
    %3510 = arith.cmpf oge, %3503, %3509 : vector<8x128xf32>
    %3511 = arith.andi %3508, %3510 : vector<8x128xi1>
    %cst_814 = arith.constant 9.99999997E-7 : f32
    %3512 = vector.broadcast %cst_814 : f32 to vector<8x128xf32>
    %3513 = arith.cmpf ogt, %3500, %3512 : vector<8x128xf32>
    %3514 = arith.andi %3511, %3513 : vector<8x128xi1>
    %3515 = arith.extui %3514 : vector<8x128xi1> to vector<8x128xi32>
    %3516 = arith.sitofp %3515 : vector<8x128xi32> to vector<8x128xf32>
    %3517 = arith.mulf %3516, %3500 : vector<8x128xf32>
    %3518 = vector.broadcast %3476 : f32 to vector<8x128xf32>
    %3519 = arith.mulf %3517, %3518 : vector<8x128xf32>
    %3520 = arith.addf %3441, %3519 : vector<8x128xf32>
    %3521 = vector.broadcast %3479 : f32 to vector<8x128xf32>
    %3522 = arith.mulf %3516, %3521 : vector<8x128xf32>
    %3523 = arith.addf %3444, %3522 : vector<8x128xf32>
    %c8_i32_815 = arith.constant 8 : i32
    %c11_i32_816 = arith.constant 11 : i32
    %3524 = arith.muli %c11_i32_816, %c8_i32_815 : i32
    %3525 = arith.addi %2891, %3524 : i32
    %c0_i32_817 = arith.constant 0 : i32
    %3526 = arith.addi %3525, %c0_i32_817 : i32
    %3527 = arith.index_cast %3526 : i32 to index
    %3528 = memref.load %arg2[%3527] : memref<528xf32, #tpu.memory_space<smem>>
    %c1_i32_818 = arith.constant 1 : i32
    %3529 = arith.addi %3525, %c1_i32_818 : i32
    %3530 = arith.index_cast %3529 : i32 to index
    %3531 = memref.load %arg2[%3530] : memref<528xf32, #tpu.memory_space<smem>>
    %c2_i32_819 = arith.constant 2 : i32
    %3532 = arith.addi %3525, %c2_i32_819 : i32
    %3533 = arith.index_cast %3532 : i32 to index
    %3534 = memref.load %arg2[%3533] : memref<528xf32, #tpu.memory_space<smem>>
    %c3_i32_820 = arith.constant 3 : i32
    %3535 = arith.addi %3525, %c3_i32_820 : i32
    %3536 = arith.index_cast %3535 : i32 to index
    %3537 = memref.load %arg2[%3536] : memref<528xf32, #tpu.memory_space<smem>>
    %c4_i32_821 = arith.constant 4 : i32
    %3538 = arith.addi %3525, %c4_i32_821 : i32
    %3539 = arith.index_cast %3538 : i32 to index
    %3540 = memref.load %arg2[%3539] : memref<528xf32, #tpu.memory_space<smem>>
    %c5_i32_822 = arith.constant 5 : i32
    %3541 = arith.addi %3525, %c5_i32_822 : i32
    %3542 = arith.index_cast %3541 : i32 to index
    %3543 = memref.load %arg2[%3542] : memref<528xf32, #tpu.memory_space<smem>>
    %c6_i32_823 = arith.constant 6 : i32
    %3544 = arith.addi %3525, %c6_i32_823 : i32
    %3545 = arith.index_cast %3544 : i32 to index
    %3546 = memref.load %arg2[%3545] : memref<528xf32, #tpu.memory_space<smem>>
    %c7_i32_824 = arith.constant 7 : i32
    %3547 = arith.addi %3525, %c7_i32_824 : i32
    %3548 = arith.index_cast %3547 : i32 to index
    %3549 = memref.load %arg2[%3548] : memref<528xf32, #tpu.memory_space<smem>>
    %c8_i32_825 = arith.constant 8 : i32
    %3550 = arith.addi %3525, %c8_i32_825 : i32
    %3551 = arith.index_cast %3550 : i32 to index
    %3552 = memref.load %arg2[%3551] : memref<528xf32, #tpu.memory_space<smem>>
    %c9_i32_826 = arith.constant 9 : i32
    %3553 = arith.addi %3525, %c9_i32_826 : i32
    %3554 = arith.index_cast %3553 : i32 to index
    %3555 = memref.load %arg2[%3554] : memref<528xf32, #tpu.memory_space<smem>>
    %c10_i32_827 = arith.constant 10 : i32
    %3556 = arith.addi %3525, %c10_i32_827 : i32
    %3557 = arith.index_cast %3556 : i32 to index
    %3558 = memref.load %arg2[%3557] : memref<528xf32, #tpu.memory_space<smem>>
    %3559 = vector.broadcast %3528 : f32 to vector<8x128xf32>
    %3560 = arith.mulf %3559, %0 : vector<8x128xf32>
    %3561 = vector.broadcast %3531 : f32 to vector<8x128xf32>
    %3562 = arith.mulf %3561, %1 : vector<8x128xf32>
    %3563 = arith.addf %3560, %3562 : vector<8x128xf32>
    %3564 = vector.broadcast %3534 : f32 to vector<8x128xf32>
    %3565 = arith.addf %3563, %3564 : vector<8x128xf32>
    %3566 = vector.broadcast %3537 : f32 to vector<8x128xf32>
    %3567 = arith.mulf %3566, %0 : vector<8x128xf32>
    %3568 = vector.broadcast %3540 : f32 to vector<8x128xf32>
    %3569 = arith.mulf %3568, %1 : vector<8x128xf32>
    %3570 = arith.addf %3567, %3569 : vector<8x128xf32>
    %3571 = vector.broadcast %3543 : f32 to vector<8x128xf32>
    %3572 = arith.addf %3570, %3571 : vector<8x128xf32>
    %3573 = vector.broadcast %3546 : f32 to vector<8x128xf32>
    %3574 = arith.mulf %3573, %0 : vector<8x128xf32>
    %3575 = vector.broadcast %3549 : f32 to vector<8x128xf32>
    %3576 = arith.mulf %3575, %1 : vector<8x128xf32>
    %3577 = arith.addf %3574, %3576 : vector<8x128xf32>
    %3578 = vector.broadcast %3552 : f32 to vector<8x128xf32>
    %3579 = arith.addf %3577, %3578 : vector<8x128xf32>
    %cst_828 = arith.constant 1.000000e+00 : f32
    %3580 = vector.broadcast %cst_828 : f32 to vector<8x128xf32>
    %3581 = arith.subf %3580, %3565 : vector<8x128xf32>
    %3582 = arith.subf %3581, %3572 : vector<8x128xf32>
    %cst_829 = arith.constant -9.99999997E-7 : f32
    %3583 = vector.broadcast %cst_829 : f32 to vector<8x128xf32>
    %3584 = arith.cmpf oge, %3565, %3583 : vector<8x128xf32>
    %cst_830 = arith.constant -9.99999997E-7 : f32
    %3585 = vector.broadcast %cst_830 : f32 to vector<8x128xf32>
    %3586 = arith.cmpf oge, %3572, %3585 : vector<8x128xf32>
    %3587 = arith.andi %3584, %3586 : vector<8x128xi1>
    %cst_831 = arith.constant -9.99999997E-7 : f32
    %3588 = vector.broadcast %cst_831 : f32 to vector<8x128xf32>
    %3589 = arith.cmpf oge, %3582, %3588 : vector<8x128xf32>
    %3590 = arith.andi %3587, %3589 : vector<8x128xi1>
    %cst_832 = arith.constant 9.99999997E-7 : f32
    %3591 = vector.broadcast %cst_832 : f32 to vector<8x128xf32>
    %3592 = arith.cmpf ogt, %3579, %3591 : vector<8x128xf32>
    %3593 = arith.andi %3590, %3592 : vector<8x128xi1>
    %3594 = arith.extui %3593 : vector<8x128xi1> to vector<8x128xi32>
    %3595 = arith.sitofp %3594 : vector<8x128xi32> to vector<8x128xf32>
    %3596 = arith.mulf %3595, %3579 : vector<8x128xf32>
    %3597 = vector.broadcast %3555 : f32 to vector<8x128xf32>
    %3598 = arith.mulf %3596, %3597 : vector<8x128xf32>
    %3599 = arith.addf %3520, %3598 : vector<8x128xf32>
    %3600 = vector.broadcast %3558 : f32 to vector<8x128xf32>
    %3601 = arith.mulf %3595, %3600 : vector<8x128xf32>
    %3602 = arith.addf %3523, %3601 : vector<8x128xf32>
    %c9_i32_833 = arith.constant 9 : i32
    %c11_i32_834 = arith.constant 11 : i32
    %3603 = arith.muli %c11_i32_834, %c9_i32_833 : i32
    %3604 = arith.addi %2891, %3603 : i32
    %c0_i32_835 = arith.constant 0 : i32
    %3605 = arith.addi %3604, %c0_i32_835 : i32
    %3606 = arith.index_cast %3605 : i32 to index
    %3607 = memref.load %arg2[%3606] : memref<528xf32, #tpu.memory_space<smem>>
    %c1_i32_836 = arith.constant 1 : i32
    %3608 = arith.addi %3604, %c1_i32_836 : i32
    %3609 = arith.index_cast %3608 : i32 to index
    %3610 = memref.load %arg2[%3609] : memref<528xf32, #tpu.memory_space<smem>>
    %c2_i32_837 = arith.constant 2 : i32
    %3611 = arith.addi %3604, %c2_i32_837 : i32
    %3612 = arith.index_cast %3611 : i32 to index
    %3613 = memref.load %arg2[%3612] : memref<528xf32, #tpu.memory_space<smem>>
    %c3_i32_838 = arith.constant 3 : i32
    %3614 = arith.addi %3604, %c3_i32_838 : i32
    %3615 = arith.index_cast %3614 : i32 to index
    %3616 = memref.load %arg2[%3615] : memref<528xf32, #tpu.memory_space<smem>>
    %c4_i32_839 = arith.constant 4 : i32
    %3617 = arith.addi %3604, %c4_i32_839 : i32
    %3618 = arith.index_cast %3617 : i32 to index
    %3619 = memref.load %arg2[%3618] : memref<528xf32, #tpu.memory_space<smem>>
    %c5_i32_840 = arith.constant 5 : i32
    %3620 = arith.addi %3604, %c5_i32_840 : i32
    %3621 = arith.index_cast %3620 : i32 to index
    %3622 = memref.load %arg2[%3621] : memref<528xf32, #tpu.memory_space<smem>>
    %c6_i32_841 = arith.constant 6 : i32
    %3623 = arith.addi %3604, %c6_i32_841 : i32
    %3624 = arith.index_cast %3623 : i32 to index
    %3625 = memref.load %arg2[%3624] : memref<528xf32, #tpu.memory_space<smem>>
    %c7_i32_842 = arith.constant 7 : i32
    %3626 = arith.addi %3604, %c7_i32_842 : i32
    %3627 = arith.index_cast %3626 : i32 to index
    %3628 = memref.load %arg2[%3627] : memref<528xf32, #tpu.memory_space<smem>>
    %c8_i32_843 = arith.constant 8 : i32
    %3629 = arith.addi %3604, %c8_i32_843 : i32
    %3630 = arith.index_cast %3629 : i32 to index
    %3631 = memref.load %arg2[%3630] : memref<528xf32, #tpu.memory_space<smem>>
    %c9_i32_844 = arith.constant 9 : i32
    %3632 = arith.addi %3604, %c9_i32_844 : i32
    %3633 = arith.index_cast %3632 : i32 to index
    %3634 = memref.load %arg2[%3633] : memref<528xf32, #tpu.memory_space<smem>>
    %c10_i32_845 = arith.constant 10 : i32
    %3635 = arith.addi %3604, %c10_i32_845 : i32
    %3636 = arith.index_cast %3635 : i32 to index
    %3637 = memref.load %arg2[%3636] : memref<528xf32, #tpu.memory_space<smem>>
    %3638 = vector.broadcast %3607 : f32 to vector<8x128xf32>
    %3639 = arith.mulf %3638, %0 : vector<8x128xf32>
    %3640 = vector.broadcast %3610 : f32 to vector<8x128xf32>
    %3641 = arith.mulf %3640, %1 : vector<8x128xf32>
    %3642 = arith.addf %3639, %3641 : vector<8x128xf32>
    %3643 = vector.broadcast %3613 : f32 to vector<8x128xf32>
    %3644 = arith.addf %3642, %3643 : vector<8x128xf32>
    %3645 = vector.broadcast %3616 : f32 to vector<8x128xf32>
    %3646 = arith.mulf %3645, %0 : vector<8x128xf32>
    %3647 = vector.broadcast %3619 : f32 to vector<8x128xf32>
    %3648 = arith.mulf %3647, %1 : vector<8x128xf32>
    %3649 = arith.addf %3646, %3648 : vector<8x128xf32>
    %3650 = vector.broadcast %3622 : f32 to vector<8x128xf32>
    %3651 = arith.addf %3649, %3650 : vector<8x128xf32>
    %3652 = vector.broadcast %3625 : f32 to vector<8x128xf32>
    %3653 = arith.mulf %3652, %0 : vector<8x128xf32>
    %3654 = vector.broadcast %3628 : f32 to vector<8x128xf32>
    %3655 = arith.mulf %3654, %1 : vector<8x128xf32>
    %3656 = arith.addf %3653, %3655 : vector<8x128xf32>
    %3657 = vector.broadcast %3631 : f32 to vector<8x128xf32>
    %3658 = arith.addf %3656, %3657 : vector<8x128xf32>
    %cst_846 = arith.constant 1.000000e+00 : f32
    %3659 = vector.broadcast %cst_846 : f32 to vector<8x128xf32>
    %3660 = arith.subf %3659, %3644 : vector<8x128xf32>
    %3661 = arith.subf %3660, %3651 : vector<8x128xf32>
    %cst_847 = arith.constant -9.99999997E-7 : f32
    %3662 = vector.broadcast %cst_847 : f32 to vector<8x128xf32>
    %3663 = arith.cmpf oge, %3644, %3662 : vector<8x128xf32>
    %cst_848 = arith.constant -9.99999997E-7 : f32
    %3664 = vector.broadcast %cst_848 : f32 to vector<8x128xf32>
    %3665 = arith.cmpf oge, %3651, %3664 : vector<8x128xf32>
    %3666 = arith.andi %3663, %3665 : vector<8x128xi1>
    %cst_849 = arith.constant -9.99999997E-7 : f32
    %3667 = vector.broadcast %cst_849 : f32 to vector<8x128xf32>
    %3668 = arith.cmpf oge, %3661, %3667 : vector<8x128xf32>
    %3669 = arith.andi %3666, %3668 : vector<8x128xi1>
    %cst_850 = arith.constant 9.99999997E-7 : f32
    %3670 = vector.broadcast %cst_850 : f32 to vector<8x128xf32>
    %3671 = arith.cmpf ogt, %3658, %3670 : vector<8x128xf32>
    %3672 = arith.andi %3669, %3671 : vector<8x128xi1>
    %3673 = arith.extui %3672 : vector<8x128xi1> to vector<8x128xi32>
    %3674 = arith.sitofp %3673 : vector<8x128xi32> to vector<8x128xf32>
    %3675 = arith.mulf %3674, %3658 : vector<8x128xf32>
    %3676 = vector.broadcast %3634 : f32 to vector<8x128xf32>
    %3677 = arith.mulf %3675, %3676 : vector<8x128xf32>
    %3678 = arith.addf %3599, %3677 : vector<8x128xf32>
    %3679 = vector.broadcast %3637 : f32 to vector<8x128xf32>
    %3680 = arith.mulf %3674, %3679 : vector<8x128xf32>
    %3681 = arith.addf %3602, %3680 : vector<8x128xf32>
    %c10_i32_851 = arith.constant 10 : i32
    %c11_i32_852 = arith.constant 11 : i32
    %3682 = arith.muli %c11_i32_852, %c10_i32_851 : i32
    %3683 = arith.addi %2891, %3682 : i32
    %c0_i32_853 = arith.constant 0 : i32
    %3684 = arith.addi %3683, %c0_i32_853 : i32
    %3685 = arith.index_cast %3684 : i32 to index
    %3686 = memref.load %arg2[%3685] : memref<528xf32, #tpu.memory_space<smem>>
    %c1_i32_854 = arith.constant 1 : i32
    %3687 = arith.addi %3683, %c1_i32_854 : i32
    %3688 = arith.index_cast %3687 : i32 to index
    %3689 = memref.load %arg2[%3688] : memref<528xf32, #tpu.memory_space<smem>>
    %c2_i32_855 = arith.constant 2 : i32
    %3690 = arith.addi %3683, %c2_i32_855 : i32
    %3691 = arith.index_cast %3690 : i32 to index
    %3692 = memref.load %arg2[%3691] : memref<528xf32, #tpu.memory_space<smem>>
    %c3_i32_856 = arith.constant 3 : i32
    %3693 = arith.addi %3683, %c3_i32_856 : i32
    %3694 = arith.index_cast %3693 : i32 to index
    %3695 = memref.load %arg2[%3694] : memref<528xf32, #tpu.memory_space<smem>>
    %c4_i32_857 = arith.constant 4 : i32
    %3696 = arith.addi %3683, %c4_i32_857 : i32
    %3697 = arith.index_cast %3696 : i32 to index
    %3698 = memref.load %arg2[%3697] : memref<528xf32, #tpu.memory_space<smem>>
    %c5_i32_858 = arith.constant 5 : i32
    %3699 = arith.addi %3683, %c5_i32_858 : i32
    %3700 = arith.index_cast %3699 : i32 to index
    %3701 = memref.load %arg2[%3700] : memref<528xf32, #tpu.memory_space<smem>>
    %c6_i32_859 = arith.constant 6 : i32
    %3702 = arith.addi %3683, %c6_i32_859 : i32
    %3703 = arith.index_cast %3702 : i32 to index
    %3704 = memref.load %arg2[%3703] : memref<528xf32, #tpu.memory_space<smem>>
    %c7_i32_860 = arith.constant 7 : i32
    %3705 = arith.addi %3683, %c7_i32_860 : i32
    %3706 = arith.index_cast %3705 : i32 to index
    %3707 = memref.load %arg2[%3706] : memref<528xf32, #tpu.memory_space<smem>>
    %c8_i32_861 = arith.constant 8 : i32
    %3708 = arith.addi %3683, %c8_i32_861 : i32
    %3709 = arith.index_cast %3708 : i32 to index
    %3710 = memref.load %arg2[%3709] : memref<528xf32, #tpu.memory_space<smem>>
    %c9_i32_862 = arith.constant 9 : i32
    %3711 = arith.addi %3683, %c9_i32_862 : i32
    %3712 = arith.index_cast %3711 : i32 to index
    %3713 = memref.load %arg2[%3712] : memref<528xf32, #tpu.memory_space<smem>>
    %c10_i32_863 = arith.constant 10 : i32
    %3714 = arith.addi %3683, %c10_i32_863 : i32
    %3715 = arith.index_cast %3714 : i32 to index
    %3716 = memref.load %arg2[%3715] : memref<528xf32, #tpu.memory_space<smem>>
    %3717 = vector.broadcast %3686 : f32 to vector<8x128xf32>
    %3718 = arith.mulf %3717, %0 : vector<8x128xf32>
    %3719 = vector.broadcast %3689 : f32 to vector<8x128xf32>
    %3720 = arith.mulf %3719, %1 : vector<8x128xf32>
    %3721 = arith.addf %3718, %3720 : vector<8x128xf32>
    %3722 = vector.broadcast %3692 : f32 to vector<8x128xf32>
    %3723 = arith.addf %3721, %3722 : vector<8x128xf32>
    %3724 = vector.broadcast %3695 : f32 to vector<8x128xf32>
    %3725 = arith.mulf %3724, %0 : vector<8x128xf32>
    %3726 = vector.broadcast %3698 : f32 to vector<8x128xf32>
    %3727 = arith.mulf %3726, %1 : vector<8x128xf32>
    %3728 = arith.addf %3725, %3727 : vector<8x128xf32>
    %3729 = vector.broadcast %3701 : f32 to vector<8x128xf32>
    %3730 = arith.addf %3728, %3729 : vector<8x128xf32>
    %3731 = vector.broadcast %3704 : f32 to vector<8x128xf32>
    %3732 = arith.mulf %3731, %0 : vector<8x128xf32>
    %3733 = vector.broadcast %3707 : f32 to vector<8x128xf32>
    %3734 = arith.mulf %3733, %1 : vector<8x128xf32>
    %3735 = arith.addf %3732, %3734 : vector<8x128xf32>
    %3736 = vector.broadcast %3710 : f32 to vector<8x128xf32>
    %3737 = arith.addf %3735, %3736 : vector<8x128xf32>
    %cst_864 = arith.constant 1.000000e+00 : f32
    %3738 = vector.broadcast %cst_864 : f32 to vector<8x128xf32>
    %3739 = arith.subf %3738, %3723 : vector<8x128xf32>
    %3740 = arith.subf %3739, %3730 : vector<8x128xf32>
    %cst_865 = arith.constant -9.99999997E-7 : f32
    %3741 = vector.broadcast %cst_865 : f32 to vector<8x128xf32>
    %3742 = arith.cmpf oge, %3723, %3741 : vector<8x128xf32>
    %cst_866 = arith.constant -9.99999997E-7 : f32
    %3743 = vector.broadcast %cst_866 : f32 to vector<8x128xf32>
    %3744 = arith.cmpf oge, %3730, %3743 : vector<8x128xf32>
    %3745 = arith.andi %3742, %3744 : vector<8x128xi1>
    %cst_867 = arith.constant -9.99999997E-7 : f32
    %3746 = vector.broadcast %cst_867 : f32 to vector<8x128xf32>
    %3747 = arith.cmpf oge, %3740, %3746 : vector<8x128xf32>
    %3748 = arith.andi %3745, %3747 : vector<8x128xi1>
    %cst_868 = arith.constant 9.99999997E-7 : f32
    %3749 = vector.broadcast %cst_868 : f32 to vector<8x128xf32>
    %3750 = arith.cmpf ogt, %3737, %3749 : vector<8x128xf32>
    %3751 = arith.andi %3748, %3750 : vector<8x128xi1>
    %3752 = arith.extui %3751 : vector<8x128xi1> to vector<8x128xi32>
    %3753 = arith.sitofp %3752 : vector<8x128xi32> to vector<8x128xf32>
    %3754 = arith.mulf %3753, %3737 : vector<8x128xf32>
    %3755 = vector.broadcast %3713 : f32 to vector<8x128xf32>
    %3756 = arith.mulf %3754, %3755 : vector<8x128xf32>
    %3757 = arith.addf %3678, %3756 : vector<8x128xf32>
    %3758 = vector.broadcast %3716 : f32 to vector<8x128xf32>
    %3759 = arith.mulf %3753, %3758 : vector<8x128xf32>
    %3760 = arith.addf %3681, %3759 : vector<8x128xf32>
    %c11_i32_869 = arith.constant 11 : i32
    %c11_i32_870 = arith.constant 11 : i32
    %3761 = arith.muli %c11_i32_870, %c11_i32_869 : i32
    %3762 = arith.addi %2891, %3761 : i32
    %c0_i32_871 = arith.constant 0 : i32
    %3763 = arith.addi %3762, %c0_i32_871 : i32
    %3764 = arith.index_cast %3763 : i32 to index
    %3765 = memref.load %arg2[%3764] : memref<528xf32, #tpu.memory_space<smem>>
    %c1_i32_872 = arith.constant 1 : i32
    %3766 = arith.addi %3762, %c1_i32_872 : i32
    %3767 = arith.index_cast %3766 : i32 to index
    %3768 = memref.load %arg2[%3767] : memref<528xf32, #tpu.memory_space<smem>>
    %c2_i32_873 = arith.constant 2 : i32
    %3769 = arith.addi %3762, %c2_i32_873 : i32
    %3770 = arith.index_cast %3769 : i32 to index
    %3771 = memref.load %arg2[%3770] : memref<528xf32, #tpu.memory_space<smem>>
    %c3_i32_874 = arith.constant 3 : i32
    %3772 = arith.addi %3762, %c3_i32_874 : i32
    %3773 = arith.index_cast %3772 : i32 to index
    %3774 = memref.load %arg2[%3773] : memref<528xf32, #tpu.memory_space<smem>>
    %c4_i32_875 = arith.constant 4 : i32
    %3775 = arith.addi %3762, %c4_i32_875 : i32
    %3776 = arith.index_cast %3775 : i32 to index
    %3777 = memref.load %arg2[%3776] : memref<528xf32, #tpu.memory_space<smem>>
    %c5_i32_876 = arith.constant 5 : i32
    %3778 = arith.addi %3762, %c5_i32_876 : i32
    %3779 = arith.index_cast %3778 : i32 to index
    %3780 = memref.load %arg2[%3779] : memref<528xf32, #tpu.memory_space<smem>>
    %c6_i32_877 = arith.constant 6 : i32
    %3781 = arith.addi %3762, %c6_i32_877 : i32
    %3782 = arith.index_cast %3781 : i32 to index
    %3783 = memref.load %arg2[%3782] : memref<528xf32, #tpu.memory_space<smem>>
    %c7_i32_878 = arith.constant 7 : i32
    %3784 = arith.addi %3762, %c7_i32_878 : i32
    %3785 = arith.index_cast %3784 : i32 to index
    %3786 = memref.load %arg2[%3785] : memref<528xf32, #tpu.memory_space<smem>>
    %c8_i32_879 = arith.constant 8 : i32
    %3787 = arith.addi %3762, %c8_i32_879 : i32
    %3788 = arith.index_cast %3787 : i32 to index
    %3789 = memref.load %arg2[%3788] : memref<528xf32, #tpu.memory_space<smem>>
    %c9_i32_880 = arith.constant 9 : i32
    %3790 = arith.addi %3762, %c9_i32_880 : i32
    %3791 = arith.index_cast %3790 : i32 to index
    %3792 = memref.load %arg2[%3791] : memref<528xf32, #tpu.memory_space<smem>>
    %c10_i32_881 = arith.constant 10 : i32
    %3793 = arith.addi %3762, %c10_i32_881 : i32
    %3794 = arith.index_cast %3793 : i32 to index
    %3795 = memref.load %arg2[%3794] : memref<528xf32, #tpu.memory_space<smem>>
    %3796 = vector.broadcast %3765 : f32 to vector<8x128xf32>
    %3797 = arith.mulf %3796, %0 : vector<8x128xf32>
    %3798 = vector.broadcast %3768 : f32 to vector<8x128xf32>
    %3799 = arith.mulf %3798, %1 : vector<8x128xf32>
    %3800 = arith.addf %3797, %3799 : vector<8x128xf32>
    %3801 = vector.broadcast %3771 : f32 to vector<8x128xf32>
    %3802 = arith.addf %3800, %3801 : vector<8x128xf32>
    %3803 = vector.broadcast %3774 : f32 to vector<8x128xf32>
    %3804 = arith.mulf %3803, %0 : vector<8x128xf32>
    %3805 = vector.broadcast %3777 : f32 to vector<8x128xf32>
    %3806 = arith.mulf %3805, %1 : vector<8x128xf32>
    %3807 = arith.addf %3804, %3806 : vector<8x128xf32>
    %3808 = vector.broadcast %3780 : f32 to vector<8x128xf32>
    %3809 = arith.addf %3807, %3808 : vector<8x128xf32>
    %3810 = vector.broadcast %3783 : f32 to vector<8x128xf32>
    %3811 = arith.mulf %3810, %0 : vector<8x128xf32>
    %3812 = vector.broadcast %3786 : f32 to vector<8x128xf32>
    %3813 = arith.mulf %3812, %1 : vector<8x128xf32>
    %3814 = arith.addf %3811, %3813 : vector<8x128xf32>
    %3815 = vector.broadcast %3789 : f32 to vector<8x128xf32>
    %3816 = arith.addf %3814, %3815 : vector<8x128xf32>
    %cst_882 = arith.constant 1.000000e+00 : f32
    %3817 = vector.broadcast %cst_882 : f32 to vector<8x128xf32>
    %3818 = arith.subf %3817, %3802 : vector<8x128xf32>
    %3819 = arith.subf %3818, %3809 : vector<8x128xf32>
    %cst_883 = arith.constant -9.99999997E-7 : f32
    %3820 = vector.broadcast %cst_883 : f32 to vector<8x128xf32>
    %3821 = arith.cmpf oge, %3802, %3820 : vector<8x128xf32>
    %cst_884 = arith.constant -9.99999997E-7 : f32
    %3822 = vector.broadcast %cst_884 : f32 to vector<8x128xf32>
    %3823 = arith.cmpf oge, %3809, %3822 : vector<8x128xf32>
    %3824 = arith.andi %3821, %3823 : vector<8x128xi1>
    %cst_885 = arith.constant -9.99999997E-7 : f32
    %3825 = vector.broadcast %cst_885 : f32 to vector<8x128xf32>
    %3826 = arith.cmpf oge, %3819, %3825 : vector<8x128xf32>
    %3827 = arith.andi %3824, %3826 : vector<8x128xi1>
    %cst_886 = arith.constant 9.99999997E-7 : f32
    %3828 = vector.broadcast %cst_886 : f32 to vector<8x128xf32>
    %3829 = arith.cmpf ogt, %3816, %3828 : vector<8x128xf32>
    %3830 = arith.andi %3827, %3829 : vector<8x128xi1>
    %3831 = arith.extui %3830 : vector<8x128xi1> to vector<8x128xi32>
    %3832 = arith.sitofp %3831 : vector<8x128xi32> to vector<8x128xf32>
    %3833 = arith.mulf %3832, %3816 : vector<8x128xf32>
    %3834 = vector.broadcast %3792 : f32 to vector<8x128xf32>
    %3835 = arith.mulf %3833, %3834 : vector<8x128xf32>
    %3836 = arith.addf %3757, %3835 : vector<8x128xf32>
    %3837 = vector.broadcast %3795 : f32 to vector<8x128xf32>
    %3838 = arith.mulf %3832, %3837 : vector<8x128xf32>
    %3839 = arith.addf %3760, %3838 : vector<8x128xf32>
    %c12_i32_887 = arith.constant 12 : i32
    %c3 = arith.constant 3 : index
    %c0_888 = arith.constant 0 : index
    %c0_889 = arith.constant 0 : index
    %3840 = vector.load %arg5[%c3, %c0_888, %c0_889] : memref<4x8x128xf32, #tpu.memory_space<vmem>>, vector<1x8x128xf32>
    %3841 = vector.shape_cast %3840 : vector<1x8x128xf32> to vector<8x128xf32>
    %3842 = vector.shape_cast %3836 : vector<8x128xf32> to vector<1x8x128xf32>
    tpu.vector_store %arg5[%c3, %c0_888, %c0_889], %3842 {strides = array<i32>} : memref<4x8x128xf32, #tpu.memory_space<vmem>>, vector<1x8x128xf32>,
    %3843 = math.absf %3839 : vector<8x128xf32>
    %cst_890 = arith.constant 5.000000e-01 : f32
    %3844 = vector.broadcast %cst_890 : f32 to vector<8x128xf32>
    %3845 = arith.cmpf olt, %3843, %3844 : vector<8x128xf32>
    %3846 = arith.extui %3845 : vector<8x128xi1> to vector<8x128xi32>
    %3847 = arith.sitofp %3846 : vector<8x128xi32> to vector<8x128xf32>
    %c3_891 = arith.constant 3 : index
    %c0_892 = arith.constant 0 : index
    %c0_893 = arith.constant 0 : index
    %3848 = vector.load %arg6[%c3_891, %c0_892, %c0_893] : memref<4x8x128xf32, #tpu.memory_space<vmem>>, vector<1x8x128xf32>
    %3849 = vector.shape_cast %3848 : vector<1x8x128xf32> to vector<8x128xf32>
    %3850 = vector.shape_cast %3847 : vector<8x128xf32> to vector<1x8x128xf32>
    tpu.vector_store %arg6[%c3_891, %c0_892, %c0_893], %3850 {strides = array<i32>} : memref<4x8x128xf32, #tpu.memory_space<vmem>>, vector<1x8x128xf32>,
    return
  }
  func.func @transform_0(%arg0: i32, %arg1: i32) -> i32 {
    %c0_i32 = arith.constant 0 : i32
    %c0_i32_0 = arith.constant 0 : i32
    return %c0_i32 : i32
  }
  func.func @transform_1(%arg0: i32, %arg1: i32) -> (i32, i32) {
    %c0_i32 = arith.constant 0 : i32
    %c0_i32_0 = arith.constant 0 : i32
    return %arg1, %c0_i32 : i32, i32
  }
  func.func @transform_2(%arg0: i32, %arg1: i32) -> (i32, i32) {
    %c0_i32 = arith.constant 0 : i32
    %c0_i32_0 = arith.constant 0 : i32
    return %arg1, %c0_i32 : i32, i32
  }
  func.func @transform_3(%arg0: i32, %arg1: i32) -> (i32, i32, i32) {
    %c0_i32 = arith.constant 0 : i32
    %c0_i32_0 = arith.constant 0 : i32
    return %arg0, %arg1, %c0_i32 : i32, i32, i32
  }
  func.func @transform_4(%arg0: i32, %arg1: i32) -> (i32, i32, i32) {
    %c0_i32 = arith.constant 0 : i32
    %c0_i32_0 = arith.constant 0 : i32
    return %arg0, %arg1, %c0_i32 : i32, i32, i32
  }
}

</mosaic_0001>

<llo_original>
// kernel: _lambda_.1
$region0: #{_lambda_.1}
  #allocation0 [shape = 'u32[]', space=smem, size = 0x4, offset = 0x4, fixed_abs, tag = 'smem constant byte address 0x4 - core index']
  #allocation1 [shape = 'u32[144,128]{1,0:T(1,128)}', space=vmem, size = 0x12000, scoped, tag = 'internal scratch']
  %s0 = inlined_call_operand.vmem [shape: f32[528], index: 0, kind: input, shape index: {}]
  %s1 = inlined_call_operand.vmem [shape: f32[8,128], index: 1, kind: input, shape index: {}]
  %s2 = inlined_call_operand.vmem [shape: f32[8,128], index: 2, kind: input, shape index: {}]
  %s3 = inlined_call_operand.vmem [shape: f32[4,8,128], index: 3, kind: output, shape index: {0}]
  %s4 = inlined_call_operand.vmem [shape: f32[4,8,128], index: 4, kind: output, shape index: {1}]
  %5 = xla_tuple %s3, %s4
  %s6 = sld [smem:[#allocation0]]
  $region34: #{_lambda_.1} parent=0
    _
  %s8 = ssub.s32 1, %s6
  %s9 = scalar_select 0, %s8, %s6
  $region1: #{_lambda_.1} parent=0
    #allocation2 [shape = 'u8[2560]{0}', space=smem, size = 0xa00, scoped, tag = 'input window, operand 0, single buffered']
    #allocation3 [shape = 's32[1]{0}', space=sflag, size = 0x4, scoped, tag = 'scoped memory for _lambda_.1']
    %10 = vsyncpa [#allocation3], 0
    // Predicated region
    $region2: #{_lambda_.1} parent=1 // pred_check
      _
    $region3: #{_lambda_.1} parent=1 // pred_check_branch
      %12 = sbr.rel (0) target = $region5
    $region4: #{_lambda_.1} parent=1 // pred_region
      %s14 = ssub.s32 80, 80
      %15 = vsyncadd [#allocation3], %s14
      %s17 = sshll.u32 %s0, 4
      %s18 = int_to_ptr.vmem [resolvable:$true] %s17
      %20 = dma.vmem_to_smem %s18, 80, [#allocation2], [#allocation3]
    $region5: #{_lambda_.1} parent=1 // pred_fallthru
      _
    // Predicated region
    $region6: #{_lambda_.1} parent=1 // pred_check
      _
    $region7: #{_lambda_.1} parent=1 // pred_check_branch
      %22 = sbr.rel (0) target = $region9
    $region8: #{_lambda_.1} parent=1 // pred_region
      _
    $region9: #{_lambda_.1} parent=1 // pred_fallthru
      _
    // Predicated region
    $region10: #{_lambda_.1} parent=1 // pred_check
      _
    $region11: #{_lambda_.1} parent=1 // pred_check_branch
      %24 = sbr.rel (0) target = $region13
    $region12: #{_lambda_.1} parent=1 // pred_region
      _
    $region13: #{_lambda_.1} parent=1 // pred_fallthru
      _
    // Predicated region
    $region14: #{_lambda_.1} parent=1 // pred_check
      _
    $region15: #{_lambda_.1} parent=1 // pred_check_branch
      %26 = sbr.rel (0) target = $region17
    $region16: #{_lambda_.1} parent=1 // pred_region
      %27 = dma.done [#allocation3], 80
    $region17: #{_lambda_.1} parent=1 // pred_fallthru
      _
    %28 = sfence
    %v29 = vld [vmem:[%s1] sm:$0xff]
    %v30 = vld [vmem:[%s2] sm:$0xff]
    %s31 = smul.u32 0, 528
    %s32 = sld [smem:[#allocation2 + %s31]]
    %s33 = sadd.s32 %s31, 1
    %s34 = sld [smem:[#allocation2 + %s33]]
    %s35 = sadd.s32 %s31, 2
    %s36 = sld [smem:[#allocation2 + %s35]]
    %s37 = sadd.s32 %s31, 3
    %s38 = sld [smem:[#allocation2 + %s37]]
    %s39 = sadd.s32 %s31, 4
    %s40 = sld [smem:[#allocation2 + %s39]]
    %s41 = sadd.s32 %s31, 5
    %s42 = sld [smem:[#allocation2 + %s41]]
    %s43 = sadd.s32 %s31, 6
    %s44 = sld [smem:[#allocation2 + %s43]]
    %s45 = sadd.s32 %s31, 7
    %s46 = sld [smem:[#allocation2 + %s45]]
    %s47 = sadd.s32 %s31, 8
    %s48 = sld [smem:[#allocation2 + %s47]]
    %s49 = sadd.s32 %s31, 9
    %s50 = sld [smem:[#allocation2 + %s49]]
    %s51 = sadd.s32 %s31, 10
    %s52 = sld [smem:[#allocation2 + %s51]]
    %v53 = vstv %s32
    %v54 = vmul.f32 %v53, %v29
    %v55 = vstv %s34
    %v56 = vmul.f32 %v55, %v30
    %v57 = vadd.f32 %v54, %v56
    %v58 = vstv %s36
    %v59 = vadd.f32 %v57, %v58
    %v60 = vstv %s38
    %v61 = vmul.f32 %v60, %v29
    %v62 = vstv %s40
    %v63 = vmul.f32 %v62, %v30
    %v64 = vadd.f32 %v61, %v63
    %v65 = vstv %s42
    %v66 = vadd.f32 %v64, %v65
    %v67 = vstv %s44
    %v68 = vmul.f32 %v67, %v29
    %v69 = vstv %s46
    %v70 = vmul.f32 %v69, %v30
    %v71 = vadd.f32 %v68, %v70
    %v72 = vstv %s48
    %v73 = vadd.f32 %v71, %v72
    %v74 = vsub.f32 1.0, %v59
    %v75 = vsub.f32 %v74, %v66
    %vm76 = vcmp.ge.f32.partialorder %v59, -1e-06
    %vm77 = vcmp.ge.f32.partialorder %v66, -1e-06
    %vm78 = vmand %vm76, %vm77
    %vm79 = vcmp.ge.f32.partialorder %v75, -1e-06
    %vm80 = vmand %vm78, %vm79
    %vm81 = vcmp.gt.f32.partialorder %v73, 1e-06
    %vm82 = vmand %vm80, %vm81
    %v83 = vsel %vm82, 1, 0
    %v84 = vcvt.s32.f32 %v83
    %v85 = vmul.f32 %v84, %v73
    %v86 = vstv %s50
    %v87 = vmul.f32 %v85, %v86
    %v88 = vadd.f32 %v87, 0.0
    %v89 = vstv %s52
    %v90 = vmul.f32 %v84, %v89
    %v91 = vadd.f32 %v90, 0.0
    %s92 = sadd.s32 %s31, 11
    %s93 = sld [smem:[#allocation2 + %s92]]
    %s94 = sadd.s32 %s31, 12
    %s95 = sld [smem:[#allocation2 + %s94]]
    %s96 = sadd.s32 %s31, 13
    %s97 = sld [smem:[#allocation2 + %s96]]
    %s98 = sadd.s32 %s31, 14
    %s99 = sld [smem:[#allocation2 + %s98]]
    %s100 = sadd.s32 %s31, 15
    %s101 = sld [smem:[#allocation2 + %s100]]
    %s102 = sadd.s32 %s31, 16
    %s103 = sld [smem:[#allocation2 + %s102]]
    %s104 = sadd.s32 %s31, 17
    %s105 = sld [smem:[#allocation2 + %s104]]
    %s106 = sadd.s32 %s31, 18
    %s107 = sld [smem:[#allocation2 + %s106]]
    %s108 = sadd.s32 %s31, 19
    %s109 = sld [smem:[#allocation2 + %s108]]
    %s110 = sadd.s32 %s31, 20
    %s111 = sld [smem:[#allocation2 + %s110]]
    %s112 = sadd.s32 %s31, 21
    %s113 = sld [smem:[#allocation2 + %s112]]
    %v114 = vstv %s93
    %v115 = vmul.f32 %v114, %v29
    %v116 = vstv %s95
    %v117 = vmul.f32 %v116, %v30
    %v118 = vadd.f32 %v115, %v117
    %v119 = vstv %s97
    %v120 = vadd.f32 %v118, %v119
    %v121 = vstv %s99
    %v122 = vmul.f32 %v121, %v29
    %v123 = vstv %s101
    %v124 = vmul.f32 %v123, %v30
    %v125 = vadd.f32 %v122, %v124
    %v126 = vstv %s103
    %v127 = vadd.f32 %v125, %v126
    %v128 = vstv %s105
    %v129 = vmul.f32 %v128, %v29
    %v130 = vstv %s107
    %v131 = vmul.f32 %v130, %v30
    %v132 = vadd.f32 %v129, %v131
    %v133 = vstv %s109
    %v134 = vadd.f32 %v132, %v133
    %v135 = vsub.f32 1.0, %v120
    %v136 = vsub.f32 %v135, %v127
    %vm137 = vcmp.ge.f32.partialorder %v120, -1e-06
    %vm138 = vcmp.ge.f32.partialorder %v127, -1e-06
    %vm139 = vmand %vm137, %vm138
    %vm140 = vcmp.ge.f32.partialorder %v136, -1e-06
    %vm141 = vmand %vm139, %vm140
    %vm142 = vcmp.gt.f32.partialorder %v134, 1e-06
    %vm143 = vmand %vm141, %vm142
    %v144 = vsel %vm143, 1, 0
    %v145 = vcvt.s32.f32 %v144
    %v146 = vmul.f32 %v145, %v134
    %v147 = vstv %s111
    %v148 = vmul.f32 %v146, %v147
    %v149 = vadd.f32 %v88, %v148
    %v150 = vstv %s113
    %v151 = vmul.f32 %v145, %v150
    %v152 = vadd.f32 %v91, %v151
    %s153 = sadd.s32 %s31, 22
    %s154 = sld [smem:[#allocation2 + %s153]]
    %s155 = sadd.s32 %s31, 23
    %s156 = sld [smem:[#allocation2 + %s155]]
    %s157 = sadd.s32 %s31, 24
    %s158 = sld [smem:[#allocation2 + %s157]]
    %s159 = sadd.s32 %s31, 25
    %s160 = sld [smem:[#allocation2 + %s159]]
    %s161 = sadd.s32 %s31, 26
    %s162 = sld [smem:[#allocation2 + %s161]]
    %s163 = sadd.s32 %s31, 27
    %s164 = sld [smem:[#allocation2 + %s163]]
    %s165 = sadd.s32 %s31, 28
    %s166 = sld [smem:[#allocation2 + %s165]]
    %s167 = sadd.s32 %s31, 29
    %s168 = sld [smem:[#allocation2 + %s167]]
    %s169 = sadd.s32 %s31, 30
    %s170 = sld [smem:[#allocation2 + %s169]]
    %s171 = sadd.s32 %s31, 31
    %s172 = sld [smem:[#allocation2 + %s171]]
    %s173 = sadd.s32 %s31, 32
    %s174 = sld [smem:[#allocation2 + %s173]]
    %v175 = vstv %s154
    %v176 = vmul.f32 %v175, %v29
    %v177 = vstv %s156
    %v178 = vmul.f32 %v177, %v30
    %v179 = vadd.f32 %v176, %v178
    %v180 = vstv %s158
    %v181 = vadd.f32 %v179, %v180
    %v182 = vstv %s160
    %v183 = vmul.f32 %v182, %v29
    %v184 = vstv %s162
    %v185 = vmul.f32 %v184, %v30
    %v186 = vadd.f32 %v183, %v185
    %v187 = vstv %s164
    %v188 = vadd.f32 %v186, %v187
    %v189 = vstv %s166
    %v190 = vmul.f32 %v189, %v29
    %v191 = vstv %s168
    %v192 = vmul.f32 %v191, %v30
    %v193 = vadd.f32 %v190, %v192
    %v194 = vstv %s170
    %v195 = vadd.f32 %v193, %v194
    %v196 = vsub.f32 1.0, %v181
    %v197 = vsub.f32 %v196, %v188
    %vm198 = vcmp.ge.f32.partialorder %v181, -1e-06
    %vm199 = vcmp.ge.f32.partialorder %v188, -1e-06
    %vm200 = vmand %vm198, %vm199
    %vm201 = vcmp.ge.f32.partialorder %v197, -1e-06
    %vm202 = vmand %vm200, %vm201
    %vm203 = vcmp.gt.f32.partialorder %v195, 1e-06
    %vm204 = vmand %vm202, %vm203
    %v205 = vsel %vm204, 1, 0
    %v206 = vcvt.s32.f32 %v205
    %v207 = vmul.f32 %v206, %v195
    %v208 = vstv %s172
    %v209 = vmul.f32 %v207, %v208
    %v210 = vadd.f32 %v149, %v209
    %v211 = vstv %s174
    %v212 = vmul.f32 %v206, %v211
    %v213 = vadd.f32 %v152, %v212
    %s214 = sadd.s32 %s31, 33
    %s215 = sld [smem:[#allocation2 + %s214]]
    %s216 = sadd.s32 %s31, 34
    %s217 = sld [smem:[#allocation2 + %s216]]
    %s218 = sadd.s32 %s31, 35
    %s219 = sld [smem:[#allocation2 + %s218]]
    %s220 = sadd.s32 %s31, 36
    %s221 = sld [smem:[#allocation2 + %s220]]
    %s222 = sadd.s32 %s31, 37
    %s223 = sld [smem:[#allocation2 + %s222]]
    %s224 = sadd.s32 %s31, 38
    %s225 = sld [smem:[#allocation2 + %s224]]
    %s226 = sadd.s32 %s31, 39
    %s227 = sld [smem:[#allocation2 + %s226]]
    %s228 = sadd.s32 %s31, 40
    %s229 = sld [smem:[#allocation2 + %s228]]
    %s230 = sadd.s32 %s31, 41
    %s231 = sld [smem:[#allocation2 + %s230]]
    %s232 = sadd.s32 %s31, 42
    %s233 = sld [smem:[#allocation2 + %s232]]
    %s234 = sadd.s32 %s31, 43
    %s235 = sld [smem:[#allocation2 + %s234]]
    %v236 = vstv %s215
    %v237 = vmul.f32 %v236, %v29
    %v238 = vstv %s217
    %v239 = vmul.f32 %v238, %v30
    %v240 = vadd.f32 %v237, %v239
    %v241 = vstv %s219
    %v242 = vadd.f32 %v240, %v241
    %v243 = vstv %s221
    %v244 = vmul.f32 %v243, %v29
    %v245 = vstv %s223
    %v246 = vmul.f32 %v245, %v30
    %v247 = vadd.f32 %v244, %v246
    %v248 = vstv %s225
    %v249 = vadd.f32 %v247, %v248
    %v250 = vstv %s227
    %v251 = vmul.f32 %v250, %v29
    %v252 = vstv %s229
    %v253 = vmul.f32 %v252, %v30
    %v254 = vadd.f32 %v251, %v253
    %v255 = vstv %s231
    %v256 = vadd.f32 %v254, %v255
    %v257 = vsub.f32 1.0, %v242
    %v258 = vsub.f32 %v257, %v249
    %vm259 = vcmp.ge.f32.partialorder %v242, -1e-06
    %vm260 = vcmp.ge.f32.partialorder %v249, -1e-06
    %vm261 = vmand %vm259, %vm260
    %vm262 = vcmp.ge.f32.partialorder %v258, -1e-06
    %vm263 = vmand %vm261, %vm262
    %vm264 = vcmp.gt.f32.partialorder %v256, 1e-06
    %vm265 = vmand %vm263, %vm264
    %v266 = vsel %vm265, 1, 0
    %v267 = vcvt.s32.f32 %v266
    %v268 = vmul.f32 %v267, %v256
    %v269 = vstv %s233
    %v270 = vmul.f32 %v268, %v269
    %v271 = vadd.f32 %v210, %v270
    %v272 = vstv %s235
    %v273 = vmul.f32 %v267, %v272
    %v274 = vadd.f32 %v213, %v273
    %s275 = sadd.s32 %s31, 44
    %s276 = sld [smem:[#allocation2 + %s275]]
    %s277 = sadd.s32 %s31, 45
    %s278 = sld [smem:[#allocation2 + %s277]]
    %s279 = sadd.s32 %s31, 46
    %s280 = sld [smem:[#allocation2 + %s279]]
    %s281 = sadd.s32 %s31, 47
    %s282 = sld [smem:[#allocation2 + %s281]]
    %s283 = sadd.s32 %s31, 48
    %s284 = sld [smem:[#allocation2 + %s283]]
    %s285 = sadd.s32 %s31, 49
    %s286 = sld [smem:[#allocation2 + %s285]]
    %s287 = sadd.s32 %s31, 50
    %s288 = sld [smem:[#allocation2 + %s287]]
    %s289 = sadd.s32 %s31, 51
    %s290 = sld [smem:[#allocation2 + %s289]]
    %s291 = sadd.s32 %s31, 52
    %s292 = sld [smem:[#allocation2 + %s291]]
    %s293 = sadd.s32 %s31, 53
    %s294 = sld [smem:[#allocation2 + %s293]]
    %s295 = sadd.s32 %s31, 54
    %s296 = sld [smem:[#allocation2 + %s295]]
    %v297 = vstv %s276
    %v298 = vmul.f32 %v297, %v29
    %v299 = vstv %s278
    %v300 = vmul.f32 %v299, %v30
    %v301 = vadd.f32 %v298, %v300
    %v302 = vstv %s280
    %v303 = vadd.f32 %v301, %v302
    %v304 = vstv %s282
    %v305 = vmul.f32 %v304, %v29
    %v306 = vstv %s284
    %v307 = vmul.f32 %v306, %v30
    %v308 = vadd.f32 %v305, %v307
    %v309 = vstv %s286
    %v310 = vadd.f32 %v308, %v309
    %v311 = vstv %s288
    %v312 = vmul.f32 %v311, %v29
    %v313 = vstv %s290
    %v314 = vmul.f32 %v313, %v30
    %v315 = vadd.f32 %v312, %v314
    %v316 = vstv %s292
    %v317 = vadd.f32 %v315, %v316
    %v318 = vsub.f32 1.0, %v303
    %v319 = vsub.f32 %v318, %v310
    %vm320 = vcmp.ge.f32.partialorder %v303, -1e-06
    %vm321 = vcmp.ge.f32.partialorder %v310, -1e-06
    %vm322 = vmand %vm320, %vm321
    %vm323 = vcmp.ge.f32.partialorder %v319, -1e-06
    %vm324 = vmand %vm322, %vm323
    %vm325 = vcmp.gt.f32.partialorder %v317, 1e-06
    %vm326 = vmand %vm324, %vm325
    %v327 = vsel %vm326, 1, 0
    %v328 = vcvt.s32.f32 %v327
    %v329 = vmul.f32 %v328, %v317
    %v330 = vstv %s294
    %v331 = vmul.f32 %v329, %v330
    %v332 = vadd.f32 %v271, %v331
    %v333 = vstv %s296
    %v334 = vmul.f32 %v328, %v333
    %v335 = vadd.f32 %v274, %v334
    %s336 = sadd.s32 %s31, 55
    %s337 = sld [smem:[#allocation2 + %s336]]
    %s338 = sadd.s32 %s31, 56
    %s339 = sld [smem:[#allocation2 + %s338]]
    %s340 = sadd.s32 %s31, 57
    %s341 = sld [smem:[#allocation2 + %s340]]
    %s342 = sadd.s32 %s31, 58
    %s343 = sld [smem:[#allocation2 + %s342]]
    %s344 = sadd.s32 %s31, 59
    %s345 = sld [smem:[#allocation2 + %s344]]
    %s346 = sadd.s32 %s31, 60
    %s347 = sld [smem:[#allocation2 + %s346]]
    %s348 = sadd.s32 %s31, 61
    %s349 = sld [smem:[#allocation2 + %s348]]
    %s350 = sadd.s32 %s31, 62
    %s351 = sld [smem:[#allocation2 + %s350]]
    %s352 = sadd.s32 %s31, 63
    %s353 = sld [smem:[#allocation2 + %s352]]
    %s354 = sadd.s32 %s31, 64
    %s355 = sld [smem:[#allocation2 + %s354]]
    %s356 = sadd.s32 %s31, 65
    %s357 = sld [smem:[#allocation2 + %s356]]
    %v358 = vstv %s337
    %v359 = vmul.f32 %v358, %v29
    %v360 = vstv %s339
    %v361 = vmul.f32 %v360, %v30
    %v362 = vadd.f32 %v359, %v361
    %v363 = vstv %s341
    %v364 = vadd.f32 %v362, %v363
    %v365 = vstv %s343
    %v366 = vmul.f32 %v365, %v29
    %v367 = vstv %s345
    %v368 = vmul.f32 %v367, %v30
    %v369 = vadd.f32 %v366, %v368
    %v370 = vstv %s347
    %v371 = vadd.f32 %v369, %v370
    %v372 = vstv %s349
    %v373 = vmul.f32 %v372, %v29
    %v374 = vstv %s351
    %v375 = vmul.f32 %v374, %v30
    %v376 = vadd.f32 %v373, %v375
    %v377 = vstv %s353
    %v378 = vadd.f32 %v376, %v377
    %v379 = vsub.f32 1.0, %v364
    %v380 = vsub.f32 %v379, %v371
    %vm381 = vcmp.ge.f32.partialorder %v364, -1e-06
    %vm382 = vcmp.ge.f32.partialorder %v371, -1e-06
    %vm383 = vmand %vm381, %vm382
    %vm384 = vcmp.ge.f32.partialorder %v380, -1e-06
    %vm385 = vmand %vm383, %vm384
    %vm386 = vcmp.gt.f32.partialorder %v378, 1e-06
    %vm387 = vmand %vm385, %vm386
    %v388 = vsel %vm387, 1, 0
    %v389 = vcvt.s32.f32 %v388
    %v390 = vmul.f32 %v389, %v378
    %v391 = vstv %s355
    %v392 = vmul.f32 %v390, %v391
    %v393 = vadd.f32 %v332, %v392
    %v394 = vstv %s357
    %v395 = vmul.f32 %v389, %v394
    %v396 = vadd.f32 %v335, %v395
    %s397 = sadd.s32 %s31, 66
    %s398 = sld [smem:[#allocation2 + %s397]]
    %s399 = sadd.s32 %s31, 67
    %s400 = sld [smem:[#allocation2 + %s399]]
    %s401 = sadd.s32 %s31, 68
    %s402 = sld [smem:[#allocation2 + %s401]]
    %s403 = sadd.s32 %s31, 69
    %s404 = sld [smem:[#allocation2 + %s403]]
    %s405 = sadd.s32 %s31, 70
    %s406 = sld [smem:[#allocation2 + %s405]]
    %s407 = sadd.s32 %s31, 71
    %s408 = sld [smem:[#allocation2 + %s407]]
    %s409 = sadd.s32 %s31, 72
    %s410 = sld [smem:[#allocation2 + %s409]]
    %s411 = sadd.s32 %s31, 73
    %s412 = sld [smem:[#allocation2 + %s411]]
    %s413 = sadd.s32 %s31, 74
    %s414 = sld [smem:[#allocation2 + %s413]]
    %s415 = sadd.s32 %s31, 75
    %s416 = sld [smem:[#allocation2 + %s415]]
    %s417 = sadd.s32 %s31, 76
    %s418 = sld [smem:[#allocation2 + %s417]]
    %v419 = vstv %s398
    %v420 = vmul.f32 %v419, %v29
    %v421 = vstv %s400
    %v422 = vmul.f32 %v421, %v30
    %v423 = vadd.f32 %v420, %v422
    %v424 = vstv %s402
    %v425 = vadd.f32 %v423, %v424
    %v426 = vstv %s404
    %v427 = vmul.f32 %v426, %v29
    %v428 = vstv %s406
    %v429 = vmul.f32 %v428, %v30
    %v430 = vadd.f32 %v427, %v429
    %v431 = vstv %s408
    %v432 = vadd.f32 %v430, %v431
    %v433 = vstv %s410
    %v434 = vmul.f32 %v433, %v29
    %v435 = vstv %s412
    %v436 = vmul.f32 %v435, %v30
    %v437 = vadd.f32 %v434, %v436
    %v438 = vstv %s414
    %v439 = vadd.f32 %v437, %v438
    %v440 = vsub.f32 1.0, %v425
    %v441 = vsub.f32 %v440, %v432
    %vm442 = vcmp.ge.f32.partialorder %v425, -1e-06
    %vm443 = vcmp.ge.f32.partialorder %v432, -1e-06
    %vm444 = vmand %vm442, %vm443
    %vm445 = vcmp.ge.f32.partialorder %v441, -1e-06
    %vm446 = vmand %vm444, %vm445
    %vm447 = vcmp.gt.f32.partialorder %v439, 1e-06
    %vm448 = vmand %vm446, %vm447
    %v449 = vsel %vm448, 1, 0
    %v450 = vcvt.s32.f32 %v449
    %v451 = vmul.f32 %v450, %v439
    %v452 = vstv %s416
    %v453 = vmul.f32 %v451, %v452
    %v454 = vadd.f32 %v393, %v453
    %v455 = vstv %s418
    %v456 = vmul.f32 %v450, %v455
    %v457 = vadd.f32 %v396, %v456
    %s458 = sadd.s32 %s31, 77
    %s459 = sld [smem:[#allocation2 + %s458]]
    %s460 = sadd.s32 %s31, 78
    %s461 = sld [smem:[#allocation2 + %s460]]
    %s462 = sadd.s32 %s31, 79
    %s463 = sld [smem:[#allocation2 + %s462]]
    %s464 = sadd.s32 %s31, 80
    %s465 = sld [smem:[#allocation2 + %s464]]
    %s466 = sadd.s32 %s31, 81
    %s467 = sld [smem:[#allocation2 + %s466]]
    %s468 = sadd.s32 %s31, 82
    %s469 = sld [smem:[#allocation2 + %s468]]
    %s470 = sadd.s32 %s31, 83
    %s471 = sld [smem:[#allocation2 + %s470]]
    %s472 = sadd.s32 %s31, 84
    %s473 = sld [smem:[#allocation2 + %s472]]
    %s474 = sadd.s32 %s31, 85
    %s475 = sld [smem:[#allocation2 + %s474]]
    %s476 = sadd.s32 %s31, 86
    %s477 = sld [smem:[#allocation2 + %s476]]
    %s478 = sadd.s32 %s31, 87
    %s479 = sld [smem:[#allocation2 + %s478]]
    %v480 = vstv %s459
    %v481 = vmul.f32 %v480, %v29
    %v482 = vstv %s461
    %v483 = vmul.f32 %v482, %v30
    %v484 = vadd.f32 %v481, %v483
    %v485 = vstv %s463
    %v486 = vadd.f32 %v484, %v485
    %v487 = vstv %s465
    %v488 = vmul.f32 %v487, %v29
    %v489 = vstv %s467
    %v490 = vmul.f32 %v489, %v30
    %v491 = vadd.f32 %v488, %v490
    %v492 = vstv %s469
    %v493 = vadd.f32 %v491, %v492
    %v494 = vstv %s471
    %v495 = vmul.f32 %v494, %v29
    %v496 = vstv %s473
    %v497 = vmul.f32 %v496, %v30
    %v498 = vadd.f32 %v495, %v497
    %v499 = vstv %s475
    %v500 = vadd.f32 %v498, %v499
    %v501 = vsub.f32 1.0, %v486
    %v502 = vsub.f32 %v501, %v493
    %vm503 = vcmp.ge.f32.partialorder %v486, -1e-06
    %vm504 = vcmp.ge.f32.partialorder %v493, -1e-06
    %vm505 = vmand %vm503, %vm504
    %vm506 = vcmp.ge.f32.partialorder %v502, -1e-06
    %vm507 = vmand %vm505, %vm506
    %vm508 = vcmp.gt.f32.partialorder %v500, 1e-06
    %vm509 = vmand %vm507, %vm508
    %v510 = vsel %vm509, 1, 0
    %v511 = vcvt.s32.f32 %v510
    %v512 = vmul.f32 %v511, %v500
    %v513 = vstv %s477
    %v514 = vmul.f32 %v512, %v513
    %v515 = vadd.f32 %v454, %v514
    %v516 = vstv %s479
    %v517 = vmul.f32 %v511, %v516
    %v518 = vadd.f32 %v457, %v517
    %s519 = sadd.s32 %s31, 88
    %s520 = sld [smem:[#allocation2 + %s519]]
    %s521 = sadd.s32 %s31, 89
    %s522 = sld [smem:[#allocation2 + %s521]]
    %s523 = sadd.s32 %s31, 90
    %s524 = sld [smem:[#allocation2 + %s523]]
    %s525 = sadd.s32 %s31, 91
    %s526 = sld [smem:[#allocation2 + %s525]]
    %s527 = sadd.s32 %s31, 92
    %s528 = sld [smem:[#allocation2 + %s527]]
    %s529 = sadd.s32 %s31, 93
    %s530 = sld [smem:[#allocation2 + %s529]]
    %s531 = sadd.s32 %s31, 94
    %s532 = sld [smem:[#allocation2 + %s531]]
    %s533 = sadd.s32 %s31, 95
    %s534 = sld [smem:[#allocation2 + %s533]]
    %s535 = sadd.s32 %s31, 96
    %s536 = sld [smem:[#allocation2 + %s535]]
    %s537 = sadd.s32 %s31, 97
    %s538 = sld [smem:[#allocation2 + %s537]]
    %s539 = sadd.s32 %s31, 98
    %s540 = sld [smem:[#allocation2 + %s539]]
    %v541 = vstv %s520
    %v542 = vmul.f32 %v541, %v29
    %v543 = vstv %s522
    %v544 = vmul.f32 %v543, %v30
    %v545 = vadd.f32 %v542, %v544
    %v546 = vstv %s524
    %v547 = vadd.f32 %v545, %v546
    %v548 = vstv %s526
    %v549 = vmul.f32 %v548, %v29
    %v550 = vstv %s528
    %v551 = vmul.f32 %v550, %v30
    %v552 = vadd.f32 %v549, %v551
    %v553 = vstv %s530
    %v554 = vadd.f32 %v552, %v553
    %v555 = vstv %s532
    %v556 = vmul.f32 %v555, %v29
    %v557 = vstv %s534
    %v558 = vmul.f32 %v557, %v30
    %v559 = vadd.f32 %v556, %v558
    %v560 = vstv %s536
    %v561 = vadd.f32 %v559, %v560
    %v562 = vsub.f32 1.0, %v547
    %v563 = vsub.f32 %v562, %v554
    %vm564 = vcmp.ge.f32.partialorder %v547, -1e-06
    %vm565 = vcmp.ge.f32.partialorder %v554, -1e-06
    %vm566 = vmand %vm564, %vm565
    %vm567 = vcmp.ge.f32.partialorder %v563, -1e-06
    %vm568 = vmand %vm566, %vm567
    %vm569 = vcmp.gt.f32.partialorder %v561, 1e-06
    %vm570 = vmand %vm568, %vm569
    %v571 = vsel %vm570, 1, 0
    %v572 = vcvt.s32.f32 %v571
    %v573 = vmul.f32 %v572, %v561
    %v574 = vstv %s538
    %v575 = vmul.f32 %v573, %v574
    %v576 = vadd.f32 %v515, %v575
    %v577 = vstv %s540
    %v578 = vmul.f32 %v572, %v577
    %v579 = vadd.f32 %v518, %v578
    %s580 = sadd.s32 %s31, 99
    %s581 = sld [smem:[#allocation2 + %s580]]
    %s582 = sadd.s32 %s31, 100
    %s583 = sld [smem:[#allocation2 + %s582]]
    %s584 = sadd.s32 %s31, 101
    %s585 = sld [smem:[#allocation2 + %s584]]
    %s586 = sadd.s32 %s31, 102
    %s587 = sld [smem:[#allocation2 + %s586]]
    %s588 = sadd.s32 %s31, 103
    %s589 = sld [smem:[#allocation2 + %s588]]
    %s590 = sadd.s32 %s31, 104
    %s591 = sld [smem:[#allocation2 + %s590]]
    %s592 = sadd.s32 %s31, 105
    %s593 = sld [smem:[#allocation2 + %s592]]
    %s594 = sadd.s32 %s31, 106
    %s595 = sld [smem:[#allocation2 + %s594]]
    %s596 = sadd.s32 %s31, 107
    %s597 = sld [smem:[#allocation2 + %s596]]
    %s598 = sadd.s32 %s31, 108
    %s599 = sld [smem:[#allocation2 + %s598]]
    %s600 = sadd.s32 %s31, 109
    %s601 = sld [smem:[#allocation2 + %s600]]
    %v602 = vstv %s581
    %v603 = vmul.f32 %v602, %v29
    %v604 = vstv %s583
    %v605 = vmul.f32 %v604, %v30
    %v606 = vadd.f32 %v603, %v605
    %v607 = vstv %s585
    %v608 = vadd.f32 %v606, %v607
    %v609 = vstv %s587
    %v610 = vmul.f32 %v609, %v29
    %v611 = vstv %s589
    %v612 = vmul.f32 %v611, %v30
    %v613 = vadd.f32 %v610, %v612
    %v614 = vstv %s591
    %v615 = vadd.f32 %v613, %v614
    %v616 = vstv %s593
    %v617 = vmul.f32 %v616, %v29
    %v618 = vstv %s595
    %v619 = vmul.f32 %v618, %v30
    %v620 = vadd.f32 %v617, %v619
    %v621 = vstv %s597
    %v622 = vadd.f32 %v620, %v621
    %v623 = vsub.f32 1.0, %v608
    %v624 = vsub.f32 %v623, %v615
    %vm625 = vcmp.ge.f32.partialorder %v608, -1e-06
    %vm626 = vcmp.ge.f32.partialorder %v615, -1e-06
    %vm627 = vmand %vm625, %vm626
    %vm628 = vcmp.ge.f32.partialorder %v624, -1e-06
    %vm629 = vmand %vm627, %vm628
    %vm630 = vcmp.gt.f32.partialorder %v622, 1e-06
    %vm631 = vmand %vm629, %vm630
    %v632 = vsel %vm631, 1, 0
    %v633 = vcvt.s32.f32 %v632
    %v634 = vmul.f32 %v633, %v622
    %v635 = vstv %s599
    %v636 = vmul.f32 %v634, %v635
    %v637 = vadd.f32 %v576, %v636
    %v638 = vstv %s601
    %v639 = vmul.f32 %v633, %v638
    %v640 = vadd.f32 %v579, %v639
    %s641 = sadd.s32 %s31, 110
    %s642 = sld [smem:[#allocation2 + %s641]]
    %s643 = sadd.s32 %s31, 111
    %s644 = sld [smem:[#allocation2 + %s643]]
    %s645 = sadd.s32 %s31, 112
    %s646 = sld [smem:[#allocation2 + %s645]]
    %s647 = sadd.s32 %s31, 113
    %s648 = sld [smem:[#allocation2 + %s647]]
    %s649 = sadd.s32 %s31, 114
    %s650 = sld [smem:[#allocation2 + %s649]]
    %s651 = sadd.s32 %s31, 115
    %s652 = sld [smem:[#allocation2 + %s651]]
    %s653 = sadd.s32 %s31, 116
    %s654 = sld [smem:[#allocation2 + %s653]]
    %s655 = sadd.s32 %s31, 117
    %s656 = sld [smem:[#allocation2 + %s655]]
    %s657 = sadd.s32 %s31, 118
    %s658 = sld [smem:[#allocation2 + %s657]]
    %s659 = sadd.s32 %s31, 119
    %s660 = sld [smem:[#allocation2 + %s659]]
    %s661 = sadd.s32 %s31, 120
    %s662 = sld [smem:[#allocation2 + %s661]]
    %v663 = vstv %s642
    %v664 = vmul.f32 %v663, %v29
    %v665 = vstv %s644
    %v666 = vmul.f32 %v665, %v30
    %v667 = vadd.f32 %v664, %v666
    %v668 = vstv %s646
    %v669 = vadd.f32 %v667, %v668
    %v670 = vstv %s648
    %v671 = vmul.f32 %v670, %v29
    %v672 = vstv %s650
    %v673 = vmul.f32 %v672, %v30
    %v674 = vadd.f32 %v671, %v673
    %v675 = vstv %s652
    %v676 = vadd.f32 %v674, %v675
    %v677 = vstv %s654
    %v678 = vmul.f32 %v677, %v29
    %v679 = vstv %s656
    %v680 = vmul.f32 %v679, %v30
    %v681 = vadd.f32 %v678, %v680
    %v682 = vstv %s658
    %v683 = vadd.f32 %v681, %v682
    %v684 = vsub.f32 1.0, %v669
    %v685 = vsub.f32 %v684, %v676
    %vm686 = vcmp.ge.f32.partialorder %v669, -1e-06
    %vm687 = vcmp.ge.f32.partialorder %v676, -1e-06
    %vm688 = vmand %vm686, %vm687
    %vm689 = vcmp.ge.f32.partialorder %v685, -1e-06
    %vm690 = vmand %vm688, %vm689
    %vm691 = vcmp.gt.f32.partialorder %v683, 1e-06
    %vm692 = vmand %vm690, %vm691
    %v693 = vsel %vm692, 1, 0
    %v694 = vcvt.s32.f32 %v693
    %v695 = vmul.f32 %v694, %v683
    %v696 = vstv %s660
    %v697 = vmul.f32 %v695, %v696
    %v698 = vadd.f32 %v637, %v697
    %v699 = vstv %s662
    %v700 = vmul.f32 %v694, %v699
    %v701 = vadd.f32 %v640, %v700
    %s702 = sadd.s32 %s31, 121
    %s703 = sld [smem:[#allocation2 + %s702]]
    %s704 = sadd.s32 %s31, 122
    %s705 = sld [smem:[#allocation2 + %s704]]
    %s706 = sadd.s32 %s31, 123
    %s707 = sld [smem:[#allocation2 + %s706]]
    %s708 = sadd.s32 %s31, 124
    %s709 = sld [smem:[#allocation2 + %s708]]
    %s710 = sadd.s32 %s31, 125
    %s711 = sld [smem:[#allocation2 + %s710]]
    %s712 = sadd.s32 %s31, 126
    %s713 = sld [smem:[#allocation2 + %s712]]
    %s714 = sadd.s32 %s31, 127
    %s715 = sld [smem:[#allocation2 + %s714]]
    %s716 = sadd.s32 %s31, 128
    %s717 = sld [smem:[#allocation2 + %s716]]
    %s718 = sadd.s32 %s31, 129
    %s719 = sld [smem:[#allocation2 + %s718]]
    %s720 = sadd.s32 %s31, 130
    %s721 = sld [smem:[#allocation2 + %s720]]
    %s722 = sadd.s32 %s31, 131
    %s723 = sld [smem:[#allocation2 + %s722]]
    %v724 = vstv %s703
    %v725 = vmul.f32 %v724, %v29
    %v726 = vstv %s705
    %v727 = vmul.f32 %v726, %v30
    %v728 = vadd.f32 %v725, %v727
    %v729 = vstv %s707
    %v730 = vadd.f32 %v728, %v729
    %v731 = vstv %s709
    %v732 = vmul.f32 %v731, %v29
    %v733 = vstv %s711
    %v734 = vmul.f32 %v733, %v30
    %v735 = vadd.f32 %v732, %v734
    %v736 = vstv %s713
    %v737 = vadd.f32 %v735, %v736
    %v738 = vstv %s715
    %v739 = vmul.f32 %v738, %v29
    %v740 = vstv %s717
    %v741 = vmul.f32 %v740, %v30
    %v742 = vadd.f32 %v739, %v741
    %v743 = vstv %s719
    %v744 = vadd.f32 %v742, %v743
    %v745 = vsub.f32 1.0, %v730
    %v746 = vsub.f32 %v745, %v737
    %vm747 = vcmp.ge.f32.partialorder %v730, -1e-06
    %vm748 = vcmp.ge.f32.partialorder %v737, -1e-06
    %vm749 = vmand %vm747, %vm748
    %vm750 = vcmp.ge.f32.partialorder %v746, -1e-06
    %vm751 = vmand %vm749, %vm750
    %vm752 = vcmp.gt.f32.partialorder %v744, 1e-06
    %vm753 = vmand %vm751, %vm752
    %v754 = vsel %vm753, 1, 0
    %v755 = vcvt.s32.f32 %v754
    %v756 = vmul.f32 %v755, %v744
    %v757 = vstv %s721
    %v758 = vmul.f32 %v756, %v757
    %v759 = vadd.f32 %v698, %v758
    %v760 = vstv %s723
    %v761 = vmul.f32 %v755, %v760
    %v762 = vadd.f32 %v701, %v761
    %763 = vst [vmem:[%s3] sm:$0xff] %v759
    %v764 = vand.u32 2147483647, %v762
    %vm765 = vcmp.lt.f32.partialorder %v764, 0.5
    %v766 = vsel %vm765, 1, 0
    %v767 = vcvt.s32.f32 %v766
    %768 = vst [vmem:[%s4] sm:$0xff] %v767
    %s769 = smul.u32 0, 4
    %s770 = sadd.s32 %s769, 1
    %s771 = smul.u32 %s770, 132
    %s772 = sld [smem:[#allocation2 + %s771]]
    %s773 = sadd.s32 %s771, 1
    %s774 = sld [smem:[#allocation2 + %s773]]
    %s775 = sadd.s32 %s771, 2
    %s776 = sld [smem:[#allocation2 + %s775]]
    %s777 = sadd.s32 %s771, 3
    %s778 = sld [smem:[#allocation2 + %s777]]
    %s779 = sadd.s32 %s771, 4
    %s780 = sld [smem:[#allocation2 + %s779]]
    %s781 = sadd.s32 %s771, 5
    %s782 = sld [smem:[#allocation2 + %s781]]
    %s783 = sadd.s32 %s771, 6
    %s784 = sld [smem:[#allocation2 + %s783]]
    %s785 = sadd.s32 %s771, 7
    %s786 = sld [smem:[#allocation2 + %s785]]
    %s787 = sadd.s32 %s771, 8
    %s788 = sld [smem:[#allocation2 + %s787]]
    %s789 = sadd.s32 %s771, 9
    %s790 = sld [smem:[#allocation2 + %s789]]
    %s791 = sadd.s32 %s771, 10
    %s792 = sld [smem:[#allocation2 + %s791]]
    %v793 = vstv %s772
    %v794 = vmul.f32 %v793, %v29
    %v795 = vstv %s774
    %v796 = vmul.f32 %v795, %v30
    %v797 = vadd.f32 %v794, %v796
    %v798 = vstv %s776
    %v799 = vadd.f32 %v797, %v798
    %v800 = vstv %s778
    %v801 = vmul.f32 %v800, %v29
    %v802 = vstv %s780
    %v803 = vmul.f32 %v802, %v30
    %v804 = vadd.f32 %v801, %v803
    %v805 = vstv %s782
    %v806 = vadd.f32 %v804, %v805
    %v807 = vstv %s784
    %v808 = vmul.f32 %v807, %v29
    %v809 = vstv %s786
    %v810 = vmul.f32 %v809, %v30
    %v811 = vadd.f32 %v808, %v810
    %v812 = vstv %s788
    %v813 = vadd.f32 %v811, %v812
    %v814 = vsub.f32 1.0, %v799
    %v815 = vsub.f32 %v814, %v806
    %vm816 = vcmp.ge.f32.partialorder %v799, -1e-06
    %vm817 = vcmp.ge.f32.partialorder %v806, -1e-06
    %vm818 = vmand %vm816, %vm817
    %vm819 = vcmp.ge.f32.partialorder %v815, -1e-06
    %vm820 = vmand %vm818, %vm819
    %vm821 = vcmp.gt.f32.partialorder %v813, 1e-06
    %vm822 = vmand %vm820, %vm821
    %v823 = vsel %vm822, 1, 0
    %v824 = vcvt.s32.f32 %v823
    %v825 = vmul.f32 %v824, %v813
    %v826 = vstv %s790
    %v827 = vmul.f32 %v825, %v826
    %v828 = vadd.f32 %v827, 0.0
    %v829 = vstv %s792
    %v830 = vmul.f32 %v824, %v829
    %v831 = vadd.f32 %v830, 0.0
    %s832 = sadd.s32 %s771, 11
    %s833 = sld [smem:[#allocation2 + %s832]]
    %s834 = sadd.s32 %s771, 12
    %s835 = sld [smem:[#allocation2 + %s834]]
    %s836 = sadd.s32 %s771, 13
    %s837 = sld [smem:[#allocation2 + %s836]]
    %s838 = sadd.s32 %s771, 14
    %s839 = sld [smem:[#allocation2 + %s838]]
    %s840 = sadd.s32 %s771, 15
    %s841 = sld [smem:[#allocation2 + %s840]]
    %s842 = sadd.s32 %s771, 16
    %s843 = sld [smem:[#allocation2 + %s842]]
    %s844 = sadd.s32 %s771, 17
    %s845 = sld [smem:[#allocation2 + %s844]]
    %s846 = sadd.s32 %s771, 18
    %s847 = sld [smem:[#allocation2 + %s846]]
    %s848 = sadd.s32 %s771, 19
    %s849 = sld [smem:[#allocation2 + %s848]]
    %s850 = sadd.s32 %s771, 20
    %s851 = sld [smem:[#allocation2 + %s850]]
    %s852 = sadd.s32 %s771, 21
    %s853 = sld [smem:[#allocation2 + %s852]]
    %v854 = vstv %s833
    %v855 = vmul.f32 %v854, %v29
    %v856 = vstv %s835
    %v857 = vmul.f32 %v856, %v30
    %v858 = vadd.f32 %v855, %v857
    %v859 = vstv %s837
    %v860 = vadd.f32 %v858, %v859
    %v861 = vstv %s839
    %v862 = vmul.f32 %v861, %v29
    %v863 = vstv %s841
    %v864 = vmul.f32 %v863, %v30
    %v865 = vadd.f32 %v862, %v864
    %v866 = vstv %s843
    %v867 = vadd.f32 %v865, %v866
    %v868 = vstv %s845
    %v869 = vmul.f32 %v868, %v29
    %v870 = vstv %s847
    %v871 = vmul.f32 %v870, %v30
    %v872 = vadd.f32 %v869, %v871
    %v873 = vstv %s849
    %v874 = vadd.f32 %v872, %v873
    %v875 = vsub.f32 1.0, %v860
    %v876 = vsub.f32 %v875, %v867
    %vm877 = vcmp.ge.f32.partialorder %v860, -1e-06
    %vm878 = vcmp.ge.f32.partialorder %v867, -1e-06
    %vm879 = vmand %vm877, %vm878
    %vm880 = vcmp.ge.f32.partialorder %v876, -1e-06
    %vm881 = vmand %vm879, %vm880
    %vm882 = vcmp.gt.f32.partialorder %v874, 1e-06
    %vm883 = vmand %vm881, %vm882
    %v884 = vsel %vm883, 1, 0
    %v885 = vcvt.s32.f32 %v884
    %v886 = vmul.f32 %v885, %v874
    %v887 = vstv %s851
    %v888 = vmul.f32 %v886, %v887
    %v889 = vadd.f32 %v828, %v888
    %v890 = vstv %s853
    %v891 = vmul.f32 %v885, %v890
    %v892 = vadd.f32 %v831, %v891
    %s893 = sadd.s32 %s771, 22
    %s894 = sld [smem:[#allocation2 + %s893]]
    %s895 = sadd.s32 %s771, 23
    %s896 = sld [smem:[#allocation2 + %s895]]
    %s897 = sadd.s32 %s771, 24
    %s898 = sld [smem:[#allocation2 + %s897]]
    %s899 = sadd.s32 %s771, 25
    %s900 = sld [smem:[#allocation2 + %s899]]
    %s901 = sadd.s32 %s771, 26
    %s902 = sld [smem:[#allocation2 + %s901]]
    %s903 = sadd.s32 %s771, 27
    %s904 = sld [smem:[#allocation2 + %s903]]
    %s905 = sadd.s32 %s771, 28
    %s906 = sld [smem:[#allocation2 + %s905]]
    %s907 = sadd.s32 %s771, 29
    %s908 = sld [smem:[#allocation2 + %s907]]
    %s909 = sadd.s32 %s771, 30
    %s910 = sld [smem:[#allocation2 + %s909]]
    %s911 = sadd.s32 %s771, 31
    %s912 = sld [smem:[#allocation2 + %s911]]
    %s913 = sadd.s32 %s771, 32
    %s914 = sld [smem:[#allocation2 + %s913]]
    %v915 = vstv %s894
    %v916 = vmul.f32 %v915, %v29
    %v917 = vstv %s896
    %v918 = vmul.f32 %v917, %v30
    %v919 = vadd.f32 %v916, %v918
    %v920 = vstv %s898
    %v921 = vadd.f32 %v919, %v920
    %v922 = vstv %s900
    %v923 = vmul.f32 %v922, %v29
    %v924 = vstv %s902
    %v925 = vmul.f32 %v924, %v30
    %v926 = vadd.f32 %v923, %v925
    %v927 = vstv %s904
    %v928 = vadd.f32 %v926, %v927
    %v929 = vstv %s906
    %v930 = vmul.f32 %v929, %v29
    %v931 = vstv %s908
    %v932 = vmul.f32 %v931, %v30
    %v933 = vadd.f32 %v930, %v932
    %v934 = vstv %s910
    %v935 = vadd.f32 %v933, %v934
    %v936 = vsub.f32 1.0, %v921
    %v937 = vsub.f32 %v936, %v928
    %vm938 = vcmp.ge.f32.partialorder %v921, -1e-06
    %vm939 = vcmp.ge.f32.partialorder %v928, -1e-06
    %vm940 = vmand %vm938, %vm939
    %vm941 = vcmp.ge.f32.partialorder %v937, -1e-06
    %vm942 = vmand %vm940, %vm941
    %vm943 = vcmp.gt.f32.partialorder %v935, 1e-06
    %vm944 = vmand %vm942, %vm943
    %v945 = vsel %vm944, 1, 0
    %v946 = vcvt.s32.f32 %v945
    %v947 = vmul.f32 %v946, %v935
    %v948 = vstv %s912
    %v949 = vmul.f32 %v947, %v948
    %v950 = vadd.f32 %v889, %v949
    %v951 = vstv %s914
    %v952 = vmul.f32 %v946, %v951
    %v953 = vadd.f32 %v892, %v952
    %s954 = sadd.s32 %s771, 33
    %s955 = sld [smem:[#allocation2 + %s954]]
    %s956 = sadd.s32 %s771, 34
    %s957 = sld [smem:[#allocation2 + %s956]]
    %s958 = sadd.s32 %s771, 35
    %s959 = sld [smem:[#allocation2 + %s958]]
    %s960 = sadd.s32 %s771, 36
    %s961 = sld [smem:[#allocation2 + %s960]]
    %s962 = sadd.s32 %s771, 37
    %s963 = sld [smem:[#allocation2 + %s962]]
    %s964 = sadd.s32 %s771, 38
    %s965 = sld [smem:[#allocation2 + %s964]]
    %s966 = sadd.s32 %s771, 39
    %s967 = sld [smem:[#allocation2 + %s966]]
    %s968 = sadd.s32 %s771, 40
    %s969 = sld [smem:[#allocation2 + %s968]]
    %s970 = sadd.s32 %s771, 41
    %s971 = sld [smem:[#allocation2 + %s970]]
    %s972 = sadd.s32 %s771, 42
    %s973 = sld [smem:[#allocation2 + %s972]]
    %s974 = sadd.s32 %s771, 43
    %s975 = sld [smem:[#allocation2 + %s974]]
    %v976 = vstv %s955
    %v977 = vmul.f32 %v976, %v29
    %v978 = vstv %s957
    %v979 = vmul.f32 %v978, %v30
    %v980 = vadd.f32 %v977, %v979
    %v981 = vstv %s959
    %v982 = vadd.f32 %v980, %v981
    %v983 = vstv %s961
    %v984 = vmul.f32 %v983, %v29
    %v985 = vstv %s963
    %v986 = vmul.f32 %v985, %v30
    %v987 = vadd.f32 %v984, %v986
    %v988 = vstv %s965
    %v989 = vadd.f32 %v987, %v988
    %v990 = vstv %s967
    %v991 = vmul.f32 %v990, %v29
    %v992 = vstv %s969
    %v993 = vmul.f32 %v992, %v30
    %v994 = vadd.f32 %v991, %v993
    %v995 = vstv %s971
    %v996 = vadd.f32 %v994, %v995
    %v997 = vsub.f32 1.0, %v982
    %v998 = vsub.f32 %v997, %v989
    %vm999 = vcmp.ge.f32.partialorder %v982, -1e-06
    %vm1000 = vcmp.ge.f32.partialorder %v989, -1e-06
    %vm1001 = vmand %vm999, %vm1000
    %vm1002 = vcmp.ge.f32.partialorder %v998, -1e-06
    %vm1003 = vmand %vm1001, %vm1002
    %vm1004 = vcmp.gt.f32.partialorder %v996, 1e-06
    %vm1005 = vmand %vm1003, %vm1004
    %v1006 = vsel %vm1005, 1, 0
    %v1007 = vcvt.s32.f32 %v1006
    %v1008 = vmul.f32 %v1007, %v996
    %v1009 = vstv %s973
    %v1010 = vmul.f32 %v1008, %v1009
    %v1011 = vadd.f32 %v950, %v1010
    %v1012 = vstv %s975
    %v1013 = vmul.f32 %v1007, %v1012
    %v1014 = vadd.f32 %v953, %v1013
    %s1015 = sadd.s32 %s771, 44
    %s1016 = sld [smem:[#allocation2 + %s1015]]
    %s1017 = sadd.s32 %s771, 45
    %s1018 = sld [smem:[#allocation2 + %s1017]]
    %s1019 = sadd.s32 %s771, 46
    %s1020 = sld [smem:[#allocation2 + %s1019]]
    %s1021 = sadd.s32 %s771, 47
    %s1022 = sld [smem:[#allocation2 + %s1021]]
    %s1023 = sadd.s32 %s771, 48
    %s1024 = sld [smem:[#allocation2 + %s1023]]
    %s1025 = sadd.s32 %s771, 49
    %s1026 = sld [smem:[#allocation2 + %s1025]]
    %s1027 = sadd.s32 %s771, 50
    %s1028 = sld [smem:[#allocation2 + %s1027]]
    %s1029 = sadd.s32 %s771, 51
    %s1030 = sld [smem:[#allocation2 + %s1029]]
    %s1031 = sadd.s32 %s771, 52
    %s1032 = sld [smem:[#allocation2 + %s1031]]
    %s1033 = sadd.s32 %s771, 53
    %s1034 = sld [smem:[#allocation2 + %s1033]]
    %s1035 = sadd.s32 %s771, 54
    %s1036 = sld [smem:[#allocation2 + %s1035]]
    %v1037 = vstv %s1016
    %v1038 = vmul.f32 %v1037, %v29
    %v1039 = vstv %s1018
    %v1040 = vmul.f32 %v1039, %v30
    %v1041 = vadd.f32 %v1038, %v1040
    %v1042 = vstv %s1020
    %v1043 = vadd.f32 %v1041, %v1042
    %v1044 = vstv %s1022
    %v1045 = vmul.f32 %v1044, %v29
    %v1046 = vstv %s1024
    %v1047 = vmul.f32 %v1046, %v30
    %v1048 = vadd.f32 %v1045, %v1047
    %v1049 = vstv %s1026
    %v1050 = vadd.f32 %v1048, %v1049
    %v1051 = vstv %s1028
    %v1052 = vmul.f32 %v1051, %v29
    %v1053 = vstv %s1030
    %v1054 = vmul.f32 %v1053, %v30
    %v1055 = vadd.f32 %v1052, %v1054
    %v1056 = vstv %s1032
    %v1057 = vadd.f32 %v1055, %v1056
    %v1058 = vsub.f32 1.0, %v1043
    %v1059 = vsub.f32 %v1058, %v1050
    %vm1060 = vcmp.ge.f32.partialorder %v1043, -1e-06
    %vm1061 = vcmp.ge.f32.partialorder %v1050, -1e-06
    %vm1062 = vmand %vm1060, %vm1061
    %vm1063 = vcmp.ge.f32.partialorder %v1059, -1e-06
    %vm1064 = vmand %vm1062, %vm1063
    %vm1065 = vcmp.gt.f32.partialorder %v1057, 1e-06
    %vm1066 = vmand %vm1064, %vm1065
    %v1067 = vsel %vm1066, 1, 0
    %v1068 = vcvt.s32.f32 %v1067
    %v1069 = vmul.f32 %v1068, %v1057
    %v1070 = vstv %s1034
    %v1071 = vmul.f32 %v1069, %v1070
    %v1072 = vadd.f32 %v1011, %v1071
    %v1073 = vstv %s1036
    %v1074 = vmul.f32 %v1068, %v1073
    %v1075 = vadd.f32 %v1014, %v1074
    %s1076 = sadd.s32 %s771, 55
    %s1077 = sld [smem:[#allocation2 + %s1076]]
    %s1078 = sadd.s32 %s771, 56
    %s1079 = sld [smem:[#allocation2 + %s1078]]
    %s1080 = sadd.s32 %s771, 57
    %s1081 = sld [smem:[#allocation2 + %s1080]]
    %s1082 = sadd.s32 %s771, 58
    %s1083 = sld [smem:[#allocation2 + %s1082]]
    %s1084 = sadd.s32 %s771, 59
    %s1085 = sld [smem:[#allocation2 + %s1084]]
    %s1086 = sadd.s32 %s771, 60
    %s1087 = sld [smem:[#allocation2 + %s1086]]
    %s1088 = sadd.s32 %s771, 61
    %s1089 = sld [smem:[#allocation2 + %s1088]]
    %s1090 = sadd.s32 %s771, 62
    %s1091 = sld [smem:[#allocation2 + %s1090]]
    %s1092 = sadd.s32 %s771, 63
    %s1093 = sld [smem:[#allocation2 + %s1092]]
    %s1094 = sadd.s32 %s771, 64
    %s1095 = sld [smem:[#allocation2 + %s1094]]
    %s1096 = sadd.s32 %s771, 65
    %s1097 = sld [smem:[#allocation2 + %s1096]]
    %v1098 = vstv %s1077
    %v1099 = vmul.f32 %v1098, %v29
    %v1100 = vstv %s1079
    %v1101 = vmul.f32 %v1100, %v30
    %v1102 = vadd.f32 %v1099, %v1101
    %v1103 = vstv %s1081
    %v1104 = vadd.f32 %v1102, %v1103
    %v1105 = vstv %s1083
    %v1106 = vmul.f32 %v1105, %v29
    %v1107 = vstv %s1085
    %v1108 = vmul.f32 %v1107, %v30
    %v1109 = vadd.f32 %v1106, %v1108
    %v1110 = vstv %s1087
    %v1111 = vadd.f32 %v1109, %v1110
    %v1112 = vstv %s1089
    %v1113 = vmul.f32 %v1112, %v29
    %v1114 = vstv %s1091
    %v1115 = vmul.f32 %v1114, %v30
    %v1116 = vadd.f32 %v1113, %v1115
    %v1117 = vstv %s1093
    %v1118 = vadd.f32 %v1116, %v1117
    %v1119 = vsub.f32 1.0, %v1104
    %v1120 = vsub.f32 %v1119, %v1111
    %vm1121 = vcmp.ge.f32.partialorder %v1104, -1e-06
    %vm1122 = vcmp.ge.f32.partialorder %v1111, -1e-06
    %vm1123 = vmand %vm1121, %vm1122
    %vm1124 = vcmp.ge.f32.partialorder %v1120, -1e-06
    %vm1125 = vmand %vm1123, %vm1124
    %vm1126 = vcmp.gt.f32.partialorder %v1118, 1e-06
    %vm1127 = vmand %vm1125, %vm1126
    %v1128 = vsel %vm1127, 1, 0
    %v1129 = vcvt.s32.f32 %v1128
    %v1130 = vmul.f32 %v1129, %v1118
    %v1131 = vstv %s1095
    %v1132 = vmul.f32 %v1130, %v1131
    %v1133 = vadd.f32 %v1072, %v1132
    %v1134 = vstv %s1097
    %v1135 = vmul.f32 %v1129, %v1134
    %v1136 = vadd.f32 %v1075, %v1135
    %s1137 = sadd.s32 %s771, 66
    %s1138 = sld [smem:[#allocation2 + %s1137]]
    %s1139 = sadd.s32 %s771, 67
    %s1140 = sld [smem:[#allocation2 + %s1139]]
    %s1141 = sadd.s32 %s771, 68
    %s1142 = sld [smem:[#allocation2 + %s1141]]
    %s1143 = sadd.s32 %s771, 69
    %s1144 = sld [smem:[#allocation2 + %s1143]]
    %s1145 = sadd.s32 %s771, 70
    %s1146 = sld [smem:[#allocation2 + %s1145]]
    %s1147 = sadd.s32 %s771, 71
    %s1148 = sld [smem:[#allocation2 + %s1147]]
    %s1149 = sadd.s32 %s771, 72
    %s1150 = sld [smem:[#allocation2 + %s1149]]
    %s1151 = sadd.s32 %s771, 73
    %s1152 = sld [smem:[#allocation2 + %s1151]]
    %s1153 = sadd.s32 %s771, 74
    %s1154 = sld [smem:[#allocation2 + %s1153]]
    %s1155 = sadd.s32 %s771, 75
    %s1156 = sld [smem:[#allocation2 + %s1155]]
    %s1157 = sadd.s32 %s771, 76
    %s1158 = sld [smem:[#allocation2 + %s1157]]
    %v1159 = vstv %s1138
    %v1160 = vmul.f32 %v1159, %v29
    %v1161 = vstv %s1140
    %v1162 = vmul.f32 %v1161, %v30
    %v1163 = vadd.f32 %v1160, %v1162
    %v1164 = vstv %s1142
    %v1165 = vadd.f32 %v1163, %v1164
    %v1166 = vstv %s1144
    %v1167 = vmul.f32 %v1166, %v29
    %v1168 = vstv %s1146
    %v1169 = vmul.f32 %v1168, %v30
    %v1170 = vadd.f32 %v1167, %v1169
    %v1171 = vstv %s1148
    %v1172 = vadd.f32 %v1170, %v1171
    %v1173 = vstv %s1150
    %v1174 = vmul.f32 %v1173, %v29
    %v1175 = vstv %s1152
    %v1176 = vmul.f32 %v1175, %v30
    %v1177 = vadd.f32 %v1174, %v1176
    %v1178 = vstv %s1154
    %v1179 = vadd.f32 %v1177, %v1178
    %v1180 = vsub.f32 1.0, %v1165
    %v1181 = vsub.f32 %v1180, %v1172
    %vm1182 = vcmp.ge.f32.partialorder %v1165, -1e-06
    %vm1183 = vcmp.ge.f32.partialorder %v1172, -1e-06
    %vm1184 = vmand %vm1182, %vm1183
    %vm1185 = vcmp.ge.f32.partialorder %v1181, -1e-06
    %vm1186 = vmand %vm1184, %vm1185
    %vm1187 = vcmp.gt.f32.partialorder %v1179, 1e-06
    %vm1188 = vmand %vm1186, %vm1187
    %v1189 = vsel %vm1188, 1, 0
    %v1190 = vcvt.s32.f32 %v1189
    %v1191 = vmul.f32 %v1190, %v1179
    %v1192 = vstv %s1156
    %v1193 = vmul.f32 %v1191, %v1192
    %v1194 = vadd.f32 %v1133, %v1193
    %v1195 = vstv %s1158
    %v1196 = vmul.f32 %v1190, %v1195
    %v1197 = vadd.f32 %v1136, %v1196
    %s1198 = sadd.s32 %s771, 77
    %s1199 = sld [smem:[#allocation2 + %s1198]]
    %s1200 = sadd.s32 %s771, 78
    %s1201 = sld [smem:[#allocation2 + %s1200]]
    %s1202 = sadd.s32 %s771, 79
    %s1203 = sld [smem:[#allocation2 + %s1202]]
    %s1204 = sadd.s32 %s771, 80
    %s1205 = sld [smem:[#allocation2 + %s1204]]
    %s1206 = sadd.s32 %s771, 81
    %s1207 = sld [smem:[#allocation2 + %s1206]]
    %s1208 = sadd.s32 %s771, 82
    %s1209 = sld [smem:[#allocation2 + %s1208]]
    %s1210 = sadd.s32 %s771, 83
    %s1211 = sld [smem:[#allocation2 + %s1210]]
    %s1212 = sadd.s32 %s771, 84
    %s1213 = sld [smem:[#allocation2 + %s1212]]
    %s1214 = sadd.s32 %s771, 85
    %s1215 = sld [smem:[#allocation2 + %s1214]]
    %s1216 = sadd.s32 %s771, 86
    %s1217 = sld [smem:[#allocation2 + %s1216]]
    %s1218 = sadd.s32 %s771, 87
    %s1219 = sld [smem:[#allocation2 + %s1218]]
    %v1220 = vstv %s1199
    %v1221 = vmul.f32 %v1220, %v29
    %v1222 = vstv %s1201
    %v1223 = vmul.f32 %v1222, %v30
    %v1224 = vadd.f32 %v1221, %v1223
    %v1225 = vstv %s1203
    %v1226 = vadd.f32 %v1224, %v1225
    %v1227 = vstv %s1205
    %v1228 = vmul.f32 %v1227, %v29
    %v1229 = vstv %s1207
    %v1230 = vmul.f32 %v1229, %v30
    %v1231 = vadd.f32 %v1228, %v1230
    %v1232 = vstv %s1209
    %v1233 = vadd.f32 %v1231, %v1232
    %v1234 = vstv %s1211
    %v1235 = vmul.f32 %v1234, %v29
    %v1236 = vstv %s1213
    %v1237 = vmul.f32 %v1236, %v30
    %v1238 = vadd.f32 %v1235, %v1237
    %v1239 = vstv %s1215
    %v1240 = vadd.f32 %v1238, %v1239
    %v1241 = vsub.f32 1.0, %v1226
    %v1242 = vsub.f32 %v1241, %v1233
    %vm1243 = vcmp.ge.f32.partialorder %v1226, -1e-06
    %vm1244 = vcmp.ge.f32.partialorder %v1233, -1e-06
    %vm1245 = vmand %vm1243, %vm1244
    %vm1246 = vcmp.ge.f32.partialorder %v1242, -1e-06
    %vm1247 = vmand %vm1245, %vm1246
    %vm1248 = vcmp.gt.f32.partialorder %v1240, 1e-06
    %vm1249 = vmand %vm1247, %vm1248
    %v1250 = vsel %vm1249, 1, 0
    %v1251 = vcvt.s32.f32 %v1250
    %v1252 = vmul.f32 %v1251, %v1240
    %v1253 = vstv %s1217
    %v1254 = vmul.f32 %v1252, %v1253
    %v1255 = vadd.f32 %v1194, %v1254
    %v1256 = vstv %s1219
    %v1257 = vmul.f32 %v1251, %v1256
    %v1258 = vadd.f32 %v1197, %v1257
    %s1259 = sadd.s32 %s771, 88
    %s1260 = sld [smem:[#allocation2 + %s1259]]
    %s1261 = sadd.s32 %s771, 89
    %s1262 = sld [smem:[#allocation2 + %s1261]]
    %s1263 = sadd.s32 %s771, 90
    %s1264 = sld [smem:[#allocation2 + %s1263]]
    %s1265 = sadd.s32 %s771, 91
    %s1266 = sld [smem:[#allocation2 + %s1265]]
    %s1267 = sadd.s32 %s771, 92
    %s1268 = sld [smem:[#allocation2 + %s1267]]
    %s1269 = sadd.s32 %s771, 93
    %s1270 = sld [smem:[#allocation2 + %s1269]]
    %s1271 = sadd.s32 %s771, 94
    %s1272 = sld [smem:[#allocation2 + %s1271]]
    %s1273 = sadd.s32 %s771, 95
    %s1274 = sld [smem:[#allocation2 + %s1273]]
    %s1275 = sadd.s32 %s771, 96
    %s1276 = sld [smem:[#allocation2 + %s1275]]
    %s1277 = sadd.s32 %s771, 97
    %s1278 = sld [smem:[#allocation2 + %s1277]]
    %s1279 = sadd.s32 %s771, 98
    %s1280 = sld [smem:[#allocation2 + %s1279]]
    %v1281 = vstv %s1260
    %v1282 = vmul.f32 %v1281, %v29
    %v1283 = vstv %s1262
    %v1284 = vmul.f32 %v1283, %v30
    %v1285 = vadd.f32 %v1282, %v1284
    %v1286 = vstv %s1264
    %v1287 = vadd.f32 %v1285, %v1286
    %v1288 = vstv %s1266
    %v1289 = vmul.f32 %v1288, %v29
    %v1290 = vstv %s1268
    %v1291 = vmul.f32 %v1290, %v30
    %v1292 = vadd.f32 %v1289, %v1291
    %v1293 = vstv %s1270
    %v1294 = vadd.f32 %v1292, %v1293
    %v1295 = vstv %s1272
    %v1296 = vmul.f32 %v1295, %v29
    %v1297 = vstv %s1274
    %v1298 = vmul.f32 %v1297, %v30
    %v1299 = vadd.f32 %v1296, %v1298
    %v1300 = vstv %s1276
    %v1301 = vadd.f32 %v1299, %v1300
    %v1302 = vsub.f32 1.0, %v1287
    %v1303 = vsub.f32 %v1302, %v1294
    %vm1304 = vcmp.ge.f32.partialorder %v1287, -1e-06
    %vm1305 = vcmp.ge.f32.partialorder %v1294, -1e-06
    %vm1306 = vmand %vm1304, %vm1305
    %vm1307 = vcmp.ge.f32.partialorder %v1303, -1e-06
    %vm1308 = vmand %vm1306, %vm1307
    %vm1309 = vcmp.gt.f32.partialorder %v1301, 1e-06
    %vm1310 = vmand %vm1308, %vm1309
    %v1311 = vsel %vm1310, 1, 0
    %v1312 = vcvt.s32.f32 %v1311
    %v1313 = vmul.f32 %v1312, %v1301
    %v1314 = vstv %s1278
    %v1315 = vmul.f32 %v1313, %v1314
    %v1316 = vadd.f32 %v1255, %v1315
    %v1317 = vstv %s1280
    %v1318 = vmul.f32 %v1312, %v1317
    %v1319 = vadd.f32 %v1258, %v1318
    %s1320 = sadd.s32 %s771, 99
    %s1321 = sld [smem:[#allocation2 + %s1320]]
    %s1322 = sadd.s32 %s771, 100
    %s1323 = sld [smem:[#allocation2 + %s1322]]
    %s1324 = sadd.s32 %s771, 101
    %s1325 = sld [smem:[#allocation2 + %s1324]]
    %s1326 = sadd.s32 %s771, 102
    %s1327 = sld [smem:[#allocation2 + %s1326]]
    %s1328 = sadd.s32 %s771, 103
    %s1329 = sld [smem:[#allocation2 + %s1328]]
    %s1330 = sadd.s32 %s771, 104
    %s1331 = sld [smem:[#allocation2 + %s1330]]
    %s1332 = sadd.s32 %s771, 105
    %s1333 = sld [smem:[#allocation2 + %s1332]]
    %s1334 = sadd.s32 %s771, 106
    %s1335 = sld [smem:[#allocation2 + %s1334]]
    %s1336 = sadd.s32 %s771, 107
    %s1337 = sld [smem:[#allocation2 + %s1336]]
    %s1338 = sadd.s32 %s771, 108
    %s1339 = sld [smem:[#allocation2 + %s1338]]
    %s1340 = sadd.s32 %s771, 109
    %s1341 = sld [smem:[#allocation2 + %s1340]]
    %v1342 = vstv %s1321
    %v1343 = vmul.f32 %v1342, %v29
    %v1344 = vstv %s1323
    %v1345 = vmul.f32 %v1344, %v30
    %v1346 = vadd.f32 %v1343, %v1345
    %v1347 = vstv %s1325
    %v1348 = vadd.f32 %v1346, %v1347
    %v1349 = vstv %s1327
    %v1350 = vmul.f32 %v1349, %v29
    %v1351 = vstv %s1329
    %v1352 = vmul.f32 %v1351, %v30
    %v1353 = vadd.f32 %v1350, %v1352
    %v1354 = vstv %s1331
    %v1355 = vadd.f32 %v1353, %v1354
    %v1356 = vstv %s1333
    %v1357 = vmul.f32 %v1356, %v29
    %v1358 = vstv %s1335
    %v1359 = vmul.f32 %v1358, %v30
    %v1360 = vadd.f32 %v1357, %v1359
    %v1361 = vstv %s1337
    %v1362 = vadd.f32 %v1360, %v1361
    %v1363 = vsub.f32 1.0, %v1348
    %v1364 = vsub.f32 %v1363, %v1355
    %vm1365 = vcmp.ge.f32.partialorder %v1348, -1e-06
    %vm1366 = vcmp.ge.f32.partialorder %v1355, -1e-06
    %vm1367 = vmand %vm1365, %vm1366
    %vm1368 = vcmp.ge.f32.partialorder %v1364, -1e-06
    %vm1369 = vmand %vm1367, %vm1368
    %vm1370 = vcmp.gt.f32.partialorder %v1362, 1e-06
    %vm1371 = vmand %vm1369, %vm1370
    %v1372 = vsel %vm1371, 1, 0
    %v1373 = vcvt.s32.f32 %v1372
    %v1374 = vmul.f32 %v1373, %v1362
    %v1375 = vstv %s1339
    %v1376 = vmul.f32 %v1374, %v1375
    %v1377 = vadd.f32 %v1316, %v1376
    %v1378 = vstv %s1341
    %v1379 = vmul.f32 %v1373, %v1378
    %v1380 = vadd.f32 %v1319, %v1379
    %s1381 = sadd.s32 %s771, 110
    %s1382 = sld [smem:[#allocation2 + %s1381]]
    %s1383 = sadd.s32 %s771, 111
    %s1384 = sld [smem:[#allocation2 + %s1383]]
    %s1385 = sadd.s32 %s771, 112
    %s1386 = sld [smem:[#allocation2 + %s1385]]
    %s1387 = sadd.s32 %s771, 113
    %s1388 = sld [smem:[#allocation2 + %s1387]]
    %s1389 = sadd.s32 %s771, 114
    %s1390 = sld [smem:[#allocation2 + %s1389]]
    %s1391 = sadd.s32 %s771, 115
    %s1392 = sld [smem:[#allocation2 + %s1391]]
    %s1393 = sadd.s32 %s771, 116
    %s1394 = sld [smem:[#allocation2 + %s1393]]
    %s1395 = sadd.s32 %s771, 117
    %s1396 = sld [smem:[#allocation2 + %s1395]]
    %s1397 = sadd.s32 %s771, 118
    %s1398 = sld [smem:[#allocation2 + %s1397]]
    %s1399 = sadd.s32 %s771, 119
    %s1400 = sld [smem:[#allocation2 + %s1399]]
    %s1401 = sadd.s32 %s771, 120
    %s1402 = sld [smem:[#allocation2 + %s1401]]
    %v1403 = vstv %s1382
    %v1404 = vmul.f32 %v1403, %v29
    %v1405 = vstv %s1384
    %v1406 = vmul.f32 %v1405, %v30
    %v1407 = vadd.f32 %v1404, %v1406
    %v1408 = vstv %s1386
    %v1409 = vadd.f32 %v1407, %v1408
    %v1410 = vstv %s1388
    %v1411 = vmul.f32 %v1410, %v29
    %v1412 = vstv %s1390
    %v1413 = vmul.f32 %v1412, %v30
    %v1414 = vadd.f32 %v1411, %v1413
    %v1415 = vstv %s1392
    %v1416 = vadd.f32 %v1414, %v1415
    %v1417 = vstv %s1394
    %v1418 = vmul.f32 %v1417, %v29
    %v1419 = vstv %s1396
    %v1420 = vmul.f32 %v1419, %v30
    %v1421 = vadd.f32 %v1418, %v1420
    %v1422 = vstv %s1398
    %v1423 = vadd.f32 %v1421, %v1422
    %v1424 = vsub.f32 1.0, %v1409
    %v1425 = vsub.f32 %v1424, %v1416
    %vm1426 = vcmp.ge.f32.partialorder %v1409, -1e-06
    %vm1427 = vcmp.ge.f32.partialorder %v1416, -1e-06
    %vm1428 = vmand %vm1426, %vm1427
    %vm1429 = vcmp.ge.f32.partialorder %v1425, -1e-06
    %vm1430 = vmand %vm1428, %vm1429
    %vm1431 = vcmp.gt.f32.partialorder %v1423, 1e-06
    %vm1432 = vmand %vm1430, %vm1431
    %v1433 = vsel %vm1432, 1, 0
    %v1434 = vcvt.s32.f32 %v1433
    %v1435 = vmul.f32 %v1434, %v1423
    %v1436 = vstv %s1400
    %v1437 = vmul.f32 %v1435, %v1436
    %v1438 = vadd.f32 %v1377, %v1437
    %v1439 = vstv %s1402
    %v1440 = vmul.f32 %v1434, %v1439
    %v1441 = vadd.f32 %v1380, %v1440
    %s1442 = sadd.s32 %s771, 121
    %s1443 = sld [smem:[#allocation2 + %s1442]]
    %s1444 = sadd.s32 %s771, 122
    %s1445 = sld [smem:[#allocation2 + %s1444]]
    %s1446 = sadd.s32 %s771, 123
    %s1447 = sld [smem:[#allocation2 + %s1446]]
    %s1448 = sadd.s32 %s771, 124
    %s1449 = sld [smem:[#allocation2 + %s1448]]
    %s1450 = sadd.s32 %s771, 125
    %s1451 = sld [smem:[#allocation2 + %s1450]]
    %s1452 = sadd.s32 %s771, 126
    %s1453 = sld [smem:[#allocation2 + %s1452]]
    %s1454 = sadd.s32 %s771, 127
    %s1455 = sld [smem:[#allocation2 + %s1454]]
    %s1456 = sadd.s32 %s771, 128
    %s1457 = sld [smem:[#allocation2 + %s1456]]
    %s1458 = sadd.s32 %s771, 129
    %s1459 = sld [smem:[#allocation2 + %s1458]]
    %s1460 = sadd.s32 %s771, 130
    %s1461 = sld [smem:[#allocation2 + %s1460]]
    %s1462 = sadd.s32 %s771, 131
    %s1463 = sld [smem:[#allocation2 + %s1462]]
    %v1464 = vstv %s1443
    %v1465 = vmul.f32 %v1464, %v29
    %v1466 = vstv %s1445
    %v1467 = vmul.f32 %v1466, %v30
    %v1468 = vadd.f32 %v1465, %v1467
    %v1469 = vstv %s1447
    %v1470 = vadd.f32 %v1468, %v1469
    %v1471 = vstv %s1449
    %v1472 = vmul.f32 %v1471, %v29
    %v1473 = vstv %s1451
    %v1474 = vmul.f32 %v1473, %v30
    %v1475 = vadd.f32 %v1472, %v1474
    %v1476 = vstv %s1453
    %v1477 = vadd.f32 %v1475, %v1476
    %v1478 = vstv %s1455
    %v1479 = vmul.f32 %v1478, %v29
    %v1480 = vstv %s1457
    %v1481 = vmul.f32 %v1480, %v30
    %v1482 = vadd.f32 %v1479, %v1481
    %v1483 = vstv %s1459
    %v1484 = vadd.f32 %v1482, %v1483
    %v1485 = vsub.f32 1.0, %v1470
    %v1486 = vsub.f32 %v1485, %v1477
    %vm1487 = vcmp.ge.f32.partialorder %v1470, -1e-06
    %vm1488 = vcmp.ge.f32.partialorder %v1477, -1e-06
    %vm1489 = vmand %vm1487, %vm1488
    %vm1490 = vcmp.ge.f32.partialorder %v1486, -1e-06
    %vm1491 = vmand %vm1489, %vm1490
    %vm1492 = vcmp.gt.f32.partialorder %v1484, 1e-06
    %vm1493 = vmand %vm1491, %vm1492
    %v1494 = vsel %vm1493, 1, 0
    %v1495 = vcvt.s32.f32 %v1494
    %v1496 = vmul.f32 %v1495, %v1484
    %v1497 = vstv %s1461
    %v1498 = vmul.f32 %v1496, %v1497
    %v1499 = vadd.f32 %v1438, %v1498
    %v1500 = vstv %s1463
    %v1501 = vmul.f32 %v1495, %v1500
    %v1502 = vadd.f32 %v1441, %v1501
    %s1503 = scalar_lea.vmem %s3, 8
    %1504 = vst [vmem:[%s1503] sm:$0xff] %v1499
    %v1505 = vand.u32 2147483647, %v1502
    %vm1506 = vcmp.lt.f32.partialorder %v1505, 0.5
    %v1507 = vsel %vm1506, 1, 0
    %v1508 = vcvt.s32.f32 %v1507
    %s1509 = scalar_lea.vmem %s4, 8
    %1510 = vst [vmem:[%s1509] sm:$0xff] %v1508
    %s1511 = sadd.s32 %s769, 2
    %s1512 = smul.u32 %s1511, 132
    %s1513 = sld [smem:[#allocation2 + %s1512]]
    %s1514 = sadd.s32 %s1512, 1
    %s1515 = sld [smem:[#allocation2 + %s1514]]
    %s1516 = sadd.s32 %s1512, 2
    %s1517 = sld [smem:[#allocation2 + %s1516]]
    %s1518 = sadd.s32 %s1512, 3
    %s1519 = sld [smem:[#allocation2 + %s1518]]
    %s1520 = sadd.s32 %s1512, 4
    %s1521 = sld [smem:[#allocation2 + %s1520]]
    %s1522 = sadd.s32 %s1512, 5
    %s1523 = sld [smem:[#allocation2 + %s1522]]
    %s1524 = sadd.s32 %s1512, 6
    %s1525 = sld [smem:[#allocation2 + %s1524]]
    %s1526 = sadd.s32 %s1512, 7
    %s1527 = sld [smem:[#allocation2 + %s1526]]
    %s1528 = sadd.s32 %s1512, 8
    %s1529 = sld [smem:[#allocation2 + %s1528]]
    %s1530 = sadd.s32 %s1512, 9
    %s1531 = sld [smem:[#allocation2 + %s1530]]
    %s1532 = sadd.s32 %s1512, 10
    %s1533 = sld [smem:[#allocation2 + %s1532]]
    %v1534 = vstv %s1513
    %v1535 = vmul.f32 %v1534, %v29
    %v1536 = vstv %s1515
    %v1537 = vmul.f32 %v1536, %v30
    %v1538 = vadd.f32 %v1535, %v1537
    %v1539 = vstv %s1517
    %v1540 = vadd.f32 %v1538, %v1539
    %v1541 = vstv %s1519
    %v1542 = vmul.f32 %v1541, %v29
    %v1543 = vstv %s1521
    %v1544 = vmul.f32 %v1543, %v30
    %v1545 = vadd.f32 %v1542, %v1544
    %v1546 = vstv %s1523
    %v1547 = vadd.f32 %v1545, %v1546
    %v1548 = vstv %s1525
    %v1549 = vmul.f32 %v1548, %v29
    %v1550 = vstv %s1527
    %v1551 = vmul.f32 %v1550, %v30
    %v1552 = vadd.f32 %v1549, %v1551
    %v1553 = vstv %s1529
    %v1554 = vadd.f32 %v1552, %v1553
    %v1555 = vsub.f32 1.0, %v1540
    %v1556 = vsub.f32 %v1555, %v1547
    %vm1557 = vcmp.ge.f32.partialorder %v1540, -1e-06
    %vm1558 = vcmp.ge.f32.partialorder %v1547, -1e-06
    %vm1559 = vmand %vm1557, %vm1558
    %vm1560 = vcmp.ge.f32.partialorder %v1556, -1e-06
    %vm1561 = vmand %vm1559, %vm1560
    %vm1562 = vcmp.gt.f32.partialorder %v1554, 1e-06
    %vm1563 = vmand %vm1561, %vm1562
    %v1564 = vsel %vm1563, 1, 0
    %v1565 = vcvt.s32.f32 %v1564
    %v1566 = vmul.f32 %v1565, %v1554
    %v1567 = vstv %s1531
    %v1568 = vmul.f32 %v1566, %v1567
    %v1569 = vadd.f32 %v1568, 0.0
    %v1570 = vstv %s1533
    %v1571 = vmul.f32 %v1565, %v1570
    %v1572 = vadd.f32 %v1571, 0.0
    %s1573 = sadd.s32 %s1512, 11
    %s1574 = sld [smem:[#allocation2 + %s1573]]
    %s1575 = sadd.s32 %s1512, 12
    %s1576 = sld [smem:[#allocation2 + %s1575]]
    %s1577 = sadd.s32 %s1512, 13
    %s1578 = sld [smem:[#allocation2 + %s1577]]
    %s1579 = sadd.s32 %s1512, 14
    %s1580 = sld [smem:[#allocation2 + %s1579]]
    %s1581 = sadd.s32 %s1512, 15
    %s1582 = sld [smem:[#allocation2 + %s1581]]
    %s1583 = sadd.s32 %s1512, 16
    %s1584 = sld [smem:[#allocation2 + %s1583]]
    %s1585 = sadd.s32 %s1512, 17
    %s1586 = sld [smem:[#allocation2 + %s1585]]
    %s1587 = sadd.s32 %s1512, 18
    %s1588 = sld [smem:[#allocation2 + %s1587]]
    %s1589 = sadd.s32 %s1512, 19
    %s1590 = sld [smem:[#allocation2 + %s1589]]
    %s1591 = sadd.s32 %s1512, 20
    %s1592 = sld [smem:[#allocation2 + %s1591]]
    %s1593 = sadd.s32 %s1512, 21
    %s1594 = sld [smem:[#allocation2 + %s1593]]
    %v1595 = vstv %s1574
    %v1596 = vmul.f32 %v1595, %v29
    %v1597 = vstv %s1576
    %v1598 = vmul.f32 %v1597, %v30
    %v1599 = vadd.f32 %v1596, %v1598
    %v1600 = vstv %s1578
    %v1601 = vadd.f32 %v1599, %v1600
    %v1602 = vstv %s1580
    %v1603 = vmul.f32 %v1602, %v29
    %v1604 = vstv %s1582
    %v1605 = vmul.f32 %v1604, %v30
    %v1606 = vadd.f32 %v1603, %v1605
    %v1607 = vstv %s1584
    %v1608 = vadd.f32 %v1606, %v1607
    %v1609 = vstv %s1586
    %v1610 = vmul.f32 %v1609, %v29
    %v1611 = vstv %s1588
    %v1612 = vmul.f32 %v1611, %v30
    %v1613 = vadd.f32 %v1610, %v1612
    %v1614 = vstv %s1590
    %v1615 = vadd.f32 %v1613, %v1614
    %v1616 = vsub.f32 1.0, %v1601
    %v1617 = vsub.f32 %v1616, %v1608
    %vm1618 = vcmp.ge.f32.partialorder %v1601, -1e-06
    %vm1619 = vcmp.ge.f32.partialorder %v1608, -1e-06
    %vm1620 = vmand %vm1618, %vm1619
    %vm1621 = vcmp.ge.f32.partialorder %v1617, -1e-06
    %vm1622 = vmand %vm1620, %vm1621
    %vm1623 = vcmp.gt.f32.partialorder %v1615, 1e-06
    %vm1624 = vmand %vm1622, %vm1623
    %v1625 = vsel %vm1624, 1, 0
    %v1626 = vcvt.s32.f32 %v1625
    %v1627 = vmul.f32 %v1626, %v1615
    %v1628 = vstv %s1592
    %v1629 = vmul.f32 %v1627, %v1628
    %v1630 = vadd.f32 %v1569, %v1629
    %v1631 = vstv %s1594
    %v1632 = vmul.f32 %v1626, %v1631
    %v1633 = vadd.f32 %v1572, %v1632
    %s1634 = sadd.s32 %s1512, 22
    %s1635 = sld [smem:[#allocation2 + %s1634]]
    %s1636 = sadd.s32 %s1512, 23
    %s1637 = sld [smem:[#allocation2 + %s1636]]
    %s1638 = sadd.s32 %s1512, 24
    %s1639 = sld [smem:[#allocation2 + %s1638]]
    %s1640 = sadd.s32 %s1512, 25
    %s1641 = sld [smem:[#allocation2 + %s1640]]
    %s1642 = sadd.s32 %s1512, 26
    %s1643 = sld [smem:[#allocation2 + %s1642]]
    %s1644 = sadd.s32 %s1512, 27
    %s1645 = sld [smem:[#allocation2 + %s1644]]
    %s1646 = sadd.s32 %s1512, 28
    %s1647 = sld [smem:[#allocation2 + %s1646]]
    %s1648 = sadd.s32 %s1512, 29
    %s1649 = sld [smem:[#allocation2 + %s1648]]
    %s1650 = sadd.s32 %s1512, 30
    %s1651 = sld [smem:[#allocation2 + %s1650]]
    %s1652 = sadd.s32 %s1512, 31
    %s1653 = sld [smem:[#allocation2 + %s1652]]
    %s1654 = sadd.s32 %s1512, 32
    %s1655 = sld [smem:[#allocation2 + %s1654]]
    %v1656 = vstv %s1635
    %v1657 = vmul.f32 %v1656, %v29
    %v1658 = vstv %s1637
    %v1659 = vmul.f32 %v1658, %v30
    %v1660 = vadd.f32 %v1657, %v1659
    %v1661 = vstv %s1639
    %v1662 = vadd.f32 %v1660, %v1661
    %v1663 = vstv %s1641
    %v1664 = vmul.f32 %v1663, %v29
    %v1665 = vstv %s1643
    %v1666 = vmul.f32 %v1665, %v30
    %v1667 = vadd.f32 %v1664, %v1666
    %v1668 = vstv %s1645
    %v1669 = vadd.f32 %v1667, %v1668
    %v1670 = vstv %s1647
    %v1671 = vmul.f32 %v1670, %v29
    %v1672 = vstv %s1649
    %v1673 = vmul.f32 %v1672, %v30
    %v1674 = vadd.f32 %v1671, %v1673
    %v1675 = vstv %s1651
    %v1676 = vadd.f32 %v1674, %v1675
    %v1677 = vsub.f32 1.0, %v1662
    %v1678 = vsub.f32 %v1677, %v1669
    %vm1679 = vcmp.ge.f32.partialorder %v1662, -1e-06
    %vm1680 = vcmp.ge.f32.partialorder %v1669, -1e-06
    %vm1681 = vmand %vm1679, %vm1680
    %vm1682 = vcmp.ge.f32.partialorder %v1678, -1e-06
    %vm1683 = vmand %vm1681, %vm1682
    %vm1684 = vcmp.gt.f32.partialorder %v1676, 1e-06
    %vm1685 = vmand %vm1683, %vm1684
    %v1686 = vsel %vm1685, 1, 0
    %v1687 = vcvt.s32.f32 %v1686
    %v1688 = vmul.f32 %v1687, %v1676
    %v1689 = vstv %s1653
    %v1690 = vmul.f32 %v1688, %v1689
    %v1691 = vadd.f32 %v1630, %v1690
    %v1692 = vstv %s1655
    %v1693 = vmul.f32 %v1687, %v1692
    %v1694 = vadd.f32 %v1633, %v1693
    %s1695 = sadd.s32 %s1512, 33
    %s1696 = sld [smem:[#allocation2 + %s1695]]
    %s1697 = sadd.s32 %s1512, 34
    %s1698 = sld [smem:[#allocation2 + %s1697]]
    %s1699 = sadd.s32 %s1512, 35
    %s1700 = sld [smem:[#allocation2 + %s1699]]
    %s1701 = sadd.s32 %s1512, 36
    %s1702 = sld [smem:[#allocation2 + %s1701]]
    %s1703 = sadd.s32 %s1512, 37
    %s1704 = sld [smem:[#allocation2 + %s1703]]
    %s1705 = sadd.s32 %s1512, 38
    %s1706 = sld [smem:[#allocation2 + %s1705]]
    %s1707 = sadd.s32 %s1512, 39
    %s1708 = sld [smem:[#allocation2 + %s1707]]
    %s1709 = sadd.s32 %s1512, 40
    %s1710 = sld [smem:[#allocation2 + %s1709]]
    %s1711 = sadd.s32 %s1512, 41
    %s1712 = sld [smem:[#allocation2 + %s1711]]
    %s1713 = sadd.s32 %s1512, 42
    %s1714 = sld [smem:[#allocation2 + %s1713]]
    %s1715 = sadd.s32 %s1512, 43
    %s1716 = sld [smem:[#allocation2 + %s1715]]
    %v1717 = vstv %s1696
    %v1718 = vmul.f32 %v1717, %v29
    %v1719 = vstv %s1698
    %v1720 = vmul.f32 %v1719, %v30
    %v1721 = vadd.f32 %v1718, %v1720
    %v1722 = vstv %s1700
    %v1723 = vadd.f32 %v1721, %v1722
    %v1724 = vstv %s1702
    %v1725 = vmul.f32 %v1724, %v29
    %v1726 = vstv %s1704
    %v1727 = vmul.f32 %v1726, %v30
    %v1728 = vadd.f32 %v1725, %v1727
    %v1729 = vstv %s1706
    %v1730 = vadd.f32 %v1728, %v1729
    %v1731 = vstv %s1708
    %v1732 = vmul.f32 %v1731, %v29
    %v1733 = vstv %s1710
    %v1734 = vmul.f32 %v1733, %v30
    %v1735 = vadd.f32 %v1732, %v1734
    %v1736 = vstv %s1712
    %v1737 = vadd.f32 %v1735, %v1736
    %v1738 = vsub.f32 1.0, %v1723
    %v1739 = vsub.f32 %v1738, %v1730
    %vm1740 = vcmp.ge.f32.partialorder %v1723, -1e-06
    %vm1741 = vcmp.ge.f32.partialorder %v1730, -1e-06
    %vm1742 = vmand %vm1740, %vm1741
    %vm1743 = vcmp.ge.f32.partialorder %v1739, -1e-06
    %vm1744 = vmand %vm1742, %vm1743
    %vm1745 = vcmp.gt.f32.partialorder %v1737, 1e-06
    %vm1746 = vmand %vm1744, %vm1745
    %v1747 = vsel %vm1746, 1, 0
    %v1748 = vcvt.s32.f32 %v1747
    %v1749 = vmul.f32 %v1748, %v1737
    %v1750 = vstv %s1714
    %v1751 = vmul.f32 %v1749, %v1750
    %v1752 = vadd.f32 %v1691, %v1751
    %v1753 = vstv %s1716
    %v1754 = vmul.f32 %v1748, %v1753
    %v1755 = vadd.f32 %v1694, %v1754
    %s1756 = sadd.s32 %s1512, 44
    %s1757 = sld [smem:[#allocation2 + %s1756]]
    %s1758 = sadd.s32 %s1512, 45
    %s1759 = sld [smem:[#allocation2 + %s1758]]
    %s1760 = sadd.s32 %s1512, 46
    %s1761 = sld [smem:[#allocation2 + %s1760]]
    %s1762 = sadd.s32 %s1512, 47
    %s1763 = sld [smem:[#allocation2 + %s1762]]
    %s1764 = sadd.s32 %s1512, 48
    %s1765 = sld [smem:[#allocation2 + %s1764]]
    %s1766 = sadd.s32 %s1512, 49
    %s1767 = sld [smem:[#allocation2 + %s1766]]
    %s1768 = sadd.s32 %s1512, 50
    %s1769 = sld [smem:[#allocation2 + %s1768]]
    %s1770 = sadd.s32 %s1512, 51
    %s1771 = sld [smem:[#allocation2 + %s1770]]
    %s1772 = sadd.s32 %s1512, 52
    %s1773 = sld [smem:[#allocation2 + %s1772]]
    %s1774 = sadd.s32 %s1512, 53
    %s1775 = sld [smem:[#allocation2 + %s1774]]
    %s1776 = sadd.s32 %s1512, 54
    %s1777 = sld [smem:[#allocation2 + %s1776]]
    %v1778 = vstv %s1757
    %v1779 = vmul.f32 %v1778, %v29
    %v1780 = vstv %s1759
    %v1781 = vmul.f32 %v1780, %v30
    %v1782 = vadd.f32 %v1779, %v1781
    %v1783 = vstv %s1761
    %v1784 = vadd.f32 %v1782, %v1783
    %v1785 = vstv %s1763
    %v1786 = vmul.f32 %v1785, %v29
    %v1787 = vstv %s1765
    %v1788 = vmul.f32 %v1787, %v30
    %v1789 = vadd.f32 %v1786, %v1788
    %v1790 = vstv %s1767
    %v1791 = vadd.f32 %v1789, %v1790
    %v1792 = vstv %s1769
    %v1793 = vmul.f32 %v1792, %v29
    %v1794 = vstv %s1771
    %v1795 = vmul.f32 %v1794, %v30
    %v1796 = vadd.f32 %v1793, %v1795
    %v1797 = vstv %s1773
    %v1798 = vadd.f32 %v1796, %v1797
    %v1799 = vsub.f32 1.0, %v1784
    %v1800 = vsub.f32 %v1799, %v1791
    %vm1801 = vcmp.ge.f32.partialorder %v1784, -1e-06
    %vm1802 = vcmp.ge.f32.partialorder %v1791, -1e-06
    %vm1803 = vmand %vm1801, %vm1802
    %vm1804 = vcmp.ge.f32.partialorder %v1800, -1e-06
    %vm1805 = vmand %vm1803, %vm1804
    %vm1806 = vcmp.gt.f32.partialorder %v1798, 1e-06
    %vm1807 = vmand %vm1805, %vm1806
    %v1808 = vsel %vm1807, 1, 0
    %v1809 = vcvt.s32.f32 %v1808
    %v1810 = vmul.f32 %v1809, %v1798
    %v1811 = vstv %s1775
    %v1812 = vmul.f32 %v1810, %v1811
    %v1813 = vadd.f32 %v1752, %v1812
    %v1814 = vstv %s1777
    %v1815 = vmul.f32 %v1809, %v1814
    %v1816 = vadd.f32 %v1755, %v1815
    %s1817 = sadd.s32 %s1512, 55
    %s1818 = sld [smem:[#allocation2 + %s1817]]
    %s1819 = sadd.s32 %s1512, 56
    %s1820 = sld [smem:[#allocation2 + %s1819]]
    %s1821 = sadd.s32 %s1512, 57
    %s1822 = sld [smem:[#allocation2 + %s1821]]
    %s1823 = sadd.s32 %s1512, 58
    %s1824 = sld [smem:[#allocation2 + %s1823]]
    %s1825 = sadd.s32 %s1512, 59
    %s1826 = sld [smem:[#allocation2 + %s1825]]
    %s1827 = sadd.s32 %s1512, 60
    %s1828 = sld [smem:[#allocation2 + %s1827]]
    %s1829 = sadd.s32 %s1512, 61
    %s1830 = sld [smem:[#allocation2 + %s1829]]
    %s1831 = sadd.s32 %s1512, 62
    %s1832 = sld [smem:[#allocation2 + %s1831]]
    %s1833 = sadd.s32 %s1512, 63
    %s1834 = sld [smem:[#allocation2 + %s1833]]
    %s1835 = sadd.s32 %s1512, 64
    %s1836 = sld [smem:[#allocation2 + %s1835]]
    %s1837 = sadd.s32 %s1512, 65
    %s1838 = sld [smem:[#allocation2 + %s1837]]
    %v1839 = vstv %s1818
    %v1840 = vmul.f32 %v1839, %v29
    %v1841 = vstv %s1820
    %v1842 = vmul.f32 %v1841, %v30
    %v1843 = vadd.f32 %v1840, %v1842
    %v1844 = vstv %s1822
    %v1845 = vadd.f32 %v1843, %v1844
    %v1846 = vstv %s1824
    %v1847 = vmul.f32 %v1846, %v29
    %v1848 = vstv %s1826
    %v1849 = vmul.f32 %v1848, %v30
    %v1850 = vadd.f32 %v1847, %v1849
    %v1851 = vstv %s1828
    %v1852 = vadd.f32 %v1850, %v1851
    %v1853 = vstv %s1830
    %v1854 = vmul.f32 %v1853, %v29
    %v1855 = vstv %s1832
    %v1856 = vmul.f32 %v1855, %v30
    %v1857 = vadd.f32 %v1854, %v1856
    %v1858 = vstv %s1834
    %v1859 = vadd.f32 %v1857, %v1858
    %v1860 = vsub.f32 1.0, %v1845
    %v1861 = vsub.f32 %v1860, %v1852
    %vm1862 = vcmp.ge.f32.partialorder %v1845, -1e-06
    %vm1863 = vcmp.ge.f32.partialorder %v1852, -1e-06
    %vm1864 = vmand %vm1862, %vm1863
    %vm1865 = vcmp.ge.f32.partialorder %v1861, -1e-06
    %vm1866 = vmand %vm1864, %vm1865
    %vm1867 = vcmp.gt.f32.partialorder %v1859, 1e-06
    %vm1868 = vmand %vm1866, %vm1867
    %v1869 = vsel %vm1868, 1, 0
    %v1870 = vcvt.s32.f32 %v1869
    %v1871 = vmul.f32 %v1870, %v1859
    %v1872 = vstv %s1836
    %v1873 = vmul.f32 %v1871, %v1872
    %v1874 = vadd.f32 %v1813, %v1873
    %v1875 = vstv %s1838
    %v1876 = vmul.f32 %v1870, %v1875
    %v1877 = vadd.f32 %v1816, %v1876
    %s1878 = sadd.s32 %s1512, 66
    %s1879 = sld [smem:[#allocation2 + %s1878]]
    %s1880 = sadd.s32 %s1512, 67
    %s1881 = sld [smem:[#allocation2 + %s1880]]
    %s1882 = sadd.s32 %s1512, 68
    %s1883 = sld [smem:[#allocation2 + %s1882]]
    %s1884 = sadd.s32 %s1512, 69
    %s1885 = sld [smem:[#allocation2 + %s1884]]
    %s1886 = sadd.s32 %s1512, 70
    %s1887 = sld [smem:[#allocation2 + %s1886]]
    %s1888 = sadd.s32 %s1512, 71
    %s1889 = sld [smem:[#allocation2 + %s1888]]
    %s1890 = sadd.s32 %s1512, 72
    %s1891 = sld [smem:[#allocation2 + %s1890]]
    %s1892 = sadd.s32 %s1512, 73
    %s1893 = sld [smem:[#allocation2 + %s1892]]
    %s1894 = sadd.s32 %s1512, 74
    %s1895 = sld [smem:[#allocation2 + %s1894]]
    %s1896 = sadd.s32 %s1512, 75
    %s1897 = sld [smem:[#allocation2 + %s1896]]
    %s1898 = sadd.s32 %s1512, 76
    %s1899 = sld [smem:[#allocation2 + %s1898]]
    %v1900 = vstv %s1879
    %v1901 = vmul.f32 %v1900, %v29
    %v1902 = vstv %s1881
    %v1903 = vmul.f32 %v1902, %v30
    %v1904 = vadd.f32 %v1901, %v1903
    %v1905 = vstv %s1883
    %v1906 = vadd.f32 %v1904, %v1905
    %v1907 = vstv %s1885
    %v1908 = vmul.f32 %v1907, %v29
    %v1909 = vstv %s1887
    %v1910 = vmul.f32 %v1909, %v30
    %v1911 = vadd.f32 %v1908, %v1910
    %v1912 = vstv %s1889
    %v1913 = vadd.f32 %v1911, %v1912
    %v1914 = vstv %s1891
    %v1915 = vmul.f32 %v1914, %v29
    %v1916 = vstv %s1893
    %v1917 = vmul.f32 %v1916, %v30
    %v1918 = vadd.f32 %v1915, %v1917
    %v1919 = vstv %s1895
    %v1920 = vadd.f32 %v1918, %v1919
    %v1921 = vsub.f32 1.0, %v1906
    %v1922 = vsub.f32 %v1921, %v1913
    %vm1923 = vcmp.ge.f32.partialorder %v1906, -1e-06
    %vm1924 = vcmp.ge.f32.partialorder %v1913, -1e-06
    %vm1925 = vmand %vm1923, %vm1924
    %vm1926 = vcmp.ge.f32.partialorder %v1922, -1e-06
    %vm1927 = vmand %vm1925, %vm1926
    %vm1928 = vcmp.gt.f32.partialorder %v1920, 1e-06
    %vm1929 = vmand %vm1927, %vm1928
    %v1930 = vsel %vm1929, 1, 0
    %v1931 = vcvt.s32.f32 %v1930
    %v1932 = vmul.f32 %v1931, %v1920
    %v1933 = vstv %s1897
    %v1934 = vmul.f32 %v1932, %v1933
    %v1935 = vadd.f32 %v1874, %v1934
    %v1936 = vstv %s1899
    %v1937 = vmul.f32 %v1931, %v1936
    %v1938 = vadd.f32 %v1877, %v1937
    %s1939 = sadd.s32 %s1512, 77
    %s1940 = sld [smem:[#allocation2 + %s1939]]
    %s1941 = sadd.s32 %s1512, 78
    %s1942 = sld [smem:[#allocation2 + %s1941]]
    %s1943 = sadd.s32 %s1512, 79
    %s1944 = sld [smem:[#allocation2 + %s1943]]
    %s1945 = sadd.s32 %s1512, 80
    %s1946 = sld [smem:[#allocation2 + %s1945]]
    %s1947 = sadd.s32 %s1512, 81
    %s1948 = sld [smem:[#allocation2 + %s1947]]
    %s1949 = sadd.s32 %s1512, 82
    %s1950 = sld [smem:[#allocation2 + %s1949]]
    %s1951 = sadd.s32 %s1512, 83
    %s1952 = sld [smem:[#allocation2 + %s1951]]
    %s1953 = sadd.s32 %s1512, 84
    %s1954 = sld [smem:[#allocation2 + %s1953]]
    %s1955 = sadd.s32 %s1512, 85
    %s1956 = sld [smem:[#allocation2 + %s1955]]
    %s1957 = sadd.s32 %s1512, 86
    %s1958 = sld [smem:[#allocation2 + %s1957]]
    %s1959 = sadd.s32 %s1512, 87
    %s1960 = sld [smem:[#allocation2 + %s1959]]
    %v1961 = vstv %s1940
    %v1962 = vmul.f32 %v1961, %v29
    %v1963 = vstv %s1942
    %v1964 = vmul.f32 %v1963, %v30
    %v1965 = vadd.f32 %v1962, %v1964
    %v1966 = vstv %s1944
    %v1967 = vadd.f32 %v1965, %v1966
    %v1968 = vstv %s1946
    %v1969 = vmul.f32 %v1968, %v29
    %v1970 = vstv %s1948
    %v1971 = vmul.f32 %v1970, %v30
    %v1972 = vadd.f32 %v1969, %v1971
    %v1973 = vstv %s1950
    %v1974 = vadd.f32 %v1972, %v1973
    %v1975 = vstv %s1952
    %v1976 = vmul.f32 %v1975, %v29
    %v1977 = vstv %s1954
    %v1978 = vmul.f32 %v1977, %v30
    %v1979 = vadd.f32 %v1976, %v1978
    %v1980 = vstv %s1956
    %v1981 = vadd.f32 %v1979, %v1980
    %v1982 = vsub.f32 1.0, %v1967
    %v1983 = vsub.f32 %v1982, %v1974
    %vm1984 = vcmp.ge.f32.partialorder %v1967, -1e-06
    %vm1985 = vcmp.ge.f32.partialorder %v1974, -1e-06
    %vm1986 = vmand %vm1984, %vm1985
    %vm1987 = vcmp.ge.f32.partialorder %v1983, -1e-06
    %vm1988 = vmand %vm1986, %vm1987
    %vm1989 = vcmp.gt.f32.partialorder %v1981, 1e-06
    %vm1990 = vmand %vm1988, %vm1989
    %v1991 = vsel %vm1990, 1, 0
    %v1992 = vcvt.s32.f32 %v1991
    %v1993 = vmul.f32 %v1992, %v1981
    %v1994 = vstv %s1958
    %v1995 = vmul.f32 %v1993, %v1994
    %v1996 = vadd.f32 %v1935, %v1995
    %v1997 = vstv %s1960
    %v1998 = vmul.f32 %v1992, %v1997
    %v1999 = vadd.f32 %v1938, %v1998
    %s2000 = sadd.s32 %s1512, 88
    %s2001 = sld [smem:[#allocation2 + %s2000]]
    %s2002 = sadd.s32 %s1512, 89
    %s2003 = sld [smem:[#allocation2 + %s2002]]
    %s2004 = sadd.s32 %s1512, 90
    %s2005 = sld [smem:[#allocation2 + %s2004]]
    %s2006 = sadd.s32 %s1512, 91
    %s2007 = sld [smem:[#allocation2 + %s2006]]
    %s2008 = sadd.s32 %s1512, 92
    %s2009 = sld [smem:[#allocation2 + %s2008]]
    %s2010 = sadd.s32 %s1512, 93
    %s2011 = sld [smem:[#allocation2 + %s2010]]
    %s2012 = sadd.s32 %s1512, 94
    %s2013 = sld [smem:[#allocation2 + %s2012]]
    %s2014 = sadd.s32 %s1512, 95
    %s2015 = sld [smem:[#allocation2 + %s2014]]
    %s2016 = sadd.s32 %s1512, 96
    %s2017 = sld [smem:[#allocation2 + %s2016]]
    %s2018 = sadd.s32 %s1512, 97
    %s2019 = sld [smem:[#allocation2 + %s2018]]
    %s2020 = sadd.s32 %s1512, 98
    %s2021 = sld [smem:[#allocation2 + %s2020]]
    %v2022 = vstv %s2001
    %v2023 = vmul.f32 %v2022, %v29
    %v2024 = vstv %s2003
    %v2025 = vmul.f32 %v2024, %v30
    %v2026 = vadd.f32 %v2023, %v2025
    %v2027 = vstv %s2005
    %v2028 = vadd.f32 %v2026, %v2027
    %v2029 = vstv %s2007
    %v2030 = vmul.f32 %v2029, %v29
    %v2031 = vstv %s2009
    %v2032 = vmul.f32 %v2031, %v30
    %v2033 = vadd.f32 %v2030, %v2032
    %v2034 = vstv %s2011
    %v2035 = vadd.f32 %v2033, %v2034
    %v2036 = vstv %s2013
    %v2037 = vmul.f32 %v2036, %v29
    %v2038 = vstv %s2015
    %v2039 = vmul.f32 %v2038, %v30
    %v2040 = vadd.f32 %v2037, %v2039
    %v2041 = vstv %s2017
    %v2042 = vadd.f32 %v2040, %v2041
    %v2043 = vsub.f32 1.0, %v2028
    %v2044 = vsub.f32 %v2043, %v2035
    %vm2045 = vcmp.ge.f32.partialorder %v2028, -1e-06
    %vm2046 = vcmp.ge.f32.partialorder %v2035, -1e-06
    %vm2047 = vmand %vm2045, %vm2046
    %vm2048 = vcmp.ge.f32.partialorder %v2044, -1e-06
    %vm2049 = vmand %vm2047, %vm2048
    %vm2050 = vcmp.gt.f32.partialorder %v2042, 1e-06
    %vm2051 = vmand %vm2049, %vm2050
    %v2052 = vsel %vm2051, 1, 0
    %v2053 = vcvt.s32.f32 %v2052
    %v2054 = vmul.f32 %v2053, %v2042
    %v2055 = vstv %s2019
    %v2056 = vmul.f32 %v2054, %v2055
    %v2057 = vadd.f32 %v1996, %v2056
    %v2058 = vstv %s2021
    %v2059 = vmul.f32 %v2053, %v2058
    %v2060 = vadd.f32 %v1999, %v2059
    %s2061 = sadd.s32 %s1512, 99
    %s2062 = sld [smem:[#allocation2 + %s2061]]
    %s2063 = sadd.s32 %s1512, 100
    %s2064 = sld [smem:[#allocation2 + %s2063]]
    %s2065 = sadd.s32 %s1512, 101
    %s2066 = sld [smem:[#allocation2 + %s2065]]
    %s2067 = sadd.s32 %s1512, 102
    %s2068 = sld [smem:[#allocation2 + %s2067]]
    %s2069 = sadd.s32 %s1512, 103
    %s2070 = sld [smem:[#allocation2 + %s2069]]
    %s2071 = sadd.s32 %s1512, 104
    %s2072 = sld [smem:[#allocation2 + %s2071]]
    %s2073 = sadd.s32 %s1512, 105
    %s2074 = sld [smem:[#allocation2 + %s2073]]
    %s2075 = sadd.s32 %s1512, 106
    %s2076 = sld [smem:[#allocation2 + %s2075]]
    %s2077 = sadd.s32 %s1512, 107
    %s2078 = sld [smem:[#allocation2 + %s2077]]
    %s2079 = sadd.s32 %s1512, 108
    %s2080 = sld [smem:[#allocation2 + %s2079]]
    %s2081 = sadd.s32 %s1512, 109
    %s2082 = sld [smem:[#allocation2 + %s2081]]
    %v2083 = vstv %s2062
    %v2084 = vmul.f32 %v2083, %v29
    %v2085 = vstv %s2064
    %v2086 = vmul.f32 %v2085, %v30
    %v2087 = vadd.f32 %v2084, %v2086
    %v2088 = vstv %s2066
    %v2089 = vadd.f32 %v2087, %v2088
    %v2090 = vstv %s2068
    %v2091 = vmul.f32 %v2090, %v29
    %v2092 = vstv %s2070
    %v2093 = vmul.f32 %v2092, %v30
    %v2094 = vadd.f32 %v2091, %v2093
    %v2095 = vstv %s2072
    %v2096 = vadd.f32 %v2094, %v2095
    %v2097 = vstv %s2074
    %v2098 = vmul.f32 %v2097, %v29
    %v2099 = vstv %s2076
    %v2100 = vmul.f32 %v2099, %v30
    %v2101 = vadd.f32 %v2098, %v2100
    %v2102 = vstv %s2078
    %v2103 = vadd.f32 %v2101, %v2102
    %v2104 = vsub.f32 1.0, %v2089
    %v2105 = vsub.f32 %v2104, %v2096
    %vm2106 = vcmp.ge.f32.partialorder %v2089, -1e-06
    %vm2107 = vcmp.ge.f32.partialorder %v2096, -1e-06
    %vm2108 = vmand %vm2106, %vm2107
    %vm2109 = vcmp.ge.f32.partialorder %v2105, -1e-06
    %vm2110 = vmand %vm2108, %vm2109
    %vm2111 = vcmp.gt.f32.partialorder %v2103, 1e-06
    %vm2112 = vmand %vm2110, %vm2111
    %v2113 = vsel %vm2112, 1, 0
    %v2114 = vcvt.s32.f32 %v2113
    %v2115 = vmul.f32 %v2114, %v2103
    %v2116 = vstv %s2080
    %v2117 = vmul.f32 %v2115, %v2116
    %v2118 = vadd.f32 %v2057, %v2117
    %v2119 = vstv %s2082
    %v2120 = vmul.f32 %v2114, %v2119
    %v2121 = vadd.f32 %v2060, %v2120
    %s2122 = sadd.s32 %s1512, 110
    %s2123 = sld [smem:[#allocation2 + %s2122]]
    %s2124 = sadd.s32 %s1512, 111
    %s2125 = sld [smem:[#allocation2 + %s2124]]
    %s2126 = sadd.s32 %s1512, 112
    %s2127 = sld [smem:[#allocation2 + %s2126]]
    %s2128 = sadd.s32 %s1512, 113
    %s2129 = sld [smem:[#allocation2 + %s2128]]
    %s2130 = sadd.s32 %s1512, 114
    %s2131 = sld [smem:[#allocation2 + %s2130]]
    %s2132 = sadd.s32 %s1512, 115
    %s2133 = sld [smem:[#allocation2 + %s2132]]
    %s2134 = sadd.s32 %s1512, 116
    %s2135 = sld [smem:[#allocation2 + %s2134]]
    %s2136 = sadd.s32 %s1512, 117
    %s2137 = sld [smem:[#allocation2 + %s2136]]
    %s2138 = sadd.s32 %s1512, 118
    %s2139 = sld [smem:[#allocation2 + %s2138]]
    %s2140 = sadd.s32 %s1512, 119
    %s2141 = sld [smem:[#allocation2 + %s2140]]
    %s2142 = sadd.s32 %s1512, 120
    %s2143 = sld [smem:[#allocation2 + %s2142]]
    %v2144 = vstv %s2123
    %v2145 = vmul.f32 %v2144, %v29
    %v2146 = vstv %s2125
    %v2147 = vmul.f32 %v2146, %v30
    %v2148 = vadd.f32 %v2145, %v2147
    %v2149 = vstv %s2127
    %v2150 = vadd.f32 %v2148, %v2149
    %v2151 = vstv %s2129
    %v2152 = vmul.f32 %v2151, %v29
    %v2153 = vstv %s2131
    %v2154 = vmul.f32 %v2153, %v30
    %v2155 = vadd.f32 %v2152, %v2154
    %v2156 = vstv %s2133
    %v2157 = vadd.f32 %v2155, %v2156
    %v2158 = vstv %s2135
    %v2159 = vmul.f32 %v2158, %v29
    %v2160 = vstv %s2137
    %v2161 = vmul.f32 %v2160, %v30
    %v2162 = vadd.f32 %v2159, %v2161
    %v2163 = vstv %s2139
    %v2164 = vadd.f32 %v2162, %v2163
    %v2165 = vsub.f32 1.0, %v2150
    %v2166 = vsub.f32 %v2165, %v2157
    %vm2167 = vcmp.ge.f32.partialorder %v2150, -1e-06
    %vm2168 = vcmp.ge.f32.partialorder %v2157, -1e-06
    %vm2169 = vmand %vm2167, %vm2168
    %vm2170 = vcmp.ge.f32.partialorder %v2166, -1e-06
    %vm2171 = vmand %vm2169, %vm2170
    %vm2172 = vcmp.gt.f32.partialorder %v2164, 1e-06
    %vm2173 = vmand %vm2171, %vm2172
    %v2174 = vsel %vm2173, 1, 0
    %v2175 = vcvt.s32.f32 %v2174
    %v2176 = vmul.f32 %v2175, %v2164
    %v2177 = vstv %s2141
    %v2178 = vmul.f32 %v2176, %v2177
    %v2179 = vadd.f32 %v2118, %v2178
    %v2180 = vstv %s2143
    %v2181 = vmul.f32 %v2175, %v2180
    %v2182 = vadd.f32 %v2121, %v2181
    %s2183 = sadd.s32 %s1512, 121
    %s2184 = sld [smem:[#allocation2 + %s2183]]
    %s2185 = sadd.s32 %s1512, 122
    %s2186 = sld [smem:[#allocation2 + %s2185]]
    %s2187 = sadd.s32 %s1512, 123
    %s2188 = sld [smem:[#allocation2 + %s2187]]
    %s2189 = sadd.s32 %s1512, 124
    %s2190 = sld [smem:[#allocation2 + %s2189]]
    %s2191 = sadd.s32 %s1512, 125
    %s2192 = sld [smem:[#allocation2 + %s2191]]
    %s2193 = sadd.s32 %s1512, 126
    %s2194 = sld [smem:[#allocation2 + %s2193]]
    %s2195 = sadd.s32 %s1512, 127
    %s2196 = sld [smem:[#allocation2 + %s2195]]
    %s2197 = sadd.s32 %s1512, 128
    %s2198 = sld [smem:[#allocation2 + %s2197]]
    %s2199 = sadd.s32 %s1512, 129
    %s2200 = sld [smem:[#allocation2 + %s2199]]
    %s2201 = sadd.s32 %s1512, 130
    %s2202 = sld [smem:[#allocation2 + %s2201]]
    %s2203 = sadd.s32 %s1512, 131
    %s2204 = sld [smem:[#allocation2 + %s2203]]
    %v2205 = vstv %s2184
    %v2206 = vmul.f32 %v2205, %v29
    %v2207 = vstv %s2186
    %v2208 = vmul.f32 %v2207, %v30
    %v2209 = vadd.f32 %v2206, %v2208
    %v2210 = vstv %s2188
    %v2211 = vadd.f32 %v2209, %v2210
    %v2212 = vstv %s2190
    %v2213 = vmul.f32 %v2212, %v29
    %v2214 = vstv %s2192
    %v2215 = vmul.f32 %v2214, %v30
    %v2216 = vadd.f32 %v2213, %v2215
    %v2217 = vstv %s2194
    %v2218 = vadd.f32 %v2216, %v2217
    %v2219 = vstv %s2196
    %v2220 = vmul.f32 %v2219, %v29
    %v2221 = vstv %s2198
    %v2222 = vmul.f32 %v2221, %v30
    %v2223 = vadd.f32 %v2220, %v2222
    %v2224 = vstv %s2200
    %v2225 = vadd.f32 %v2223, %v2224
    %v2226 = vsub.f32 1.0, %v2211
    %v2227 = vsub.f32 %v2226, %v2218
    %vm2228 = vcmp.ge.f32.partialorder %v2211, -1e-06
    %vm2229 = vcmp.ge.f32.partialorder %v2218, -1e-06
    %vm2230 = vmand %vm2228, %vm2229
    %vm2231 = vcmp.ge.f32.partialorder %v2227, -1e-06
    %vm2232 = vmand %vm2230, %vm2231
    %vm2233 = vcmp.gt.f32.partialorder %v2225, 1e-06
    %vm2234 = vmand %vm2232, %vm2233
    %v2235 = vsel %vm2234, 1, 0
    %v2236 = vcvt.s32.f32 %v2235
    %v2237 = vmul.f32 %v2236, %v2225
    %v2238 = vstv %s2202
    %v2239 = vmul.f32 %v2237, %v2238
    %v2240 = vadd.f32 %v2179, %v2239
    %v2241 = vstv %s2204
    %v2242 = vmul.f32 %v2236, %v2241
    %v2243 = vadd.f32 %v2182, %v2242
    %s2244 = scalar_lea.vmem %s3, 16
    %2245 = vst [vmem:[%s2244] sm:$0xff] %v2240
    %v2246 = vand.u32 2147483647, %v2243
    %vm2247 = vcmp.lt.f32.partialorder %v2246, 0.5
    %v2248 = vsel %vm2247, 1, 0
    %v2249 = vcvt.s32.f32 %v2248
    %s2250 = scalar_lea.vmem %s4, 16
    %2251 = vst [vmem:[%s2250] sm:$0xff] %v2249
    %s2252 = sadd.s32 %s769, 3
    %s2253 = smul.u32 %s2252, 132
    %s2254 = sld [smem:[#allocation2 + %s2253]]
    %s2255 = sadd.s32 %s2253, 1
    %s2256 = sld [smem:[#allocation2 + %s2255]]
    %s2257 = sadd.s32 %s2253, 2
    %s2258 = sld [smem:[#allocation2 + %s2257]]
    %s2259 = sadd.s32 %s2253, 3
    %s2260 = sld [smem:[#allocation2 + %s2259]]
    %s2261 = sadd.s32 %s2253, 4
    %s2262 = sld [smem:[#allocation2 + %s2261]]
    %s2263 = sadd.s32 %s2253, 5
    %s2264 = sld [smem:[#allocation2 + %s2263]]
    %s2265 = sadd.s32 %s2253, 6
    %s2266 = sld [smem:[#allocation2 + %s2265]]
    %s2267 = sadd.s32 %s2253, 7
    %s2268 = sld [smem:[#allocation2 + %s2267]]
    %s2269 = sadd.s32 %s2253, 8
    %s2270 = sld [smem:[#allocation2 + %s2269]]
    %s2271 = sadd.s32 %s2253, 9
    %s2272 = sld [smem:[#allocation2 + %s2271]]
    %s2273 = sadd.s32 %s2253, 10
    %s2274 = sld [smem:[#allocation2 + %s2273]]
    %v2275 = vstv %s2254
    %v2276 = vmul.f32 %v2275, %v29
    %v2277 = vstv %s2256
    %v2278 = vmul.f32 %v2277, %v30
    %v2279 = vadd.f32 %v2276, %v2278
    %v2280 = vstv %s2258
    %v2281 = vadd.f32 %v2279, %v2280
    %v2282 = vstv %s2260
    %v2283 = vmul.f32 %v2282, %v29
    %v2284 = vstv %s2262
    %v2285 = vmul.f32 %v2284, %v30
    %v2286 = vadd.f32 %v2283, %v2285
    %v2287 = vstv %s2264
    %v2288 = vadd.f32 %v2286, %v2287
    %v2289 = vstv %s2266
    %v2290 = vmul.f32 %v2289, %v29
    %v2291 = vstv %s2268
    %v2292 = vmul.f32 %v2291, %v30
    %v2293 = vadd.f32 %v2290, %v2292
    %v2294 = vstv %s2270
    %v2295 = vadd.f32 %v2293, %v2294
    %v2296 = vsub.f32 1.0, %v2281
    %v2297 = vsub.f32 %v2296, %v2288
    %vm2298 = vcmp.ge.f32.partialorder %v2281, -1e-06
    %vm2299 = vcmp.ge.f32.partialorder %v2288, -1e-06
    %vm2300 = vmand %vm2298, %vm2299
    %vm2301 = vcmp.ge.f32.partialorder %v2297, -1e-06
    %vm2302 = vmand %vm2300, %vm2301
    %vm2303 = vcmp.gt.f32.partialorder %v2295, 1e-06
    %vm2304 = vmand %vm2302, %vm2303
    %v2305 = vsel %vm2304, 1, 0
    %v2306 = vcvt.s32.f32 %v2305
    %v2307 = vmul.f32 %v2306, %v2295
    %v2308 = vstv %s2272
    %v2309 = vmul.f32 %v2307, %v2308
    %v2310 = vadd.f32 %v2309, 0.0
    %v2311 = vstv %s2274
    %v2312 = vmul.f32 %v2306, %v2311
    %v2313 = vadd.f32 %v2312, 0.0
    %s2314 = sadd.s32 %s2253, 11
    %s2315 = sld [smem:[#allocation2 + %s2314]]
    %s2316 = sadd.s32 %s2253, 12
    %s2317 = sld [smem:[#allocation2 + %s2316]]
    %s2318 = sadd.s32 %s2253, 13
    %s2319 = sld [smem:[#allocation2 + %s2318]]
    %s2320 = sadd.s32 %s2253, 14
    %s2321 = sld [smem:[#allocation2 + %s2320]]
    %s2322 = sadd.s32 %s2253, 15
    %s2323 = sld [smem:[#allocation2 + %s2322]]
    %s2324 = sadd.s32 %s2253, 16
    %s2325 = sld [smem:[#allocation2 + %s2324]]
    %s2326 = sadd.s32 %s2253, 17
    %s2327 = sld [smem:[#allocation2 + %s2326]]
    %s2328 = sadd.s32 %s2253, 18
    %s2329 = sld [smem:[#allocation2 + %s2328]]
    %s2330 = sadd.s32 %s2253, 19
    %s2331 = sld [smem:[#allocation2 + %s2330]]
    %s2332 = sadd.s32 %s2253, 20
    %s2333 = sld [smem:[#allocation2 + %s2332]]
    %s2334 = sadd.s32 %s2253, 21
    %s2335 = sld [smem:[#allocation2 + %s2334]]
    %v2336 = vstv %s2315
    %v2337 = vmul.f32 %v2336, %v29
    %v2338 = vstv %s2317
    %v2339 = vmul.f32 %v2338, %v30
    %v2340 = vadd.f32 %v2337, %v2339
    %v2341 = vstv %s2319
    %v2342 = vadd.f32 %v2340, %v2341
    %v2343 = vstv %s2321
    %v2344 = vmul.f32 %v2343, %v29
    %v2345 = vstv %s2323
    %v2346 = vmul.f32 %v2345, %v30
    %v2347 = vadd.f32 %v2344, %v2346
    %v2348 = vstv %s2325
    %v2349 = vadd.f32 %v2347, %v2348
    %v2350 = vstv %s2327
    %v2351 = vmul.f32 %v2350, %v29
    %v2352 = vstv %s2329
    %v2353 = vmul.f32 %v2352, %v30
    %v2354 = vadd.f32 %v2351, %v2353
    %v2355 = vstv %s2331
    %v2356 = vadd.f32 %v2354, %v2355
    %v2357 = vsub.f32 1.0, %v2342
    %v2358 = vsub.f32 %v2357, %v2349
    %vm2359 = vcmp.ge.f32.partialorder %v2342, -1e-06
    %vm2360 = vcmp.ge.f32.partialorder %v2349, -1e-06
    %vm2361 = vmand %vm2359, %vm2360
    %vm2362 = vcmp.ge.f32.partialorder %v2358, -1e-06
    %vm2363 = vmand %vm2361, %vm2362
    %vm2364 = vcmp.gt.f32.partialorder %v2356, 1e-06
    %vm2365 = vmand %vm2363, %vm2364
    %v2366 = vsel %vm2365, 1, 0
    %v2367 = vcvt.s32.f32 %v2366
    %v2368 = vmul.f32 %v2367, %v2356
    %v2369 = vstv %s2333
    %v2370 = vmul.f32 %v2368, %v2369
    %v2371 = vadd.f32 %v2310, %v2370
    %v2372 = vstv %s2335
    %v2373 = vmul.f32 %v2367, %v2372
    %v2374 = vadd.f32 %v2313, %v2373
    %s2375 = sadd.s32 %s2253, 22
    %s2376 = sld [smem:[#allocation2 + %s2375]]
    %s2377 = sadd.s32 %s2253, 23
    %s2378 = sld [smem:[#allocation2 + %s2377]]
    %s2379 = sadd.s32 %s2253, 24
    %s2380 = sld [smem:[#allocation2 + %s2379]]
    %s2381 = sadd.s32 %s2253, 25
    %s2382 = sld [smem:[#allocation2 + %s2381]]
    %s2383 = sadd.s32 %s2253, 26
    %s2384 = sld [smem:[#allocation2 + %s2383]]
    %s2385 = sadd.s32 %s2253, 27
    %s2386 = sld [smem:[#allocation2 + %s2385]]
    %s2387 = sadd.s32 %s2253, 28
    %s2388 = sld [smem:[#allocation2 + %s2387]]
    %s2389 = sadd.s32 %s2253, 29
    %s2390 = sld [smem:[#allocation2 + %s2389]]
    %s2391 = sadd.s32 %s2253, 30
    %s2392 = sld [smem:[#allocation2 + %s2391]]
    %s2393 = sadd.s32 %s2253, 31
    %s2394 = sld [smem:[#allocation2 + %s2393]]
    %s2395 = sadd.s32 %s2253, 32
    %s2396 = sld [smem:[#allocation2 + %s2395]]
    %v2397 = vstv %s2376
    %v2398 = vmul.f32 %v2397, %v29
    %v2399 = vstv %s2378
    %v2400 = vmul.f32 %v2399, %v30
    %v2401 = vadd.f32 %v2398, %v2400
    %v2402 = vstv %s2380
    %v2403 = vadd.f32 %v2401, %v2402
    %v2404 = vstv %s2382
    %v2405 = vmul.f32 %v2404, %v29
    %v2406 = vstv %s2384
    %v2407 = vmul.f32 %v2406, %v30
    %v2408 = vadd.f32 %v2405, %v2407
    %v2409 = vstv %s2386
    %v2410 = vadd.f32 %v2408, %v2409
    %v2411 = vstv %s2388
    %v2412 = vmul.f32 %v2411, %v29
    %v2413 = vstv %s2390
    %v2414 = vmul.f32 %v2413, %v30
    %v2415 = vadd.f32 %v2412, %v2414
    %v2416 = vstv %s2392
    %v2417 = vadd.f32 %v2415, %v2416
    %v2418 = vsub.f32 1.0, %v2403
    %v2419 = vsub.f32 %v2418, %v2410
    %vm2420 = vcmp.ge.f32.partialorder %v2403, -1e-06
    %vm2421 = vcmp.ge.f32.partialorder %v2410, -1e-06
    %vm2422 = vmand %vm2420, %vm2421
    %vm2423 = vcmp.ge.f32.partialorder %v2419, -1e-06
    %vm2424 = vmand %vm2422, %vm2423
    %vm2425 = vcmp.gt.f32.partialorder %v2417, 1e-06
    %vm2426 = vmand %vm2424, %vm2425
    %v2427 = vsel %vm2426, 1, 0
    %v2428 = vcvt.s32.f32 %v2427
    %v2429 = vmul.f32 %v2428, %v2417
    %v2430 = vstv %s2394
    %v2431 = vmul.f32 %v2429, %v2430
    %v2432 = vadd.f32 %v2371, %v2431
    %v2433 = vstv %s2396
    %v2434 = vmul.f32 %v2428, %v2433
    %v2435 = vadd.f32 %v2374, %v2434
    %s2436 = sadd.s32 %s2253, 33
    %s2437 = sld [smem:[#allocation2 + %s2436]]
    %s2438 = sadd.s32 %s2253, 34
    %s2439 = sld [smem:[#allocation2 + %s2438]]
    %s2440 = sadd.s32 %s2253, 35
    %s2441 = sld [smem:[#allocation2 + %s2440]]
    %s2442 = sadd.s32 %s2253, 36
    %s2443 = sld [smem:[#allocation2 + %s2442]]
    %s2444 = sadd.s32 %s2253, 37
    %s2445 = sld [smem:[#allocation2 + %s2444]]
    %s2446 = sadd.s32 %s2253, 38
    %s2447 = sld [smem:[#allocation2 + %s2446]]
    %s2448 = sadd.s32 %s2253, 39
    %s2449 = sld [smem:[#allocation2 + %s2448]]
    %s2450 = sadd.s32 %s2253, 40
    %s2451 = sld [smem:[#allocation2 + %s2450]]
    %s2452 = sadd.s32 %s2253, 41
    %s2453 = sld [smem:[#allocation2 + %s2452]]
    %s2454 = sadd.s32 %s2253, 42
    %s2455 = sld [smem:[#allocation2 + %s2454]]
    %s2456 = sadd.s32 %s2253, 43
    %s2457 = sld [smem:[#allocation2 + %s2456]]
    %v2458 = vstv %s2437
    %v2459 = vmul.f32 %v2458, %v29
    %v2460 = vstv %s2439
    %v2461 = vmul.f32 %v2460, %v30
    %v2462 = vadd.f32 %v2459, %v2461
    %v2463 = vstv %s2441
    %v2464 = vadd.f32 %v2462, %v2463
    %v2465 = vstv %s2443
    %v2466 = vmul.f32 %v2465, %v29
    %v2467 = vstv %s2445
    %v2468 = vmul.f32 %v2467, %v30
    %v2469 = vadd.f32 %v2466, %v2468
    %v2470 = vstv %s2447
    %v2471 = vadd.f32 %v2469, %v2470
    %v2472 = vstv %s2449
    %v2473 = vmul.f32 %v2472, %v29
    %v2474 = vstv %s2451
    %v2475 = vmul.f32 %v2474, %v30
    %v2476 = vadd.f32 %v2473, %v2475
    %v2477 = vstv %s2453
    %v2478 = vadd.f32 %v2476, %v2477
    %v2479 = vsub.f32 1.0, %v2464
    %v2480 = vsub.f32 %v2479, %v2471
    %vm2481 = vcmp.ge.f32.partialorder %v2464, -1e-06
    %vm2482 = vcmp.ge.f32.partialorder %v2471, -1e-06
    %vm2483 = vmand %vm2481, %vm2482
    %vm2484 = vcmp.ge.f32.partialorder %v2480, -1e-06
    %vm2485 = vmand %vm2483, %vm2484
    %vm2486 = vcmp.gt.f32.partialorder %v2478, 1e-06
    %vm2487 = vmand %vm2485, %vm2486
    %v2488 = vsel %vm2487, 1, 0
    %v2489 = vcvt.s32.f32 %v2488
    %v2490 = vmul.f32 %v2489, %v2478
    %v2491 = vstv %s2455
    %v2492 = vmul.f32 %v2490, %v2491
    %v2493 = vadd.f32 %v2432, %v2492
    %v2494 = vstv %s2457
    %v2495 = vmul.f32 %v2489, %v2494
    %v2496 = vadd.f32 %v2435, %v2495
    %s2497 = sadd.s32 %s2253, 44
    %s2498 = sld [smem:[#allocation2 + %s2497]]
    %s2499 = sadd.s32 %s2253, 45
    %s2500 = sld [smem:[#allocation2 + %s2499]]
    %s2501 = sadd.s32 %s2253, 46
    %s2502 = sld [smem:[#allocation2 + %s2501]]
    %s2503 = sadd.s32 %s2253, 47
    %s2504 = sld [smem:[#allocation2 + %s2503]]
    %s2505 = sadd.s32 %s2253, 48
    %s2506 = sld [smem:[#allocation2 + %s2505]]
    %s2507 = sadd.s32 %s2253, 49
    %s2508 = sld [smem:[#allocation2 + %s2507]]
    %s2509 = sadd.s32 %s2253, 50
    %s2510 = sld [smem:[#allocation2 + %s2509]]
    %s2511 = sadd.s32 %s2253, 51
    %s2512 = sld [smem:[#allocation2 + %s2511]]
    %s2513 = sadd.s32 %s2253, 52
    %s2514 = sld [smem:[#allocation2 + %s2513]]
    %s2515 = sadd.s32 %s2253, 53
    %s2516 = sld [smem:[#allocation2 + %s2515]]
    %s2517 = sadd.s32 %s2253, 54
    %s2518 = sld [smem:[#allocation2 + %s2517]]
    %v2519 = vstv %s2498
    %v2520 = vmul.f32 %v2519, %v29
    %v2521 = vstv %s2500
    %v2522 = vmul.f32 %v2521, %v30
    %v2523 = vadd.f32 %v2520, %v2522
    %v2524 = vstv %s2502
    %v2525 = vadd.f32 %v2523, %v2524
    %v2526 = vstv %s2504
    %v2527 = vmul.f32 %v2526, %v29
    %v2528 = vstv %s2506
    %v2529 = vmul.f32 %v2528, %v30
    %v2530 = vadd.f32 %v2527, %v2529
    %v2531 = vstv %s2508
    %v2532 = vadd.f32 %v2530, %v2531
    %v2533 = vstv %s2510
    %v2534 = vmul.f32 %v2533, %v29
    %v2535 = vstv %s2512
    %v2536 = vmul.f32 %v2535, %v30
    %v2537 = vadd.f32 %v2534, %v2536
    %v2538 = vstv %s2514
    %v2539 = vadd.f32 %v2537, %v2538
    %v2540 = vsub.f32 1.0, %v2525
    %v2541 = vsub.f32 %v2540, %v2532
    %vm2542 = vcmp.ge.f32.partialorder %v2525, -1e-06
    %vm2543 = vcmp.ge.f32.partialorder %v2532, -1e-06
    %vm2544 = vmand %vm2542, %vm2543
    %vm2545 = vcmp.ge.f32.partialorder %v2541, -1e-06
    %vm2546 = vmand %vm2544, %vm2545
    %vm2547 = vcmp.gt.f32.partialorder %v2539, 1e-06
    %vm2548 = vmand %vm2546, %vm2547
    %v2549 = vsel %vm2548, 1, 0
    %v2550 = vcvt.s32.f32 %v2549
    %v2551 = vmul.f32 %v2550, %v2539
    %v2552 = vstv %s2516
    %v2553 = vmul.f32 %v2551, %v2552
    %v2554 = vadd.f32 %v2493, %v2553
    %v2555 = vstv %s2518
    %v2556 = vmul.f32 %v2550, %v2555
    %v2557 = vadd.f32 %v2496, %v2556
    %s2558 = sadd.s32 %s2253, 55
    %s2559 = sld [smem:[#allocation2 + %s2558]]
    %s2560 = sadd.s32 %s2253, 56
    %s2561 = sld [smem:[#allocation2 + %s2560]]
    %s2562 = sadd.s32 %s2253, 57
    %s2563 = sld [smem:[#allocation2 + %s2562]]
    %s2564 = sadd.s32 %s2253, 58
    %s2565 = sld [smem:[#allocation2 + %s2564]]
    %s2566 = sadd.s32 %s2253, 59
    %s2567 = sld [smem:[#allocation2 + %s2566]]
    %s2568 = sadd.s32 %s2253, 60
    %s2569 = sld [smem:[#allocation2 + %s2568]]
    %s2570 = sadd.s32 %s2253, 61
    %s2571 = sld [smem:[#allocation2 + %s2570]]
    %s2572 = sadd.s32 %s2253, 62
    %s2573 = sld [smem:[#allocation2 + %s2572]]
    %s2574 = sadd.s32 %s2253, 63
    %s2575 = sld [smem:[#allocation2 + %s2574]]
    %s2576 = sadd.s32 %s2253, 64
    %s2577 = sld [smem:[#allocation2 + %s2576]]
    %s2578 = sadd.s32 %s2253, 65
    %s2579 = sld [smem:[#allocation2 + %s2578]]
    %v2580 = vstv %s2559
    %v2581 = vmul.f32 %v2580, %v29
    %v2582 = vstv %s2561
    %v2583 = vmul.f32 %v2582, %v30
    %v2584 = vadd.f32 %v2581, %v2583
    %v2585 = vstv %s2563
    %v2586 = vadd.f32 %v2584, %v2585
    %v2587 = vstv %s2565
    %v2588 = vmul.f32 %v2587, %v29
    %v2589 = vstv %s2567
    %v2590 = vmul.f32 %v2589, %v30
    %v2591 = vadd.f32 %v2588, %v2590
    %v2592 = vstv %s2569
    %v2593 = vadd.f32 %v2591, %v2592
    %v2594 = vstv %s2571
    %v2595 = vmul.f32 %v2594, %v29
    %v2596 = vstv %s2573
    %v2597 = vmul.f32 %v2596, %v30
    %v2598 = vadd.f32 %v2595, %v2597
    %v2599 = vstv %s2575
    %v2600 = vadd.f32 %v2598, %v2599
    %v2601 = vsub.f32 1.0, %v2586
    %v2602 = vsub.f32 %v2601, %v2593
    %vm2603 = vcmp.ge.f32.partialorder %v2586, -1e-06
    %vm2604 = vcmp.ge.f32.partialorder %v2593, -1e-06
    %vm2605 = vmand %vm2603, %vm2604
    %vm2606 = vcmp.ge.f32.partialorder %v2602, -1e-06
    %vm2607 = vmand %vm2605, %vm2606
    %vm2608 = vcmp.gt.f32.partialorder %v2600, 1e-06
    %vm2609 = vmand %vm2607, %vm2608
    %v2610 = vsel %vm2609, 1, 0
    %v2611 = vcvt.s32.f32 %v2610
    %v2612 = vmul.f32 %v2611, %v2600
    %v2613 = vstv %s2577
    %v2614 = vmul.f32 %v2612, %v2613
    %v2615 = vadd.f32 %v2554, %v2614
    %v2616 = vstv %s2579
    %v2617 = vmul.f32 %v2611, %v2616
    %v2618 = vadd.f32 %v2557, %v2617
    %s2619 = sadd.s32 %s2253, 66
    %s2620 = sld [smem:[#allocation2 + %s2619]]
    %s2621 = sadd.s32 %s2253, 67
    %s2622 = sld [smem:[#allocation2 + %s2621]]
    %s2623 = sadd.s32 %s2253, 68
    %s2624 = sld [smem:[#allocation2 + %s2623]]
    %s2625 = sadd.s32 %s2253, 69
    %s2626 = sld [smem:[#allocation2 + %s2625]]
    %s2627 = sadd.s32 %s2253, 70
    %s2628 = sld [smem:[#allocation2 + %s2627]]
    %s2629 = sadd.s32 %s2253, 71
    %s2630 = sld [smem:[#allocation2 + %s2629]]
    %s2631 = sadd.s32 %s2253, 72
    %s2632 = sld [smem:[#allocation2 + %s2631]]
    %s2633 = sadd.s32 %s2253, 73
    %s2634 = sld [smem:[#allocation2 + %s2633]]
    %s2635 = sadd.s32 %s2253, 74
    %s2636 = sld [smem:[#allocation2 + %s2635]]
    %s2637 = sadd.s32 %s2253, 75
    %s2638 = sld [smem:[#allocation2 + %s2637]]
    %s2639 = sadd.s32 %s2253, 76
    %s2640 = sld [smem:[#allocation2 + %s2639]]
    %v2641 = vstv %s2620
    %v2642 = vmul.f32 %v2641, %v29
    %v2643 = vstv %s2622
    %v2644 = vmul.f32 %v2643, %v30
    %v2645 = vadd.f32 %v2642, %v2644
    %v2646 = vstv %s2624
    %v2647 = vadd.f32 %v2645, %v2646
    %v2648 = vstv %s2626
    %v2649 = vmul.f32 %v2648, %v29
    %v2650 = vstv %s2628
    %v2651 = vmul.f32 %v2650, %v30
    %v2652 = vadd.f32 %v2649, %v2651
    %v2653 = vstv %s2630
    %v2654 = vadd.f32 %v2652, %v2653
    %v2655 = vstv %s2632
    %v2656 = vmul.f32 %v2655, %v29
    %v2657 = vstv %s2634
    %v2658 = vmul.f32 %v2657, %v30
    %v2659 = vadd.f32 %v2656, %v2658
    %v2660 = vstv %s2636
    %v2661 = vadd.f32 %v2659, %v2660
    %v2662 = vsub.f32 1.0, %v2647
    %v2663 = vsub.f32 %v2662, %v2654
    %vm2664 = vcmp.ge.f32.partialorder %v2647, -1e-06
    %vm2665 = vcmp.ge.f32.partialorder %v2654, -1e-06
    %vm2666 = vmand %vm2664, %vm2665
    %vm2667 = vcmp.ge.f32.partialorder %v2663, -1e-06
    %vm2668 = vmand %vm2666, %vm2667
    %vm2669 = vcmp.gt.f32.partialorder %v2661, 1e-06
    %vm2670 = vmand %vm2668, %vm2669
    %v2671 = vsel %vm2670, 1, 0
    %v2672 = vcvt.s32.f32 %v2671
    %v2673 = vmul.f32 %v2672, %v2661
    %v2674 = vstv %s2638
    %v2675 = vmul.f32 %v2673, %v2674
    %v2676 = vadd.f32 %v2615, %v2675
    %v2677 = vstv %s2640
    %v2678 = vmul.f32 %v2672, %v2677
    %v2679 = vadd.f32 %v2618, %v2678
    %s2680 = sadd.s32 %s2253, 77
    %s2681 = sld [smem:[#allocation2 + %s2680]]
    %s2682 = sadd.s32 %s2253, 78
    %s2683 = sld [smem:[#allocation2 + %s2682]]
    %s2684 = sadd.s32 %s2253, 79
    %s2685 = sld [smem:[#allocation2 + %s2684]]
    %s2686 = sadd.s32 %s2253, 80
    %s2687 = sld [smem:[#allocation2 + %s2686]]
    %s2688 = sadd.s32 %s2253, 81
    %s2689 = sld [smem:[#allocation2 + %s2688]]
    %s2690 = sadd.s32 %s2253, 82
    %s2691 = sld [smem:[#allocation2 + %s2690]]
    %s2692 = sadd.s32 %s2253, 83
    %s2693 = sld [smem:[#allocation2 + %s2692]]
    %s2694 = sadd.s32 %s2253, 84
    %s2695 = sld [smem:[#allocation2 + %s2694]]
    %s2696 = sadd.s32 %s2253, 85
    %s2697 = sld [smem:[#allocation2 + %s2696]]
    %s2698 = sadd.s32 %s2253, 86
    %s2699 = sld [smem:[#allocation2 + %s2698]]
    %s2700 = sadd.s32 %s2253, 87
    %s2701 = sld [smem:[#allocation2 + %s2700]]
    %v2702 = vstv %s2681
    %v2703 = vmul.f32 %v2702, %v29
    %v2704 = vstv %s2683
    %v2705 = vmul.f32 %v2704, %v30
    %v2706 = vadd.f32 %v2703, %v2705
    %v2707 = vstv %s2685
    %v2708 = vadd.f32 %v2706, %v2707
    %v2709 = vstv %s2687
    %v2710 = vmul.f32 %v2709, %v29
    %v2711 = vstv %s2689
    %v2712 = vmul.f32 %v2711, %v30
    %v2713 = vadd.f32 %v2710, %v2712
    %v2714 = vstv %s2691
    %v2715 = vadd.f32 %v2713, %v2714
    %v2716 = vstv %s2693
    %v2717 = vmul.f32 %v2716, %v29
    %v2718 = vstv %s2695
    %v2719 = vmul.f32 %v2718, %v30
    %v2720 = vadd.f32 %v2717, %v2719
    %v2721 = vstv %s2697
    %v2722 = vadd.f32 %v2720, %v2721
    %v2723 = vsub.f32 1.0, %v2708
    %v2724 = vsub.f32 %v2723, %v2715
    %vm2725 = vcmp.ge.f32.partialorder %v2708, -1e-06
    %vm2726 = vcmp.ge.f32.partialorder %v2715, -1e-06
    %vm2727 = vmand %vm2725, %vm2726
    %vm2728 = vcmp.ge.f32.partialorder %v2724, -1e-06
    %vm2729 = vmand %vm2727, %vm2728
    %vm2730 = vcmp.gt.f32.partialorder %v2722, 1e-06
    %vm2731 = vmand %vm2729, %vm2730
    %v2732 = vsel %vm2731, 1, 0
    %v2733 = vcvt.s32.f32 %v2732
    %v2734 = vmul.f32 %v2733, %v2722
    %v2735 = vstv %s2699
    %v2736 = vmul.f32 %v2734, %v2735
    %v2737 = vadd.f32 %v2676, %v2736
    %v2738 = vstv %s2701
    %v2739 = vmul.f32 %v2733, %v2738
    %v2740 = vadd.f32 %v2679, %v2739
    %s2741 = sadd.s32 %s2253, 88
    %s2742 = sld [smem:[#allocation2 + %s2741]]
    %s2743 = sadd.s32 %s2253, 89
    %s2744 = sld [smem:[#allocation2 + %s2743]]
    %s2745 = sadd.s32 %s2253, 90
    %s2746 = sld [smem:[#allocation2 + %s2745]]
    %s2747 = sadd.s32 %s2253, 91
    %s2748 = sld [smem:[#allocation2 + %s2747]]
    %s2749 = sadd.s32 %s2253, 92
    %s2750 = sld [smem:[#allocation2 + %s2749]]
    %s2751 = sadd.s32 %s2253, 93
    %s2752 = sld [smem:[#allocation2 + %s2751]]
    %s2753 = sadd.s32 %s2253, 94
    %s2754 = sld [smem:[#allocation2 + %s2753]]
    %s2755 = sadd.s32 %s2253, 95
    %s2756 = sld [smem:[#allocation2 + %s2755]]
    %s2757 = sadd.s32 %s2253, 96
    %s2758 = sld [smem:[#allocation2 + %s2757]]
    %s2759 = sadd.s32 %s2253, 97
    %s2760 = sld [smem:[#allocation2 + %s2759]]
    %s2761 = sadd.s32 %s2253, 98
    %s2762 = sld [smem:[#allocation2 + %s2761]]
    %v2763 = vstv %s2742
    %v2764 = vmul.f32 %v2763, %v29
    %v2765 = vstv %s2744
    %v2766 = vmul.f32 %v2765, %v30
    %v2767 = vadd.f32 %v2764, %v2766
    %v2768 = vstv %s2746
    %v2769 = vadd.f32 %v2767, %v2768
    %v2770 = vstv %s2748
    %v2771 = vmul.f32 %v2770, %v29
    %v2772 = vstv %s2750
    %v2773 = vmul.f32 %v2772, %v30
    %v2774 = vadd.f32 %v2771, %v2773
    %v2775 = vstv %s2752
    %v2776 = vadd.f32 %v2774, %v2775
    %v2777 = vstv %s2754
    %v2778 = vmul.f32 %v2777, %v29
    %v2779 = vstv %s2756
    %v2780 = vmul.f32 %v2779, %v30
    %v2781 = vadd.f32 %v2778, %v2780
    %v2782 = vstv %s2758
    %v2783 = vadd.f32 %v2781, %v2782
    %v2784 = vsub.f32 1.0, %v2769
    %v2785 = vsub.f32 %v2784, %v2776
    %vm2786 = vcmp.ge.f32.partialorder %v2769, -1e-06
    %vm2787 = vcmp.ge.f32.partialorder %v2776, -1e-06
    %vm2788 = vmand %vm2786, %vm2787
    %vm2789 = vcmp.ge.f32.partialorder %v2785, -1e-06
    %vm2790 = vmand %vm2788, %vm2789
    %vm2791 = vcmp.gt.f32.partialorder %v2783, 1e-06
    %vm2792 = vmand %vm2790, %vm2791
    %v2793 = vsel %vm2792, 1, 0
    %v2794 = vcvt.s32.f32 %v2793
    %v2795 = vmul.f32 %v2794, %v2783
    %v2796 = vstv %s2760
    %v2797 = vmul.f32 %v2795, %v2796
    %v2798 = vadd.f32 %v2737, %v2797
    %v2799 = vstv %s2762
    %v2800 = vmul.f32 %v2794, %v2799
    %v2801 = vadd.f32 %v2740, %v2800
    %s2802 = sadd.s32 %s2253, 99
    %s2803 = sld [smem:[#allocation2 + %s2802]]
    %s2804 = sadd.s32 %s2253, 100
    %s2805 = sld [smem:[#allocation2 + %s2804]]
    %s2806 = sadd.s32 %s2253, 101
    %s2807 = sld [smem:[#allocation2 + %s2806]]
    %s2808 = sadd.s32 %s2253, 102
    %s2809 = sld [smem:[#allocation2 + %s2808]]
    %s2810 = sadd.s32 %s2253, 103
    %s2811 = sld [smem:[#allocation2 + %s2810]]
    %s2812 = sadd.s32 %s2253, 104
    %s2813 = sld [smem:[#allocation2 + %s2812]]
    %s2814 = sadd.s32 %s2253, 105
    %s2815 = sld [smem:[#allocation2 + %s2814]]
    %s2816 = sadd.s32 %s2253, 106
    %s2817 = sld [smem:[#allocation2 + %s2816]]
    %s2818 = sadd.s32 %s2253, 107
    %s2819 = sld [smem:[#allocation2 + %s2818]]
    %s2820 = sadd.s32 %s2253, 108
    %s2821 = sld [smem:[#allocation2 + %s2820]]
    %s2822 = sadd.s32 %s2253, 109
    %s2823 = sld [smem:[#allocation2 + %s2822]]
    %v2824 = vstv %s2803
    %v2825 = vmul.f32 %v2824, %v29
    %v2826 = vstv %s2805
    %v2827 = vmul.f32 %v2826, %v30
    %v2828 = vadd.f32 %v2825, %v2827
    %v2829 = vstv %s2807
    %v2830 = vadd.f32 %v2828, %v2829
    %v2831 = vstv %s2809
    %v2832 = vmul.f32 %v2831, %v29
    %v2833 = vstv %s2811
    %v2834 = vmul.f32 %v2833, %v30
    %v2835 = vadd.f32 %v2832, %v2834
    %v2836 = vstv %s2813
    %v2837 = vadd.f32 %v2835, %v2836
    %v2838 = vstv %s2815
    %v2839 = vmul.f32 %v2838, %v29
    %v2840 = vstv %s2817
    %v2841 = vmul.f32 %v2840, %v30
    %v2842 = vadd.f32 %v2839, %v2841
    %v2843 = vstv %s2819
    %v2844 = vadd.f32 %v2842, %v2843
    %v2845 = vsub.f32 1.0, %v2830
    %v2846 = vsub.f32 %v2845, %v2837
    %vm2847 = vcmp.ge.f32.partialorder %v2830, -1e-06
    %vm2848 = vcmp.ge.f32.partialorder %v2837, -1e-06
    %vm2849 = vmand %vm2847, %vm2848
    %vm2850 = vcmp.ge.f32.partialorder %v2846, -1e-06
    %vm2851 = vmand %vm2849, %vm2850
    %vm2852 = vcmp.gt.f32.partialorder %v2844, 1e-06
    %vm2853 = vmand %vm2851, %vm2852
    %v2854 = vsel %vm2853, 1, 0
    %v2855 = vcvt.s32.f32 %v2854
    %v2856 = vmul.f32 %v2855, %v2844
    %v2857 = vstv %s2821
    %v2858 = vmul.f32 %v2856, %v2857
    %v2859 = vadd.f32 %v2798, %v2858
    %v2860 = vstv %s2823
    %v2861 = vmul.f32 %v2855, %v2860
    %v2862 = vadd.f32 %v2801, %v2861
    %s2863 = sadd.s32 %s2253, 110
    %s2864 = sld [smem:[#allocation2 + %s2863]]
    %s2865 = sadd.s32 %s2253, 111
    %s2866 = sld [smem:[#allocation2 + %s2865]]
    %s2867 = sadd.s32 %s2253, 112
    %s2868 = sld [smem:[#allocation2 + %s2867]]
    %s2869 = sadd.s32 %s2253, 113
    %s2870 = sld [smem:[#allocation2 + %s2869]]
    %s2871 = sadd.s32 %s2253, 114
    %s2872 = sld [smem:[#allocation2 + %s2871]]
    %s2873 = sadd.s32 %s2253, 115
    %s2874 = sld [smem:[#allocation2 + %s2873]]
    %s2875 = sadd.s32 %s2253, 116
    %s2876 = sld [smem:[#allocation2 + %s2875]]
    %s2877 = sadd.s32 %s2253, 117
    %s2878 = sld [smem:[#allocation2 + %s2877]]
    %s2879 = sadd.s32 %s2253, 118
    %s2880 = sld [smem:[#allocation2 + %s2879]]
    %s2881 = sadd.s32 %s2253, 119
    %s2882 = sld [smem:[#allocation2 + %s2881]]
    %s2883 = sadd.s32 %s2253, 120
    %s2884 = sld [smem:[#allocation2 + %s2883]]
    %v2885 = vstv %s2864
    %v2886 = vmul.f32 %v2885, %v29
    %v2887 = vstv %s2866
    %v2888 = vmul.f32 %v2887, %v30
    %v2889 = vadd.f32 %v2886, %v2888
    %v2890 = vstv %s2868
    %v2891 = vadd.f32 %v2889, %v2890
    %v2892 = vstv %s2870
    %v2893 = vmul.f32 %v2892, %v29
    %v2894 = vstv %s2872
    %v2895 = vmul.f32 %v2894, %v30
    %v2896 = vadd.f32 %v2893, %v2895
    %v2897 = vstv %s2874
    %v2898 = vadd.f32 %v2896, %v2897
    %v2899 = vstv %s2876
    %v2900 = vmul.f32 %v2899, %v29
    %v2901 = vstv %s2878
    %v2902 = vmul.f32 %v2901, %v30
    %v2903 = vadd.f32 %v2900, %v2902
    %v2904 = vstv %s2880
    %v2905 = vadd.f32 %v2903, %v2904
    %v2906 = vsub.f32 1.0, %v2891
    %v2907 = vsub.f32 %v2906, %v2898
    %vm2908 = vcmp.ge.f32.partialorder %v2891, -1e-06
    %vm2909 = vcmp.ge.f32.partialorder %v2898, -1e-06
    %vm2910 = vmand %vm2908, %vm2909
    %vm2911 = vcmp.ge.f32.partialorder %v2907, -1e-06
    %vm2912 = vmand %vm2910, %vm2911
    %vm2913 = vcmp.gt.f32.partialorder %v2905, 1e-06
    %vm2914 = vmand %vm2912, %vm2913
    %v2915 = vsel %vm2914, 1, 0
    %v2916 = vcvt.s32.f32 %v2915
    %v2917 = vmul.f32 %v2916, %v2905
    %v2918 = vstv %s2882
    %v2919 = vmul.f32 %v2917, %v2918
    %v2920 = vadd.f32 %v2859, %v2919
    %v2921 = vstv %s2884
    %v2922 = vmul.f32 %v2916, %v2921
    %v2923 = vadd.f32 %v2862, %v2922
    %s2924 = sadd.s32 %s2253, 121
    %s2925 = sld [smem:[#allocation2 + %s2924]]
    %s2926 = sadd.s32 %s2253, 122
    %s2927 = sld [smem:[#allocation2 + %s2926]]
    %s2928 = sadd.s32 %s2253, 123
    %s2929 = sld [smem:[#allocation2 + %s2928]]
    %s2930 = sadd.s32 %s2253, 124
    %s2931 = sld [smem:[#allocation2 + %s2930]]
    %s2932 = sadd.s32 %s2253, 125
    %s2933 = sld [smem:[#allocation2 + %s2932]]
    %s2934 = sadd.s32 %s2253, 126
    %s2935 = sld [smem:[#allocation2 + %s2934]]
    %s2936 = sadd.s32 %s2253, 127
    %s2937 = sld [smem:[#allocation2 + %s2936]]
    %s2938 = sadd.s32 %s2253, 128
    %s2939 = sld [smem:[#allocation2 + %s2938]]
    %s2940 = sadd.s32 %s2253, 129
    %s2941 = sld [smem:[#allocation2 + %s2940]]
    %s2942 = sadd.s32 %s2253, 130
    %s2943 = sld [smem:[#allocation2 + %s2942]]
    %s2944 = sadd.s32 %s2253, 131
    %s2945 = sld [smem:[#allocation2 + %s2944]]
    %v2946 = vstv %s2925
    %v2947 = vmul.f32 %v2946, %v29
    %v2948 = vstv %s2927
    %v2949 = vmul.f32 %v2948, %v30
    %v2950 = vadd.f32 %v2947, %v2949
    %v2951 = vstv %s2929
    %v2952 = vadd.f32 %v2950, %v2951
    %v2953 = vstv %s2931
    %v2954 = vmul.f32 %v2953, %v29
    %v2955 = vstv %s2933
    %v2956 = vmul.f32 %v2955, %v30
    %v2957 = vadd.f32 %v2954, %v2956
    %v2958 = vstv %s2935
    %v2959 = vadd.f32 %v2957, %v2958
    %v2960 = vstv %s2937
    %v2961 = vmul.f32 %v2960, %v29
    %v2962 = vstv %s2939
    %v2963 = vmul.f32 %v2962, %v30
    %v2964 = vadd.f32 %v2961, %v2963
    %v2965 = vstv %s2941
    %v2966 = vadd.f32 %v2964, %v2965
    %v2967 = vsub.f32 1.0, %v2952
    %v2968 = vsub.f32 %v2967, %v2959
    %vm2969 = vcmp.ge.f32.partialorder %v2952, -1e-06
    %vm2970 = vcmp.ge.f32.partialorder %v2959, -1e-06
    %vm2971 = vmand %vm2969, %vm2970
    %vm2972 = vcmp.ge.f32.partialorder %v2968, -1e-06
    %vm2973 = vmand %vm2971, %vm2972
    %vm2974 = vcmp.gt.f32.partialorder %v2966, 1e-06
    %vm2975 = vmand %vm2973, %vm2974
    %v2976 = vsel %vm2975, 1, 0
    %v2977 = vcvt.s32.f32 %v2976
    %v2978 = vmul.f32 %v2977, %v2966
    %v2979 = vstv %s2943
    %v2980 = vmul.f32 %v2978, %v2979
    %v2981 = vadd.f32 %v2920, %v2980
    %v2982 = vstv %s2945
    %v2983 = vmul.f32 %v2977, %v2982
    %v2984 = vadd.f32 %v2923, %v2983
    %s2985 = scalar_lea.vmem %s3, 24
    %2986 = vst [vmem:[%s2985] sm:$0xff] %v2981
    %v2987 = vand.u32 2147483647, %v2984
    %vm2988 = vcmp.lt.f32.partialorder %v2987, 0.5
    %v2989 = vsel %vm2988, 1, 0
    %v2990 = vcvt.s32.f32 %v2989
    %s2991 = scalar_lea.vmem %s4, 24
    %2992 = vst [vmem:[%s2991] sm:$0xff] %v2990
    // Predicated region
    $region18: #{_lambda_.1} parent=1 // pred_check
      _
    $region19: #{_lambda_.1} parent=1 // pred_check_branch
      %2994 = sbr.rel (0) target = $region21
    $region20: #{_lambda_.1} parent=1 // pred_region
      _
    $region21: #{_lambda_.1} parent=1 // pred_fallthru
      _
    // Predicated region
    $region22: #{_lambda_.1} parent=1 // pred_check
      _
    $region23: #{_lambda_.1} parent=1 // pred_check_branch
      %2996 = sbr.rel (0) target = $region25
    $region24: #{_lambda_.1} parent=1 // pred_region
      _
    $region25: #{_lambda_.1} parent=1 // pred_fallthru
      _
    // Predicated region
    $region26: #{_lambda_.1} parent=1 // pred_check
      _
    $region27: #{_lambda_.1} parent=1 // pred_check_branch
      %2998 = sbr.rel (0) target = $region29
    $region28: #{_lambda_.1} parent=1 // pred_region
      _
    $region29: #{_lambda_.1} parent=1 // pred_fallthru
      _
    // Predicated region
    $region30: #{_lambda_.1} parent=1 // pred_check
      _
    $region31: #{_lambda_.1} parent=1 // pred_check_branch
      %3000 = sbr.rel (0) target = $region33
    $region32: #{_lambda_.1} parent=1 // pred_region
      _
    $region33: #{_lambda_.1} parent=1 // pred_fallthru
      _
    %3001 = vsyncpa [#allocation3], 1

</llo_original>
